<compile_context>
chip_gen: v7x
topology: tpu7x:2x2x1
jax: 0.10.0
libtpu: 0.0.40
codegen_flags: <defaults>
</compile_context>

<pallas_src>
import functools
import math

import jax
import jax.numpy as jnp
import numpy as np
from jax.experimental import pallas as pl
from jax.experimental.pallas import tpu as pltpu


def _round_up(v, m):
    return ((v + m - 1) // m) * m


# ---------------------------------------------------------------------------
# Pallas kernel: 3x3 conv (+bias, ReLU, optional fused 2x2 maxpool),
# reading and writing the padded-flat layout.
# ---------------------------------------------------------------------------
def _conv3x3_kernel(x_ref, w_ref, b_ref, o_ref, *, H, W, Wp, merge_kx, pool, pad_out):
    """3x3 "same" conv (PyTorch cross-correlation) + bias + ReLU [+ 2x2 maxpool].

    x_ref : (1, (H+3)*Wp, Cin)  zero-padded input, (row, col) flattened; real data lives
                                at rows 1..H and cols 1..W of the (H+3, Wp) grid.
    w_ref : (3, 3*Cin, Cout) bf16 if merge_kx else (9, Cin, Cout) bf16
    b_ref : (1, Cout) f32
    o_ref : (1, Ho+3, Wop, Cout)  padded output for the next layer   (pad_out=True)
            (1, Ho,   Wo,  Cout)  dense final output                 (pad_out=False)
    """
    rows = H * Wp
    cout = w_ref.shape[-1]
    acc = None
    if merge_kx:
        # Merge the three kx taps into the contraction dim: K = 3*Cin.
        for ky in range(3):
            base = ky * Wp
            lhs = jnp.concatenate(
                [x_ref[0, base + kx: base + kx + rows, :].astype(jnp.bfloat16)
                 for kx in range(3)],
                axis=1)
            d = jnp.dot(lhs, w_ref[ky], preferred_element_type=jnp.float32)
            acc = d if acc is None else acc + d
    else:
        for ky in range(3):
            for kx in range(3):
                s = ky * Wp + kx
                d = jnp.dot(x_ref[0, s:s + rows, :].astype(jnp.bfloat16),
                            w_ref[ky * 3 + kx],
                            preferred_element_type=jnp.float32)
                acc = d if acc is None else acc + d

    acc = jnp.maximum(acc + b_ref[...], 0.0)           # bias + ReLU in f32
    y = acc.reshape(H, Wp, cout)[:, :W, :]             # drop wrap / right-pad columns

    if pool:
        Ho, Wo = H // 2, W // 2
        y = y.reshape(H, Wo, 2, cout).max(axis=2)      # pool along width
        y = y.reshape(Ho, 2, Wo, cout).max(axis=1)     # pool along height
    else:
        Ho, Wo = H, W

    y = y.astype(o_ref.dtype)
    if pad_out:
        # Write the next layer's padded input directly (zero borders, data at [1:,1:]).
        o_ref[0] = jnp.zeros(o_ref.shape[1:], o_ref.dtype)
        o_ref[0, 1:Ho + 1, 1:Wo + 1, :] = y
    else:
        o_ref[0] = y


# ---------------------------------------------------------------------------
# Wrapper
# ---------------------------------------------------------------------------
def conv3x3(x_flat, w, b, *, H, W, pool=False, pad_out=True, out_dtype=jnp.bfloat16):
    """x_flat: (N, (H+3)*Wp, Cin) padded-flat activation; w: (3,3,Cin,Cout); b: (Cout,)."""
    N, Lp, Cin = x_flat.shape
    Cout = w.shape[-1]
    Wp = _round_up(W + 2, 8)
    assert Lp == (H + 3) * Wp, (Lp, H, Wp)

    merge_kx = (Cin % 8 == 0)          # merge kx taps into K for the wide layers
    if merge_kx:
        wk = w.reshape(3, 3 * Cin, Cout).astype(jnp.bfloat16)
    else:
        wk = w.reshape(9, Cin, Cout).astype(jnp.bfloat16)
    b2 = b.reshape(1, Cout).astype(jnp.float32)

    if pool:
        assert H % 2 == 0 and W % 2 == 0
        Ho, Wo = H // 2, W // 2
    else:
        Ho, Wo = H, W
    if pad_out:
        out_sds = jax.ShapeDtypeStruct((N, Ho + 3, _round_up(Wo + 2, 8), Cout), out_dtype)
    else:
        out_sds = jax.ShapeDtypeStruct((N, Ho, Wo, Cout), out_dtype)
    out_spec = pl.BlockSpec((1,) + out_sds.shape[1:], lambda n: (n, 0, 0, 0))

    kernel = functools.partial(_conv3x3_kernel, H=H, W=W, Wp=Wp,
                               merge_kx=merge_kx, pool=pool, pad_out=pad_out)
    return pl.pallas_call(
        kernel,
        out_shape=out_sds,
        grid=(N,),
        in_specs=[
            pl.BlockSpec((1, Lp, Cin), lambda n: (n, 0, 0)),
            pl.BlockSpec(wk.shape, lambda n: (0, 0, 0)),
            pl.BlockSpec((1, Cout), lambda n: (0, 0)),
        ],
        out_specs=out_spec,
        compiler_params=pltpu.CompilerParams(dimension_semantics=("parallel",)),
    )(x_flat, wk, b2)


# ---------------------------------------------------------------------------
# Parameters & forward
# ---------------------------------------------------------------------------
_MEAN = np.array([0.485 - 0.5, 0.456 - 0.5, 0.406 - 0.5], np.float32)
_STD = np.array([0.229, 0.224, 0.225], np.float32)
SHIFT = jnp.asarray(2.0 * _MEAN)          # (x*0.5 - mean)/std == (x - 2*mean)*(0.5/std)
SCALE = jnp.asarray(0.5 / _STD)


def init_params(key):
    # Pretrained VGG16 weights are replaced by deterministic random init
    # (synthetic kernel; no checkpoint loading).
    dims = [(3, 64), (64, 64), (64, 128), (128, 128)]
    params = {}
    for i, (cin, cout) in enumerate(dims, start=1):
        key, kw, kb = jax.random.split(key, 3)
        scale = 1.0 / math.sqrt(9 * cin)
        params[f"w{i}"] = jax.random.normal(kw, (3, 3, cin, cout), jnp.float32) * scale
        params[f"b{i}"] = jax.random.normal(kb, (cout,), jnp.float32) * 0.01
    return params


@jax.jit
def netf_forward(images_nchw, params):
    x = jnp.transpose(images_nchw, (0, 2, 3, 1)).astype(jnp.float32)    # NCHW -> NHWC
    N, H, W, _ = x.shape
    Wp = _round_up(W + 2, 8)

    # Normalization folded into conv1: the shift rides on the (single) input pad,
    # the per-channel scale is folded into w1.
    xp = jnp.pad(x - SHIFT, ((0, 0), (1, 2), (1, Wp - W - 1), (0, 0)))
    xf = xp.reshape(N, (H + 3) * Wp, 3)
    w1 = params["w1"] * SCALE[None, None, :, None]

    y = conv3x3(xf, w1, params["b1"], H=H, W=W)                          # 3   -> 64
    y = conv3x3(y.reshape(N, -1, 64), params["w2"], params["b2"],
                H=H, W=W, pool=True)                                     # 64  -> 64, /2
    Ho, Wo = H // 2, W // 2
    y = conv3x3(y.reshape(N, -1, 64), params["w3"], params["b3"],
                H=Ho, W=Wo)                                              # 64  -> 128
    y = conv3x3(y.reshape(N, -1, 128), params["w4"], params["b4"],
                H=Ho, W=Wo, pad_out=False, out_dtype=jnp.float32)        # 128 -> 128
    return jnp.transpose(y, (0, 3, 1, 2))                                # NHWC -> NCHW


# ---------------------------------------------------------------------------
# Pure-JAX f32 reference (original module semantics) for the correctness check
# ---------------------------------------------------------------------------
def _reference(images_nchw, params):
    x = jnp.transpose(images_nchw, (0, 2, 3, 1)).astype(jnp.float32)
    mean = jnp.asarray(_MEAN).reshape(1, 1, 1, 3)
    std = jnp.asarray(_STD).reshape(1, 1, 1, 3)
    x = (x * 0.5 - mean) / std

    def conv(h, w, b):
        y = jax.lax.conv_general_dilated(
            h, w, window_strides=(1, 1), padding="SAME",
            dimension_numbers=("NHWC", "HWIO", "NHWC"),
            precision=jax.lax.Precision.HIGHEST)
        return jnp.maximum(y + b, 0.0)

    x = conv(x, params["w1"], params["b1"])
    x = conv(x, params["w2"], params["b2"])
    x = jax.lax.reduce_window(x, -jnp.inf, jax.lax.max,
                              (1, 2, 2, 1), (1, 2, 2, 1), "VALID")
    x = conv(x, params["w3"], params["b3"])
    x = conv(x, params["w4"], params["b4"])
    return jnp.transpose(x, (0, 3, 1, 2))


if __name__ == "__main__":
    key = jax.random.PRNGKey(0)
    k_img, k_par = jax.random.split(key)
    images = jax.random.uniform(k_img, (2, 3, 16, 16), jnp.float32)   # NCHW, in [0, 1]
    params = init_params(k_par)

    out = jax.block_until_ready(netf_forward(images, params))
    assert out.shape == (2, 128, 8, 8), out.shape

    ref = np.asarray(_reference(images, params))
    outn = np.asarray(out)
    # bf16 matmul operands -> loose elementwise tolerance plus a tight mean-error check
    # (structural bugs produce O(0.3+) errors at many positions and fail both).
    np.testing.assert_allclose(outn, ref, rtol=1e-1, atol=1e-1)
    assert float(np.mean(np.abs(outn - ref))) < 2e-2

    print("KERNEL_OK")
</pallas_src>

<mosaic_0001>
module attributes {stable_mosaic.version = 11 : i64} {
  func.func @_conv3x3_kernel(%arg0: i32, %arg1: memref<1x456x3xf32, #tpu.memory_space<vmem>>, %arg2: memref<9x3x64xbf16, #tpu.memory_space<vmem>>, %arg3: memref<1x64xf32, #tpu.memory_space<vmem>>, %arg4: memref<1x19x24x64xbf16, #tpu.memory_space<vmem>>) attributes {dimension_semantics = [#tpu.dimension_semantics<parallel>], iteration_bounds = array<i64: 2>, scalar_prefetch = 0 : i64, scratch_operands = 0 : i64, tpu.core_type = #tpu.core_type<tc>, window_params = [{transform_indices = @transform_0, window_bounds = array<i64: 1, 456, 3>}, {pipeline_mode = #tpu.pipeline_mode<synchronous>, transform_indices = @transform_1, window_bounds = array<i64: 9, 3, 64>}, {pipeline_mode = #tpu.pipeline_mode<synchronous>, transform_indices = @transform_2, window_bounds = array<i64: 1, 64>}, {transform_indices = @transform_3, window_bounds = array<i64: 1, 19, 24, 64>}]} {
    %c0 = arith.constant 0 : index
    %c0_0 = arith.constant 0 : index
    %c0_1 = arith.constant 0 : index
    %0 = vector.load %arg1[%c0, %c0_0, %c0_1] : memref<1x456x3xf32, #tpu.memory_space<vmem>>, vector<1x384x3xf32>
    %1 = vector.shape_cast %0 : vector<1x384x3xf32> to vector<384x3xf32>
    %2 = arith.truncf %1 : vector<384x3xf32> to vector<384x3xbf16>
    %c0_2 = arith.constant 0 : index
    %c0_3 = arith.constant 0 : index
    %c0_4 = arith.constant 0 : index
    %3 = vector.load %arg2[%c0_2, %c0_3, %c0_4] : memref<9x3x64xbf16, #tpu.memory_space<vmem>>, vector<1x3x64xbf16>
    %4 = vector.shape_cast %3 : vector<1x3x64xbf16> to vector<3x64xbf16>
    %cst = arith.constant dense<0.000000e+00> : vector<384x64xf32>
    %5 = tpu.matmul %2, %4, %cst {dimension_numbers = #tpu.dot_dimension_numbers<[1], [0], [0], [1], [0, 0, 1, 1], [], []>} : vector<384x3xbf16>, vector<3x64xbf16>, vector<384x64xf32> -> vector<384x64xf32>
    %c0_5 = arith.constant 0 : index
    %c1 = arith.constant 1 : index
    %c0_6 = arith.constant 0 : index
    %6 = vector.load %arg1[%c0_5, %c1, %c0_6] : memref<1x456x3xf32, #tpu.memory_space<vmem>>, vector<1x384x3xf32>
    %7 = vector.shape_cast %6 : vector<1x384x3xf32> to vector<384x3xf32>
    %8 = arith.truncf %7 : vector<384x3xf32> to vector<384x3xbf16>
    %c1_7 = arith.constant 1 : index
    %c0_8 = arith.constant 0 : index
    %c0_9 = arith.constant 0 : index
    %9 = vector.load %arg2[%c1_7, %c0_8, %c0_9] : memref<9x3x64xbf16, #tpu.memory_space<vmem>>, vector<1x3x64xbf16>
    %10 = vector.shape_cast %9 : vector<1x3x64xbf16> to vector<3x64xbf16>
    %cst_10 = arith.constant dense<0.000000e+00> : vector<384x64xf32>
    %11 = tpu.matmul %8, %10, %cst_10 {dimension_numbers = #tpu.dot_dimension_numbers<[1], [0], [0], [1], [0, 0, 1, 1], [], []>} : vector<384x3xbf16>, vector<3x64xbf16>, vector<384x64xf32> -> vector<384x64xf32>
    %12 = arith.addf %5, %11 : vector<384x64xf32>
    %c0_11 = arith.constant 0 : index
    %c2 = arith.constant 2 : index
    %c0_12 = arith.constant 0 : index
    %13 = vector.load %arg1[%c0_11, %c2, %c0_12] : memref<1x456x3xf32, #tpu.memory_space<vmem>>, vector<1x384x3xf32>
    %14 = vector.shape_cast %13 : vector<1x384x3xf32> to vector<384x3xf32>
    %15 = arith.truncf %14 : vector<384x3xf32> to vector<384x3xbf16>
    %c2_13 = arith.constant 2 : index
    %c0_14 = arith.constant 0 : index
    %c0_15 = arith.constant 0 : index
    %16 = vector.load %arg2[%c2_13, %c0_14, %c0_15] : memref<9x3x64xbf16, #tpu.memory_space<vmem>>, vector<1x3x64xbf16>
    %17 = vector.shape_cast %16 : vector<1x3x64xbf16> to vector<3x64xbf16>
    %cst_16 = arith.constant dense<0.000000e+00> : vector<384x64xf32>
    %18 = tpu.matmul %15, %17, %cst_16 {dimension_numbers = #tpu.dot_dimension_numbers<[1], [0], [0], [1], [0, 0, 1, 1], [], []>} : vector<384x3xbf16>, vector<3x64xbf16>, vector<384x64xf32> -> vector<384x64xf32>
    %19 = arith.addf %12, %18 : vector<384x64xf32>
    %c0_17 = arith.constant 0 : index
    %c24 = arith.constant 24 : index
    %c0_18 = arith.constant 0 : index
    %20 = vector.load %arg1[%c0_17, %c24, %c0_18] : memref<1x456x3xf32, #tpu.memory_space<vmem>>, vector<1x384x3xf32>
    %21 = vector.shape_cast %20 : vector<1x384x3xf32> to vector<384x3xf32>
    %22 = arith.truncf %21 : vector<384x3xf32> to vector<384x3xbf16>
    %c3 = arith.constant 3 : index
    %c0_19 = arith.constant 0 : index
    %c0_20 = arith.constant 0 : index
    %23 = vector.load %arg2[%c3, %c0_19, %c0_20] : memref<9x3x64xbf16, #tpu.memory_space<vmem>>, vector<1x3x64xbf16>
    %24 = vector.shape_cast %23 : vector<1x3x64xbf16> to vector<3x64xbf16>
    %cst_21 = arith.constant dense<0.000000e+00> : vector<384x64xf32>
    %25 = tpu.matmul %22, %24, %cst_21 {dimension_numbers = #tpu.dot_dimension_numbers<[1], [0], [0], [1], [0, 0, 1, 1], [], []>} : vector<384x3xbf16>, vector<3x64xbf16>, vector<384x64xf32> -> vector<384x64xf32>
    %26 = arith.addf %19, %25 : vector<384x64xf32>
    %c0_22 = arith.constant 0 : index
    %c25 = arith.constant 25 : index
    %c0_23 = arith.constant 0 : index
    %27 = vector.load %arg1[%c0_22, %c25, %c0_23] : memref<1x456x3xf32, #tpu.memory_space<vmem>>, vector<1x384x3xf32>
    %28 = vector.shape_cast %27 : vector<1x384x3xf32> to vector<384x3xf32>
    %29 = arith.truncf %28 : vector<384x3xf32> to vector<384x3xbf16>
    %c4 = arith.constant 4 : index
    %c0_24 = arith.constant 0 : index
    %c0_25 = arith.constant 0 : index
    %30 = vector.load %arg2[%c4, %c0_24, %c0_25] : memref<9x3x64xbf16, #tpu.memory_space<vmem>>, vector<1x3x64xbf16>
    %31 = vector.shape_cast %30 : vector<1x3x64xbf16> to vector<3x64xbf16>
    %cst_26 = arith.constant dense<0.000000e+00> : vector<384x64xf32>
    %32 = tpu.matmul %29, %31, %cst_26 {dimension_numbers = #tpu.dot_dimension_numbers<[1], [0], [0], [1], [0, 0, 1, 1], [], []>} : vector<384x3xbf16>, vector<3x64xbf16>, vector<384x64xf32> -> vector<384x64xf32>
    %33 = arith.addf %26, %32 : vector<384x64xf32>
    %c0_27 = arith.constant 0 : index
    %c26 = arith.constant 26 : index
    %c0_28 = arith.constant 0 : index
    %34 = vector.load %arg1[%c0_27, %c26, %c0_28] : memref<1x456x3xf32, #tpu.memory_space<vmem>>, vector<1x384x3xf32>
    %35 = vector.shape_cast %34 : vector<1x384x3xf32> to vector<384x3xf32>
    %36 = arith.truncf %35 : vector<384x3xf32> to vector<384x3xbf16>
    %c5 = arith.constant 5 : index
    %c0_29 = arith.constant 0 : index
    %c0_30 = arith.constant 0 : index
    %37 = vector.load %arg2[%c5, %c0_29, %c0_30] : memref<9x3x64xbf16, #tpu.memory_space<vmem>>, vector<1x3x64xbf16>
    %38 = vector.shape_cast %37 : vector<1x3x64xbf16> to vector<3x64xbf16>
    %cst_31 = arith.constant dense<0.000000e+00> : vector<384x64xf32>
    %39 = tpu.matmul %36, %38, %cst_31 {dimension_numbers = #tpu.dot_dimension_numbers<[1], [0], [0], [1], [0, 0, 1, 1], [], []>} : vector<384x3xbf16>, vector<3x64xbf16>, vector<384x64xf32> -> vector<384x64xf32>
    %40 = arith.addf %33, %39 : vector<384x64xf32>
    %c0_32 = arith.constant 0 : index
    %c48 = arith.constant 48 : index
    %c0_33 = arith.constant 0 : index
    %41 = vector.load %arg1[%c0_32, %c48, %c0_33] : memref<1x456x3xf32, #tpu.memory_space<vmem>>, vector<1x384x3xf32>
    %42 = vector.shape_cast %41 : vector<1x384x3xf32> to vector<384x3xf32>
    %43 = arith.truncf %42 : vector<384x3xf32> to vector<384x3xbf16>
    %c6 = arith.constant 6 : index
    %c0_34 = arith.constant 0 : index
    %c0_35 = arith.constant 0 : index
    %44 = vector.load %arg2[%c6, %c0_34, %c0_35] : memref<9x3x64xbf16, #tpu.memory_space<vmem>>, vector<1x3x64xbf16>
    %45 = vector.shape_cast %44 : vector<1x3x64xbf16> to vector<3x64xbf16>
    %cst_36 = arith.constant dense<0.000000e+00> : vector<384x64xf32>
    %46 = tpu.matmul %43, %45, %cst_36 {dimension_numbers = #tpu.dot_dimension_numbers<[1], [0], [0], [1], [0, 0, 1, 1], [], []>} : vector<384x3xbf16>, vector<3x64xbf16>, vector<384x64xf32> -> vector<384x64xf32>
    %47 = arith.addf %40, %46 : vector<384x64xf32>
    %c0_37 = arith.constant 0 : index
    %c49 = arith.constant 49 : index
    %c0_38 = arith.constant 0 : index
    %48 = vector.load %arg1[%c0_37, %c49, %c0_38] : memref<1x456x3xf32, #tpu.memory_space<vmem>>, vector<1x384x3xf32>
    %49 = vector.shape_cast %48 : vector<1x384x3xf32> to vector<384x3xf32>
    %50 = arith.truncf %49 : vector<384x3xf32> to vector<384x3xbf16>
    %c7 = arith.constant 7 : index
    %c0_39 = arith.constant 0 : index
    %c0_40 = arith.constant 0 : index
    %51 = vector.load %arg2[%c7, %c0_39, %c0_40] : memref<9x3x64xbf16, #tpu.memory_space<vmem>>, vector<1x3x64xbf16>
    %52 = vector.shape_cast %51 : vector<1x3x64xbf16> to vector<3x64xbf16>
    %cst_41 = arith.constant dense<0.000000e+00> : vector<384x64xf32>
    %53 = tpu.matmul %50, %52, %cst_41 {dimension_numbers = #tpu.dot_dimension_numbers<[1], [0], [0], [1], [0, 0, 1, 1], [], []>} : vector<384x3xbf16>, vector<3x64xbf16>, vector<384x64xf32> -> vector<384x64xf32>
    %54 = arith.addf %47, %53 : vector<384x64xf32>
    %c0_42 = arith.constant 0 : index
    %c50 = arith.constant 50 : index
    %c0_43 = arith.constant 0 : index
    %55 = vector.load %arg1[%c0_42, %c50, %c0_43] : memref<1x456x3xf32, #tpu.memory_space<vmem>>, vector<1x384x3xf32>
    %56 = vector.shape_cast %55 : vector<1x384x3xf32> to vector<384x3xf32>
    %57 = arith.truncf %56 : vector<384x3xf32> to vector<384x3xbf16>
    %c8 = arith.constant 8 : index
    %c0_44 = arith.constant 0 : index
    %c0_45 = arith.constant 0 : index
    %58 = vector.load %arg2[%c8, %c0_44, %c0_45] : memref<9x3x64xbf16, #tpu.memory_space<vmem>>, vector<1x3x64xbf16>
    %59 = vector.shape_cast %58 : vector<1x3x64xbf16> to vector<3x64xbf16>
    %cst_46 = arith.constant dense<0.000000e+00> : vector<384x64xf32>
    %60 = tpu.matmul %57, %59, %cst_46 {dimension_numbers = #tpu.dot_dimension_numbers<[1], [0], [0], [1], [0, 0, 1, 1], [], []>} : vector<384x3xbf16>, vector<3x64xbf16>, vector<384x64xf32> -> vector<384x64xf32>
    %61 = arith.addf %54, %60 : vector<384x64xf32>
    %c0_47 = arith.constant 0 : index
    %c0_48 = arith.constant 0 : index
    %62 = vector.load %arg3[%c0_47, %c0_48] : memref<1x64xf32, #tpu.memory_space<vmem>>, vector<1x64xf32>
    %63 = vector.broadcast %62 : vector<1x64xf32> to vector<384x64xf32>
    %64 = arith.addf %61, %63 : vector<384x64xf32>
    %cst_49 = arith.constant 0.000000e+00 : f32
    %65 = vector.broadcast %cst_49 : f32 to vector<384x64xf32>
    %66 = arith.maximumf %64, %65 : vector<384x64xf32>
    %67 = vector.shape_cast %66 : vector<384x64xf32> to vector<16x24x64xf32>
    %68 = vector.extract_strided_slice %67 {offsets = [0, 0, 0], sizes = [16, 16, 64], strides = [1, 1, 1]} : vector<16x24x64xf32> to vector<16x16x64xf32>
    %69 = arith.truncf %68 : vector<16x16x64xf32> to vector<16x16x64xbf16>
    %cst_50 = arith.constant 0.000000e+00 : bf16
    %70 = vector.broadcast %cst_50 : bf16 to vector<19x24x64xbf16>
    %c0_51 = arith.constant 0 : index
    %c0_52 = arith.constant 0 : index
    %c0_53 = arith.constant 0 : index
    %c0_54 = arith.constant 0 : index
    %71 = vector.load %arg4[%c0_51, %c0_52, %c0_53, %c0_54] : memref<1x19x24x64xbf16, #tpu.memory_space<vmem>>, vector<1x19x24x64xbf16>
    %72 = vector.shape_cast %71 : vector<1x19x24x64xbf16> to vector<19x24x64xbf16>
    %73 = vector.shape_cast %70 : vector<19x24x64xbf16> to vector<1x19x24x64xbf16>
    tpu.vector_store %arg4[%c0_51, %c0_52, %c0_53, %c0_54], %73 {strides = array<i32>} : memref<1x19x24x64xbf16, #tpu.memory_space<vmem>>, vector<1x19x24x64xbf16>,
    %c0_55 = arith.constant 0 : index
    %c1_56 = arith.constant 1 : index
    %c1_57 = arith.constant 1 : index
    %c0_58 = arith.constant 0 : index
    %74 = vector.load %arg4[%c0_55, %c1_56, %c1_57, %c0_58] : memref<1x19x24x64xbf16, #tpu.memory_space<vmem>>, vector<1x16x16x64xbf16>
    %75 = vector.shape_cast %74 : vector<1x16x16x64xbf16> to vector<16x16x64xbf16>
    %76 = vector.shape_cast %69 : vector<16x16x64xbf16> to vector<1x16x16x64xbf16>
    tpu.vector_store %arg4[%c0_55, %c1_56, %c1_57, %c0_58], %76 {strides = array<i32>} : memref<1x19x24x64xbf16, #tpu.memory_space<vmem>>, vector<1x16x16x64xbf16>,
    return
  }
  func.func @transform_0(%arg0: i32) -> (i32, i32, i32) {
    %c0_i32 = arith.constant 0 : i32
    %c0_i32_0 = arith.constant 0 : i32
    %c0_i32_1 = arith.constant 0 : i32
    return %arg0, %c0_i32, %c0_i32_0 : i32, i32, i32
  }
  func.func @transform_1(%arg0: i32) -> (i32, i32, i32) {
    %c0_i32 = arith.constant 0 : i32
    %c0_i32_0 = arith.constant 0 : i32
    %c0_i32_1 = arith.constant 0 : i32
    %c0_i32_2 = arith.constant 0 : i32
    return %c0_i32, %c0_i32_0, %c0_i32_1 : i32, i32, i32
  }
  func.func @transform_2(%arg0: i32) -> (i32, i32) {
    %c0_i32 = arith.constant 0 : i32
    %c0_i32_0 = arith.constant 0 : i32
    %c0_i32_1 = arith.constant 0 : i32
    return %c0_i32, %c0_i32_0 : i32, i32
  }
  func.func @transform_3(%arg0: i32) -> (i32, i32, i32, i32) {
    %c0_i32 = arith.constant 0 : i32
    %c0_i32_0 = arith.constant 0 : i32
    %c0_i32_1 = arith.constant 0 : i32
    %c0_i32_2 = arith.constant 0 : i32
    return %arg0, %c0_i32, %c0_i32_0, %c0_i32_1 : i32, i32, i32, i32
  }
}

module attributes {stable_mosaic.version = 11 : i64} {
  func.func @_conv3x3_kernel(%arg0: i32, %arg1: memref<1x456x64xbf16, #tpu.memory_space<vmem>>, %arg2: memref<3x192x64xbf16, #tpu.memory_space<vmem>>, %arg3: memref<1x64xf32, #tpu.memory_space<vmem>>, %arg4: memref<1x11x16x64xbf16, #tpu.memory_space<vmem>>) attributes {dimension_semantics = [#tpu.dimension_semantics<parallel>], iteration_bounds = array<i64: 2>, scalar_prefetch = 0 : i64, scratch_operands = 0 : i64, tpu.core_type = #tpu.core_type<tc>, window_params = [{transform_indices = @transform_0, window_bounds = array<i64: 1, 456, 64>}, {pipeline_mode = #tpu.pipeline_mode<synchronous>, transform_indices = @transform_1, window_bounds = array<i64: 3, 192, 64>}, {pipeline_mode = #tpu.pipeline_mode<synchronous>, transform_indices = @transform_2, window_bounds = array<i64: 1, 64>}, {transform_indices = @transform_3, window_bounds = array<i64: 1, 11, 16, 64>}]} {
    %c0 = arith.constant 0 : index
    %c0_0 = arith.constant 0 : index
    %c0_1 = arith.constant 0 : index
    %0 = vector.load %arg1[%c0, %c0_0, %c0_1] : memref<1x456x64xbf16, #tpu.memory_space<vmem>>, vector<1x384x64xbf16>
    %1 = vector.shape_cast %0 : vector<1x384x64xbf16> to vector<384x64xbf16>
    %c0_2 = arith.constant 0 : index
    %c1 = arith.constant 1 : index
    %c0_3 = arith.constant 0 : index
    %2 = vector.load %arg1[%c0_2, %c1, %c0_3] : memref<1x456x64xbf16, #tpu.memory_space<vmem>>, vector<1x384x64xbf16>
    %3 = vector.shape_cast %2 : vector<1x384x64xbf16> to vector<384x64xbf16>
    %c0_4 = arith.constant 0 : index
    %c2 = arith.constant 2 : index
    %c0_5 = arith.constant 0 : index
    %4 = vector.load %arg1[%c0_4, %c2, %c0_5] : memref<1x456x64xbf16, #tpu.memory_space<vmem>>, vector<1x384x64xbf16>
    %5 = vector.shape_cast %4 : vector<1x384x64xbf16> to vector<384x64xbf16>
    %6 = tpu.concatenate %1, %3, %5 in 1 : vector<384x64xbf16>, vector<384x64xbf16>, vector<384x64xbf16> -> vector<384x192xbf16>
    %c0_6 = arith.constant 0 : index
    %c0_7 = arith.constant 0 : index
    %c0_8 = arith.constant 0 : index
    %7 = vector.load %arg2[%c0_6, %c0_7, %c0_8] : memref<3x192x64xbf16, #tpu.memory_space<vmem>>, vector<1x192x64xbf16>
    %8 = vector.shape_cast %7 : vector<1x192x64xbf16> to vector<192x64xbf16>
    %cst = arith.constant dense<0.000000e+00> : vector<384x64xf32>
    %9 = tpu.matmul %6, %8, %cst {dimension_numbers = #tpu.dot_dimension_numbers<[1], [0], [0], [1], [0, 0, 1, 1], [], []>} : vector<384x192xbf16>, vector<192x64xbf16>, vector<384x64xf32> -> vector<384x64xf32>
    %c0_9 = arith.constant 0 : index
    %c24 = arith.constant 24 : index
    %c0_10 = arith.constant 0 : index
    %10 = vector.load %arg1[%c0_9, %c24, %c0_10] : memref<1x456x64xbf16, #tpu.memory_space<vmem>>, vector<1x384x64xbf16>
    %11 = vector.shape_cast %10 : vector<1x384x64xbf16> to vector<384x64xbf16>
    %c0_11 = arith.constant 0 : index
    %c25 = arith.constant 25 : index
    %c0_12 = arith.constant 0 : index
    %12 = vector.load %arg1[%c0_11, %c25, %c0_12] : memref<1x456x64xbf16, #tpu.memory_space<vmem>>, vector<1x384x64xbf16>
    %13 = vector.shape_cast %12 : vector<1x384x64xbf16> to vector<384x64xbf16>
    %c0_13 = arith.constant 0 : index
    %c26 = arith.constant 26 : index
    %c0_14 = arith.constant 0 : index
    %14 = vector.load %arg1[%c0_13, %c26, %c0_14] : memref<1x456x64xbf16, #tpu.memory_space<vmem>>, vector<1x384x64xbf16>
    %15 = vector.shape_cast %14 : vector<1x384x64xbf16> to vector<384x64xbf16>
    %16 = tpu.concatenate %11, %13, %15 in 1 : vector<384x64xbf16>, vector<384x64xbf16>, vector<384x64xbf16> -> vector<384x192xbf16>
    %c1_15 = arith.constant 1 : index
    %c0_16 = arith.constant 0 : index
    %c0_17 = arith.constant 0 : index
    %17 = vector.load %arg2[%c1_15, %c0_16, %c0_17] : memref<3x192x64xbf16, #tpu.memory_space<vmem>>, vector<1x192x64xbf16>
    %18 = vector.shape_cast %17 : vector<1x192x64xbf16> to vector<192x64xbf16>
    %cst_18 = arith.constant dense<0.000000e+00> : vector<384x64xf32>
    %19 = tpu.matmul %16, %18, %cst_18 {dimension_numbers = #tpu.dot_dimension_numbers<[1], [0], [0], [1], [0, 0, 1, 1], [], []>} : vector<384x192xbf16>, vector<192x64xbf16>, vector<384x64xf32> -> vector<384x64xf32>
    %20 = arith.addf %9, %19 : vector<384x64xf32>
    %c0_19 = arith.constant 0 : index
    %c48 = arith.constant 48 : index
    %c0_20 = arith.constant 0 : index
    %21 = vector.load %arg1[%c0_19, %c48, %c0_20] : memref<1x456x64xbf16, #tpu.memory_space<vmem>>, vector<1x384x64xbf16>
    %22 = vector.shape_cast %21 : vector<1x384x64xbf16> to vector<384x64xbf16>
    %c0_21 = arith.constant 0 : index
    %c49 = arith.constant 49 : index
    %c0_22 = arith.constant 0 : index
    %23 = vector.load %arg1[%c0_21, %c49, %c0_22] : memref<1x456x64xbf16, #tpu.memory_space<vmem>>, vector<1x384x64xbf16>
    %24 = vector.shape_cast %23 : vector<1x384x64xbf16> to vector<384x64xbf16>
    %c0_23 = arith.constant 0 : index
    %c50 = arith.constant 50 : index
    %c0_24 = arith.constant 0 : index
    %25 = vector.load %arg1[%c0_23, %c50, %c0_24] : memref<1x456x64xbf16, #tpu.memory_space<vmem>>, vector<1x384x64xbf16>
    %26 = vector.shape_cast %25 : vector<1x384x64xbf16> to vector<384x64xbf16>
    %27 = tpu.concatenate %22, %24, %26 in 1 : vector<384x64xbf16>, vector<384x64xbf16>, vector<384x64xbf16> -> vector<384x192xbf16>
    %c2_25 = arith.constant 2 : index
    %c0_26 = arith.constant 0 : index
    %c0_27 = arith.constant 0 : index
    %28 = vector.load %arg2[%c2_25, %c0_26, %c0_27] : memref<3x192x64xbf16, #tpu.memory_space<vmem>>, vector<1x192x64xbf16>
    %29 = vector.shape_cast %28 : vector<1x192x64xbf16> to vector<192x64xbf16>
    %cst_28 = arith.constant dense<0.000000e+00> : vector<384x64xf32>
    %30 = tpu.matmul %27, %29, %cst_28 {dimension_numbers = #tpu.dot_dimension_numbers<[1], [0], [0], [1], [0, 0, 1, 1], [], []>} : vector<384x192xbf16>, vector<192x64xbf16>, vector<384x64xf32> -> vector<384x64xf32>
    %31 = arith.addf %20, %30 : vector<384x64xf32>
    %c0_29 = arith.constant 0 : index
    %c0_30 = arith.constant 0 : index
    %32 = vector.load %arg3[%c0_29, %c0_30] : memref<1x64xf32, #tpu.memory_space<vmem>>, vector<1x64xf32>
    %33 = vector.broadcast %32 : vector<1x64xf32> to vector<384x64xf32>
    %34 = arith.addf %31, %33 : vector<384x64xf32>
    %cst_31 = arith.constant 0.000000e+00 : f32
    %35 = vector.broadcast %cst_31 : f32 to vector<384x64xf32>
    %36 = arith.maximumf %34, %35 : vector<384x64xf32>
    %37 = vector.shape_cast %36 : vector<384x64xf32> to vector<16x24x64xf32>
    %38 = vector.extract_strided_slice %37 {offsets = [0, 0, 0], sizes = [16, 16, 64], strides = [1, 1, 1]} : vector<16x24x64xf32> to vector<16x16x64xf32>
    %39 = vector.shape_cast %38 : vector<16x16x64xf32> to vector<16x8x2x64xf32>
    %cst_32 = arith.constant dense<0xFF800000> : vector<16x8x64xf32>
    %40 = vector.multi_reduction <maximumf>, %39, %cst_32 [2] : vector<16x8x2x64xf32> to vector<16x8x64xf32>
    %41 = vector.shape_cast %40 : vector<16x8x64xf32> to vector<8x2x8x64xf32>
    %cst_33 = arith.constant dense<0xFF800000> : vector<8x8x64xf32>
    %42 = vector.multi_reduction <maximumf>, %41, %cst_33 [1] : vector<8x2x8x64xf32> to vector<8x8x64xf32>
    %43 = arith.truncf %42 : vector<8x8x64xf32> to vector<8x8x64xbf16>
    %cst_34 = arith.constant 0.000000e+00 : bf16
    %44 = vector.broadcast %cst_34 : bf16 to vector<11x16x64xbf16>
    %c0_35 = arith.constant 0 : index
    %c0_36 = arith.constant 0 : index
    %c0_37 = arith.constant 0 : index
    %c0_38 = arith.constant 0 : index
    %45 = vector.load %arg4[%c0_35, %c0_36, %c0_37, %c0_38] : memref<1x11x16x64xbf16, #tpu.memory_space<vmem>>, vector<1x11x16x64xbf16>
    %46 = vector.shape_cast %45 : vector<1x11x16x64xbf16> to vector<11x16x64xbf16>
    %47 = vector.shape_cast %44 : vector<11x16x64xbf16> to vector<1x11x16x64xbf16>
    tpu.vector_store %arg4[%c0_35, %c0_36, %c0_37, %c0_38], %47 {strides = array<i32>} : memref<1x11x16x64xbf16, #tpu.memory_space<vmem>>, vector<1x11x16x64xbf16>,
    %c0_39 = arith.constant 0 : index
    %c1_40 = arith.constant 1 : index
    %c1_41 = arith.constant 1 : index
    %c0_42 = arith.constant 0 : index
    %48 = vector.load %arg4[%c0_39, %c1_40, %c1_41, %c0_42] : memref<1x11x16x64xbf16, #tpu.memory_space<vmem>>, vector<1x8x8x64xbf16>
    %49 = vector.shape_cast %48 : vector<1x8x8x64xbf16> to vector<8x8x64xbf16>
    %50 = vector.shape_cast %43 : vector<8x8x64xbf16> to vector<1x8x8x64xbf16>
    tpu.vector_store %arg4[%c0_39, %c1_40, %c1_41, %c0_42], %50 {strides = array<i32>} : memref<1x11x16x64xbf16, #tpu.memory_space<vmem>>, vector<1x8x8x64xbf16>,
    return
  }
  func.func @transform_0(%arg0: i32) -> (i32, i32, i32) {
    %c0_i32 = arith.constant 0 : i32
    %c0_i32_0 = arith.constant 0 : i32
    %c0_i32_1 = arith.constant 0 : i32
    return %arg0, %c0_i32, %c0_i32_0 : i32, i32, i32
  }
  func.func @transform_1(%arg0: i32) -> (i32, i32, i32) {
    %c0_i32 = arith.constant 0 : i32
    %c0_i32_0 = arith.constant 0 : i32
    %c0_i32_1 = arith.constant 0 : i32
    %c0_i32_2 = arith.constant 0 : i32
    return %c0_i32, %c0_i32_0, %c0_i32_1 : i32, i32, i32
  }
  func.func @transform_2(%arg0: i32) -> (i32, i32) {
    %c0_i32 = arith.constant 0 : i32
    %c0_i32_0 = arith.constant 0 : i32
    %c0_i32_1 = arith.constant 0 : i32
    return %c0_i32, %c0_i32_0 : i32, i32
  }
  func.func @transform_3(%arg0: i32) -> (i32, i32, i32, i32) {
    %c0_i32 = arith.constant 0 : i32
    %c0_i32_0 = arith.constant 0 : i32
    %c0_i32_1 = arith.constant 0 : i32
    %c0_i32_2 = arith.constant 0 : i32
    return %arg0, %c0_i32, %c0_i32_0, %c0_i32_1 : i32, i32, i32, i32
  }
}

module attributes {stable_mosaic.version = 11 : i64} {
  func.func @_conv3x3_kernel(%arg0: i32, %arg1: memref<1x176x64xbf16, #tpu.memory_space<vmem>>, %arg2: memref<3x192x128xbf16, #tpu.memory_space<vmem>>, %arg3: memref<1x128xf32, #tpu.memory_space<vmem>>, %arg4: memref<1x11x16x128xbf16, #tpu.memory_space<vmem>>) attributes {dimension_semantics = [#tpu.dimension_semantics<parallel>], iteration_bounds = array<i64: 2>, scalar_prefetch = 0 : i64, scratch_operands = 0 : i64, tpu.core_type = #tpu.core_type<tc>, window_params = [{transform_indices = @transform_0, window_bounds = array<i64: 1, 176, 64>}, {pipeline_mode = #tpu.pipeline_mode<synchronous>, transform_indices = @transform_1, window_bounds = array<i64: 3, 192, 128>}, {pipeline_mode = #tpu.pipeline_mode<synchronous>, transform_indices = @transform_2, window_bounds = array<i64: 1, 128>}, {transform_indices = @transform_3, window_bounds = array<i64: 1, 11, 16, 128>}]} {
    %c0 = arith.constant 0 : index
    %c0_0 = arith.constant 0 : index
    %c0_1 = arith.constant 0 : index
    %0 = vector.load %arg1[%c0, %c0_0, %c0_1] : memref<1x176x64xbf16, #tpu.memory_space<vmem>>, vector<1x128x64xbf16>
    %1 = vector.shape_cast %0 : vector<1x128x64xbf16> to vector<128x64xbf16>
    %c0_2 = arith.constant 0 : index
    %c1 = arith.constant 1 : index
    %c0_3 = arith.constant 0 : index
    %2 = vector.load %arg1[%c0_2, %c1, %c0_3] : memref<1x176x64xbf16, #tpu.memory_space<vmem>>, vector<1x128x64xbf16>
    %3 = vector.shape_cast %2 : vector<1x128x64xbf16> to vector<128x64xbf16>
    %c0_4 = arith.constant 0 : index
    %c2 = arith.constant 2 : index
    %c0_5 = arith.constant 0 : index
    %4 = vector.load %arg1[%c0_4, %c2, %c0_5] : memref<1x176x64xbf16, #tpu.memory_space<vmem>>, vector<1x128x64xbf16>
    %5 = vector.shape_cast %4 : vector<1x128x64xbf16> to vector<128x64xbf16>
    %6 = tpu.concatenate %1, %3, %5 in 1 : vector<128x64xbf16>, vector<128x64xbf16>, vector<128x64xbf16> -> vector<128x192xbf16>
    %c0_6 = arith.constant 0 : index
    %c0_7 = arith.constant 0 : index
    %c0_8 = arith.constant 0 : index
    %7 = vector.load %arg2[%c0_6, %c0_7, %c0_8] : memref<3x192x128xbf16, #tpu.memory_space<vmem>>, vector<1x192x128xbf16>
    %8 = vector.shape_cast %7 : vector<1x192x128xbf16> to vector<192x128xbf16>
    %cst = arith.constant dense<0.000000e+00> : vector<128x128xf32>
    %9 = tpu.matmul %6, %8, %cst {dimension_numbers = #tpu.dot_dimension_numbers<[1], [0], [0], [1], [0, 0, 1, 1], [], []>} : vector<128x192xbf16>, vector<192x128xbf16>, vector<128x128xf32> -> vector<128x128xf32>
    %c0_9 = arith.constant 0 : index
    %c16 = arith.constant 16 : index
    %c0_10 = arith.constant 0 : index
    %10 = vector.load %arg1[%c0_9, %c16, %c0_10] : memref<1x176x64xbf16, #tpu.memory_space<vmem>>, vector<1x128x64xbf16>
    %11 = vector.shape_cast %10 : vector<1x128x64xbf16> to vector<128x64xbf16>
    %c0_11 = arith.constant 0 : index
    %c17 = arith.constant 17 : index
    %c0_12 = arith.constant 0 : index
    %12 = vector.load %arg1[%c0_11, %c17, %c0_12] : memref<1x176x64xbf16, #tpu.memory_space<vmem>>, vector<1x128x64xbf16>
    %13 = vector.shape_cast %12 : vector<1x128x64xbf16> to vector<128x64xbf16>
    %c0_13 = arith.constant 0 : index
    %c18 = arith.constant 18 : index
    %c0_14 = arith.constant 0 : index
    %14 = vector.load %arg1[%c0_13, %c18, %c0_14] : memref<1x176x64xbf16, #tpu.memory_space<vmem>>, vector<1x128x64xbf16>
    %15 = vector.shape_cast %14 : vector<1x128x64xbf16> to vector<128x64xbf16>
    %16 = tpu.concatenate %11, %13, %15 in 1 : vector<128x64xbf16>, vector<128x64xbf16>, vector<128x64xbf16> -> vector<128x192xbf16>
    %c1_15 = arith.constant 1 : index
    %c0_16 = arith.constant 0 : index
    %c0_17 = arith.constant 0 : index
    %17 = vector.load %arg2[%c1_15, %c0_16, %c0_17] : memref<3x192x128xbf16, #tpu.memory_space<vmem>>, vector<1x192x128xbf16>
    %18 = vector.shape_cast %17 : vector<1x192x128xbf16> to vector<192x128xbf16>
    %cst_18 = arith.constant dense<0.000000e+00> : vector<128x128xf32>
    %19 = tpu.matmul %16, %18, %cst_18 {dimension_numbers = #tpu.dot_dimension_numbers<[1], [0], [0], [1], [0, 0, 1, 1], [], []>} : vector<128x192xbf16>, vector<192x128xbf16>, vector<128x128xf32> -> vector<128x128xf32>
    %20 = arith.addf %9, %19 : vector<128x128xf32>
    %c0_19 = arith.constant 0 : index
    %c32 = arith.constant 32 : index
    %c0_20 = arith.constant 0 : index
    %21 = vector.load %arg1[%c0_19, %c32, %c0_20] : memref<1x176x64xbf16, #tpu.memory_space<vmem>>, vector<1x128x64xbf16>
    %22 = vector.shape_cast %21 : vector<1x128x64xbf16> to vector<128x64xbf16>
    %c0_21 = arith.constant 0 : index
    %c33 = arith.constant 33 : index
    %c0_22 = arith.constant 0 : index
    %23 = vector.load %arg1[%c0_21, %c33, %c0_22] : memref<1x176x64xbf16, #tpu.memory_space<vmem>>, vector<1x128x64xbf16>
    %24 = vector.shape_cast %23 : vector<1x128x64xbf16> to vector<128x64xbf16>
    %c0_23 = arith.constant 0 : index
    %c34 = arith.constant 34 : index
    %c0_24 = arith.constant 0 : index
    %25 = vector.load %arg1[%c0_23, %c34, %c0_24] : memref<1x176x64xbf16, #tpu.memory_space<vmem>>, vector<1x128x64xbf16>
    %26 = vector.shape_cast %25 : vector<1x128x64xbf16> to vector<128x64xbf16>
    %27 = tpu.concatenate %22, %24, %26 in 1 : vector<128x64xbf16>, vector<128x64xbf16>, vector<128x64xbf16> -> vector<128x192xbf16>
    %c2_25 = arith.constant 2 : index
    %c0_26 = arith.constant 0 : index
    %c0_27 = arith.constant 0 : index
    %28 = vector.load %arg2[%c2_25, %c0_26, %c0_27] : memref<3x192x128xbf16, #tpu.memory_space<vmem>>, vector<1x192x128xbf16>
    %29 = vector.shape_cast %28 : vector<1x192x128xbf16> to vector<192x128xbf16>
    %cst_28 = arith.constant dense<0.000000e+00> : vector<128x128xf32>
    %30 = tpu.matmul %27, %29, %cst_28 {dimension_numbers = #tpu.dot_dimension_numbers<[1], [0], [0], [1], [0, 0, 1, 1], [], []>} : vector<128x192xbf16>, vector<192x128xbf16>, vector<128x128xf32> -> vector<128x128xf32>
    %31 = arith.addf %20, %30 : vector<128x128xf32>
    %c0_29 = arith.constant 0 : index
    %c0_30 = arith.constant 0 : index
    %32 = vector.load %arg3[%c0_29, %c0_30] : memref<1x128xf32, #tpu.memory_space<vmem>>, vector<1x128xf32>
    %33 = vector.broadcast %32 : vector<1x128xf32> to vector<128x128xf32>
    %34 = arith.addf %31, %33 : vector<128x128xf32>
    %cst_31 = arith.constant 0.000000e+00 : f32
    %35 = vector.broadcast %cst_31 : f32 to vector<128x128xf32>
    %36 = arith.maximumf %34, %35 : vector<128x128xf32>
    %37 = vector.shape_cast %36 : vector<128x128xf32> to vector<8x16x128xf32>
    %38 = vector.extract_strided_slice %37 {offsets = [0, 0, 0], sizes = [8, 8, 128], strides = [1, 1, 1]} : vector<8x16x128xf32> to vector<8x8x128xf32>
    %39 = arith.truncf %38 : vector<8x8x128xf32> to vector<8x8x128xbf16>
    %cst_32 = arith.constant 0.000000e+00 : bf16
    %40 = vector.broadcast %cst_32 : bf16 to vector<11x16x128xbf16>
    %c0_33 = arith.constant 0 : index
    %c0_34 = arith.constant 0 : index
    %c0_35 = arith.constant 0 : index
    %c0_36 = arith.constant 0 : index
    %41 = vector.load %arg4[%c0_33, %c0_34, %c0_35, %c0_36] : memref<1x11x16x128xbf16, #tpu.memory_space<vmem>>, vector<1x11x16x128xbf16>
    %42 = vector.shape_cast %41 : vector<1x11x16x128xbf16> to vector<11x16x128xbf16>
    %43 = vector.shape_cast %40 : vector<11x16x128xbf16> to vector<1x11x16x128xbf16>
    tpu.vector_store %arg4[%c0_33, %c0_34, %c0_35, %c0_36], %43 {strides = array<i32>} : memref<1x11x16x128xbf16, #tpu.memory_space<vmem>>, vector<1x11x16x128xbf16>,
    %c0_37 = arith.constant 0 : index
    %c1_38 = arith.constant 1 : index
    %c1_39 = arith.constant 1 : index
    %c0_40 = arith.constant 0 : index
    %44 = vector.load %arg4[%c0_37, %c1_38, %c1_39, %c0_40] : memref<1x11x16x128xbf16, #tpu.memory_space<vmem>>, vector<1x8x8x128xbf16>
    %45 = vector.shape_cast %44 : vector<1x8x8x128xbf16> to vector<8x8x128xbf16>
    %46 = vector.shape_cast %39 : vector<8x8x128xbf16> to vector<1x8x8x128xbf16>
    tpu.vector_store %arg4[%c0_37, %c1_38, %c1_39, %c0_40], %46 {strides = array<i32>} : memref<1x11x16x128xbf16, #tpu.memory_space<vmem>>, vector<1x8x8x128xbf16>,
    return
  }
  func.func @transform_0(%arg0: i32) -> (i32, i32, i32) {
    %c0_i32 = arith.constant 0 : i32
    %c0_i32_0 = arith.constant 0 : i32
    %c0_i32_1 = arith.constant 0 : i32
    return %arg0, %c0_i32, %c0_i32_0 : i32, i32, i32
  }
  func.func @transform_1(%arg0: i32) -> (i32, i32, i32) {
    %c0_i32 = arith.constant 0 : i32
    %c0_i32_0 = arith.constant 0 : i32
    %c0_i32_1 = arith.constant 0 : i32
    %c0_i32_2 = arith.constant 0 : i32
    return %c0_i32, %c0_i32_0, %c0_i32_1 : i32, i32, i32
  }
  func.func @transform_2(%arg0: i32) -> (i32, i32) {
    %c0_i32 = arith.constant 0 : i32
    %c0_i32_0 = arith.constant 0 : i32
    %c0_i32_1 = arith.constant 0 : i32
    return %c0_i32, %c0_i32_0 : i32, i32
  }
  func.func @transform_3(%arg0: i32) -> (i32, i32, i32, i32) {
    %c0_i32 = arith.constant 0 : i32
    %c0_i32_0 = arith.constant 0 : i32
    %c0_i32_1 = arith.constant 0 : i32
    %c0_i32_2 = arith.constant 0 : i32
    return %arg0, %c0_i32, %c0_i32_0, %c0_i32_1 : i32, i32, i32, i32
  }
}

module attributes {stable_mosaic.version = 11 : i64} {
  func.func @_conv3x3_kernel(%arg0: i32, %arg1: memref<1x176x128xbf16, #tpu.memory_space<vmem>>, %arg2: memref<3x384x128xbf16, #tpu.memory_space<vmem>>, %arg3: memref<1x128xf32, #tpu.memory_space<vmem>>, %arg4: memref<1x8x8x128xf32, #tpu.memory_space<vmem>>) attributes {dimension_semantics = [#tpu.dimension_semantics<parallel>], iteration_bounds = array<i64: 2>, scalar_prefetch = 0 : i64, scratch_operands = 0 : i64, tpu.core_type = #tpu.core_type<tc>, window_params = [{transform_indices = @transform_0, window_bounds = array<i64: 1, 176, 128>}, {pipeline_mode = #tpu.pipeline_mode<synchronous>, transform_indices = @transform_1, window_bounds = array<i64: 3, 384, 128>}, {pipeline_mode = #tpu.pipeline_mode<synchronous>, transform_indices = @transform_2, window_bounds = array<i64: 1, 128>}, {transform_indices = @transform_3, window_bounds = array<i64: 1, 8, 8, 128>}]} {
    %c0 = arith.constant 0 : index
    %c0_0 = arith.constant 0 : index
    %c0_1 = arith.constant 0 : index
    %0 = vector.load %arg1[%c0, %c0_0, %c0_1] : memref<1x176x128xbf16, #tpu.memory_space<vmem>>, vector<1x128x128xbf16>
    %1 = vector.shape_cast %0 : vector<1x128x128xbf16> to vector<128x128xbf16>
    %c0_2 = arith.constant 0 : index
    %c1 = arith.constant 1 : index
    %c0_3 = arith.constant 0 : index
    %2 = vector.load %arg1[%c0_2, %c1, %c0_3] : memref<1x176x128xbf16, #tpu.memory_space<vmem>>, vector<1x128x128xbf16>
    %3 = vector.shape_cast %2 : vector<1x128x128xbf16> to vector<128x128xbf16>
    %c0_4 = arith.constant 0 : index
    %c2 = arith.constant 2 : index
    %c0_5 = arith.constant 0 : index
    %4 = vector.load %arg1[%c0_4, %c2, %c0_5] : memref<1x176x128xbf16, #tpu.memory_space<vmem>>, vector<1x128x128xbf16>
    %5 = vector.shape_cast %4 : vector<1x128x128xbf16> to vector<128x128xbf16>
    %6 = tpu.concatenate %1, %3, %5 in 1 : vector<128x128xbf16>, vector<128x128xbf16>, vector<128x128xbf16> -> vector<128x384xbf16>
    %c0_6 = arith.constant 0 : index
    %c0_7 = arith.constant 0 : index
    %c0_8 = arith.constant 0 : index
    %7 = vector.load %arg2[%c0_6, %c0_7, %c0_8] : memref<3x384x128xbf16, #tpu.memory_space<vmem>>, vector<1x384x128xbf16>
    %8 = vector.shape_cast %7 : vector<1x384x128xbf16> to vector<384x128xbf16>
    %cst = arith.constant dense<0.000000e+00> : vector<128x128xf32>
    %9 = tpu.matmul %6, %8, %cst {dimension_numbers = #tpu.dot_dimension_numbers<[1], [0], [0], [1], [0, 0, 1, 1], [], []>} : vector<128x384xbf16>, vector<384x128xbf16>, vector<128x128xf32> -> vector<128x128xf32>
    %c0_9 = arith.constant 0 : index
    %c16 = arith.constant 16 : index
    %c0_10 = arith.constant 0 : index
    %10 = vector.load %arg1[%c0_9, %c16, %c0_10] : memref<1x176x128xbf16, #tpu.memory_space<vmem>>, vector<1x128x128xbf16>
    %11 = vector.shape_cast %10 : vector<1x128x128xbf16> to vector<128x128xbf16>
    %c0_11 = arith.constant 0 : index
    %c17 = arith.constant 17 : index
    %c0_12 = arith.constant 0 : index
    %12 = vector.load %arg1[%c0_11, %c17, %c0_12] : memref<1x176x128xbf16, #tpu.memory_space<vmem>>, vector<1x128x128xbf16>
    %13 = vector.shape_cast %12 : vector<1x128x128xbf16> to vector<128x128xbf16>
    %c0_13 = arith.constant 0 : index
    %c18 = arith.constant 18 : index
    %c0_14 = arith.constant 0 : index
    %14 = vector.load %arg1[%c0_13, %c18, %c0_14] : memref<1x176x128xbf16, #tpu.memory_space<vmem>>, vector<1x128x128xbf16>
    %15 = vector.shape_cast %14 : vector<1x128x128xbf16> to vector<128x128xbf16>
    %16 = tpu.concatenate %11, %13, %15 in 1 : vector<128x128xbf16>, vector<128x128xbf16>, vector<128x128xbf16> -> vector<128x384xbf16>
    %c1_15 = arith.constant 1 : index
    %c0_16 = arith.constant 0 : index
    %c0_17 = arith.constant 0 : index
    %17 = vector.load %arg2[%c1_15, %c0_16, %c0_17] : memref<3x384x128xbf16, #tpu.memory_space<vmem>>, vector<1x384x128xbf16>
    %18 = vector.shape_cast %17 : vector<1x384x128xbf16> to vector<384x128xbf16>
    %cst_18 = arith.constant dense<0.000000e+00> : vector<128x128xf32>
    %19 = tpu.matmul %16, %18, %cst_18 {dimension_numbers = #tpu.dot_dimension_numbers<[1], [0], [0], [1], [0, 0, 1, 1], [], []>} : vector<128x384xbf16>, vector<384x128xbf16>, vector<128x128xf32> -> vector<128x128xf32>
    %20 = arith.addf %9, %19 : vector<128x128xf32>
    %c0_19 = arith.constant 0 : index
    %c32 = arith.constant 32 : index
    %c0_20 = arith.constant 0 : index
    %21 = vector.load %arg1[%c0_19, %c32, %c0_20] : memref<1x176x128xbf16, #tpu.memory_space<vmem>>, vector<1x128x128xbf16>
    %22 = vector.shape_cast %21 : vector<1x128x128xbf16> to vector<128x128xbf16>
    %c0_21 = arith.constant 0 : index
    %c33 = arith.constant 33 : index
    %c0_22 = arith.constant 0 : index
    %23 = vector.load %arg1[%c0_21, %c33, %c0_22] : memref<1x176x128xbf16, #tpu.memory_space<vmem>>, vector<1x128x128xbf16>
    %24 = vector.shape_cast %23 : vector<1x128x128xbf16> to vector<128x128xbf16>
    %c0_23 = arith.constant 0 : index
    %c34 = arith.constant 34 : index
    %c0_24 = arith.constant 0 : index
    %25 = vector.load %arg1[%c0_23, %c34, %c0_24] : memref<1x176x128xbf16, #tpu.memory_space<vmem>>, vector<1x128x128xbf16>
    %26 = vector.shape_cast %25 : vector<1x128x128xbf16> to vector<128x128xbf16>
    %27 = tpu.concatenate %22, %24, %26 in 1 : vector<128x128xbf16>, vector<128x128xbf16>, vector<128x128xbf16> -> vector<128x384xbf16>
    %c2_25 = arith.constant 2 : index
    %c0_26 = arith.constant 0 : index
    %c0_27 = arith.constant 0 : index
    %28 = vector.load %arg2[%c2_25, %c0_26, %c0_27] : memref<3x384x128xbf16, #tpu.memory_space<vmem>>, vector<1x384x128xbf16>
    %29 = vector.shape_cast %28 : vector<1x384x128xbf16> to vector<384x128xbf16>
    %cst_28 = arith.constant dense<0.000000e+00> : vector<128x128xf32>
    %30 = tpu.matmul %27, %29, %cst_28 {dimension_numbers = #tpu.dot_dimension_numbers<[1], [0], [0], [1], [0, 0, 1, 1], [], []>} : vector<128x384xbf16>, vector<384x128xbf16>, vector<128x128xf32> -> vector<128x128xf32>
    %31 = arith.addf %20, %30 : vector<128x128xf32>
    %c0_29 = arith.constant 0 : index
    %c0_30 = arith.constant 0 : index
    %32 = vector.load %arg3[%c0_29, %c0_30] : memref<1x128xf32, #tpu.memory_space<vmem>>, vector<1x128xf32>
    %33 = vector.broadcast %32 : vector<1x128xf32> to vector<128x128xf32>
    %34 = arith.addf %31, %33 : vector<128x128xf32>
    %cst_31 = arith.constant 0.000000e+00 : f32
    %35 = vector.broadcast %cst_31 : f32 to vector<128x128xf32>
    %36 = arith.maximumf %34, %35 : vector<128x128xf32>
    %37 = vector.shape_cast %36 : vector<128x128xf32> to vector<8x16x128xf32>
    %38 = vector.extract_strided_slice %37 {offsets = [0, 0, 0], sizes = [8, 8, 128], strides = [1, 1, 1]} : vector<8x16x128xf32> to vector<8x8x128xf32>
    %c0_32 = arith.constant 0 : index
    %c0_33 = arith.constant 0 : index
    %c0_34 = arith.constant 0 : index
    %c0_35 = arith.constant 0 : index
    %39 = vector.load %arg4[%c0_32, %c0_33, %c0_34, %c0_35] : memref<1x8x8x128xf32, #tpu.memory_space<vmem>>, vector<1x8x8x128xf32>
    %40 = vector.shape_cast %39 : vector<1x8x8x128xf32> to vector<8x8x128xf32>
    %41 = vector.shape_cast %38 : vector<8x8x128xf32> to vector<1x8x8x128xf32>
    tpu.vector_store %arg4[%c0_32, %c0_33, %c0_34, %c0_35], %41 {strides = array<i32>} : memref<1x8x8x128xf32, #tpu.memory_space<vmem>>, vector<1x8x8x128xf32>,
    return
  }
  func.func @transform_0(%arg0: i32) -> (i32, i32, i32) {
    %c0_i32 = arith.constant 0 : i32
    %c0_i32_0 = arith.constant 0 : i32
    %c0_i32_1 = arith.constant 0 : i32
    return %arg0, %c0_i32, %c0_i32_0 : i32, i32, i32
  }
  func.func @transform_1(%arg0: i32) -> (i32, i32, i32) {
    %c0_i32 = arith.constant 0 : i32
    %c0_i32_0 = arith.constant 0 : i32
    %c0_i32_1 = arith.constant 0 : i32
    %c0_i32_2 = arith.constant 0 : i32
    return %c0_i32, %c0_i32_0, %c0_i32_1 : i32, i32, i32
  }
  func.func @transform_2(%arg0: i32) -> (i32, i32) {
    %c0_i32 = arith.constant 0 : i32
    %c0_i32_0 = arith.constant 0 : i32
    %c0_i32_1 = arith.constant 0 : i32
    return %c0_i32, %c0_i32_0 : i32, i32
  }
  func.func @transform_3(%arg0: i32) -> (i32, i32, i32, i32) {
    %c0_i32 = arith.constant 0 : i32
    %c0_i32_0 = arith.constant 0 : i32
    %c0_i32_1 = arith.constant 0 : i32
    %c0_i32_2 = arith.constant 0 : i32
    return %arg0, %c0_i32, %c0_i32_0, %c0_i32_1 : i32, i32, i32, i32
  }
}

</mosaic_0001>

<llo_original>
// kernel: netf_forward.6
$region0: #{netf_forward.6}
  #allocation0 [shape = 'u32[]', space=smem, size = 0x4, offset = 0x4, fixed_abs, tag = 'smem constant byte address 0x4 - core index']
  #allocation1 [shape = 'u32[144,128]{1,0:T(1,128)}', space=vmem, size = 0x12000, scoped, tag = 'internal scratch']
  %s0 = inlined_call_operand.vmem [shape: bf16[2,176,64], index: 0, kind: input, shape index: {}]
  %s1 = inlined_call_operand.vmem [shape: bf16[3,192,128], index: 1, kind: input, shape index: {}]
  %s2 = inlined_call_operand.vmem [shape: f32[1,128], index: 2, kind: input, shape index: {}]
  %s3 = inlined_call_operand.vmem [shape: bf16[2,11,16,128], index: 3, kind: output, shape index: {}]
  %s4 = sld [smem:[#allocation0]]
  $region45: #{netf_forward.6} parent=0
    _
  %s6 = ssub.s32 1, %s4
  %s7 = scalar_select 0, %s6, %s4
  loop: start=0, step=1, limit=4
  $region2: #{netf_forward.6} parent=0 // loop_pre_header
    _
  $region3: #{netf_forward.6} parent=0 // loop_header
    %s9 = sphi 0, %s13
    %p10 = scmp.ge.s32.totalorder %s9, 4
    %s19 = sphi 0, %s21
    %s22 = sphi 0, %s19
    %s23 = sphi 0, %s22
    %s39 = sphi 0, %s23
    %s43 = sphi 0, %s43
    %s45 = sphi 0, %s43
    %s46 = sphi 0, %s45
    %s60 = sphi 0, %s46
    %s64 = sphi 0, %s64
    %s66 = sphi 0, %s64
    %s67 = sphi 0, %s66
    %s81 = sphi 0, %s67
    %s87 = sphi 0, %s89
    %s90 = sphi 0, %s87
    %s91 = sphi 0, %s90
    %s107 = sphi 0, %s91
  $region4: #{netf_forward.6} parent=0 // loop_header_branch
    %12 = sbr.rel (%p10) target = $region8
  $region5: #{netf_forward.6} parent=0 // loop_body
    %s14 = ssub.s32 %s9, 1
    %s15 = ssub.s32 %s9, 2
    %s16 = sadd.s32 %s9, 1
    %s17 = ssub.s32 %s9, %s16
    %p18 = scmp.eq.s32.totalorder %s17, 0
    %s20 = sadd.s32 %s19, 1
    %s21 = scalar_select %p18, %s19, %s20
    %p24 = pneg %p18
    %p25 = scmp.eq.s32.totalorder %s9, 1
    %p26 = por %p24, %p25
    %p27 = scmp.ne.s32.totalorder %s19, %s22
    %p28 = scmp.eq.s32.totalorder %s9, 0
    %p29 = por %p27, %p28
    %p30 = scmp.ne.s32.totalorder %s19, %s22
    %p31 = scmp.eq.s32.totalorder %s14, 1
    %p32 = por %p30, %p31
    %p33 = scmp.ne.s32.totalorder %s22, %s23
    %p34 = scmp.eq.s32.totalorder %s14, 0
    %p35 = por %p33, %p34
    %p36 = scmp.ne.s32.totalorder %s22, %s23
    %p37 = scmp.eq.s32.totalorder %s15, 1
    %p38 = por %p36, %p37
    %p40 = scmp.ne.s32.totalorder %s23, %s39
    %p41 = scmp.eq.s32.totalorder %s15, 0
    %p42 = por %p40, %p41
    %s44 = sadd.s32 %s43, 1
    %p47 = scmp.eq.s32.totalorder %s9, 1
    %p48 = scmp.ne.s32.totalorder %s43, %s45
    %p49 = scmp.eq.s32.totalorder %s9, 0
    %p50 = por %p48, %p49
    %p51 = scmp.ne.s32.totalorder %s43, %s45
    %p52 = scmp.eq.s32.totalorder %s14, 1
    %p53 = por %p51, %p52
    %p54 = scmp.ne.s32.totalorder %s45, %s46
    %p55 = scmp.eq.s32.totalorder %s14, 0
    %p56 = por %p54, %p55
    %p57 = scmp.ne.s32.totalorder %s45, %s46
    %p58 = scmp.eq.s32.totalorder %s15, 1
    %p59 = por %p57, %p58
    %p61 = scmp.ne.s32.totalorder %s46, %s60
    %p62 = scmp.eq.s32.totalorder %s15, 0
    %p63 = por %p61, %p62
    %s65 = sadd.s32 %s64, 1
    %p68 = scmp.eq.s32.totalorder %s9, 1
    %p69 = scmp.ne.s32.totalorder %s64, %s66
    %p70 = scmp.eq.s32.totalorder %s9, 0
    %p71 = por %p69, %p70
    %p72 = scmp.ne.s32.totalorder %s64, %s66
    %p73 = scmp.eq.s32.totalorder %s14, 1
    %p74 = por %p72, %p73
    %p75 = scmp.ne.s32.totalorder %s66, %s67
    %p76 = scmp.eq.s32.totalorder %s14, 0
    %p77 = por %p75, %p76
    %p78 = scmp.ne.s32.totalorder %s66, %s67
    %p79 = scmp.eq.s32.totalorder %s15, 1
    %p80 = por %p78, %p79
    %p82 = scmp.ne.s32.totalorder %s67, %s81
    %p83 = scmp.eq.s32.totalorder %s15, 0
    %p84 = por %p82, %p83
    %s85 = ssub.s32 %s9, %s16
    %p86 = scmp.eq.s32.totalorder %s85, 0
    %s88 = sadd.s32 %s87, 1
    %s89 = scalar_select %p86, %s87, %s88
    %p92 = pneg %p86
    %p93 = scmp.eq.s32.totalorder %s9, 1
    %p94 = por %p92, %p93
    %p95 = scmp.ne.s32.totalorder %s87, %s90
    %p96 = scmp.eq.s32.totalorder %s9, 0
    %p97 = por %p95, %p96
    %p98 = scmp.ne.s32.totalorder %s87, %s90
    %p99 = scmp.eq.s32.totalorder %s14, 1
    %p100 = por %p98, %p99
    %p101 = scmp.ne.s32.totalorder %s90, %s91
    %p102 = scmp.eq.s32.totalorder %s14, 0
    %p103 = por %p101, %p102
    %p104 = scmp.ne.s32.totalorder %s90, %s91
    %p105 = scmp.eq.s32.totalorder %s15, 1
    %p106 = por %p104, %p105
    %p108 = scmp.ne.s32.totalorder %s91, %s107
    %p109 = scmp.eq.s32.totalorder %s15, 0
    %p110 = por %p108, %p109
    %p111 = scmp.le.s32.totalorder 1, %s9
    %p112 = scmp.lt.s32.totalorder %s9, 3
    %p113 = pnand %p111, %p112
    %p114 = pneg %p113
    // Predicated region
    $region9: #{netf_forward.6} parent=5 // pred_check
      _
    $region10: #{netf_forward.6} parent=5 // pred_check_branch
      %116 = sbr.rel (%p113) target = $region12
    $region11: #{netf_forward.6} parent=5 // pred_region
      %s117 = ssub.s32 %s9, 1
      // Predicated region
      $region13: #{netf_forward.6} parent=11 // pred_check
        %p118 = pneg %p56
      $region14: #{netf_forward.6} parent=11 // pred_check_branch
        %120 = sbr.rel (%p118) target = $region16
      $region15: #{netf_forward.6} parent=11 // pred_region
        _
      $region16: #{netf_forward.6} parent=11 // pred_fallthru
        _
      // Predicated region
      $region17: #{netf_forward.6} parent=11 // pred_check
        %p121 = pneg %p77
      $region18: #{netf_forward.6} parent=11 // pred_check_branch
        %123 = sbr.rel (%p121) target = $region20
      $region19: #{netf_forward.6} parent=11 // pred_region
        _
      $region20: #{netf_forward.6} parent=11 // pred_fallthru
        _
    $region12: #{netf_forward.6} parent=5 // pred_fallthru
      _
    %p124 = scmp.lt.s32.totalorder %s9, 2
    // Predicated region
    $region21: #{netf_forward.6} parent=5 // pred_check
      %p125 = pneg %p124
    $region22: #{netf_forward.6} parent=5 // pred_check_branch
      %127 = sbr.rel (%p125) target = $region24
    $region23: #{netf_forward.6} parent=5 // pred_region
      // Predicated region
      $region25: #{netf_forward.6} parent=23 // pred_check
        %p128 = pneg %p29
      $region26: #{netf_forward.6} parent=23 // pred_check_branch
        %130 = sbr.rel (%p128) target = $region28
      $region27: #{netf_forward.6} parent=23 // pred_region
        %p131 = scmp.lt.s32.totalorder %s9, 1
        %s132 = scalar_select %p131, %s9, 1
        %s133 = smul.addr %s132, 22
        %s134 = smul.addr %s133, 4
        %s135 = scalar_lea.vmem %s0, %s134
      $region28: #{netf_forward.6} parent=23 // pred_fallthru
        _
    $region24: #{netf_forward.6} parent=5 // pred_fallthru
      _
    %p136 = scmp.le.s32.totalorder 1, %s9
    %p137 = scmp.lt.s32.totalorder %s9, 3
    %p138 = pnand %p136, %p137
    %p139 = pneg %p138
    // Predicated region
    $region29: #{netf_forward.6} parent=5 // pred_check
      _
    $region30: #{netf_forward.6} parent=5 // pred_check_branch
      %141 = sbr.rel (%p138) target = $region32
    $region31: #{netf_forward.6} parent=5 // pred_region
      %s142 = ssub.s32 %s9, 1
      %p143 = scmp.lt.s32.totalorder %s14, 1
      %s144 = scalar_select %p143, %s14, 1
      %s145 = smul.addr %s144, 22
      %s146 = smul.addr %s145, 4
      %s147 = scalar_lea.vmem %s0, %s146
      %p148 = pneg %p35
      %p149 = pneg %p32
      %p150 = pneg %p56
      %p151 = pneg %p53
      %p152 = pneg %p77
      %p153 = pneg %p74
      %p154 = pneg %p103
      %p155 = pneg %p100
      %p156 = scmp.lt.s32.totalorder %s14, 1
      %s157 = scalar_select %p156, %s14, 1
      %s158 = smul.addr %s157, 22
      %s159 = smul.addr %s158, 4
      %s160 = scalar_lea.vmem %s3, %s159
      %p161 = scmp.lt.s32.totalorder %s14, 1
      %s162 = scalar_select %p161, %s14, 1
      %s163 = smul.addr %s162, 22
      %s164 = smul.addr %s163, 4
      %s165 = scalar_lea.vmem %s0, %s164
      %p166 = scmp.lt.s32.totalorder %s14, 1
      %s167 = scalar_select %p166, %s14, 1
      %s168 = smul.addr %s167, 22
      %s169 = smul.addr %s168, 4
      %s170 = scalar_lea.vmem %s3, %s169
      %v172 = vld [vmem:[%s165] sm:$0xf]
      %v173 = vld [vmem:[%s165 + $0x4] sm:$0xf]
      %v174 = vld [vmem:[%s165 + $0x8] sm:$0xf]
      %v175 = vld [vmem:[%s165 + $0xc] sm:$0xf]
      %v176 = vld [vmem:[%s165 + $0x10] sm:$0xf]
      %v177 = vld [vmem:[%s165 + $0x14] sm:$0xf]
      %v178 = vld [vmem:[%s165 + $0x18] sm:$0xf]
      %v179 = vld [vmem:[%s165 + $0x1c] sm:$0xf]
      %v180 = vld [vmem:[%s165 + $0x20] sm:$0xf]
      %v181 = vld [vmem:[%s165 + $0x24] sm:$0xf]
      %v182 = vld [vmem:[%s165 + $0x28] sm:$0xf]
      %v183 = vld [vmem:[%s165 + $0x2c] sm:$0xf]
      %v184 = vld [vmem:[%s165 + $0x30] sm:$0xf]
      %v185 = vld [vmem:[%s165 + $0x34] sm:$0xf]
      %v186 = vld [vmem:[%s165 + $0x38] sm:$0xf]
      %v187 = vld [vmem:[%s165 + $0x3c] sm:$0xf]
      %v188 = vld [vmem:[%s165 + $0x40] sm:$0x1]
      %v189 = vld [vmem:[%s165] sm:$0xe]
      %v206 = vunpack.c.l.b16 %v172
      %v207 = vunpack.c.l.b16 %v173
      %v208 = vunpack.c.l.b16 %v174
      %v209 = vunpack.c.l.b16 %v175
      %v210 = vunpack.c.l.b16 %v176
      %v211 = vunpack.c.l.b16 %v177
      %v212 = vunpack.c.l.b16 %v178
      %v213 = vunpack.c.l.b16 %v179
      %v214 = vunpack.c.l.b16 %v180
      %v215 = vunpack.c.l.b16 %v181
      %v216 = vunpack.c.l.b16 %v182
      %v217 = vunpack.c.l.b16 %v183
      %v218 = vunpack.c.l.b16 %v184
      %v219 = vunpack.c.l.b16 %v185
      %v220 = vunpack.c.l.b16 %v186
      %v221 = vunpack.c.l.b16 %v187
      %v222 = vpack.c.b16 %v207, %v206
      %v223 = vpack.c.b16 %v209, %v208
      %v224 = vpack.c.b16 %v211, %v210
      %v225 = vpack.c.b16 %v213, %v212
      %v226 = vpack.c.b16 %v215, %v214
      %v227 = vpack.c.b16 %v217, %v216
      %v228 = vpack.c.b16 %v219, %v218
      %v229 = vpack.c.b16 %v221, %v220
      %v231 = vunpack.c.l.b16 %v188
      %v232 = vpack.c.b16 %v231, %v231
      %vm233 = vsmask.f32 7424
      %v235 = vshrl.u32 %v222, 16
      %v237 = vshll.u32 %v222, 16
      %v239 = vrot.slane %v237, 1
      %v240 = vor.u32 %v235, %v239
      %v242 = vshll.u32 %v223, 16
      %v244 = vrot.slane %v242, 1
      %v245 = vsel %vm233, %v240, %v244
      %v246 = vshrl.u32 %v223, 16
      %v248 = vor.u32 %v246, %v244
      %v250 = vshll.u32 %v224, 16
      %v252 = vrot.slane %v250, 1
      %v253 = vsel %vm233, %v248, %v252
      %v254 = vshrl.u32 %v224, 16
      %v256 = vor.u32 %v254, %v252
      %v258 = vshll.u32 %v225, 16
      %v260 = vrot.slane %v258, 1
      %v261 = vsel %vm233, %v256, %v260
      %v262 = vshrl.u32 %v225, 16
      %v264 = vor.u32 %v262, %v260
      %v266 = vshll.u32 %v226, 16
      %v268 = vrot.slane %v266, 1
      %v269 = vsel %vm233, %v264, %v268
      %v270 = vshrl.u32 %v226, 16
      %v272 = vor.u32 %v270, %v268
      %v274 = vshll.u32 %v227, 16
      %v276 = vrot.slane %v274, 1
      %v277 = vsel %vm233, %v272, %v276
      %v278 = vshrl.u32 %v227, 16
      %v280 = vor.u32 %v278, %v276
      %v282 = vshll.u32 %v228, 16
      %v284 = vrot.slane %v282, 1
      %v285 = vsel %vm233, %v280, %v284
      %v286 = vshrl.u32 %v228, 16
      %v288 = vor.u32 %v286, %v284
      %v290 = vshll.u32 %v229, 16
      %v292 = vrot.slane %v290, 1
      %v293 = vsel %vm233, %v288, %v292
      %v294 = vshrl.u32 %v229, 16
      %v296 = vor.u32 %v294, %v292
      %v298 = vshll.u32 %v232, 16
      %v300 = vrot.slane %v298, 1
      %v301 = vsel %vm233, %v296, %v300
      %302 = vrot.lane.b32.xlu0 %v245, 64
      %v303 = vpop.permute.xlu0 %302
      %304 = vrot.lane.b32.xlu0 %v253, 64
      %v305 = vpop.permute.xlu0 %304
      %306 = vrot.lane.b32.xlu0 %v261, 64
      %v307 = vpop.permute.xlu0 %306
      %308 = vrot.lane.b32.xlu0 %v269, 64
      %v309 = vpop.permute.xlu0 %308
      %310 = vrot.lane.b32.xlu0 %v277, 64
      %v311 = vpop.permute.xlu0 %310
      %312 = vrot.lane.b32.xlu0 %v285, 64
      %v313 = vpop.permute.xlu0 %312
      %314 = vrot.lane.b32.xlu0 %v293, 64
      %v315 = vpop.permute.xlu0 %314
      %316 = vrot.lane.b32.xlu0 %v301, 64
      %v317 = vpop.permute.xlu0 %316
      %v319 = vunpack.c.l.b16 %v189
      %v320 = vpack.c.b16 %v207, %v319
      %vm321 = vcmask 1046528
      %v322 = vrot.slane %v320, 1
      %v323 = vrot.slane %v223, 1
      %v324 = vsel %vm321, %v322, %v323
      %v325 = vrot.slane %v224, 1
      %v326 = vsel %vm321, %v323, %v325
      %v327 = vrot.slane %v225, 1
      %v328 = vsel %vm321, %v325, %v327
      %v329 = vrot.slane %v226, 1
      %v330 = vsel %vm321, %v327, %v329
      %v331 = vrot.slane %v227, 1
      %v332 = vsel %vm321, %v329, %v331
      %v333 = vrot.slane %v228, 1
      %v334 = vsel %vm321, %v331, %v333
      %v335 = vrot.slane %v229, 1
      %v336 = vsel %vm321, %v333, %v335
      %v337 = vrot.slane %v232, 1
      %v338 = vsel %vm321, %v335, %v337
      %vm339 = vcmask 523264
      %v341 = vsel %vm339, %v222, %v303
      %v344 = vsel %vm339, %v223, %v305
      %v347 = vsel %vm339, %v224, %v307
      %v350 = vsel %vm339, %v225, %v309
      %v353 = vsel %vm339, %v226, %v311
      %v356 = vsel %vm339, %v227, %v313
      %v359 = vsel %vm339, %v228, %v315
      %v362 = vsel %vm339, %v229, %v317
      %v364 = vld [vmem:[%s1] sm:$0xf]
      %v365 = vld [vmem:[%s1 + $0x4] sm:$0xf]
      %v366 = vld [vmem:[%s1 + $0x8] sm:$0xf]
      %v367 = vld [vmem:[%s1 + $0xc] sm:$0xf]
      %v368 = vld [vmem:[%s1 + $0x10] sm:$0xf]
      %v369 = vld [vmem:[%s1 + $0x14] sm:$0xf]
      %v370 = vld [vmem:[%s1 + $0x18] sm:$0xf]
      %v371 = vld [vmem:[%s1 + $0x1c] sm:$0xf]
      %v372 = vld [vmem:[%s1 + $0x20] sm:$0xf]
      %v373 = vld [vmem:[%s1 + $0x24] sm:$0xf]
      %v374 = vld [vmem:[%s1 + $0x28] sm:$0xf]
      %v375 = vld [vmem:[%s1 + $0x2c] sm:$0xf]
      %v376 = vld [vmem:[%s1 + $0x30] sm:$0xf]
      %v377 = vld [vmem:[%s1 + $0x34] sm:$0xf]
      %v378 = vld [vmem:[%s1 + $0x38] sm:$0xf]
      %v379 = vld [vmem:[%s1 + $0x3c] sm:$0xf]
      %v380 = vld [vmem:[%s1 + $0x40] sm:$0xf]
      %v381 = vld [vmem:[%s1 + $0x44] sm:$0xf]
      %v382 = vld [vmem:[%s1 + $0x48] sm:$0xf]
      %v383 = vld [vmem:[%s1 + $0x4c] sm:$0xf]
      %v384 = vld [vmem:[%s1 + $0x50] sm:$0xf]
      %v385 = vld [vmem:[%s1 + $0x54] sm:$0xf]
      %v386 = vld [vmem:[%s1 + $0x58] sm:$0xf]
      %v387 = vld [vmem:[%s1 + $0x5c] sm:$0xf]
      %v388 = vld [vmem:[%s165 + $0x40] sm:$0xf]
      %v389 = vld [vmem:[%s165 + $0x44] sm:$0xf]
      %v390 = vld [vmem:[%s165 + $0x48] sm:$0x1]
      %v391 = vld [vmem:[%s165 + $0x8] sm:$0xe]
      %v394 = vunpack.c.l.b16 %v388
      %v395 = vunpack.c.l.b16 %v389
      %v396 = vpack.c.b16 %v395, %v394
      %v398 = vunpack.c.l.b16 %v390
      %v399 = vpack.c.b16 %v398, %v398
      %v401 = vshll.u32 %v396, 16
      %v403 = vrot.slane %v401, 1
      %v404 = vsel %vm233, %v296, %v403
      %v405 = vshrl.u32 %v396, 16
      %v407 = vor.u32 %v405, %v403
      %v409 = vshll.u32 %v399, 16
      %v411 = vrot.slane %v409, 1
      %v412 = vsel %vm233, %v407, %v411
      %413 = vrot.lane.b32.xlu0 %v404, 64
      %v414 = vpop.permute.xlu0 %413
      %415 = vrot.lane.b32.xlu0 %v412, 64
      %v416 = vpop.permute.xlu0 %415
      %v418 = vunpack.c.l.b16 %v391
      %v419 = vpack.c.b16 %v209, %v418
      %v420 = vrot.slane %v419, 1
      %v421 = vsel %vm321, %v420, %v325
      %v422 = vrot.slane %v396, 1
      %v423 = vsel %vm321, %v335, %v422
      %v424 = vrot.slane %v399, 1
      %v425 = vsel %vm321, %v422, %v424
      %v427 = vsel %vm339, %v229, %v414
      %v430 = vsel %vm339, %v396, %v416
      %s432 = scalar_lea.vmem %s1, 96
      %v433 = vld [vmem:[%s432] sm:$0xf]
      %v434 = vld [vmem:[%s432 + $0x4] sm:$0xf]
      %v435 = vld [vmem:[%s432 + $0x8] sm:$0xf]
      %v436 = vld [vmem:[%s432 + $0xc] sm:$0xf]
      %v437 = vld [vmem:[%s432 + $0x10] sm:$0xf]
      %v438 = vld [vmem:[%s432 + $0x14] sm:$0xf]
      %v439 = vld [vmem:[%s432 + $0x18] sm:$0xf]
      %v440 = vld [vmem:[%s432 + $0x1c] sm:$0xf]
      %v441 = vld [vmem:[%s432 + $0x20] sm:$0xf]
      %v442 = vld [vmem:[%s432 + $0x24] sm:$0xf]
      %v443 = vld [vmem:[%s432 + $0x28] sm:$0xf]
      %v444 = vld [vmem:[%s432 + $0x2c] sm:$0xf]
      %v445 = vld [vmem:[%s432 + $0x30] sm:$0xf]
      %v446 = vld [vmem:[%s432 + $0x34] sm:$0xf]
      %v447 = vld [vmem:[%s432 + $0x38] sm:$0xf]
      %v448 = vld [vmem:[%s432 + $0x3c] sm:$0xf]
      %v449 = vld [vmem:[%s432 + $0x40] sm:$0xf]
      %v450 = vld [vmem:[%s432 + $0x44] sm:$0xf]
      %v451 = vld [vmem:[%s432 + $0x48] sm:$0xf]
      %v452 = vld [vmem:[%s432 + $0x4c] sm:$0xf]
      %v453 = vld [vmem:[%s432 + $0x50] sm:$0xf]
      %v454 = vld [vmem:[%s432 + $0x54] sm:$0xf]
      %v455 = vld [vmem:[%s432 + $0x58] sm:$0xf]
      %v456 = vld [vmem:[%s432 + $0x5c] sm:$0xf]
      %v481 = vunpack.c.l.b16 %v433
      %v482 = vunpack.c.l.b16 %v434
      %v483 = vunpack.c.l.b16 %v435
      %v484 = vunpack.c.l.b16 %v436
      %v485 = vunpack.c.l.b16 %v437
      %v486 = vunpack.c.l.b16 %v438
      %v487 = vunpack.c.l.b16 %v439
      %v488 = vunpack.c.l.b16 %v440
      %v489 = vunpack.c.l.b16 %v441
      %v490 = vunpack.c.l.b16 %v442
      %v491 = vunpack.c.l.b16 %v443
      %v492 = vunpack.c.l.b16 %v444
      %v493 = vunpack.c.l.b16 %v445
      %v494 = vunpack.c.l.b16 %v446
      %v495 = vunpack.c.l.b16 %v447
      %v496 = vunpack.c.l.b16 %v448
      %v497 = vunpack.c.l.b16 %v449
      %v498 = vunpack.c.l.b16 %v450
      %v499 = vunpack.c.l.b16 %v451
      %v500 = vunpack.c.l.b16 %v452
      %v501 = vunpack.c.l.b16 %v453
      %v502 = vunpack.c.l.b16 %v454
      %v503 = vunpack.c.l.b16 %v455
      %v504 = vunpack.c.l.b16 %v456
      %v505 = vpack.c.b16 %v482, %v481
      %v506 = vpack.c.b16 %v484, %v483
      %v507 = vpack.c.b16 %v486, %v485
      %v508 = vpack.c.b16 %v488, %v487
      %v509 = vpack.c.b16 %v490, %v489
      %v510 = vpack.c.b16 %v492, %v491
      %v511 = vpack.c.b16 %v494, %v493
      %v512 = vpack.c.b16 %v496, %v495
      %v513 = vpack.c.b16 %v498, %v497
      %v514 = vpack.c.b16 %v500, %v499
      %v515 = vpack.c.b16 %v502, %v501
      %v516 = vpack.c.b16 %v504, %v503
      %v530 = vsel %vm339, %v421, 0
      %v533 = vsel %vm339, %v328, 0
      %v536 = vsel %vm339, %v330, 0
      %v539 = vsel %vm339, %v332, 0
      %v542 = vsel %vm339, %v334, 0
      %v545 = vsel %vm339, %v336, 0
      %v548 = vsel %vm339, %v423, 0
      %v551 = vsel %vm339, %v425, 0
      %553 = vmatprep.subr.bf16.mxu0 0
      %554 = vmatpush1.bf16.msra.mxu0 %v505
      %555 = vmatprep.subr.bf16.mxu0 0
      %556 = vmatpush1.bf16.msra.mxu0 %v506
      %557 = vmatprep.subr.bf16.mxu0 0
      %558 = vmatpush1.bf16.msra.mxu0 %v507
      %559 = vmatprep.subr.bf16.mxu0 0
      %560 = vmatpush1.bf16.msra.mxu0 %v508
      %561 = vmatprep.subr.bf16.mxu0 0
      %562 = vmatpush1.bf16.msra.mxu0 %v509
      %563 = vmatprep.subr.bf16.mxu0 0
      %564 = vmatpush1.bf16.msra.mxu0 %v510
      %565 = vmatprep.subr.bf16.mxu0 0
      %566 = vmatpush1.bf16.msra.mxu0 %v511
      %567 = vmatprep.subr.bf16.mxu0 0
      %568 = vmatpush1.bf16.msra.mxu0 %v512
      %569 = vmatprep.subr.bf16.mxu0 0
      %570 = vmatpush1.bf16.msra.mxu0 %v513
      %571 = vmatprep.subr.bf16.mxu0 0
      %572 = vmatpush1.bf16.msra.mxu0 %v514
      %573 = vmatprep.subr.bf16.mxu0 0
      %574 = vmatpush1.bf16.msra.mxu0 %v515
      %575 = vmatprep.subr.bf16.mxu0 0
      %576 = vmatpush1.bf16.msra.mxu0 %v516
      %577 = vmatprep.subr.bf16.mxu0 0
      %578 = vmatpush1.bf16.msra.mxu0 0
      %579 = vmatprep.subr.bf16.mxu0 0
      %580 = vmatpush1.bf16.msra.mxu0 0
      %581 = vmatprep.subr.bf16.mxu0 0
      %582 = vmatpush1.bf16.msra.mxu0 0
      %583 = vmatprep.subr.bf16.mxu0 0
      %584 = vmatpush1.bf16.msra.mxu0 0
      %585 = vmatprep.mubr.bf16.mxu0 %v530
      %586 = vmatmul.mubr.bf16.gmra.mrb[0].mxu0 %v344
      %v587 = vpop.f32.mrb[0].mxu0
      %v588 = vadd.f32 0.0, %v587
      %v589 = vpop.f32.mrb[0].mxu0
      %v590 = vpop.f32.mrb[0].mxu0
      %v591 = vpop.f32.mrb[0].mxu0
      %592 = vmatprep.mubr.bf16.mxu0 %v533
      %593 = vmatmul.mubr.bf16.gmra.mrb[0].mxu0 %v347
      %v594 = vpop.f32.mrb[0].mxu0
      %v595 = vadd.f32 0.0, %v594
      %v596 = vpop.f32.mrb[0].mxu0
      %v597 = vpop.f32.mrb[0].mxu0
      %v598 = vpop.f32.mrb[0].mxu0
      %599 = vmatprep.mubr.bf16.mxu0 %v536
      %600 = vmatmul.mubr.bf16.gmra.mrb[0].mxu0 %v350
      %v601 = vpop.f32.mrb[0].mxu0
      %v602 = vadd.f32 0.0, %v601
      %v603 = vpop.f32.mrb[0].mxu0
      %v604 = vpop.f32.mrb[0].mxu0
      %v605 = vpop.f32.mrb[0].mxu0
      %606 = vmatprep.mubr.bf16.mxu0 %v539
      %607 = vmatmul.mubr.bf16.gmra.mrb[0].mxu0 %v353
      %v608 = vpop.f32.mrb[0].mxu0
      %v609 = vadd.f32 0.0, %v608
      %v610 = vpop.f32.mrb[0].mxu0
      %v611 = vpop.f32.mrb[0].mxu0
      %v612 = vpop.f32.mrb[0].mxu0
      %613 = vmatprep.mubr.bf16.mxu0 %v542
      %614 = vmatmul.mubr.bf16.gmra.mrb[0].mxu0 %v356
      %v615 = vpop.f32.mrb[0].mxu0
      %v616 = vadd.f32 0.0, %v615
      %v617 = vpop.f32.mrb[0].mxu0
      %v618 = vpop.f32.mrb[0].mxu0
      %v619 = vpop.f32.mrb[0].mxu0
      %620 = vmatprep.mubr.bf16.mxu0 %v545
      %621 = vmatmul.mubr.bf16.gmra.mrb[0].mxu0 %v359
      %v622 = vpop.f32.mrb[0].mxu0
      %v623 = vadd.f32 0.0, %v622
      %v624 = vpop.f32.mrb[0].mxu0
      %v625 = vpop.f32.mrb[0].mxu0
      %v626 = vpop.f32.mrb[0].mxu0
      %627 = vmatprep.mubr.bf16.mxu0 %v548
      %628 = vmatmul.mubr.bf16.gmra.mrb[0].mxu0 %v427
      %v629 = vpop.f32.mrb[0].mxu0
      %v630 = vadd.f32 0.0, %v629
      %v631 = vpop.f32.mrb[0].mxu0
      %v632 = vpop.f32.mrb[0].mxu0
      %v633 = vpop.f32.mrb[0].mxu0
      %634 = vmatprep.mubr.bf16.mxu0 %v551
      %635 = vmatmul.mubr.bf16.gmra.mrb[0].mxu0 %v430
      %v636 = vpop.f32.mrb[0].mxu0
      %v637 = vadd.f32 0.0, %v636
      %v638 = vpop.f32.mrb[0].mxu0
      %v639 = vpop.f32.mrb[0].mxu0
      %v640 = vpop.f32.mrb[0].mxu0
      %641 = vdwg.mxu0
      %v666 = vunpack.c.l.b16 %v364
      %v667 = vunpack.c.l.b16 %v365
      %v668 = vunpack.c.l.b16 %v366
      %v669 = vunpack.c.l.b16 %v367
      %v670 = vunpack.c.l.b16 %v368
      %v671 = vunpack.c.l.b16 %v369
      %v672 = vunpack.c.l.b16 %v370
      %v673 = vunpack.c.l.b16 %v371
      %v674 = vunpack.c.l.b16 %v372
      %v675 = vunpack.c.l.b16 %v373
      %v676 = vunpack.c.l.b16 %v374
      %v677 = vunpack.c.l.b16 %v375
      %v678 = vunpack.c.l.b16 %v376
      %v679 = vunpack.c.l.b16 %v377
      %v680 = vunpack.c.l.b16 %v378
      %v681 = vunpack.c.l.b16 %v379
      %v682 = vunpack.c.l.b16 %v380
      %v683 = vunpack.c.l.b16 %v381
      %v684 = vunpack.c.l.b16 %v382
      %v685 = vunpack.c.l.b16 %v383
      %v686 = vunpack.c.l.b16 %v384
      %v687 = vunpack.c.l.b16 %v385
      %v688 = vunpack.c.l.b16 %v386
      %v689 = vunpack.c.l.b16 %v387
      %v690 = vpack.c.b16 %v667, %v666
      %v691 = vpack.c.b16 %v669, %v668
      %v692 = vpack.c.b16 %v671, %v670
      %v693 = vpack.c.b16 %v673, %v672
      %v694 = vpack.c.b16 %v675, %v674
      %v695 = vpack.c.b16 %v677, %v676
      %v696 = vpack.c.b16 %v679, %v678
      %v697 = vpack.c.b16 %v681, %v680
      %v698 = vpack.c.b16 %v683, %v682
      %v699 = vpack.c.b16 %v685, %v684
      %v700 = vpack.c.b16 %v687, %v686
      %v701 = vpack.c.b16 %v689, %v688
      %v715 = vsel %vm339, %v324, 0
      %v718 = vsel %vm339, %v326, 0
      %v721 = vsel %vm339, %v338, 0
      %723 = vmatprep.subr.bf16.mxu0 0
      %724 = vmatpush1.bf16.msra.mxu0 %v690
      %725 = vmatprep.subr.bf16.mxu0 0
      %726 = vmatpush1.bf16.msra.mxu0 %v691
      %727 = vmatprep.subr.bf16.mxu0 0
      %728 = vmatpush1.bf16.msra.mxu0 %v692
      %729 = vmatprep.subr.bf16.mxu0 0
      %730 = vmatpush1.bf16.msra.mxu0 %v693
      %731 = vmatprep.subr.bf16.mxu0 0
      %732 = vmatpush1.bf16.msra.mxu0 %v694
      %733 = vmatprep.subr.bf16.mxu0 0
      %734 = vmatpush1.bf16.msra.mxu0 %v695
      %735 = vmatprep.subr.bf16.mxu0 0
      %736 = vmatpush1.bf16.msra.mxu0 %v696
      %737 = vmatprep.subr.bf16.mxu0 0
      %738 = vmatpush1.bf16.msra.mxu0 %v697
      %739 = vmatprep.subr.bf16.mxu0 0
      %740 = vmatpush1.bf16.msra.mxu0 %v698
      %741 = vmatprep.subr.bf16.mxu0 0
      %742 = vmatpush1.bf16.msra.mxu0 %v699
      %743 = vmatprep.subr.bf16.mxu0 0
      %744 = vmatpush1.bf16.msra.mxu0 %v700
      %745 = vmatprep.subr.bf16.mxu0 0
      %746 = vmatpush1.bf16.msra.mxu0 %v701
      %747 = vmatprep.subr.bf16.mxu0 0
      %748 = vmatpush1.bf16.msra.mxu0 0
      %749 = vmatprep.subr.bf16.mxu0 0
      %750 = vmatpush1.bf16.msra.mxu0 0
      %751 = vmatprep.subr.bf16.mxu0 0
      %752 = vmatpush1.bf16.msra.mxu0 0
      %753 = vmatprep.subr.bf16.mxu0 0
      %754 = vmatpush1.bf16.msra.mxu0 0
      %755 = vmatprep.mubr.bf16.mxu0 %v715
      %756 = vmatmul.mubr.bf16.gmra.mrb[0].mxu0 %v341
      %v757 = vpop.f32.mrb[0].mxu0
      %v758 = vadd.f32 %v588, %v757
      %v759 = vpop.f32.mrb[0].mxu0
      %v760 = vpop.f32.mrb[0].mxu0
      %v761 = vpop.f32.mrb[0].mxu0
      %762 = vmatprep.mubr.bf16.mxu0 %v718
      %763 = vmatmul.mubr.bf16.gmra.mrb[0].mxu0 %v344
      %v764 = vpop.f32.mrb[0].mxu0
      %v765 = vadd.f32 %v595, %v764
      %v766 = vpop.f32.mrb[0].mxu0
      %v767 = vpop.f32.mrb[0].mxu0
      %v768 = vpop.f32.mrb[0].mxu0
      %769 = vmatprep.mubr.bf16.mxu0 %v533
      %770 = vmatmul.mubr.bf16.gmra.mrb[0].mxu0 %v347
      %v771 = vpop.f32.mrb[0].mxu0
      %v772 = vadd.f32 %v602, %v771
      %v773 = vpop.f32.mrb[0].mxu0
      %v774 = vpop.f32.mrb[0].mxu0
      %v775 = vpop.f32.mrb[0].mxu0
      %776 = vmatprep.mubr.bf16.mxu0 %v536
      %777 = vmatmul.mubr.bf16.gmra.mrb[0].mxu0 %v350
      %v778 = vpop.f32.mrb[0].mxu0
      %v779 = vadd.f32 %v609, %v778
      %v780 = vpop.f32.mrb[0].mxu0
      %v781 = vpop.f32.mrb[0].mxu0
      %v782 = vpop.f32.mrb[0].mxu0
      %783 = vmatprep.mubr.bf16.mxu0 %v539
      %784 = vmatmul.mubr.bf16.gmra.mrb[0].mxu0 %v353
      %v785 = vpop.f32.mrb[0].mxu0
      %v786 = vadd.f32 %v616, %v785
      %v787 = vpop.f32.mrb[0].mxu0
      %v788 = vpop.f32.mrb[0].mxu0
      %v789 = vpop.f32.mrb[0].mxu0
      %790 = vmatprep.mubr.bf16.mxu0 %v542
      %791 = vmatmul.mubr.bf16.gmra.mrb[0].mxu0 %v356
      %v792 = vpop.f32.mrb[0].mxu0
      %v793 = vadd.f32 %v623, %v792
      %v794 = vpop.f32.mrb[0].mxu0
      %v795 = vpop.f32.mrb[0].mxu0
      %v796 = vpop.f32.mrb[0].mxu0
      %797 = vmatprep.mubr.bf16.mxu0 %v545
      %798 = vmatmul.mubr.bf16.gmra.mrb[0].mxu0 %v359
      %v799 = vpop.f32.mrb[0].mxu0
      %v800 = vadd.f32 %v630, %v799
      %v801 = vpop.f32.mrb[0].mxu0
      %v802 = vpop.f32.mrb[0].mxu0
      %v803 = vpop.f32.mrb[0].mxu0
      %804 = vmatprep.mubr.bf16.mxu0 %v721
      %805 = vmatmul.mubr.bf16.gmra.mrb[0].mxu0 %v362
      %v806 = vpop.f32.mrb[0].mxu0
      %v807 = vadd.f32 %v637, %v806
      %v808 = vpop.f32.mrb[0].mxu0
      %v809 = vpop.f32.mrb[0].mxu0
      %v810 = vpop.f32.mrb[0].mxu0
      %811 = vdwg.mxu0
      %v812 = vld [vmem:[%s165 + $0x10] sm:$0xf]
      %v813 = vld [vmem:[%s165 + $0x14] sm:$0xf]
      %v814 = vld [vmem:[%s165 + $0x18] sm:$0xf]
      %v815 = vld [vmem:[%s165 + $0x1c] sm:$0xf]
      %v816 = vld [vmem:[%s165 + $0x20] sm:$0xf]
      %v817 = vld [vmem:[%s165 + $0x24] sm:$0xf]
      %v818 = vld [vmem:[%s165 + $0x28] sm:$0xf]
      %v819 = vld [vmem:[%s165 + $0x2c] sm:$0xf]
      %v820 = vld [vmem:[%s165 + $0x30] sm:$0xf]
      %v821 = vld [vmem:[%s165 + $0x34] sm:$0xf]
      %v822 = vld [vmem:[%s165 + $0x38] sm:$0xf]
      %v823 = vld [vmem:[%s165 + $0x3c] sm:$0xf]
      %v824 = vld [vmem:[%s165 + $0x40] sm:$0xf]
      %v825 = vld [vmem:[%s165 + $0x44] sm:$0xf]
      %v826 = vld [vmem:[%s165 + $0x48] sm:$0xf]
      %v827 = vld [vmem:[%s165 + $0x4c] sm:$0xf]
      %v828 = vld [vmem:[%s165 + $0x50] sm:$0x1]
      %v829 = vld [vmem:[%s165 + $0x10] sm:$0xe]
      %v846 = vunpack.c.l.b16 %v812
      %v847 = vunpack.c.l.b16 %v813
      %v848 = vunpack.c.l.b16 %v814
      %v849 = vunpack.c.l.b16 %v815
      %v850 = vunpack.c.l.b16 %v816
      %v851 = vunpack.c.l.b16 %v817
      %v852 = vunpack.c.l.b16 %v818
      %v853 = vunpack.c.l.b16 %v819
      %v854 = vunpack.c.l.b16 %v820
      %v855 = vunpack.c.l.b16 %v821
      %v856 = vunpack.c.l.b16 %v822
      %v857 = vunpack.c.l.b16 %v823
      %v858 = vunpack.c.l.b16 %v824
      %v859 = vunpack.c.l.b16 %v825
      %v860 = vunpack.c.l.b16 %v826
      %v861 = vunpack.c.l.b16 %v827
      %v862 = vpack.c.b16 %v847, %v846
      %v863 = vpack.c.b16 %v849, %v848
      %v864 = vpack.c.b16 %v851, %v850
      %v865 = vpack.c.b16 %v853, %v852
      %v866 = vpack.c.b16 %v855, %v854
      %v867 = vpack.c.b16 %v857, %v856
      %v868 = vpack.c.b16 %v859, %v858
      %v869 = vpack.c.b16 %v861, %v860
      %v871 = vunpack.c.l.b16 %v828
      %v872 = vpack.c.b16 %v871, %v871
      %v874 = vshrl.u32 %v862, 16
      %v876 = vshll.u32 %v862, 16
      %v878 = vrot.slane %v876, 1
      %v879 = vor.u32 %v874, %v878
      %v881 = vshll.u32 %v863, 16
      %v883 = vrot.slane %v881, 1
      %v884 = vsel %vm233, %v879, %v883
      %v885 = vshrl.u32 %v863, 16
      %v887 = vor.u32 %v885, %v883
      %v889 = vshll.u32 %v864, 16
      %v891 = vrot.slane %v889, 1
      %v892 = vsel %vm233, %v887, %v891
      %v893 = vshrl.u32 %v864, 16
      %v895 = vor.u32 %v893, %v891
      %v897 = vshll.u32 %v865, 16
      %v899 = vrot.slane %v897, 1
      %v900 = vsel %vm233, %v895, %v899
      %v901 = vshrl.u32 %v865, 16
      %v903 = vor.u32 %v901, %v899
      %v905 = vshll.u32 %v866, 16
      %v907 = vrot.slane %v905, 1
      %v908 = vsel %vm233, %v903, %v907
      %v909 = vshrl.u32 %v866, 16
      %v911 = vor.u32 %v909, %v907
      %v913 = vshll.u32 %v867, 16
      %v915 = vrot.slane %v913, 1
      %v916 = vsel %vm233, %v911, %v915
      %v917 = vshrl.u32 %v867, 16
      %v919 = vor.u32 %v917, %v915
      %v921 = vshll.u32 %v868, 16
      %v923 = vrot.slane %v921, 1
      %v924 = vsel %vm233, %v919, %v923
      %v925 = vshrl.u32 %v868, 16
      %v927 = vor.u32 %v925, %v923
      %v929 = vshll.u32 %v869, 16
      %v931 = vrot.slane %v929, 1
      %v932 = vsel %vm233, %v927, %v931
      %v933 = vshrl.u32 %v869, 16
      %v935 = vor.u32 %v933, %v931
      %v937 = vshll.u32 %v872, 16
      %v939 = vrot.slane %v937, 1
      %v940 = vsel %vm233, %v935, %v939
      %941 = vrot.lane.b32.xlu0 %v884, 64
      %v942 = vpop.permute.xlu0 %941
      %943 = vrot.lane.b32.xlu0 %v892, 64
      %v944 = vpop.permute.xlu0 %943
      %945 = vrot.lane.b32.xlu0 %v900, 64
      %v946 = vpop.permute.xlu0 %945
      %947 = vrot.lane.b32.xlu0 %v908, 64
      %v948 = vpop.permute.xlu0 %947
      %949 = vrot.lane.b32.xlu0 %v916, 64
      %v950 = vpop.permute.xlu0 %949
      %951 = vrot.lane.b32.xlu0 %v924, 64
      %v952 = vpop.permute.xlu0 %951
      %953 = vrot.lane.b32.xlu0 %v932, 64
      %v954 = vpop.permute.xlu0 %953
      %955 = vrot.lane.b32.xlu0 %v940, 64
      %v956 = vpop.permute.xlu0 %955
      %v958 = vunpack.c.l.b16 %v829
      %v959 = vpack.c.b16 %v847, %v958
      %v960 = vrot.slane %v959, 1
      %v961 = vrot.slane %v863, 1
      %v962 = vsel %vm321, %v960, %v961
      %v963 = vrot.slane %v864, 1
      %v964 = vsel %vm321, %v961, %v963
      %v965 = vrot.slane %v865, 1
      %v966 = vsel %vm321, %v963, %v965
      %v967 = vrot.slane %v866, 1
      %v968 = vsel %vm321, %v965, %v967
      %v969 = vrot.slane %v867, 1
      %v970 = vsel %vm321, %v967, %v969
      %v971 = vrot.slane %v868, 1
      %v972 = vsel %vm321, %v969, %v971
      %v973 = vrot.slane %v869, 1
      %v974 = vsel %vm321, %v971, %v973
      %v975 = vrot.slane %v872, 1
      %v976 = vsel %vm321, %v973, %v975
      %v978 = vsel %vm339, %v862, %v942
      %v981 = vsel %vm339, %v863, %v944
      %v984 = vsel %vm339, %v864, %v946
      %v987 = vsel %vm339, %v865, %v948
      %v990 = vsel %vm339, %v866, %v950
      %v993 = vsel %vm339, %v867, %v952
      %v996 = vsel %vm339, %v868, %v954
      %v999 = vsel %vm339, %v869, %v956
      %s1001 = scalar_lea.vmem %s1, 192
      %v1002 = vld [vmem:[%s1001] sm:$0xf]
      %v1003 = vld [vmem:[%s1001 + $0x4] sm:$0xf]
      %v1004 = vld [vmem:[%s1001 + $0x8] sm:$0xf]
      %v1005 = vld [vmem:[%s1001 + $0xc] sm:$0xf]
      %v1006 = vld [vmem:[%s1001 + $0x10] sm:$0xf]
      %v1007 = vld [vmem:[%s1001 + $0x14] sm:$0xf]
      %v1008 = vld [vmem:[%s1001 + $0x18] sm:$0xf]
      %v1009 = vld [vmem:[%s1001 + $0x1c] sm:$0xf]
      %v1010 = vld [vmem:[%s1001 + $0x20] sm:$0xf]
      %v1011 = vld [vmem:[%s1001 + $0x24] sm:$0xf]
      %v1012 = vld [vmem:[%s1001 + $0x28] sm:$0xf]
      %v1013 = vld [vmem:[%s1001 + $0x2c] sm:$0xf]
      %v1014 = vld [vmem:[%s1001 + $0x30] sm:$0xf]
      %v1015 = vld [vmem:[%s1001 + $0x34] sm:$0xf]
      %v1016 = vld [vmem:[%s1001 + $0x38] sm:$0xf]
      %v1017 = vld [vmem:[%s1001 + $0x3c] sm:$0xf]
      %v1018 = vld [vmem:[%s1001 + $0x40] sm:$0xf]
      %v1019 = vld [vmem:[%s1001 + $0x44] sm:$0xf]
      %v1020 = vld [vmem:[%s1001 + $0x48] sm:$0xf]
      %v1021 = vld [vmem:[%s1001 + $0x4c] sm:$0xf]
      %v1022 = vld [vmem:[%s1001 + $0x50] sm:$0xf]
      %v1023 = vld [vmem:[%s1001 + $0x54] sm:$0xf]
      %v1024 = vld [vmem:[%s1001 + $0x58] sm:$0xf]
      %v1025 = vld [vmem:[%s1001 + $0x5c] sm:$0xf]
      %v1050 = vunpack.c.l.b16 %v1002
      %v1051 = vunpack.c.l.b16 %v1003
      %v1052 = vunpack.c.l.b16 %v1004
      %v1053 = vunpack.c.l.b16 %v1005
      %v1054 = vunpack.c.l.b16 %v1006
      %v1055 = vunpack.c.l.b16 %v1007
      %v1056 = vunpack.c.l.b16 %v1008
      %v1057 = vunpack.c.l.b16 %v1009
      %v1058 = vunpack.c.l.b16 %v1010
      %v1059 = vunpack.c.l.b16 %v1011
      %v1060 = vunpack.c.l.b16 %v1012
      %v1061 = vunpack.c.l.b16 %v1013
      %v1062 = vunpack.c.l.b16 %v1014
      %v1063 = vunpack.c.l.b16 %v1015
      %v1064 = vunpack.c.l.b16 %v1016
      %v1065 = vunpack.c.l.b16 %v1017
      %v1066 = vunpack.c.l.b16 %v1018
      %v1067 = vunpack.c.l.b16 %v1019
      %v1068 = vunpack.c.l.b16 %v1020
      %v1069 = vunpack.c.l.b16 %v1021
      %v1070 = vunpack.c.l.b16 %v1022
      %v1071 = vunpack.c.l.b16 %v1023
      %v1072 = vunpack.c.l.b16 %v1024
      %v1073 = vunpack.c.l.b16 %v1025
      %v1074 = vpack.c.b16 %v1051, %v1050
      %v1075 = vpack.c.b16 %v1053, %v1052
      %v1076 = vpack.c.b16 %v1055, %v1054
      %v1077 = vpack.c.b16 %v1057, %v1056
      %v1078 = vpack.c.b16 %v1059, %v1058
      %v1079 = vpack.c.b16 %v1061, %v1060
      %v1080 = vpack.c.b16 %v1063, %v1062
      %v1081 = vpack.c.b16 %v1065, %v1064
      %v1082 = vpack.c.b16 %v1067, %v1066
      %v1083 = vpack.c.b16 %v1069, %v1068
      %v1084 = vpack.c.b16 %v1071, %v1070
      %v1085 = vpack.c.b16 %v1073, %v1072
      %v1099 = vsel %vm339, %v962, 0
      %v1102 = vsel %vm339, %v964, 0
      %v1105 = vsel %vm339, %v966, 0
      %v1108 = vsel %vm339, %v968, 0
      %v1111 = vsel %vm339, %v970, 0
      %v1114 = vsel %vm339, %v972, 0
      %v1117 = vsel %vm339, %v974, 0
      %v1120 = vsel %vm339, %v976, 0
      %1122 = vmatprep.subr.bf16.mxu0 0
      %1123 = vmatpush1.bf16.msra.mxu0 %v1074
      %1124 = vmatprep.subr.bf16.mxu0 0
      %1125 = vmatpush1.bf16.msra.mxu0 %v1075
      %1126 = vmatprep.subr.bf16.mxu0 0
      %1127 = vmatpush1.bf16.msra.mxu0 %v1076
      %1128 = vmatprep.subr.bf16.mxu0 0
      %1129 = vmatpush1.bf16.msra.mxu0 %v1077
      %1130 = vmatprep.subr.bf16.mxu0 0
      %1131 = vmatpush1.bf16.msra.mxu0 %v1078
      %1132 = vmatprep.subr.bf16.mxu0 0
      %1133 = vmatpush1.bf16.msra.mxu0 %v1079
      %1134 = vmatprep.subr.bf16.mxu0 0
      %1135 = vmatpush1.bf16.msra.mxu0 %v1080
      %1136 = vmatprep.subr.bf16.mxu0 0
      %1137 = vmatpush1.bf16.msra.mxu0 %v1081
      %1138 = vmatprep.subr.bf16.mxu0 0
      %1139 = vmatpush1.bf16.msra.mxu0 %v1082
      %1140 = vmatprep.subr.bf16.mxu0 0
      %1141 = vmatpush1.bf16.msra.mxu0 %v1083
      %1142 = vmatprep.subr.bf16.mxu0 0
      %1143 = vmatpush1.bf16.msra.mxu0 %v1084
      %1144 = vmatprep.subr.bf16.mxu0 0
      %1145 = vmatpush1.bf16.msra.mxu0 %v1085
      %1146 = vmatprep.subr.bf16.mxu0 0
      %1147 = vmatpush1.bf16.msra.mxu0 0
      %1148 = vmatprep.subr.bf16.mxu0 0
      %1149 = vmatpush1.bf16.msra.mxu0 0
      %1150 = vmatprep.subr.bf16.mxu0 0
      %1151 = vmatpush1.bf16.msra.mxu0 0
      %1152 = vmatprep.subr.bf16.mxu0 0
      %1153 = vmatpush1.bf16.msra.mxu0 0
      %1154 = vmatprep.mubr.bf16.mxu0 %v1099
      %1155 = vmatmul.mubr.bf16.gmra.mrb[0].mxu0 %v978
      %v1156 = vpop.f32.mrb[0].mxu0
      %v1157 = vadd.f32 0.0, %v1156
      %v1158 = vpop.f32.mrb[0].mxu0
      %v1159 = vpop.f32.mrb[0].mxu0
      %v1160 = vpop.f32.mrb[0].mxu0
      %1161 = vmatprep.mubr.bf16.mxu0 %v1102
      %1162 = vmatmul.mubr.bf16.gmra.mrb[0].mxu0 %v981
      %v1163 = vpop.f32.mrb[0].mxu0
      %v1164 = vadd.f32 0.0, %v1163
      %v1165 = vpop.f32.mrb[0].mxu0
      %v1166 = vpop.f32.mrb[0].mxu0
      %v1167 = vpop.f32.mrb[0].mxu0
      %1168 = vmatprep.mubr.bf16.mxu0 %v1105
      %1169 = vmatmul.mubr.bf16.gmra.mrb[0].mxu0 %v984
      %v1170 = vpop.f32.mrb[0].mxu0
      %v1171 = vadd.f32 0.0, %v1170
      %v1172 = vpop.f32.mrb[0].mxu0
      %v1173 = vpop.f32.mrb[0].mxu0
      %v1174 = vpop.f32.mrb[0].mxu0
      %1175 = vmatprep.mubr.bf16.mxu0 %v1108
      %1176 = vmatmul.mubr.bf16.gmra.mrb[0].mxu0 %v987
      %v1177 = vpop.f32.mrb[0].mxu0
      %v1178 = vadd.f32 0.0, %v1177
      %v1179 = vpop.f32.mrb[0].mxu0
      %v1180 = vpop.f32.mrb[0].mxu0
      %v1181 = vpop.f32.mrb[0].mxu0
      %1182 = vmatprep.mubr.bf16.mxu0 %v1111
      %1183 = vmatmul.mubr.bf16.gmra.mrb[0].mxu0 %v990
      %v1184 = vpop.f32.mrb[0].mxu0
      %v1185 = vadd.f32 0.0, %v1184
      %v1186 = vpop.f32.mrb[0].mxu0
      %v1187 = vpop.f32.mrb[0].mxu0
      %v1188 = vpop.f32.mrb[0].mxu0
      %1189 = vmatprep.mubr.bf16.mxu0 %v1114
      %1190 = vmatmul.mubr.bf16.gmra.mrb[0].mxu0 %v993
      %v1191 = vpop.f32.mrb[0].mxu0
      %v1192 = vadd.f32 0.0, %v1191
      %v1193 = vpop.f32.mrb[0].mxu0
      %v1194 = vpop.f32.mrb[0].mxu0
      %v1195 = vpop.f32.mrb[0].mxu0
      %1196 = vmatprep.mubr.bf16.mxu0 %v1117
      %1197 = vmatmul.mubr.bf16.gmra.mrb[0].mxu0 %v996
      %v1198 = vpop.f32.mrb[0].mxu0
      %v1199 = vadd.f32 0.0, %v1198
      %v1200 = vpop.f32.mrb[0].mxu0
      %v1201 = vpop.f32.mrb[0].mxu0
      %v1202 = vpop.f32.mrb[0].mxu0
      %1203 = vmatprep.mubr.bf16.mxu0 %v1120
      %1204 = vmatmul.mubr.bf16.gmra.mrb[0].mxu0 %v999
      %v1205 = vpop.f32.mrb[0].mxu0
      %v1206 = vadd.f32 0.0, %v1205
      %v1207 = vpop.f32.mrb[0].mxu0
      %v1208 = vpop.f32.mrb[0].mxu0
      %v1209 = vpop.f32.mrb[0].mxu0
      %1210 = vdwg.mxu0
      %v1211 = vadd.f32 %v758, %v1157
      %v1212 = vadd.f32 %v765, %v1164
      %v1213 = vadd.f32 %v772, %v1171
      %v1214 = vadd.f32 %v779, %v1178
      %v1215 = vadd.f32 %v786, %v1185
      %v1216 = vadd.f32 %v793, %v1192
      %v1217 = vadd.f32 %v800, %v1199
      %v1218 = vadd.f32 %v807, %v1206
      %v1219 = vld [vmem:[%s2] sm:$0x1]
      %v1221 = vlaneseq
      %v1222 = vshrl.u32 %v1221, 7
      %v1223 = vsub.s32 0, %v1222
      %v1224 = vrot.slane %v1219, %v1223
      %v1226 = vadd.f32 %v1211, %v1224
      %v1227 = vadd.f32 %v1212, %v1224
      %v1228 = vadd.f32 %v1213, %v1224
      %v1229 = vadd.f32 %v1214, %v1224
      %v1230 = vadd.f32 %v1215, %v1224
      %v1231 = vadd.f32 %v1216, %v1224
      %v1232 = vadd.f32 %v1217, %v1224
      %v1233 = vadd.f32 %v1218, %v1224
      %v1234 = vmax.f32 %v1226, 0.0
      %v1235 = vmax.f32 %v1227, 0.0
      %v1236 = vmax.f32 %v1228, 0.0
      %v1237 = vmax.f32 %v1229, 0.0
      %v1238 = vmax.f32 %v1230, 0.0
      %v1239 = vmax.f32 %v1231, 0.0
      %v1240 = vmax.f32 %v1232, 0.0
      %v1241 = vmax.f32 %v1233, 0.0
      %v1242 = vpack.c.bf16 %v1234, %v1234
      %v1243 = vpack.c.bf16 %v1235, %v1235
      %v1244 = vpack.c.bf16 %v1236, %v1236
      %v1245 = vpack.c.bf16 %v1237, %v1237
      %v1246 = vpack.c.bf16 %v1238, %v1238
      %v1247 = vpack.c.bf16 %v1239, %v1239
      %v1248 = vpack.c.bf16 %v1240, %v1240
      %v1249 = vpack.c.bf16 %v1241, %v1241
      %1250 = vst [vmem:[%s170] sm:$0xf] 0
      %1251 = vst [vmem:[%s170 + $0x4] sm:$0xf] 0
      %1252 = vst [vmem:[%s170 + $0x8] sm:$0xf] 0
      %1253 = vst [vmem:[%s170 + $0xc] sm:$0xf] 0
      %1254 = vst [vmem:[%s170 + $0x10] sm:$0xf] 0
      %1255 = vst [vmem:[%s170 + $0x14] sm:$0xf] 0
      %1256 = vst [vmem:[%s170 + $0x18] sm:$0xf] 0
      %1257 = vst [vmem:[%s170 + $0x1c] sm:$0xf] 0
      %1258 = vst [vmem:[%s170 + $0x20] sm:$0xf] 0
      %1259 = vst [vmem:[%s170 + $0x24] sm:$0xf] 0
      %1260 = vst [vmem:[%s170 + $0x28] sm:$0xf] 0
      %1261 = vst [vmem:[%s170 + $0x2c] sm:$0xf] 0
      %1262 = vst [vmem:[%s170 + $0x30] sm:$0xf] 0
      %1263 = vst [vmem:[%s170 + $0x34] sm:$0xf] 0
      %1264 = vst [vmem:[%s170 + $0x38] sm:$0xf] 0
      %1265 = vst [vmem:[%s170 + $0x3c] sm:$0xf] 0
      %1266 = vst [vmem:[%s170 + $0x40] sm:$0xf] 0
      %1267 = vst [vmem:[%s170 + $0x44] sm:$0xf] 0
      %1268 = vst [vmem:[%s170 + $0x48] sm:$0xf] 0
      %1269 = vst [vmem:[%s170 + $0x4c] sm:$0xf] 0
      %1270 = vst [vmem:[%s170 + $0x50] sm:$0xf] 0
      %1271 = vst [vmem:[%s170 + $0x54] sm:$0xf] 0
      %v1280 = vunpack.c.l.b16 %v1242
      %v1281 = vunpack.c.l.b16 %v1243
      %v1282 = vunpack.c.l.b16 %v1244
      %v1283 = vunpack.c.l.b16 %v1245
      %v1284 = vunpack.c.l.b16 %v1246
      %v1285 = vunpack.c.l.b16 %v1247
      %v1286 = vunpack.c.l.b16 %v1248
      %v1287 = vunpack.c.l.b16 %v1249
      %v1288 = vpack.c.b16 %v1280, %v1280
      %v1289 = vpack.c.b16 %v1281, %v1281
      %v1290 = vpack.c.b16 %v1282, %v1282
      %v1291 = vpack.c.b16 %v1283, %v1283
      %v1292 = vpack.c.b16 %v1284, %v1284
      %v1293 = vpack.c.b16 %v1285, %v1285
      %v1294 = vpack.c.b16 %v1286, %v1286
      %v1295 = vpack.c.b16 %v1287, %v1287
      %v1297 = vshrl.u32 %v1288, 16
      %v1299 = vrot.slane %v1297, 7
      %v1300 = vshll.u32 %v1288, 16
      %v1302 = vor.u32 %v1299, %v1300
      %v1303 = vrot.slane %v1299, 4
      %v1305 = vshrl.u32 %v1289, 16
      %v1307 = vrot.slane %v1305, 7
      %v1308 = vshll.u32 %v1289, 16
      %v1310 = vor.u32 %v1307, %v1308
      %v1311 = vrot.slane %v1307, 4
      %v1313 = vshrl.u32 %v1290, 16
      %v1315 = vrot.slane %v1313, 7
      %v1316 = vshll.u32 %v1290, 16
      %v1318 = vor.u32 %v1315, %v1316
      %v1319 = vrot.slane %v1315, 4
      %v1321 = vshrl.u32 %v1291, 16
      %v1323 = vrot.slane %v1321, 7
      %v1324 = vshll.u32 %v1291, 16
      %v1326 = vor.u32 %v1323, %v1324
      %v1327 = vrot.slane %v1323, 4
      %v1329 = vshrl.u32 %v1292, 16
      %v1331 = vrot.slane %v1329, 7
      %v1332 = vshll.u32 %v1292, 16
      %v1334 = vor.u32 %v1331, %v1332
      %v1335 = vrot.slane %v1331, 4
      %v1337 = vshrl.u32 %v1293, 16
      %v1339 = vrot.slane %v1337, 7
      %v1340 = vshll.u32 %v1293, 16
      %v1342 = vor.u32 %v1339, %v1340
      %v1343 = vrot.slane %v1339, 4
      %v1345 = vshrl.u32 %v1294, 16
      %v1347 = vrot.slane %v1345, 7
      %v1348 = vshll.u32 %v1294, 16
      %v1350 = vor.u32 %v1347, %v1348
      %v1351 = vrot.slane %v1347, 4
      %v1353 = vshrl.u32 %v1295, 16
      %v1355 = vrot.slane %v1353, 7
      %v1356 = vshll.u32 %v1295, 16
      %v1358 = vor.u32 %v1355, %v1356
      %v1359 = vrot.slane %v1355, 4
      %s1376 = scalar_lea.vmem %s170, 8
      %vm1377 = vcmask 1043456
      %vm1378 = vsmask.f32 7938
      %vm1379 = vmand %vm1377, %vm1378
      %v1380 = vld [vmem:[%s1376] sm:$0xf]
      %v1381 = vsel %vm1379, %v1302, %v1380
      %1382 = vst [vmem:[%s1376] sm:$0xf] %v1381
      %vm1383 = vcmask 1040384
      %vm1384 = vsmask.f32 256
      %vm1385 = vmand %vm1383, %vm1384
      %v1386 = vld [vmem:[%s1376 + $0x4] sm:$0x1]
      %v1387 = vsel %vm1385, %v1303, %v1386
      %1388 = vst [vmem:[%s1376 + $0x4] sm:$0x1] %v1387
      %v1389 = vld [vmem:[%s1376 + $0x8] sm:$0xf]
      %v1390 = vsel %vm1379, %v1310, %v1389
      %1391 = vst [vmem:[%s1376 + $0x8] sm:$0xf] %v1390
      %v1392 = vld [vmem:[%s1376 + $0xc] sm:$0x1]
      %v1393 = vsel %vm1385, %v1311, %v1392
      %1394 = vst [vmem:[%s1376 + $0xc] sm:$0x1] %v1393
      %v1395 = vld [vmem:[%s1376 + $0x10] sm:$0xf]
      %v1396 = vsel %vm1379, %v1318, %v1395
      %1397 = vst [vmem:[%s1376 + $0x10] sm:$0xf] %v1396
      %v1398 = vld [vmem:[%s1376 + $0x14] sm:$0x1]
      %v1399 = vsel %vm1385, %v1319, %v1398
      %1400 = vst [vmem:[%s1376 + $0x14] sm:$0x1] %v1399
      %v1401 = vld [vmem:[%s1376 + $0x18] sm:$0xf]
      %v1402 = vsel %vm1379, %v1326, %v1401
      %1403 = vst [vmem:[%s1376 + $0x18] sm:$0xf] %v1402
      %v1404 = vld [vmem:[%s1376 + $0x1c] sm:$0x1]
      %v1405 = vsel %vm1385, %v1327, %v1404
      %1406 = vst [vmem:[%s1376 + $0x1c] sm:$0x1] %v1405
      %v1407 = vld [vmem:[%s1376 + $0x20] sm:$0xf]
      %v1408 = vsel %vm1379, %v1334, %v1407
      %1409 = vst [vmem:[%s1376 + $0x20] sm:$0xf] %v1408
      %v1410 = vld [vmem:[%s1376 + $0x24] sm:$0x1]
      %v1411 = vsel %vm1385, %v1335, %v1410
      %1412 = vst [vmem:[%s1376 + $0x24] sm:$0x1] %v1411
      %v1413 = vld [vmem:[%s1376 + $0x28] sm:$0xf]
      %v1414 = vsel %vm1379, %v1342, %v1413
      %1415 = vst [vmem:[%s1376 + $0x28] sm:$0xf] %v1414
      %v1416 = vld [vmem:[%s1376 + $0x2c] sm:$0x1]
      %v1417 = vsel %vm1385, %v1343, %v1416
      %1418 = vst [vmem:[%s1376 + $0x2c] sm:$0x1] %v1417
      %v1419 = vld [vmem:[%s1376 + $0x30] sm:$0xf]
      %v1420 = vsel %vm1379, %v1350, %v1419
      %1421 = vst [vmem:[%s1376 + $0x30] sm:$0xf] %v1420
      %v1422 = vld [vmem:[%s1376 + $0x34] sm:$0x1]
      %v1423 = vsel %vm1385, %v1351, %v1422
      %1424 = vst [vmem:[%s1376 + $0x34] sm:$0x1] %v1423
      %v1425 = vld [vmem:[%s1376 + $0x38] sm:$0xf]
      %v1426 = vsel %vm1379, %v1358, %v1425
      %1427 = vst [vmem:[%s1376 + $0x38] sm:$0xf] %v1426
      %v1428 = vld [vmem:[%s1376 + $0x3c] sm:$0x1]
      %v1429 = vsel %vm1385, %v1359, %v1428
      %1430 = vst [vmem:[%s1376 + $0x3c] sm:$0x1] %v1429
      %p1431 = scmp.lt.s32.totalorder %s14, 1
      %s1432 = scalar_select %p1431, %s14, 1
      %s1433 = smul.addr %s1432, 22
      %s1434 = smul.addr %s1433, 4
      %s1435 = scalar_lea.vmem %s3, %s1434
      // Predicated region
      $region33: #{netf_forward.6} parent=31 // pred_check
        %p1436 = pneg %p100
      $region34: #{netf_forward.6} parent=31 // pred_check_branch
        %1438 = sbr.rel (%p1436) target = $region36
      $region35: #{netf_forward.6} parent=31 // pred_region
        _
      $region36: #{netf_forward.6} parent=31 // pred_fallthru
        _
    $region32: #{netf_forward.6} parent=5 // pred_fallthru
      _
    %p1439 = scmp.le.s32.totalorder 2, %s9
    // Predicated region
    $region37: #{netf_forward.6} parent=5 // pred_check
      %p1440 = pneg %p1439
    $region38: #{netf_forward.6} parent=5 // pred_check_branch
      %1442 = sbr.rel (%p1440) target = $region40
    $region39: #{netf_forward.6} parent=5 // pred_region
      %s1443 = ssub.s32 %s9, 2
      // Predicated region
      $region41: #{netf_forward.6} parent=39 // pred_check
        %p1444 = pneg %p106
      $region42: #{netf_forward.6} parent=39 // pred_check_branch
        %1446 = sbr.rel (%p1444) target = $region44
      $region43: #{netf_forward.6} parent=39 // pred_region
        %p1447 = scmp.lt.s32.totalorder %s15, 1
        %s1448 = scalar_select %p1447, %s15, 1
        %s1449 = smul.addr %s1448, 22
        %s1450 = smul.addr %s1449, 4
        %s1451 = scalar_lea.vmem %s3, %s1450
      $region44: #{netf_forward.6} parent=39 // pred_fallthru
        _
    $region40: #{netf_forward.6} parent=5 // pred_fallthru
      _
  $region6: #{netf_forward.6} parent=0 // loop_footer
    %s13 = sadd.s32 1, %s9
  $region7: #{netf_forward.6} parent=0 // loop_footer_branch
    %8 = sbr.rel target = $region3
  $region8: #{netf_forward.6} parent=0 // loop_exit
    _

// kernel: netf_forward.7
$region0: #{netf_forward.7}
  #allocation0 [shape = 'u32[]', space=smem, size = 0x4, offset = 0x4, fixed_abs, tag = 'smem constant byte address 0x4 - core index']
  #allocation1 [shape = 'u32[144,128]{1,0:T(1,128)}', space=vmem, size = 0x12000, scoped, tag = 'internal scratch']
  %s0 = inlined_call_operand.vmem [shape: bf16[2,176,128], index: 0, kind: input, shape index: {}]
  %s1 = inlined_call_operand.vmem [shape: bf16[3,384,128], index: 1, kind: input, shape index: {}]
  %s2 = inlined_call_operand.vmem [shape: f32[1,128], index: 2, kind: input, shape index: {}]
  %s3 = inlined_call_operand.hbm [shape: f32[2,8,8,128], index: 3, kind: output, shape index: {}]
  %s4 = sld [smem:[#allocation0]]
  $region45: #{netf_forward.7} parent=0
    _
  %s6 = ssub.s32 1, %s4
  %s7 = scalar_select 0, %s6, %s4
  $region1: #{netf_forward.7} parent=0
    #allocation2 [shape = 'u8[65536]{0}', space=vmem, size = 0x10000, scoped, tag = 'output window, operand 0']
    #allocation3 [shape = 's32[2]{0}', space=sflag, size = 0x8, scoped, tag = 'scoped memory for netf_forward.7']
    %8 = vsyncpa [#allocation3], 0
    %s9 = scalar_lea.sflag [#allocation3], 1
    %10 = vsyncpa %s9, 0
    loop: start=0, step=1, limit=4
    $region2: #{netf_forward.7} parent=1 // loop_pre_header
      _
    $region3: #{netf_forward.7} parent=1 // loop_header
      %s12 = sphi 0, %s16
      %p13 = scmp.ge.s32.totalorder %s12, 4
      %s22 = sphi 0, %s24
      %s25 = sphi 0, %s22
      %s26 = sphi 0, %s25
      %s42 = sphi 0, %s26
      %s46 = sphi 0, %s46
      %s48 = sphi 0, %s46
      %s49 = sphi 0, %s48
      %s63 = sphi 0, %s49
      %s67 = sphi 0, %s67
      %s69 = sphi 0, %s67
      %s70 = sphi 0, %s69
      %s84 = sphi 0, %s70
      %s90 = sphi 0, %s92
      %s93 = sphi 0, %s90
      %s94 = sphi 0, %s93
      %s110 = sphi 0, %s94
    $region4: #{netf_forward.7} parent=1 // loop_header_branch
      %15 = sbr.rel (%p13) target = $region8
    $region5: #{netf_forward.7} parent=1 // loop_body
      %s17 = ssub.s32 %s12, 1
      %s18 = ssub.s32 %s12, 2
      %s19 = sadd.s32 %s12, 1
      %s20 = ssub.s32 %s12, %s19
      %p21 = scmp.eq.s32.totalorder %s20, 0
      %s23 = sadd.s32 %s22, 1
      %s24 = scalar_select %p21, %s22, %s23
      %p27 = pneg %p21
      %p28 = scmp.eq.s32.totalorder %s12, 1
      %p29 = por %p27, %p28
      %p30 = scmp.ne.s32.totalorder %s22, %s25
      %p31 = scmp.eq.s32.totalorder %s12, 0
      %p32 = por %p30, %p31
      %p33 = scmp.ne.s32.totalorder %s22, %s25
      %p34 = scmp.eq.s32.totalorder %s17, 1
      %p35 = por %p33, %p34
      %p36 = scmp.ne.s32.totalorder %s25, %s26
      %p37 = scmp.eq.s32.totalorder %s17, 0
      %p38 = por %p36, %p37
      %p39 = scmp.ne.s32.totalorder %s25, %s26
      %p40 = scmp.eq.s32.totalorder %s18, 1
      %p41 = por %p39, %p40
      %p43 = scmp.ne.s32.totalorder %s26, %s42
      %p44 = scmp.eq.s32.totalorder %s18, 0
      %p45 = por %p43, %p44
      %s47 = sadd.s32 %s46, 1
      %p50 = scmp.eq.s32.totalorder %s12, 1
      %p51 = scmp.ne.s32.totalorder %s46, %s48
      %p52 = scmp.eq.s32.totalorder %s12, 0
      %p53 = por %p51, %p52
      %p54 = scmp.ne.s32.totalorder %s46, %s48
      %p55 = scmp.eq.s32.totalorder %s17, 1
      %p56 = por %p54, %p55
      %p57 = scmp.ne.s32.totalorder %s48, %s49
      %p58 = scmp.eq.s32.totalorder %s17, 0
      %p59 = por %p57, %p58
      %p60 = scmp.ne.s32.totalorder %s48, %s49
      %p61 = scmp.eq.s32.totalorder %s18, 1
      %p62 = por %p60, %p61
      %p64 = scmp.ne.s32.totalorder %s49, %s63
      %p65 = scmp.eq.s32.totalorder %s18, 0
      %p66 = por %p64, %p65
      %s68 = sadd.s32 %s67, 1
      %p71 = scmp.eq.s32.totalorder %s12, 1
      %p72 = scmp.ne.s32.totalorder %s67, %s69
      %p73 = scmp.eq.s32.totalorder %s12, 0
      %p74 = por %p72, %p73
      %p75 = scmp.ne.s32.totalorder %s67, %s69
      %p76 = scmp.eq.s32.totalorder %s17, 1
      %p77 = por %p75, %p76
      %p78 = scmp.ne.s32.totalorder %s69, %s70
      %p79 = scmp.eq.s32.totalorder %s17, 0
      %p80 = por %p78, %p79
      %p81 = scmp.ne.s32.totalorder %s69, %s70
      %p82 = scmp.eq.s32.totalorder %s18, 1
      %p83 = por %p81, %p82
      %p85 = scmp.ne.s32.totalorder %s70, %s84
      %p86 = scmp.eq.s32.totalorder %s18, 0
      %p87 = por %p85, %p86
      %s88 = ssub.s32 %s12, %s19
      %p89 = scmp.eq.s32.totalorder %s88, 0
      %s91 = sadd.s32 %s90, 1
      %s92 = scalar_select %p89, %s90, %s91
      %p95 = pneg %p89
      %p96 = scmp.eq.s32.totalorder %s12, 1
      %p97 = por %p95, %p96
      %p98 = scmp.ne.s32.totalorder %s90, %s93
      %p99 = scmp.eq.s32.totalorder %s12, 0
      %p100 = por %p98, %p99
      %p101 = scmp.ne.s32.totalorder %s90, %s93
      %p102 = scmp.eq.s32.totalorder %s17, 1
      %p103 = por %p101, %p102
      %p104 = scmp.ne.s32.totalorder %s93, %s94
      %p105 = scmp.eq.s32.totalorder %s17, 0
      %p106 = por %p104, %p105
      %p107 = scmp.ne.s32.totalorder %s93, %s94
      %p108 = scmp.eq.s32.totalorder %s18, 1
      %p109 = por %p107, %p108
      %p111 = scmp.ne.s32.totalorder %s94, %s110
      %p112 = scmp.eq.s32.totalorder %s18, 0
      %p113 = por %p111, %p112
      %p114 = scmp.le.s32.totalorder 1, %s12
      %p115 = scmp.lt.s32.totalorder %s12, 3
      %p116 = pnand %p114, %p115
      %p117 = pneg %p116
      // Predicated region
      $region9: #{netf_forward.7} parent=5 // pred_check
        _
      $region10: #{netf_forward.7} parent=5 // pred_check_branch
        %119 = sbr.rel (%p116) target = $region12
      $region11: #{netf_forward.7} parent=5 // pred_region
        %s120 = ssub.s32 %s12, 1
        // Predicated region
        $region13: #{netf_forward.7} parent=11 // pred_check
          %p121 = pneg %p59
        $region14: #{netf_forward.7} parent=11 // pred_check_branch
          %123 = sbr.rel (%p121) target = $region16
        $region15: #{netf_forward.7} parent=11 // pred_region
          _
        $region16: #{netf_forward.7} parent=11 // pred_fallthru
          _
        // Predicated region
        $region17: #{netf_forward.7} parent=11 // pred_check
          %p124 = pneg %p80
        $region18: #{netf_forward.7} parent=11 // pred_check_branch
          %126 = sbr.rel (%p124) target = $region20
        $region19: #{netf_forward.7} parent=11 // pred_region
          _
        $region20: #{netf_forward.7} parent=11 // pred_fallthru
          _
      $region12: #{netf_forward.7} parent=5 // pred_fallthru
        _
      %p127 = scmp.lt.s32.totalorder %s12, 2
      // Predicated region
      $region21: #{netf_forward.7} parent=5 // pred_check
        %p128 = pneg %p127
      $region22: #{netf_forward.7} parent=5 // pred_check_branch
        %130 = sbr.rel (%p128) target = $region24
      $region23: #{netf_forward.7} parent=5 // pred_region
        // Predicated region
        $region25: #{netf_forward.7} parent=23 // pred_check
          %p131 = pneg %p32
        $region26: #{netf_forward.7} parent=23 // pred_check_branch
          %133 = sbr.rel (%p131) target = $region28
        $region27: #{netf_forward.7} parent=23 // pred_region
          %p134 = scmp.lt.s32.totalorder %s12, 1
          %s135 = scalar_select %p134, %s12, 1
          %s136 = smul.addr %s135, 22
          %s137 = smul.addr %s136, 4
          %s138 = scalar_lea.vmem %s0, %s137
        $region28: #{netf_forward.7} parent=23 // pred_fallthru
          _
      $region24: #{netf_forward.7} parent=5 // pred_fallthru
        _
      %p139 = scmp.le.s32.totalorder 1, %s12
      %p140 = scmp.lt.s32.totalorder %s12, 3
      %p141 = pnand %p139, %p140
      %p142 = pneg %p141
      // Predicated region
      $region29: #{netf_forward.7} parent=5 // pred_check
        _
      $region30: #{netf_forward.7} parent=5 // pred_check_branch
        %144 = sbr.rel (%p141) target = $region32
      $region31: #{netf_forward.7} parent=5 // pred_region
        %s145 = ssub.s32 %s12, 1
        %p146 = scmp.lt.s32.totalorder %s17, 1
        %s147 = scalar_select %p146, %s17, 1
        %s148 = smul.addr %s147, 22
        %s149 = smul.addr %s148, 4
        %s150 = scalar_lea.vmem %s0, %s149
        %p151 = pneg %p38
        %p152 = pneg %p35
        %p153 = pneg %p59
        %p154 = pneg %p56
        %p155 = pneg %p80
        %p156 = pneg %p77
        %p157 = pneg %p106
        %p158 = pneg %p103
        %s159 = sand.u32 %s93, 1
        %s160 = scalar_lea.sflag [#allocation3], %s159
        %s161 = sand.u32 %s93, 1
        %s162 = smul.addr %s161, 64
        %s163 = scalar_lea.vmem [#allocation2], %s162
        %p164 = scmp.lt.s32.totalorder %s17, 1
        %s165 = scalar_select %p164, %s17, 1
        %s166 = smul.addr %s165, 22
        %s167 = smul.addr %s166, 4
        %s168 = scalar_lea.vmem %s0, %s167
        %v170 = vld [vmem:[%s168] sm:$0xf]
        %v171 = vld [vmem:[%s168 + $0x4] sm:$0xf]
        %v172 = vld [vmem:[%s168 + $0x8] sm:$0xf]
        %v173 = vld [vmem:[%s168 + $0xc] sm:$0xf]
        %v174 = vld [vmem:[%s168 + $0x10] sm:$0xf]
        %v175 = vld [vmem:[%s168 + $0x14] sm:$0xf]
        %v176 = vld [vmem:[%s168 + $0x18] sm:$0xf]
        %v177 = vld [vmem:[%s168 + $0x1c] sm:$0xf]
        %v178 = vld [vmem:[%s168 + $0x20] sm:$0xf]
        %v179 = vld [vmem:[%s168 + $0x24] sm:$0xf]
        %v180 = vld [vmem:[%s168 + $0x28] sm:$0xf]
        %v181 = vld [vmem:[%s168 + $0x2c] sm:$0xf]
        %v182 = vld [vmem:[%s168 + $0x30] sm:$0xf]
        %v183 = vld [vmem:[%s168 + $0x34] sm:$0xf]
        %v184 = vld [vmem:[%s168 + $0x38] sm:$0xf]
        %v185 = vld [vmem:[%s168 + $0x3c] sm:$0xf]
        %v186 = vld [vmem:[%s168 + $0x40] sm:$0x1]
        %v187 = vld [vmem:[%s168] sm:$0xe]
        %v204 = vunpack.c.l.b16 %v170
        %v205 = vunpack.c.l.b16 %v171
        %v206 = vunpack.c.l.b16 %v172
        %v207 = vunpack.c.l.b16 %v173
        %v208 = vunpack.c.l.b16 %v174
        %v209 = vunpack.c.l.b16 %v175
        %v210 = vunpack.c.l.b16 %v176
        %v211 = vunpack.c.l.b16 %v177
        %v212 = vunpack.c.l.b16 %v178
        %v213 = vunpack.c.l.b16 %v179
        %v214 = vunpack.c.l.b16 %v180
        %v215 = vunpack.c.l.b16 %v181
        %v216 = vunpack.c.l.b16 %v182
        %v217 = vunpack.c.l.b16 %v183
        %v218 = vunpack.c.l.b16 %v184
        %v219 = vunpack.c.l.b16 %v185
        %v220 = vpack.c.b16 %v205, %v204
        %v221 = vpack.c.b16 %v207, %v206
        %v222 = vpack.c.b16 %v209, %v208
        %v223 = vpack.c.b16 %v211, %v210
        %v224 = vpack.c.b16 %v213, %v212
        %v225 = vpack.c.b16 %v215, %v214
        %v226 = vpack.c.b16 %v217, %v216
        %v227 = vpack.c.b16 %v219, %v218
        %v237 = vunpack.c.l.b16 %v186
        %v238 = vpack.c.b16 %v237, %v237
        %vm239 = vsmask.f32 7424
        %v241 = vshrl.u32 %v220, 16
        %v243 = vshll.u32 %v220, 16
        %v245 = vrot.slane %v243, 1
        %v246 = vor.u32 %v241, %v245
        %v248 = vshll.u32 %v221, 16
        %v250 = vrot.slane %v248, 1
        %v251 = vsel %vm239, %v246, %v250
        %v252 = vshrl.u32 %v221, 16
        %v254 = vor.u32 %v252, %v250
        %v256 = vshll.u32 %v222, 16
        %v258 = vrot.slane %v256, 1
        %v259 = vsel %vm239, %v254, %v258
        %v260 = vshrl.u32 %v222, 16
        %v262 = vor.u32 %v260, %v258
        %v264 = vshll.u32 %v223, 16
        %v266 = vrot.slane %v264, 1
        %v267 = vsel %vm239, %v262, %v266
        %v268 = vshrl.u32 %v223, 16
        %v270 = vor.u32 %v268, %v266
        %v272 = vshll.u32 %v224, 16
        %v274 = vrot.slane %v272, 1
        %v275 = vsel %vm239, %v270, %v274
        %v276 = vshrl.u32 %v224, 16
        %v278 = vor.u32 %v276, %v274
        %v280 = vshll.u32 %v225, 16
        %v282 = vrot.slane %v280, 1
        %v283 = vsel %vm239, %v278, %v282
        %v284 = vshrl.u32 %v225, 16
        %v286 = vor.u32 %v284, %v282
        %v288 = vshll.u32 %v226, 16
        %v290 = vrot.slane %v288, 1
        %v291 = vsel %vm239, %v286, %v290
        %v292 = vshrl.u32 %v226, 16
        %v294 = vor.u32 %v292, %v290
        %v296 = vshll.u32 %v227, 16
        %v298 = vrot.slane %v296, 1
        %v299 = vsel %vm239, %v294, %v298
        %v300 = vshrl.u32 %v227, 16
        %v302 = vor.u32 %v300, %v298
        %v304 = vshll.u32 %v238, 16
        %v306 = vrot.slane %v304, 1
        %v307 = vsel %vm239, %v302, %v306
        %v317 = vunpack.c.l.b16 %v187
        %v318 = vpack.c.b16 %v205, %v317
        %vm319 = vcmask 1046528
        %v320 = vrot.slane %v318, 1
        %v321 = vrot.slane %v221, 1
        %v322 = vsel %vm319, %v320, %v321
        %v323 = vrot.slane %v222, 1
        %v324 = vsel %vm319, %v321, %v323
        %v325 = vrot.slane %v223, 1
        %v326 = vsel %vm319, %v323, %v325
        %v327 = vrot.slane %v224, 1
        %v328 = vsel %vm319, %v325, %v327
        %v329 = vrot.slane %v225, 1
        %v330 = vsel %vm319, %v327, %v329
        %v331 = vrot.slane %v226, 1
        %v332 = vsel %vm319, %v329, %v331
        %v333 = vrot.slane %v227, 1
        %v334 = vsel %vm319, %v331, %v333
        %v335 = vrot.slane %v238, 1
        %v336 = vsel %vm319, %v333, %v335
        %v345 = vld [vmem:[%s1] sm:$0xf]
        %v346 = vld [vmem:[%s1 + $0x4] sm:$0xf]
        %v347 = vld [vmem:[%s1 + $0x8] sm:$0xf]
        %v348 = vld [vmem:[%s1 + $0xc] sm:$0xf]
        %v349 = vld [vmem:[%s1 + $0x10] sm:$0xf]
        %v350 = vld [vmem:[%s1 + $0x14] sm:$0xf]
        %v351 = vld [vmem:[%s1 + $0x18] sm:$0xf]
        %v352 = vld [vmem:[%s1 + $0x1c] sm:$0xf]
        %v353 = vld [vmem:[%s1 + $0x20] sm:$0xf]
        %v354 = vld [vmem:[%s1 + $0x24] sm:$0xf]
        %v355 = vld [vmem:[%s1 + $0x28] sm:$0xf]
        %v356 = vld [vmem:[%s1 + $0x2c] sm:$0xf]
        %v357 = vld [vmem:[%s1 + $0x30] sm:$0xf]
        %v358 = vld [vmem:[%s1 + $0x34] sm:$0xf]
        %v359 = vld [vmem:[%s1 + $0x38] sm:$0xf]
        %v360 = vld [vmem:[%s1 + $0x3c] sm:$0xf]
        %v361 = vld [vmem:[%s1 + $0x40] sm:$0xf]
        %v362 = vld [vmem:[%s1 + $0x44] sm:$0xf]
        %v363 = vld [vmem:[%s1 + $0x48] sm:$0xf]
        %v364 = vld [vmem:[%s1 + $0x4c] sm:$0xf]
        %v365 = vld [vmem:[%s1 + $0x50] sm:$0xf]
        %v366 = vld [vmem:[%s1 + $0x54] sm:$0xf]
        %v367 = vld [vmem:[%s1 + $0x58] sm:$0xf]
        %v368 = vld [vmem:[%s1 + $0x5c] sm:$0xf]
        %v369 = vld [vmem:[%s1 + $0x60] sm:$0xf]
        %v370 = vld [vmem:[%s1 + $0x64] sm:$0xf]
        %v371 = vld [vmem:[%s1 + $0x68] sm:$0xf]
        %v372 = vld [vmem:[%s1 + $0x6c] sm:$0xf]
        %v373 = vld [vmem:[%s1 + $0x70] sm:$0xf]
        %v374 = vld [vmem:[%s1 + $0x74] sm:$0xf]
        %v375 = vld [vmem:[%s1 + $0x78] sm:$0xf]
        %v376 = vld [vmem:[%s1 + $0x7c] sm:$0xf]
        %v377 = vld [vmem:[%s1 + $0x80] sm:$0xf]
        %v378 = vld [vmem:[%s1 + $0x84] sm:$0xf]
        %v379 = vld [vmem:[%s1 + $0x88] sm:$0xf]
        %v380 = vld [vmem:[%s1 + $0x8c] sm:$0xf]
        %v381 = vld [vmem:[%s1 + $0x90] sm:$0xf]
        %v382 = vld [vmem:[%s1 + $0x94] sm:$0xf]
        %v383 = vld [vmem:[%s1 + $0x98] sm:$0xf]
        %v384 = vld [vmem:[%s1 + $0x9c] sm:$0xf]
        %v385 = vld [vmem:[%s1 + $0xa0] sm:$0xf]
        %v386 = vld [vmem:[%s1 + $0xa4] sm:$0xf]
        %v387 = vld [vmem:[%s1 + $0xa8] sm:$0xf]
        %v388 = vld [vmem:[%s1 + $0xac] sm:$0xf]
        %v389 = vld [vmem:[%s1 + $0xb0] sm:$0xf]
        %v390 = vld [vmem:[%s1 + $0xb4] sm:$0xf]
        %v391 = vld [vmem:[%s1 + $0xb8] sm:$0xf]
        %v392 = vld [vmem:[%s1 + $0xbc] sm:$0xf]
        %v393 = vld [vmem:[%s168 + $0x40] sm:$0xf]
        %v394 = vld [vmem:[%s168 + $0x44] sm:$0xf]
        %v395 = vld [vmem:[%s168 + $0x48] sm:$0x1]
        %v396 = vld [vmem:[%s168 + $0x8] sm:$0xe]
        %v399 = vunpack.c.l.b16 %v393
        %v400 = vunpack.c.l.b16 %v394
        %v401 = vpack.c.b16 %v400, %v399
        %v404 = vunpack.c.l.b16 %v395
        %v405 = vpack.c.b16 %v404, %v404
        %v407 = vshll.u32 %v401, 16
        %v409 = vrot.slane %v407, 1
        %v410 = vsel %vm239, %v302, %v409
        %v411 = vshrl.u32 %v401, 16
        %v413 = vor.u32 %v411, %v409
        %v415 = vshll.u32 %v405, 16
        %v417 = vrot.slane %v415, 1
        %v418 = vsel %vm239, %v413, %v417
        %v422 = vunpack.c.l.b16 %v396
        %v423 = vpack.c.b16 %v207, %v422
        %v424 = vrot.slane %v423, 1
        %v425 = vsel %vm319, %v424, %v323
        %v426 = vrot.slane %v401, 1
        %v427 = vsel %vm319, %v333, %v426
        %v428 = vrot.slane %v405, 1
        %v429 = vsel %vm319, %v426, %v428
        %s433 = scalar_lea.vmem %s1, 192
        %v434 = vld [vmem:[%s433] sm:$0xf]
        %v435 = vld [vmem:[%s433 + $0x4] sm:$0xf]
        %v436 = vld [vmem:[%s433 + $0x8] sm:$0xf]
        %v437 = vld [vmem:[%s433 + $0xc] sm:$0xf]
        %v438 = vld [vmem:[%s433 + $0x10] sm:$0xf]
        %v439 = vld [vmem:[%s433 + $0x14] sm:$0xf]
        %v440 = vld [vmem:[%s433 + $0x18] sm:$0xf]
        %v441 = vld [vmem:[%s433 + $0x1c] sm:$0xf]
        %v442 = vld [vmem:[%s433 + $0x20] sm:$0xf]
        %v443 = vld [vmem:[%s433 + $0x24] sm:$0xf]
        %v444 = vld [vmem:[%s433 + $0x28] sm:$0xf]
        %v445 = vld [vmem:[%s433 + $0x2c] sm:$0xf]
        %v446 = vld [vmem:[%s433 + $0x30] sm:$0xf]
        %v447 = vld [vmem:[%s433 + $0x34] sm:$0xf]
        %v448 = vld [vmem:[%s433 + $0x38] sm:$0xf]
        %v449 = vld [vmem:[%s433 + $0x3c] sm:$0xf]
        %v450 = vld [vmem:[%s433 + $0x40] sm:$0xf]
        %v451 = vld [vmem:[%s433 + $0x44] sm:$0xf]
        %v452 = vld [vmem:[%s433 + $0x48] sm:$0xf]
        %v453 = vld [vmem:[%s433 + $0x4c] sm:$0xf]
        %v454 = vld [vmem:[%s433 + $0x50] sm:$0xf]
        %v455 = vld [vmem:[%s433 + $0x54] sm:$0xf]
        %v456 = vld [vmem:[%s433 + $0x58] sm:$0xf]
        %v457 = vld [vmem:[%s433 + $0x5c] sm:$0xf]
        %v458 = vld [vmem:[%s433 + $0x60] sm:$0xf]
        %v459 = vld [vmem:[%s433 + $0x64] sm:$0xf]
        %v460 = vld [vmem:[%s433 + $0x68] sm:$0xf]
        %v461 = vld [vmem:[%s433 + $0x6c] sm:$0xf]
        %v462 = vld [vmem:[%s433 + $0x70] sm:$0xf]
        %v463 = vld [vmem:[%s433 + $0x74] sm:$0xf]
        %v464 = vld [vmem:[%s433 + $0x78] sm:$0xf]
        %v465 = vld [vmem:[%s433 + $0x7c] sm:$0xf]
        %v466 = vld [vmem:[%s433 + $0x80] sm:$0xf]
        %v467 = vld [vmem:[%s433 + $0x84] sm:$0xf]
        %v468 = vld [vmem:[%s433 + $0x88] sm:$0xf]
        %v469 = vld [vmem:[%s433 + $0x8c] sm:$0xf]
        %v470 = vld [vmem:[%s433 + $0x90] sm:$0xf]
        %v471 = vld [vmem:[%s433 + $0x94] sm:$0xf]
        %v472 = vld [vmem:[%s433 + $0x98] sm:$0xf]
        %v473 = vld [vmem:[%s433 + $0x9c] sm:$0xf]
        %v474 = vld [vmem:[%s433 + $0xa0] sm:$0xf]
        %v475 = vld [vmem:[%s433 + $0xa4] sm:$0xf]
        %v476 = vld [vmem:[%s433 + $0xa8] sm:$0xf]
        %v477 = vld [vmem:[%s433 + $0xac] sm:$0xf]
        %v478 = vld [vmem:[%s433 + $0xb0] sm:$0xf]
        %v479 = vld [vmem:[%s433 + $0xb4] sm:$0xf]
        %v480 = vld [vmem:[%s433 + $0xb8] sm:$0xf]
        %v481 = vld [vmem:[%s433 + $0xbc] sm:$0xf]
        %v530 = vunpack.c.l.b16 %v434
        %v531 = vunpack.c.l.b16 %v435
        %v532 = vunpack.c.l.b16 %v436
        %v533 = vunpack.c.l.b16 %v437
        %v534 = vunpack.c.l.b16 %v438
        %v535 = vunpack.c.l.b16 %v439
        %v536 = vunpack.c.l.b16 %v440
        %v537 = vunpack.c.l.b16 %v441
        %v538 = vunpack.c.l.b16 %v442
        %v539 = vunpack.c.l.b16 %v443
        %v540 = vunpack.c.l.b16 %v444
        %v541 = vunpack.c.l.b16 %v445
        %v542 = vunpack.c.l.b16 %v446
        %v543 = vunpack.c.l.b16 %v447
        %v544 = vunpack.c.l.b16 %v448
        %v545 = vunpack.c.l.b16 %v449
        %v546 = vunpack.c.l.b16 %v450
        %v547 = vunpack.c.l.b16 %v451
        %v548 = vunpack.c.l.b16 %v452
        %v549 = vunpack.c.l.b16 %v453
        %v550 = vunpack.c.l.b16 %v454
        %v551 = vunpack.c.l.b16 %v455
        %v552 = vunpack.c.l.b16 %v456
        %v553 = vunpack.c.l.b16 %v457
        %v554 = vunpack.c.l.b16 %v458
        %v555 = vunpack.c.l.b16 %v459
        %v556 = vunpack.c.l.b16 %v460
        %v557 = vunpack.c.l.b16 %v461
        %v558 = vunpack.c.l.b16 %v462
        %v559 = vunpack.c.l.b16 %v463
        %v560 = vunpack.c.l.b16 %v464
        %v561 = vunpack.c.l.b16 %v465
        %v562 = vunpack.c.l.b16 %v466
        %v563 = vunpack.c.l.b16 %v467
        %v564 = vunpack.c.l.b16 %v468
        %v565 = vunpack.c.l.b16 %v469
        %v566 = vunpack.c.l.b16 %v470
        %v567 = vunpack.c.l.b16 %v471
        %v568 = vunpack.c.l.b16 %v472
        %v569 = vunpack.c.l.b16 %v473
        %v570 = vunpack.c.l.b16 %v474
        %v571 = vunpack.c.l.b16 %v475
        %v572 = vunpack.c.l.b16 %v476
        %v573 = vunpack.c.l.b16 %v477
        %v574 = vunpack.c.l.b16 %v478
        %v575 = vunpack.c.l.b16 %v479
        %v576 = vunpack.c.l.b16 %v480
        %v577 = vunpack.c.l.b16 %v481
        %v578 = vpack.c.b16 %v531, %v530
        %v579 = vpack.c.b16 %v533, %v532
        %v580 = vpack.c.b16 %v535, %v534
        %v581 = vpack.c.b16 %v537, %v536
        %v582 = vpack.c.b16 %v539, %v538
        %v583 = vpack.c.b16 %v541, %v540
        %v584 = vpack.c.b16 %v543, %v542
        %v585 = vpack.c.b16 %v545, %v544
        %v586 = vpack.c.b16 %v547, %v546
        %v587 = vpack.c.b16 %v549, %v548
        %v588 = vpack.c.b16 %v551, %v550
        %v589 = vpack.c.b16 %v553, %v552
        %v590 = vpack.c.b16 %v555, %v554
        %v591 = vpack.c.b16 %v557, %v556
        %v592 = vpack.c.b16 %v559, %v558
        %v593 = vpack.c.b16 %v561, %v560
        %v594 = vpack.c.b16 %v563, %v562
        %v595 = vpack.c.b16 %v565, %v564
        %v596 = vpack.c.b16 %v567, %v566
        %v597 = vpack.c.b16 %v569, %v568
        %v598 = vpack.c.b16 %v571, %v570
        %v599 = vpack.c.b16 %v573, %v572
        %v600 = vpack.c.b16 %v575, %v574
        %v601 = vpack.c.b16 %v577, %v576
        %626 = vmatprep.subr.bf16.mxu0 0
        %627 = vmatpush1.bf16.msra.mxu0 %v578
        %628 = vmatprep.subr.bf16.mxu0 0
        %629 = vmatpush1.bf16.msra.mxu0 %v579
        %630 = vmatprep.subr.bf16.mxu0 0
        %631 = vmatpush1.bf16.msra.mxu0 %v580
        %632 = vmatprep.subr.bf16.mxu0 0
        %633 = vmatpush1.bf16.msra.mxu0 %v581
        %634 = vmatprep.subr.bf16.mxu0 0
        %635 = vmatpush1.bf16.msra.mxu0 %v582
        %636 = vmatprep.subr.bf16.mxu0 0
        %637 = vmatpush1.bf16.msra.mxu0 %v583
        %638 = vmatprep.subr.bf16.mxu0 0
        %639 = vmatpush1.bf16.msra.mxu0 %v584
        %640 = vmatprep.subr.bf16.mxu0 0
        %641 = vmatpush1.bf16.msra.mxu0 %v585
        %642 = vmatprep.subr.bf16.mxu0 0
        %643 = vmatpush1.bf16.msra.mxu0 %v586
        %644 = vmatprep.subr.bf16.mxu0 0
        %645 = vmatpush1.bf16.msra.mxu0 %v587
        %646 = vmatprep.subr.bf16.mxu0 0
        %647 = vmatpush1.bf16.msra.mxu0 %v588
        %648 = vmatprep.subr.bf16.mxu0 0
        %649 = vmatpush1.bf16.msra.mxu0 %v589
        %650 = vmatprep.subr.bf16.mxu0 0
        %651 = vmatpush1.bf16.msra.mxu0 %v590
        %652 = vmatprep.subr.bf16.mxu0 0
        %653 = vmatpush1.bf16.msra.mxu0 %v591
        %654 = vmatprep.subr.bf16.mxu0 0
        %655 = vmatpush1.bf16.msra.mxu0 %v592
        %656 = vmatprep.subr.bf16.mxu0 0
        %657 = vmatpush1.bf16.msra.mxu0 %v593
        %658 = vmatprep.mubr.bf16.mxu0 %v259
        %659 = vmatmul.mubr.bf16.gmra.mrb[0].mxu0 %v221
        %v660 = vpop.f32.mrb[0].mxu0
        %v661 = vadd.f32 0.0, %v660
        %v662 = vpop.f32.mrb[0].mxu0
        %v663 = vpop.f32.mrb[0].mxu0
        %v664 = vpop.f32.mrb[0].mxu0
        %665 = vmatprep.mubr.bf16.mxu0 %v267
        %666 = vmatmul.mubr.bf16.gmra.mrb[0].mxu0 %v222
        %v667 = vpop.f32.mrb[0].mxu0
        %v668 = vadd.f32 0.0, %v667
        %v669 = vpop.f32.mrb[0].mxu0
        %v670 = vpop.f32.mrb[0].mxu0
        %v671 = vpop.f32.mrb[0].mxu0
        %672 = vmatprep.mubr.bf16.mxu0 %v275
        %673 = vmatmul.mubr.bf16.gmra.mrb[0].mxu0 %v223
        %v674 = vpop.f32.mrb[0].mxu0
        %v675 = vadd.f32 0.0, %v674
        %v676 = vpop.f32.mrb[0].mxu0
        %v677 = vpop.f32.mrb[0].mxu0
        %v678 = vpop.f32.mrb[0].mxu0
        %679 = vmatprep.mubr.bf16.mxu0 %v283
        %680 = vmatmul.mubr.bf16.gmra.mrb[0].mxu0 %v224
        %v681 = vpop.f32.mrb[0].mxu0
        %v682 = vadd.f32 0.0, %v681
        %v683 = vpop.f32.mrb[0].mxu0
        %v684 = vpop.f32.mrb[0].mxu0
        %v685 = vpop.f32.mrb[0].mxu0
        %686 = vmatprep.mubr.bf16.mxu0 %v291
        %687 = vmatmul.mubr.bf16.gmra.mrb[0].mxu0 %v225
        %v688 = vpop.f32.mrb[0].mxu0
        %v689 = vadd.f32 0.0, %v688
        %v690 = vpop.f32.mrb[0].mxu0
        %v691 = vpop.f32.mrb[0].mxu0
        %v692 = vpop.f32.mrb[0].mxu0
        %693 = vmatprep.mubr.bf16.mxu0 %v299
        %694 = vmatmul.mubr.bf16.gmra.mrb[0].mxu0 %v226
        %v695 = vpop.f32.mrb[0].mxu0
        %v696 = vadd.f32 0.0, %v695
        %v697 = vpop.f32.mrb[0].mxu0
        %v698 = vpop.f32.mrb[0].mxu0
        %v699 = vpop.f32.mrb[0].mxu0
        %700 = vmatprep.mubr.bf16.mxu0 %v410
        %701 = vmatmul.mubr.bf16.gmra.mrb[0].mxu0 %v227
        %v702 = vpop.f32.mrb[0].mxu0
        %v703 = vadd.f32 0.0, %v702
        %v704 = vpop.f32.mrb[0].mxu0
        %v705 = vpop.f32.mrb[0].mxu0
        %v706 = vpop.f32.mrb[0].mxu0
        %707 = vmatprep.mubr.bf16.mxu0 %v418
        %708 = vmatmul.mubr.bf16.gmra.mrb[0].mxu0 %v401
        %v709 = vpop.f32.mrb[0].mxu0
        %v710 = vadd.f32 0.0, %v709
        %v711 = vpop.f32.mrb[0].mxu0
        %v712 = vpop.f32.mrb[0].mxu0
        %v713 = vpop.f32.mrb[0].mxu0
        %714 = vdwg.mxu0
        %715 = vmatprep.subr.bf16.mxu0 0
        %716 = vmatpush1.bf16.msra.mxu0 %v594
        %717 = vmatprep.subr.bf16.mxu0 0
        %718 = vmatpush1.bf16.msra.mxu0 %v595
        %719 = vmatprep.subr.bf16.mxu0 0
        %720 = vmatpush1.bf16.msra.mxu0 %v596
        %721 = vmatprep.subr.bf16.mxu0 0
        %722 = vmatpush1.bf16.msra.mxu0 %v597
        %723 = vmatprep.subr.bf16.mxu0 0
        %724 = vmatpush1.bf16.msra.mxu0 %v598
        %725 = vmatprep.subr.bf16.mxu0 0
        %726 = vmatpush1.bf16.msra.mxu0 %v599
        %727 = vmatprep.subr.bf16.mxu0 0
        %728 = vmatpush1.bf16.msra.mxu0 %v600
        %729 = vmatprep.subr.bf16.mxu0 0
        %730 = vmatpush1.bf16.msra.mxu0 %v601
        %731 = vmatprep.subr.bf16.mxu0 0
        %732 = vmatpush1.bf16.msra.mxu0 0
        %733 = vmatprep.subr.bf16.mxu0 0
        %734 = vmatpush1.bf16.msra.mxu0 0
        %735 = vmatprep.subr.bf16.mxu0 0
        %736 = vmatpush1.bf16.msra.mxu0 0
        %737 = vmatprep.subr.bf16.mxu0 0
        %738 = vmatpush1.bf16.msra.mxu0 0
        %739 = vmatprep.subr.bf16.mxu0 0
        %740 = vmatpush1.bf16.msra.mxu0 0
        %741 = vmatprep.subr.bf16.mxu0 0
        %742 = vmatpush1.bf16.msra.mxu0 0
        %743 = vmatprep.subr.bf16.mxu0 0
        %744 = vmatpush1.bf16.msra.mxu0 0
        %745 = vmatprep.subr.bf16.mxu0 0
        %746 = vmatpush1.bf16.msra.mxu0 0
        %747 = vmatprep.mubr.bf16.mxu0 0
        %748 = vmatmul.mubr.bf16.gmra.mrb[0].mxu0 %v425
        %v749 = vpop.f32.mrb[0].mxu0
        %v750 = vadd.f32 %v661, %v749
        %v751 = vpop.f32.mrb[0].mxu0
        %v752 = vpop.f32.mrb[0].mxu0
        %v753 = vpop.f32.mrb[0].mxu0
        %754 = vmatprep.mubr.bf16.mxu0 0
        %755 = vmatmul.mubr.bf16.gmra.mrb[0].mxu0 %v326
        %v756 = vpop.f32.mrb[0].mxu0
        %v757 = vadd.f32 %v668, %v756
        %v758 = vpop.f32.mrb[0].mxu0
        %v759 = vpop.f32.mrb[0].mxu0
        %v760 = vpop.f32.mrb[0].mxu0
        %761 = vmatprep.mubr.bf16.mxu0 0
        %762 = vmatmul.mubr.bf16.gmra.mrb[0].mxu0 %v328
        %v763 = vpop.f32.mrb[0].mxu0
        %v764 = vadd.f32 %v675, %v763
        %v765 = vpop.f32.mrb[0].mxu0
        %v766 = vpop.f32.mrb[0].mxu0
        %v767 = vpop.f32.mrb[0].mxu0
        %768 = vmatprep.mubr.bf16.mxu0 0
        %769 = vmatmul.mubr.bf16.gmra.mrb[0].mxu0 %v330
        %v770 = vpop.f32.mrb[0].mxu0
        %v771 = vadd.f32 %v682, %v770
        %v772 = vpop.f32.mrb[0].mxu0
        %v773 = vpop.f32.mrb[0].mxu0
        %v774 = vpop.f32.mrb[0].mxu0
        %775 = vmatprep.mubr.bf16.mxu0 0
        %776 = vmatmul.mubr.bf16.gmra.mrb[0].mxu0 %v332
        %v777 = vpop.f32.mrb[0].mxu0
        %v778 = vadd.f32 %v689, %v777
        %v779 = vpop.f32.mrb[0].mxu0
        %v780 = vpop.f32.mrb[0].mxu0
        %v781 = vpop.f32.mrb[0].mxu0
        %782 = vmatprep.mubr.bf16.mxu0 0
        %783 = vmatmul.mubr.bf16.gmra.mrb[0].mxu0 %v334
        %v784 = vpop.f32.mrb[0].mxu0
        %v785 = vadd.f32 %v696, %v784
        %v786 = vpop.f32.mrb[0].mxu0
        %v787 = vpop.f32.mrb[0].mxu0
        %v788 = vpop.f32.mrb[0].mxu0
        %789 = vmatprep.mubr.bf16.mxu0 0
        %790 = vmatmul.mubr.bf16.gmra.mrb[0].mxu0 %v427
        %v791 = vpop.f32.mrb[0].mxu0
        %v792 = vadd.f32 %v703, %v791
        %v793 = vpop.f32.mrb[0].mxu0
        %v794 = vpop.f32.mrb[0].mxu0
        %v795 = vpop.f32.mrb[0].mxu0
        %796 = vmatprep.mubr.bf16.mxu0 0
        %797 = vmatmul.mubr.bf16.gmra.mrb[0].mxu0 %v429
        %v798 = vpop.f32.mrb[0].mxu0
        %v799 = vadd.f32 %v710, %v798
        %v800 = vpop.f32.mrb[0].mxu0
        %v801 = vpop.f32.mrb[0].mxu0
        %v802 = vpop.f32.mrb[0].mxu0
        %803 = vdwg.mxu0
        %v852 = vunpack.c.l.b16 %v345
        %v853 = vunpack.c.l.b16 %v346
        %v854 = vunpack.c.l.b16 %v347
        %v855 = vunpack.c.l.b16 %v348
        %v856 = vunpack.c.l.b16 %v349
        %v857 = vunpack.c.l.b16 %v350
        %v858 = vunpack.c.l.b16 %v351
        %v859 = vunpack.c.l.b16 %v352
        %v860 = vunpack.c.l.b16 %v353
        %v861 = vunpack.c.l.b16 %v354
        %v862 = vunpack.c.l.b16 %v355
        %v863 = vunpack.c.l.b16 %v356
        %v864 = vunpack.c.l.b16 %v357
        %v865 = vunpack.c.l.b16 %v358
        %v866 = vunpack.c.l.b16 %v359
        %v867 = vunpack.c.l.b16 %v360
        %v868 = vunpack.c.l.b16 %v361
        %v869 = vunpack.c.l.b16 %v362
        %v870 = vunpack.c.l.b16 %v363
        %v871 = vunpack.c.l.b16 %v364
        %v872 = vunpack.c.l.b16 %v365
        %v873 = vunpack.c.l.b16 %v366
        %v874 = vunpack.c.l.b16 %v367
        %v875 = vunpack.c.l.b16 %v368
        %v876 = vunpack.c.l.b16 %v369
        %v877 = vunpack.c.l.b16 %v370
        %v878 = vunpack.c.l.b16 %v371
        %v879 = vunpack.c.l.b16 %v372
        %v880 = vunpack.c.l.b16 %v373
        %v881 = vunpack.c.l.b16 %v374
        %v882 = vunpack.c.l.b16 %v375
        %v883 = vunpack.c.l.b16 %v376
        %v884 = vunpack.c.l.b16 %v377
        %v885 = vunpack.c.l.b16 %v378
        %v886 = vunpack.c.l.b16 %v379
        %v887 = vunpack.c.l.b16 %v380
        %v888 = vunpack.c.l.b16 %v381
        %v889 = vunpack.c.l.b16 %v382
        %v890 = vunpack.c.l.b16 %v383
        %v891 = vunpack.c.l.b16 %v384
        %v892 = vunpack.c.l.b16 %v385
        %v893 = vunpack.c.l.b16 %v386
        %v894 = vunpack.c.l.b16 %v387
        %v895 = vunpack.c.l.b16 %v388
        %v896 = vunpack.c.l.b16 %v389
        %v897 = vunpack.c.l.b16 %v390
        %v898 = vunpack.c.l.b16 %v391
        %v899 = vunpack.c.l.b16 %v392
        %v900 = vpack.c.b16 %v853, %v852
        %v901 = vpack.c.b16 %v855, %v854
        %v902 = vpack.c.b16 %v857, %v856
        %v903 = vpack.c.b16 %v859, %v858
        %v904 = vpack.c.b16 %v861, %v860
        %v905 = vpack.c.b16 %v863, %v862
        %v906 = vpack.c.b16 %v865, %v864
        %v907 = vpack.c.b16 %v867, %v866
        %v908 = vpack.c.b16 %v869, %v868
        %v909 = vpack.c.b16 %v871, %v870
        %v910 = vpack.c.b16 %v873, %v872
        %v911 = vpack.c.b16 %v875, %v874
        %v912 = vpack.c.b16 %v877, %v876
        %v913 = vpack.c.b16 %v879, %v878
        %v914 = vpack.c.b16 %v881, %v880
        %v915 = vpack.c.b16 %v883, %v882
        %v916 = vpack.c.b16 %v885, %v884
        %v917 = vpack.c.b16 %v887, %v886
        %v918 = vpack.c.b16 %v889, %v888
        %v919 = vpack.c.b16 %v891, %v890
        %v920 = vpack.c.b16 %v893, %v892
        %v921 = vpack.c.b16 %v895, %v894
        %v922 = vpack.c.b16 %v897, %v896
        %v923 = vpack.c.b16 %v899, %v898
        %948 = vmatprep.subr.bf16.mxu0 0
        %949 = vmatpush1.bf16.msra.mxu0 %v900
        %950 = vmatprep.subr.bf16.mxu0 0
        %951 = vmatpush1.bf16.msra.mxu0 %v901
        %952 = vmatprep.subr.bf16.mxu0 0
        %953 = vmatpush1.bf16.msra.mxu0 %v902
        %954 = vmatprep.subr.bf16.mxu0 0
        %955 = vmatpush1.bf16.msra.mxu0 %v903
        %956 = vmatprep.subr.bf16.mxu0 0
        %957 = vmatpush1.bf16.msra.mxu0 %v904
        %958 = vmatprep.subr.bf16.mxu0 0
        %959 = vmatpush1.bf16.msra.mxu0 %v905
        %960 = vmatprep.subr.bf16.mxu0 0
        %961 = vmatpush1.bf16.msra.mxu0 %v906
        %962 = vmatprep.subr.bf16.mxu0 0
        %963 = vmatpush1.bf16.msra.mxu0 %v907
        %964 = vmatprep.subr.bf16.mxu0 0
        %965 = vmatpush1.bf16.msra.mxu0 %v908
        %966 = vmatprep.subr.bf16.mxu0 0
        %967 = vmatpush1.bf16.msra.mxu0 %v909
        %968 = vmatprep.subr.bf16.mxu0 0
        %969 = vmatpush1.bf16.msra.mxu0 %v910
        %970 = vmatprep.subr.bf16.mxu0 0
        %971 = vmatpush1.bf16.msra.mxu0 %v911
        %972 = vmatprep.subr.bf16.mxu0 0
        %973 = vmatpush1.bf16.msra.mxu0 %v912
        %974 = vmatprep.subr.bf16.mxu0 0
        %975 = vmatpush1.bf16.msra.mxu0 %v913
        %976 = vmatprep.subr.bf16.mxu0 0
        %977 = vmatpush1.bf16.msra.mxu0 %v914
        %978 = vmatprep.subr.bf16.mxu0 0
        %979 = vmatpush1.bf16.msra.mxu0 %v915
        %980 = vmatprep.mubr.bf16.mxu0 %v251
        %981 = vmatmul.mubr.bf16.gmra.mrb[0].mxu0 %v220
        %v982 = vpop.f32.mrb[0].mxu0
        %v983 = vadd.f32 %v750, %v982
        %v984 = vpop.f32.mrb[0].mxu0
        %v985 = vpop.f32.mrb[0].mxu0
        %v986 = vpop.f32.mrb[0].mxu0
        %987 = vmatprep.mubr.bf16.mxu0 %v259
        %988 = vmatmul.mubr.bf16.gmra.mrb[0].mxu0 %v221
        %v989 = vpop.f32.mrb[0].mxu0
        %v990 = vadd.f32 %v757, %v989
        %v991 = vpop.f32.mrb[0].mxu0
        %v992 = vpop.f32.mrb[0].mxu0
        %v993 = vpop.f32.mrb[0].mxu0
        %994 = vmatprep.mubr.bf16.mxu0 %v267
        %995 = vmatmul.mubr.bf16.gmra.mrb[0].mxu0 %v222
        %v996 = vpop.f32.mrb[0].mxu0
        %v997 = vadd.f32 %v764, %v996
        %v998 = vpop.f32.mrb[0].mxu0
        %v999 = vpop.f32.mrb[0].mxu0
        %v1000 = vpop.f32.mrb[0].mxu0
        %1001 = vmatprep.mubr.bf16.mxu0 %v275
        %1002 = vmatmul.mubr.bf16.gmra.mrb[0].mxu0 %v223
        %v1003 = vpop.f32.mrb[0].mxu0
        %v1004 = vadd.f32 %v771, %v1003
        %v1005 = vpop.f32.mrb[0].mxu0
        %v1006 = vpop.f32.mrb[0].mxu0
        %v1007 = vpop.f32.mrb[0].mxu0
        %1008 = vmatprep.mubr.bf16.mxu0 %v283
        %1009 = vmatmul.mubr.bf16.gmra.mrb[0].mxu0 %v224
        %v1010 = vpop.f32.mrb[0].mxu0
        %v1011 = vadd.f32 %v778, %v1010
        %v1012 = vpop.f32.mrb[0].mxu0
        %v1013 = vpop.f32.mrb[0].mxu0
        %v1014 = vpop.f32.mrb[0].mxu0
        %1015 = vmatprep.mubr.bf16.mxu0 %v291
        %1016 = vmatmul.mubr.bf16.gmra.mrb[0].mxu0 %v225
        %v1017 = vpop.f32.mrb[0].mxu0
        %v1018 = vadd.f32 %v785, %v1017
        %v1019 = vpop.f32.mrb[0].mxu0
        %v1020 = vpop.f32.mrb[0].mxu0
        %v1021 = vpop.f32.mrb[0].mxu0
        %1022 = vmatprep.mubr.bf16.mxu0 %v299
        %1023 = vmatmul.mubr.bf16.gmra.mrb[0].mxu0 %v226
        %v1024 = vpop.f32.mrb[0].mxu0
        %v1025 = vadd.f32 %v792, %v1024
        %v1026 = vpop.f32.mrb[0].mxu0
        %v1027 = vpop.f32.mrb[0].mxu0
        %v1028 = vpop.f32.mrb[0].mxu0
        %1029 = vmatprep.mubr.bf16.mxu0 %v307
        %1030 = vmatmul.mubr.bf16.gmra.mrb[0].mxu0 %v227
        %v1031 = vpop.f32.mrb[0].mxu0
        %v1032 = vadd.f32 %v799, %v1031
        %v1033 = vpop.f32.mrb[0].mxu0
        %v1034 = vpop.f32.mrb[0].mxu0
        %v1035 = vpop.f32.mrb[0].mxu0
        %1036 = vdwg.mxu0
        %1037 = vmatprep.subr.bf16.mxu0 0
        %1038 = vmatpush1.bf16.msra.mxu0 %v916
        %1039 = vmatprep.subr.bf16.mxu0 0
        %1040 = vmatpush1.bf16.msra.mxu0 %v917
        %1041 = vmatprep.subr.bf16.mxu0 0
        %1042 = vmatpush1.bf16.msra.mxu0 %v918
        %1043 = vmatprep.subr.bf16.mxu0 0
        %1044 = vmatpush1.bf16.msra.mxu0 %v919
        %1045 = vmatprep.subr.bf16.mxu0 0
        %1046 = vmatpush1.bf16.msra.mxu0 %v920
        %1047 = vmatprep.subr.bf16.mxu0 0
        %1048 = vmatpush1.bf16.msra.mxu0 %v921
        %1049 = vmatprep.subr.bf16.mxu0 0
        %1050 = vmatpush1.bf16.msra.mxu0 %v922
        %1051 = vmatprep.subr.bf16.mxu0 0
        %1052 = vmatpush1.bf16.msra.mxu0 %v923
        %1053 = vmatprep.subr.bf16.mxu0 0
        %1054 = vmatpush1.bf16.msra.mxu0 0
        %1055 = vmatprep.subr.bf16.mxu0 0
        %1056 = vmatpush1.bf16.msra.mxu0 0
        %1057 = vmatprep.subr.bf16.mxu0 0
        %1058 = vmatpush1.bf16.msra.mxu0 0
        %1059 = vmatprep.subr.bf16.mxu0 0
        %1060 = vmatpush1.bf16.msra.mxu0 0
        %1061 = vmatprep.subr.bf16.mxu0 0
        %1062 = vmatpush1.bf16.msra.mxu0 0
        %1063 = vmatprep.subr.bf16.mxu0 0
        %1064 = vmatpush1.bf16.msra.mxu0 0
        %1065 = vmatprep.subr.bf16.mxu0 0
        %1066 = vmatpush1.bf16.msra.mxu0 0
        %1067 = vmatprep.subr.bf16.mxu0 0
        %1068 = vmatpush1.bf16.msra.mxu0 0
        %1069 = vmatprep.mubr.bf16.mxu0 0
        %1070 = vmatmul.mubr.bf16.gmra.mrb[0].mxu0 %v322
        %v1071 = vpop.f32.mrb[0].mxu0
        %v1072 = vadd.f32 %v983, %v1071
        %v1073 = vpop.f32.mrb[0].mxu0
        %v1074 = vpop.f32.mrb[0].mxu0
        %v1075 = vpop.f32.mrb[0].mxu0
        %1076 = vmatprep.mubr.bf16.mxu0 0
        %1077 = vmatmul.mubr.bf16.gmra.mrb[0].mxu0 %v324
        %v1078 = vpop.f32.mrb[0].mxu0
        %v1079 = vadd.f32 %v990, %v1078
        %v1080 = vpop.f32.mrb[0].mxu0
        %v1081 = vpop.f32.mrb[0].mxu0
        %v1082 = vpop.f32.mrb[0].mxu0
        %1083 = vmatprep.mubr.bf16.mxu0 0
        %1084 = vmatmul.mubr.bf16.gmra.mrb[0].mxu0 %v326
        %v1085 = vpop.f32.mrb[0].mxu0
        %v1086 = vadd.f32 %v997, %v1085
        %v1087 = vpop.f32.mrb[0].mxu0
        %v1088 = vpop.f32.mrb[0].mxu0
        %v1089 = vpop.f32.mrb[0].mxu0
        %1090 = vmatprep.mubr.bf16.mxu0 0
        %1091 = vmatmul.mubr.bf16.gmra.mrb[0].mxu0 %v328
        %v1092 = vpop.f32.mrb[0].mxu0
        %v1093 = vadd.f32 %v1004, %v1092
        %v1094 = vpop.f32.mrb[0].mxu0
        %v1095 = vpop.f32.mrb[0].mxu0
        %v1096 = vpop.f32.mrb[0].mxu0
        %1097 = vmatprep.mubr.bf16.mxu0 0
        %1098 = vmatmul.mubr.bf16.gmra.mrb[0].mxu0 %v330
        %v1099 = vpop.f32.mrb[0].mxu0
        %v1100 = vadd.f32 %v1011, %v1099
        %v1101 = vpop.f32.mrb[0].mxu0
        %v1102 = vpop.f32.mrb[0].mxu0
        %v1103 = vpop.f32.mrb[0].mxu0
        %1104 = vmatprep.mubr.bf16.mxu0 0
        %1105 = vmatmul.mubr.bf16.gmra.mrb[0].mxu0 %v332
        %v1106 = vpop.f32.mrb[0].mxu0
        %v1107 = vadd.f32 %v1018, %v1106
        %v1108 = vpop.f32.mrb[0].mxu0
        %v1109 = vpop.f32.mrb[0].mxu0
        %v1110 = vpop.f32.mrb[0].mxu0
        %1111 = vmatprep.mubr.bf16.mxu0 0
        %1112 = vmatmul.mubr.bf16.gmra.mrb[0].mxu0 %v334
        %v1113 = vpop.f32.mrb[0].mxu0
        %v1114 = vadd.f32 %v1025, %v1113
        %v1115 = vpop.f32.mrb[0].mxu0
        %v1116 = vpop.f32.mrb[0].mxu0
        %v1117 = vpop.f32.mrb[0].mxu0
        %1118 = vmatprep.mubr.bf16.mxu0 0
        %1119 = vmatmul.mubr.bf16.gmra.mrb[0].mxu0 %v336
        %v1120 = vpop.f32.mrb[0].mxu0
        %v1121 = vadd.f32 %v1032, %v1120
        %v1122 = vpop.f32.mrb[0].mxu0
        %v1123 = vpop.f32.mrb[0].mxu0
        %v1124 = vpop.f32.mrb[0].mxu0
        %1125 = vdwg.mxu0
        %v1126 = vld [vmem:[%s168 + $0x10] sm:$0xf]
        %v1127 = vld [vmem:[%s168 + $0x14] sm:$0xf]
        %v1128 = vld [vmem:[%s168 + $0x18] sm:$0xf]
        %v1129 = vld [vmem:[%s168 + $0x1c] sm:$0xf]
        %v1130 = vld [vmem:[%s168 + $0x20] sm:$0xf]
        %v1131 = vld [vmem:[%s168 + $0x24] sm:$0xf]
        %v1132 = vld [vmem:[%s168 + $0x28] sm:$0xf]
        %v1133 = vld [vmem:[%s168 + $0x2c] sm:$0xf]
        %v1134 = vld [vmem:[%s168 + $0x30] sm:$0xf]
        %v1135 = vld [vmem:[%s168 + $0x34] sm:$0xf]
        %v1136 = vld [vmem:[%s168 + $0x38] sm:$0xf]
        %v1137 = vld [vmem:[%s168 + $0x3c] sm:$0xf]
        %v1138 = vld [vmem:[%s168 + $0x40] sm:$0xf]
        %v1139 = vld [vmem:[%s168 + $0x44] sm:$0xf]
        %v1140 = vld [vmem:[%s168 + $0x48] sm:$0xf]
        %v1141 = vld [vmem:[%s168 + $0x4c] sm:$0xf]
        %v1142 = vld [vmem:[%s168 + $0x50] sm:$0x1]
        %v1143 = vld [vmem:[%s168 + $0x10] sm:$0xe]
        %v1160 = vunpack.c.l.b16 %v1126
        %v1161 = vunpack.c.l.b16 %v1127
        %v1162 = vunpack.c.l.b16 %v1128
        %v1163 = vunpack.c.l.b16 %v1129
        %v1164 = vunpack.c.l.b16 %v1130
        %v1165 = vunpack.c.l.b16 %v1131
        %v1166 = vunpack.c.l.b16 %v1132
        %v1167 = vunpack.c.l.b16 %v1133
        %v1168 = vunpack.c.l.b16 %v1134
        %v1169 = vunpack.c.l.b16 %v1135
        %v1170 = vunpack.c.l.b16 %v1136
        %v1171 = vunpack.c.l.b16 %v1137
        %v1172 = vunpack.c.l.b16 %v1138
        %v1173 = vunpack.c.l.b16 %v1139
        %v1174 = vunpack.c.l.b16 %v1140
        %v1175 = vunpack.c.l.b16 %v1141
        %v1176 = vpack.c.b16 %v1161, %v1160
        %v1177 = vpack.c.b16 %v1163, %v1162
        %v1178 = vpack.c.b16 %v1165, %v1164
        %v1179 = vpack.c.b16 %v1167, %v1166
        %v1180 = vpack.c.b16 %v1169, %v1168
        %v1181 = vpack.c.b16 %v1171, %v1170
        %v1182 = vpack.c.b16 %v1173, %v1172
        %v1183 = vpack.c.b16 %v1175, %v1174
        %v1193 = vunpack.c.l.b16 %v1142
        %v1194 = vpack.c.b16 %v1193, %v1193
        %v1196 = vshrl.u32 %v1176, 16
        %v1198 = vshll.u32 %v1176, 16
        %v1200 = vrot.slane %v1198, 1
        %v1201 = vor.u32 %v1196, %v1200
        %v1203 = vshll.u32 %v1177, 16
        %v1205 = vrot.slane %v1203, 1
        %v1206 = vsel %vm239, %v1201, %v1205
        %v1207 = vshrl.u32 %v1177, 16
        %v1209 = vor.u32 %v1207, %v1205
        %v1211 = vshll.u32 %v1178, 16
        %v1213 = vrot.slane %v1211, 1
        %v1214 = vsel %vm239, %v1209, %v1213
        %v1215 = vshrl.u32 %v1178, 16
        %v1217 = vor.u32 %v1215, %v1213
        %v1219 = vshll.u32 %v1179, 16
        %v1221 = vrot.slane %v1219, 1
        %v1222 = vsel %vm239, %v1217, %v1221
        %v1223 = vshrl.u32 %v1179, 16
        %v1225 = vor.u32 %v1223, %v1221
        %v1227 = vshll.u32 %v1180, 16
        %v1229 = vrot.slane %v1227, 1
        %v1230 = vsel %vm239, %v1225, %v1229
        %v1231 = vshrl.u32 %v1180, 16
        %v1233 = vor.u32 %v1231, %v1229
        %v1235 = vshll.u32 %v1181, 16
        %v1237 = vrot.slane %v1235, 1
        %v1238 = vsel %vm239, %v1233, %v1237
        %v1239 = vshrl.u32 %v1181, 16
        %v1241 = vor.u32 %v1239, %v1237
        %v1243 = vshll.u32 %v1182, 16
        %v1245 = vrot.slane %v1243, 1
        %v1246 = vsel %vm239, %v1241, %v1245
        %v1247 = vshrl.u32 %v1182, 16
        %v1249 = vor.u32 %v1247, %v1245
        %v1251 = vshll.u32 %v1183, 16
        %v1253 = vrot.slane %v1251, 1
        %v1254 = vsel %vm239, %v1249, %v1253
        %v1255 = vshrl.u32 %v1183, 16
        %v1257 = vor.u32 %v1255, %v1253
        %v1259 = vshll.u32 %v1194, 16
        %v1261 = vrot.slane %v1259, 1
        %v1262 = vsel %vm239, %v1257, %v1261
        %v1272 = vunpack.c.l.b16 %v1143
        %v1273 = vpack.c.b16 %v1161, %v1272
        %v1274 = vrot.slane %v1273, 1
        %v1275 = vrot.slane %v1177, 1
        %v1276 = vsel %vm319, %v1274, %v1275
        %v1277 = vrot.slane %v1178, 1
        %v1278 = vsel %vm319, %v1275, %v1277
        %v1279 = vrot.slane %v1179, 1
        %v1280 = vsel %vm319, %v1277, %v1279
        %v1281 = vrot.slane %v1180, 1
        %v1282 = vsel %vm319, %v1279, %v1281
        %v1283 = vrot.slane %v1181, 1
        %v1284 = vsel %vm319, %v1281, %v1283
        %v1285 = vrot.slane %v1182, 1
        %v1286 = vsel %vm319, %v1283, %v1285
        %v1287 = vrot.slane %v1183, 1
        %v1288 = vsel %vm319, %v1285, %v1287
        %v1289 = vrot.slane %v1194, 1
        %v1290 = vsel %vm319, %v1287, %v1289
        %s1299 = scalar_lea.vmem %s1, 384
        %v1300 = vld [vmem:[%s1299] sm:$0xf]
        %v1301 = vld [vmem:[%s1299 + $0x4] sm:$0xf]
        %v1302 = vld [vmem:[%s1299 + $0x8] sm:$0xf]
        %v1303 = vld [vmem:[%s1299 + $0xc] sm:$0xf]
        %v1304 = vld [vmem:[%s1299 + $0x10] sm:$0xf]
        %v1305 = vld [vmem:[%s1299 + $0x14] sm:$0xf]
        %v1306 = vld [vmem:[%s1299 + $0x18] sm:$0xf]
        %v1307 = vld [vmem:[%s1299 + $0x1c] sm:$0xf]
        %v1308 = vld [vmem:[%s1299 + $0x20] sm:$0xf]
        %v1309 = vld [vmem:[%s1299 + $0x24] sm:$0xf]
        %v1310 = vld [vmem:[%s1299 + $0x28] sm:$0xf]
        %v1311 = vld [vmem:[%s1299 + $0x2c] sm:$0xf]
        %v1312 = vld [vmem:[%s1299 + $0x30] sm:$0xf]
        %v1313 = vld [vmem:[%s1299 + $0x34] sm:$0xf]
        %v1314 = vld [vmem:[%s1299 + $0x38] sm:$0xf]
        %v1315 = vld [vmem:[%s1299 + $0x3c] sm:$0xf]
        %v1316 = vld [vmem:[%s1299 + $0x40] sm:$0xf]
        %v1317 = vld [vmem:[%s1299 + $0x44] sm:$0xf]
        %v1318 = vld [vmem:[%s1299 + $0x48] sm:$0xf]
        %v1319 = vld [vmem:[%s1299 + $0x4c] sm:$0xf]
        %v1320 = vld [vmem:[%s1299 + $0x50] sm:$0xf]
        %v1321 = vld [vmem:[%s1299 + $0x54] sm:$0xf]
        %v1322 = vld [vmem:[%s1299 + $0x58] sm:$0xf]
        %v1323 = vld [vmem:[%s1299 + $0x5c] sm:$0xf]
        %v1324 = vld [vmem:[%s1299 + $0x60] sm:$0xf]
        %v1325 = vld [vmem:[%s1299 + $0x64] sm:$0xf]
        %v1326 = vld [vmem:[%s1299 + $0x68] sm:$0xf]
        %v1327 = vld [vmem:[%s1299 + $0x6c] sm:$0xf]
        %v1328 = vld [vmem:[%s1299 + $0x70] sm:$0xf]
        %v1329 = vld [vmem:[%s1299 + $0x74] sm:$0xf]
        %v1330 = vld [vmem:[%s1299 + $0x78] sm:$0xf]
        %v1331 = vld [vmem:[%s1299 + $0x7c] sm:$0xf]
        %v1332 = vld [vmem:[%s1299 + $0x80] sm:$0xf]
        %v1333 = vld [vmem:[%s1299 + $0x84] sm:$0xf]
        %v1334 = vld [vmem:[%s1299 + $0x88] sm:$0xf]
        %v1335 = vld [vmem:[%s1299 + $0x8c] sm:$0xf]
        %v1336 = vld [vmem:[%s1299 + $0x90] sm:$0xf]
        %v1337 = vld [vmem:[%s1299 + $0x94] sm:$0xf]
        %v1338 = vld [vmem:[%s1299 + $0x98] sm:$0xf]
        %v1339 = vld [vmem:[%s1299 + $0x9c] sm:$0xf]
        %v1340 = vld [vmem:[%s1299 + $0xa0] sm:$0xf]
        %v1341 = vld [vmem:[%s1299 + $0xa4] sm:$0xf]
        %v1342 = vld [vmem:[%s1299 + $0xa8] sm:$0xf]
        %v1343 = vld [vmem:[%s1299 + $0xac] sm:$0xf]
        %v1344 = vld [vmem:[%s1299 + $0xb0] sm:$0xf]
        %v1345 = vld [vmem:[%s1299 + $0xb4] sm:$0xf]
        %v1346 = vld [vmem:[%s1299 + $0xb8] sm:$0xf]
        %v1347 = vld [vmem:[%s1299 + $0xbc] sm:$0xf]
        %v1396 = vunpack.c.l.b16 %v1300
        %v1397 = vunpack.c.l.b16 %v1301
        %v1398 = vunpack.c.l.b16 %v1302
        %v1399 = vunpack.c.l.b16 %v1303
        %v1400 = vunpack.c.l.b16 %v1304
        %v1401 = vunpack.c.l.b16 %v1305
        %v1402 = vunpack.c.l.b16 %v1306
        %v1403 = vunpack.c.l.b16 %v1307
        %v1404 = vunpack.c.l.b16 %v1308
        %v1405 = vunpack.c.l.b16 %v1309
        %v1406 = vunpack.c.l.b16 %v1310
        %v1407 = vunpack.c.l.b16 %v1311
        %v1408 = vunpack.c.l.b16 %v1312
        %v1409 = vunpack.c.l.b16 %v1313
        %v1410 = vunpack.c.l.b16 %v1314
        %v1411 = vunpack.c.l.b16 %v1315
        %v1412 = vunpack.c.l.b16 %v1316
        %v1413 = vunpack.c.l.b16 %v1317
        %v1414 = vunpack.c.l.b16 %v1318
        %v1415 = vunpack.c.l.b16 %v1319
        %v1416 = vunpack.c.l.b16 %v1320
        %v1417 = vunpack.c.l.b16 %v1321
        %v1418 = vunpack.c.l.b16 %v1322
        %v1419 = vunpack.c.l.b16 %v1323
        %v1420 = vunpack.c.l.b16 %v1324
        %v1421 = vunpack.c.l.b16 %v1325
        %v1422 = vunpack.c.l.b16 %v1326
        %v1423 = vunpack.c.l.b16 %v1327
        %v1424 = vunpack.c.l.b16 %v1328
        %v1425 = vunpack.c.l.b16 %v1329
        %v1426 = vunpack.c.l.b16 %v1330
        %v1427 = vunpack.c.l.b16 %v1331
        %v1428 = vunpack.c.l.b16 %v1332
        %v1429 = vunpack.c.l.b16 %v1333
        %v1430 = vunpack.c.l.b16 %v1334
        %v1431 = vunpack.c.l.b16 %v1335
        %v1432 = vunpack.c.l.b16 %v1336
        %v1433 = vunpack.c.l.b16 %v1337
        %v1434 = vunpack.c.l.b16 %v1338
        %v1435 = vunpack.c.l.b16 %v1339
        %v1436 = vunpack.c.l.b16 %v1340
        %v1437 = vunpack.c.l.b16 %v1341
        %v1438 = vunpack.c.l.b16 %v1342
        %v1439 = vunpack.c.l.b16 %v1343
        %v1440 = vunpack.c.l.b16 %v1344
        %v1441 = vunpack.c.l.b16 %v1345
        %v1442 = vunpack.c.l.b16 %v1346
        %v1443 = vunpack.c.l.b16 %v1347
        %v1444 = vpack.c.b16 %v1397, %v1396
        %v1445 = vpack.c.b16 %v1399, %v1398
        %v1446 = vpack.c.b16 %v1401, %v1400
        %v1447 = vpack.c.b16 %v1403, %v1402
        %v1448 = vpack.c.b16 %v1405, %v1404
        %v1449 = vpack.c.b16 %v1407, %v1406
        %v1450 = vpack.c.b16 %v1409, %v1408
        %v1451 = vpack.c.b16 %v1411, %v1410
        %v1452 = vpack.c.b16 %v1413, %v1412
        %v1453 = vpack.c.b16 %v1415, %v1414
        %v1454 = vpack.c.b16 %v1417, %v1416
        %v1455 = vpack.c.b16 %v1419, %v1418
        %v1456 = vpack.c.b16 %v1421, %v1420
        %v1457 = vpack.c.b16 %v1423, %v1422
        %v1458 = vpack.c.b16 %v1425, %v1424
        %v1459 = vpack.c.b16 %v1427, %v1426
        %v1460 = vpack.c.b16 %v1429, %v1428
        %v1461 = vpack.c.b16 %v1431, %v1430
        %v1462 = vpack.c.b16 %v1433, %v1432
        %v1463 = vpack.c.b16 %v1435, %v1434
        %v1464 = vpack.c.b16 %v1437, %v1436
        %v1465 = vpack.c.b16 %v1439, %v1438
        %v1466 = vpack.c.b16 %v1441, %v1440
        %v1467 = vpack.c.b16 %v1443, %v1442
        %1492 = vmatprep.subr.bf16.mxu0 0
        %1493 = vmatpush1.bf16.msra.mxu0 %v1444
        %1494 = vmatprep.subr.bf16.mxu0 0
        %1495 = vmatpush1.bf16.msra.mxu0 %v1445
        %1496 = vmatprep.subr.bf16.mxu0 0
        %1497 = vmatpush1.bf16.msra.mxu0 %v1446
        %1498 = vmatprep.subr.bf16.mxu0 0
        %1499 = vmatpush1.bf16.msra.mxu0 %v1447
        %1500 = vmatprep.subr.bf16.mxu0 0
        %1501 = vmatpush1.bf16.msra.mxu0 %v1448
        %1502 = vmatprep.subr.bf16.mxu0 0
        %1503 = vmatpush1.bf16.msra.mxu0 %v1449
        %1504 = vmatprep.subr.bf16.mxu0 0
        %1505 = vmatpush1.bf16.msra.mxu0 %v1450
        %1506 = vmatprep.subr.bf16.mxu0 0
        %1507 = vmatpush1.bf16.msra.mxu0 %v1451
        %1508 = vmatprep.subr.bf16.mxu0 0
        %1509 = vmatpush1.bf16.msra.mxu0 %v1452
        %1510 = vmatprep.subr.bf16.mxu0 0
        %1511 = vmatpush1.bf16.msra.mxu0 %v1453
        %1512 = vmatprep.subr.bf16.mxu0 0
        %1513 = vmatpush1.bf16.msra.mxu0 %v1454
        %1514 = vmatprep.subr.bf16.mxu0 0
        %1515 = vmatpush1.bf16.msra.mxu0 %v1455
        %1516 = vmatprep.subr.bf16.mxu0 0
        %1517 = vmatpush1.bf16.msra.mxu0 %v1456
        %1518 = vmatprep.subr.bf16.mxu0 0
        %1519 = vmatpush1.bf16.msra.mxu0 %v1457
        %1520 = vmatprep.subr.bf16.mxu0 0
        %1521 = vmatpush1.bf16.msra.mxu0 %v1458
        %1522 = vmatprep.subr.bf16.mxu0 0
        %1523 = vmatpush1.bf16.msra.mxu0 %v1459
        %1524 = vmatprep.mubr.bf16.mxu0 %v1206
        %1525 = vmatmul.mubr.bf16.gmra.mrb[0].mxu0 %v1176
        %v1526 = vpop.f32.mrb[0].mxu0
        %v1527 = vadd.f32 0.0, %v1526
        %v1528 = vpop.f32.mrb[0].mxu0
        %v1529 = vpop.f32.mrb[0].mxu0
        %v1530 = vpop.f32.mrb[0].mxu0
        %1531 = vmatprep.mubr.bf16.mxu0 %v1214
        %1532 = vmatmul.mubr.bf16.gmra.mrb[0].mxu0 %v1177
        %v1533 = vpop.f32.mrb[0].mxu0
        %v1534 = vadd.f32 0.0, %v1533
        %v1535 = vpop.f32.mrb[0].mxu0
        %v1536 = vpop.f32.mrb[0].mxu0
        %v1537 = vpop.f32.mrb[0].mxu0
        %1538 = vmatprep.mubr.bf16.mxu0 %v1222
        %1539 = vmatmul.mubr.bf16.gmra.mrb[0].mxu0 %v1178
        %v1540 = vpop.f32.mrb[0].mxu0
        %v1541 = vadd.f32 0.0, %v1540
        %v1542 = vpop.f32.mrb[0].mxu0
        %v1543 = vpop.f32.mrb[0].mxu0
        %v1544 = vpop.f32.mrb[0].mxu0
        %1545 = vmatprep.mubr.bf16.mxu0 %v1230
        %1546 = vmatmul.mubr.bf16.gmra.mrb[0].mxu0 %v1179
        %v1547 = vpop.f32.mrb[0].mxu0
        %v1548 = vadd.f32 0.0, %v1547
        %v1549 = vpop.f32.mrb[0].mxu0
        %v1550 = vpop.f32.mrb[0].mxu0
        %v1551 = vpop.f32.mrb[0].mxu0
        %1552 = vmatprep.mubr.bf16.mxu0 %v1238
        %1553 = vmatmul.mubr.bf16.gmra.mrb[0].mxu0 %v1180
        %v1554 = vpop.f32.mrb[0].mxu0
        %v1555 = vadd.f32 0.0, %v1554
        %v1556 = vpop.f32.mrb[0].mxu0
        %v1557 = vpop.f32.mrb[0].mxu0
        %v1558 = vpop.f32.mrb[0].mxu0
        %1559 = vmatprep.mubr.bf16.mxu0 %v1246
        %1560 = vmatmul.mubr.bf16.gmra.mrb[0].mxu0 %v1181
        %v1561 = vpop.f32.mrb[0].mxu0
        %v1562 = vadd.f32 0.0, %v1561
        %v1563 = vpop.f32.mrb[0].mxu0
        %v1564 = vpop.f32.mrb[0].mxu0
        %v1565 = vpop.f32.mrb[0].mxu0
        %1566 = vmatprep.mubr.bf16.mxu0 %v1254
        %1567 = vmatmul.mubr.bf16.gmra.mrb[0].mxu0 %v1182
        %v1568 = vpop.f32.mrb[0].mxu0
        %v1569 = vadd.f32 0.0, %v1568
        %v1570 = vpop.f32.mrb[0].mxu0
        %v1571 = vpop.f32.mrb[0].mxu0
        %v1572 = vpop.f32.mrb[0].mxu0
        %1573 = vmatprep.mubr.bf16.mxu0 %v1262
        %1574 = vmatmul.mubr.bf16.gmra.mrb[0].mxu0 %v1183
        %v1575 = vpop.f32.mrb[0].mxu0
        %v1576 = vadd.f32 0.0, %v1575
        %v1577 = vpop.f32.mrb[0].mxu0
        %v1578 = vpop.f32.mrb[0].mxu0
        %v1579 = vpop.f32.mrb[0].mxu0
        %1580 = vdwg.mxu0
        %1581 = vmatprep.subr.bf16.mxu0 0
        %1582 = vmatpush1.bf16.msra.mxu0 %v1460
        %1583 = vmatprep.subr.bf16.mxu0 0
        %1584 = vmatpush1.bf16.msra.mxu0 %v1461
        %1585 = vmatprep.subr.bf16.mxu0 0
        %1586 = vmatpush1.bf16.msra.mxu0 %v1462
        %1587 = vmatprep.subr.bf16.mxu0 0
        %1588 = vmatpush1.bf16.msra.mxu0 %v1463
        %1589 = vmatprep.subr.bf16.mxu0 0
        %1590 = vmatpush1.bf16.msra.mxu0 %v1464
        %1591 = vmatprep.subr.bf16.mxu0 0
        %1592 = vmatpush1.bf16.msra.mxu0 %v1465
        %1593 = vmatprep.subr.bf16.mxu0 0
        %1594 = vmatpush1.bf16.msra.mxu0 %v1466
        %1595 = vmatprep.subr.bf16.mxu0 0
        %1596 = vmatpush1.bf16.msra.mxu0 %v1467
        %1597 = vmatprep.subr.bf16.mxu0 0
        %1598 = vmatpush1.bf16.msra.mxu0 0
        %1599 = vmatprep.subr.bf16.mxu0 0
        %1600 = vmatpush1.bf16.msra.mxu0 0
        %1601 = vmatprep.subr.bf16.mxu0 0
        %1602 = vmatpush1.bf16.msra.mxu0 0
        %1603 = vmatprep.subr.bf16.mxu0 0
        %1604 = vmatpush1.bf16.msra.mxu0 0
        %1605 = vmatprep.subr.bf16.mxu0 0
        %1606 = vmatpush1.bf16.msra.mxu0 0
        %1607 = vmatprep.subr.bf16.mxu0 0
        %1608 = vmatpush1.bf16.msra.mxu0 0
        %1609 = vmatprep.subr.bf16.mxu0 0
        %1610 = vmatpush1.bf16.msra.mxu0 0
        %1611 = vmatprep.subr.bf16.mxu0 0
        %1612 = vmatpush1.bf16.msra.mxu0 0
        %1613 = vmatprep.mubr.bf16.mxu0 0
        %1614 = vmatmul.mubr.bf16.gmra.mrb[0].mxu0 %v1276
        %v1615 = vpop.f32.mrb[0].mxu0
        %v1616 = vadd.f32 %v1527, %v1615
        %v1617 = vpop.f32.mrb[0].mxu0
        %v1618 = vpop.f32.mrb[0].mxu0
        %v1619 = vpop.f32.mrb[0].mxu0
        %1620 = vmatprep.mubr.bf16.mxu0 0
        %1621 = vmatmul.mubr.bf16.gmra.mrb[0].mxu0 %v1278
        %v1622 = vpop.f32.mrb[0].mxu0
        %v1623 = vadd.f32 %v1534, %v1622
        %v1624 = vpop.f32.mrb[0].mxu0
        %v1625 = vpop.f32.mrb[0].mxu0
        %v1626 = vpop.f32.mrb[0].mxu0
        %1627 = vmatprep.mubr.bf16.mxu0 0
        %1628 = vmatmul.mubr.bf16.gmra.mrb[0].mxu0 %v1280
        %v1629 = vpop.f32.mrb[0].mxu0
        %v1630 = vadd.f32 %v1541, %v1629
        %v1631 = vpop.f32.mrb[0].mxu0
        %v1632 = vpop.f32.mrb[0].mxu0
        %v1633 = vpop.f32.mrb[0].mxu0
        %1634 = vmatprep.mubr.bf16.mxu0 0
        %1635 = vmatmul.mubr.bf16.gmra.mrb[0].mxu0 %v1282
        %v1636 = vpop.f32.mrb[0].mxu0
        %v1637 = vadd.f32 %v1548, %v1636
        %v1638 = vpop.f32.mrb[0].mxu0
        %v1639 = vpop.f32.mrb[0].mxu0
        %v1640 = vpop.f32.mrb[0].mxu0
        %1641 = vmatprep.mubr.bf16.mxu0 0
        %1642 = vmatmul.mubr.bf16.gmra.mrb[0].mxu0 %v1284
        %v1643 = vpop.f32.mrb[0].mxu0
        %v1644 = vadd.f32 %v1555, %v1643
        %v1645 = vpop.f32.mrb[0].mxu0
        %v1646 = vpop.f32.mrb[0].mxu0
        %v1647 = vpop.f32.mrb[0].mxu0
        %1648 = vmatprep.mubr.bf16.mxu0 0
        %1649 = vmatmul.mubr.bf16.gmra.mrb[0].mxu0 %v1286
        %v1650 = vpop.f32.mrb[0].mxu0
        %v1651 = vadd.f32 %v1562, %v1650
        %v1652 = vpop.f32.mrb[0].mxu0
        %v1653 = vpop.f32.mrb[0].mxu0
        %v1654 = vpop.f32.mrb[0].mxu0
        %1655 = vmatprep.mubr.bf16.mxu0 0
        %1656 = vmatmul.mubr.bf16.gmra.mrb[0].mxu0 %v1288
        %v1657 = vpop.f32.mrb[0].mxu0
        %v1658 = vadd.f32 %v1569, %v1657
        %v1659 = vpop.f32.mrb[0].mxu0
        %v1660 = vpop.f32.mrb[0].mxu0
        %v1661 = vpop.f32.mrb[0].mxu0
        %1662 = vmatprep.mubr.bf16.mxu0 0
        %1663 = vmatmul.mubr.bf16.gmra.mrb[0].mxu0 %v1290
        %v1664 = vpop.f32.mrb[0].mxu0
        %v1665 = vadd.f32 %v1576, %v1664
        %v1666 = vpop.f32.mrb[0].mxu0
        %v1667 = vpop.f32.mrb[0].mxu0
        %v1668 = vpop.f32.mrb[0].mxu0
        %1669 = vdwg.mxu0
        %v1670 = vadd.f32 %v1072, %v1616
        %v1671 = vadd.f32 %v1079, %v1623
        %v1672 = vadd.f32 %v1086, %v1630
        %v1673 = vadd.f32 %v1093, %v1637
        %v1674 = vadd.f32 %v1100, %v1644
        %v1675 = vadd.f32 %v1107, %v1651
        %v1676 = vadd.f32 %v1114, %v1658
        %v1677 = vadd.f32 %v1121, %v1665
        %v1678 = vld [vmem:[%s2] sm:$0x1]
        %v1680 = vlaneseq
        %v1681 = vshrl.u32 %v1680, 7
        %v1682 = vsub.s32 0, %v1681
        %v1683 = vrot.slane %v1678, %v1682
        %v1685 = vadd.f32 %v1670, %v1683
        %v1686 = vadd.f32 %v1671, %v1683
        %v1687 = vadd.f32 %v1672, %v1683
        %v1688 = vadd.f32 %v1673, %v1683
        %v1689 = vadd.f32 %v1674, %v1683
        %v1690 = vadd.f32 %v1675, %v1683
        %v1691 = vadd.f32 %v1676, %v1683
        %v1692 = vadd.f32 %v1677, %v1683
        %v1693 = vmax.f32 %v1685, 0.0
        %v1694 = vmax.f32 %v1686, 0.0
        %v1695 = vmax.f32 %v1687, 0.0
        %v1696 = vmax.f32 %v1688, 0.0
        %v1697 = vmax.f32 %v1689, 0.0
        %v1698 = vmax.f32 %v1690, 0.0
        %v1699 = vmax.f32 %v1691, 0.0
        %v1700 = vmax.f32 %v1692, 0.0
        %1701 = vst [vmem:[%s163] sm:$0xff] %v1693
        %1702 = vst [vmem:[%s163 + $0x8] sm:$0xff] %v1694
        %1703 = vst [vmem:[%s163 + $0x10] sm:$0xff] %v1695
        %1704 = vst [vmem:[%s163 + $0x18] sm:$0xff] %v1696
        %1705 = vst [vmem:[%s163 + $0x20] sm:$0xff] %v1697
        %1706 = vst [vmem:[%s163 + $0x28] sm:$0xff] %v1698
        %1707 = vst [vmem:[%s163 + $0x30] sm:$0xff] %v1699
        %1708 = vst [vmem:[%s163 + $0x38] sm:$0xff] %v1700
        %s1709 = sand.u32 %s93, 1
        %s1710 = scalar_lea.sflag [#allocation3], %s1709
        %s1711 = sand.u32 %s93, 1
        %s1712 = smul.addr %s1711, 64
        %s1713 = scalar_lea.vmem [#allocation2], %s1712
        // Predicated region
        $region33: #{netf_forward.7} parent=31 // pred_check
          %p1714 = pneg %p103
        $region34: #{netf_forward.7} parent=31 // pred_check_branch
          %1716 = sbr.rel (%p1714) target = $region36
        $region35: #{netf_forward.7} parent=31 // pred_region
          %s1718 = ssub.s32 1024, 1024
          %1719 = vsyncadd %s1710, %s1718
          %s1720 = smul.addr %s17, 8
          %s1721 = smul.addr %s1720, 128
          %s1722 = scalar_lea.hbm %s3, %s1721
          %s1723 = sshll.u32 %s1713, 4
          %s1724 = int_to_ptr.vmem [resolvable:$true] %s1723
          %1729 = dma.vmem_to_hbm [thread:$0]  %s1724, 1024, %s1722, %s1710, 128, 128, 8
        $region36: #{netf_forward.7} parent=31 // pred_fallthru
          _
      $region32: #{netf_forward.7} parent=5 // pred_fallthru
        _
      %p1730 = scmp.le.s32.totalorder 2, %s12
      // Predicated region
      $region37: #{netf_forward.7} parent=5 // pred_check
        %p1731 = pneg %p1730
      $region38: #{netf_forward.7} parent=5 // pred_check_branch
        %1733 = sbr.rel (%p1731) target = $region40
      $region39: #{netf_forward.7} parent=5 // pred_region
        %s1734 = ssub.s32 %s12, 2
        // Predicated region
        $region41: #{netf_forward.7} parent=39 // pred_check
          %p1735 = pneg %p109
        $region42: #{netf_forward.7} parent=39 // pred_check_branch
          %1737 = sbr.rel (%p1735) target = $region44
        $region43: #{netf_forward.7} parent=39 // pred_region
          %s1738 = sand.u32 %s94, 1
          %s1739 = scalar_lea.sflag [#allocation3], %s1738
          %s1740 = sand.u32 %s94, 1
          %s1741 = smul.addr %s1740, 64
          %s1742 = scalar_lea.vmem [#allocation2], %s1741
          %1743 = dma.done %s1739, 1024
        $region44: #{netf_forward.7} parent=39 // pred_fallthru
          _
      $region40: #{netf_forward.7} parent=5 // pred_fallthru
        _
    $region6: #{netf_forward.7} parent=1 // loop_footer
      %s16 = sadd.s32 1, %s12
    $region7: #{netf_forward.7} parent=1 // loop_footer_branch
      %11 = sbr.rel target = $region3
    $region8: #{netf_forward.7} parent=1 // loop_exit
      _
    %1744 = vsyncpa [#allocation3], 1
    %s1745 = scalar_lea.sflag [#allocation3], 1
    %1746 = vsyncpa %s1745, 1

// kernel: netf_forward.4
$region0: #{netf_forward.4}
  #allocation0 [shape = 'u32[]', space=smem, size = 0x4, offset = 0x4, fixed_abs, tag = 'smem constant byte address 0x4 - core index']
  #allocation1 [shape = 'u32[144,128]{1,0:T(1,128)}', space=vmem, size = 0x12000, scoped, tag = 'internal scratch']
  %s0 = inlined_call_operand.vmem [shape: f32[2,456,3], index: 0, kind: input, shape index: {}]
  %s1 = inlined_call_operand.vmem [shape: bf16[9,3,64], index: 1, kind: input, shape index: {}]
  %s2 = inlined_call_operand.vmem [shape: f32[1,64], index: 2, kind: input, shape index: {}]
  %s3 = inlined_call_operand.vmem [shape: bf16[2,19,24,64], index: 3, kind: output, shape index: {}]
  %s4 = sld [smem:[#allocation0]]
  $region45: #{netf_forward.4} parent=0
    _
  %s6 = ssub.s32 1, %s4
  %s7 = scalar_select 0, %s6, %s4
  loop: start=0, step=1, limit=4
  $region2: #{netf_forward.4} parent=0 // loop_pre_header
    _
  $region3: #{netf_forward.4} parent=0 // loop_header
    %s9 = sphi 0, %s13
    %p10 = scmp.ge.s32.totalorder %s9, 4
    %s19 = sphi 0, %s21
    %s22 = sphi 0, %s19
    %s23 = sphi 0, %s22
    %s39 = sphi 0, %s23
    %s43 = sphi 0, %s43
    %s45 = sphi 0, %s43
    %s46 = sphi 0, %s45
    %s60 = sphi 0, %s46
    %s64 = sphi 0, %s64
    %s66 = sphi 0, %s64
    %s67 = sphi 0, %s66
    %s81 = sphi 0, %s67
    %s87 = sphi 0, %s89
    %s90 = sphi 0, %s87
    %s91 = sphi 0, %s90
    %s107 = sphi 0, %s91
  $region4: #{netf_forward.4} parent=0 // loop_header_branch
    %12 = sbr.rel (%p10) target = $region8
  $region5: #{netf_forward.4} parent=0 // loop_body
    %s14 = ssub.s32 %s9, 1
    %s15 = ssub.s32 %s9, 2
    %s16 = sadd.s32 %s9, 1
    %s17 = ssub.s32 %s9, %s16
    %p18 = scmp.eq.s32.totalorder %s17, 0
    %s20 = sadd.s32 %s19, 1
    %s21 = scalar_select %p18, %s19, %s20
    %p24 = pneg %p18
    %p25 = scmp.eq.s32.totalorder %s9, 1
    %p26 = por %p24, %p25
    %p27 = scmp.ne.s32.totalorder %s19, %s22
    %p28 = scmp.eq.s32.totalorder %s9, 0
    %p29 = por %p27, %p28
    %p30 = scmp.ne.s32.totalorder %s19, %s22
    %p31 = scmp.eq.s32.totalorder %s14, 1
    %p32 = por %p30, %p31
    %p33 = scmp.ne.s32.totalorder %s22, %s23
    %p34 = scmp.eq.s32.totalorder %s14, 0
    %p35 = por %p33, %p34
    %p36 = scmp.ne.s32.totalorder %s22, %s23
    %p37 = scmp.eq.s32.totalorder %s15, 1
    %p38 = por %p36, %p37
    %p40 = scmp.ne.s32.totalorder %s23, %s39
    %p41 = scmp.eq.s32.totalorder %s15, 0
    %p42 = por %p40, %p41
    %s44 = sadd.s32 %s43, 1
    %p47 = scmp.eq.s32.totalorder %s9, 1
    %p48 = scmp.ne.s32.totalorder %s43, %s45
    %p49 = scmp.eq.s32.totalorder %s9, 0
    %p50 = por %p48, %p49
    %p51 = scmp.ne.s32.totalorder %s43, %s45
    %p52 = scmp.eq.s32.totalorder %s14, 1
    %p53 = por %p51, %p52
    %p54 = scmp.ne.s32.totalorder %s45, %s46
    %p55 = scmp.eq.s32.totalorder %s14, 0
    %p56 = por %p54, %p55
    %p57 = scmp.ne.s32.totalorder %s45, %s46
    %p58 = scmp.eq.s32.totalorder %s15, 1
    %p59 = por %p57, %p58
    %p61 = scmp.ne.s32.totalorder %s46, %s60
    %p62 = scmp.eq.s32.totalorder %s15, 0
    %p63 = por %p61, %p62
    %s65 = sadd.s32 %s64, 1
    %p68 = scmp.eq.s32.totalorder %s9, 1
    %p69 = scmp.ne.s32.totalorder %s64, %s66
    %p70 = scmp.eq.s32.totalorder %s9, 0
    %p71 = por %p69, %p70
    %p72 = scmp.ne.s32.totalorder %s64, %s66
    %p73 = scmp.eq.s32.totalorder %s14, 1
    %p74 = por %p72, %p73
    %p75 = scmp.ne.s32.totalorder %s66, %s67
    %p76 = scmp.eq.s32.totalorder %s14, 0
    %p77 = por %p75, %p76
    %p78 = scmp.ne.s32.totalorder %s66, %s67
    %p79 = scmp.eq.s32.totalorder %s15, 1
    %p80 = por %p78, %p79
    %p82 = scmp.ne.s32.totalorder %s67, %s81
    %p83 = scmp.eq.s32.totalorder %s15, 0
    %p84 = por %p82, %p83
    %s85 = ssub.s32 %s9, %s16
    %p86 = scmp.eq.s32.totalorder %s85, 0
    %s88 = sadd.s32 %s87, 1
    %s89 = scalar_select %p86, %s87, %s88
    %p92 = pneg %p86
    %p93 = scmp.eq.s32.totalorder %s9, 1
    %p94 = por %p92, %p93
    %p95 = scmp.ne.s32.totalorder %s87, %s90
    %p96 = scmp.eq.s32.totalorder %s9, 0
    %p97 = por %p95, %p96
    %p98 = scmp.ne.s32.totalorder %s87, %s90
    %p99 = scmp.eq.s32.totalorder %s14, 1
    %p100 = por %p98, %p99
    %p101 = scmp.ne.s32.totalorder %s90, %s91
    %p102 = scmp.eq.s32.totalorder %s14, 0
    %p103 = por %p101, %p102
    %p104 = scmp.ne.s32.totalorder %s90, %s91
    %p105 = scmp.eq.s32.totalorder %s15, 1
    %p106 = por %p104, %p105
    %p108 = scmp.ne.s32.totalorder %s91, %s107
    %p109 = scmp.eq.s32.totalorder %s15, 0
    %p110 = por %p108, %p109
    %p111 = scmp.le.s32.totalorder 1, %s9
    %p112 = scmp.lt.s32.totalorder %s9, 3
    %p113 = pnand %p111, %p112
    %p114 = pneg %p113
    // Predicated region
    $region9: #{netf_forward.4} parent=5 // pred_check
      _
    $region10: #{netf_forward.4} parent=5 // pred_check_branch
      %116 = sbr.rel (%p113) target = $region12
    $region11: #{netf_forward.4} parent=5 // pred_region
      %s117 = ssub.s32 %s9, 1
      // Predicated region
      $region13: #{netf_forward.4} parent=11 // pred_check
        %p118 = pneg %p56
      $region14: #{netf_forward.4} parent=11 // pred_check_branch
        %120 = sbr.rel (%p118) target = $region16
      $region15: #{netf_forward.4} parent=11 // pred_region
        _
      $region16: #{netf_forward.4} parent=11 // pred_fallthru
        _
      // Predicated region
      $region17: #{netf_forward.4} parent=11 // pred_check
        %p121 = pneg %p77
      $region18: #{netf_forward.4} parent=11 // pred_check_branch
        %123 = sbr.rel (%p121) target = $region20
      $region19: #{netf_forward.4} parent=11 // pred_region
        _
      $region20: #{netf_forward.4} parent=11 // pred_fallthru
        _
    $region12: #{netf_forward.4} parent=5 // pred_fallthru
      _
    %p124 = scmp.lt.s32.totalorder %s9, 2
    // Predicated region
    $region21: #{netf_forward.4} parent=5 // pred_check
      %p125 = pneg %p124
    $region22: #{netf_forward.4} parent=5 // pred_check_branch
      %127 = sbr.rel (%p125) target = $region24
    $region23: #{netf_forward.4} parent=5 // pred_region
      // Predicated region
      $region25: #{netf_forward.4} parent=23 // pred_check
        %p128 = pneg %p29
      $region26: #{netf_forward.4} parent=23 // pred_check_branch
        %130 = sbr.rel (%p128) target = $region28
      $region27: #{netf_forward.4} parent=23 // pred_region
        %p131 = scmp.lt.s32.totalorder %s9, 1
        %s132 = scalar_select %p131, %s9, 1
        %s133 = smul.addr %s132, 57
        %s134 = smul.addr %s133, 8
        %s135 = scalar_lea.vmem %s0, %s134
      $region28: #{netf_forward.4} parent=23 // pred_fallthru
        _
    $region24: #{netf_forward.4} parent=5 // pred_fallthru
      _
    %p136 = scmp.le.s32.totalorder 1, %s9
    %p137 = scmp.lt.s32.totalorder %s9, 3
    %p138 = pnand %p136, %p137
    %p139 = pneg %p138
    // Predicated region
    $region29: #{netf_forward.4} parent=5 // pred_check
      _
    $region30: #{netf_forward.4} parent=5 // pred_check_branch
      %141 = sbr.rel (%p138) target = $region32
    $region31: #{netf_forward.4} parent=5 // pred_region
      %s142 = ssub.s32 %s9, 1
      %p143 = scmp.lt.s32.totalorder %s14, 1
      %s144 = scalar_select %p143, %s14, 1
      %s145 = smul.addr %s144, 57
      %s146 = smul.addr %s145, 8
      %s147 = scalar_lea.vmem %s0, %s146
      %p148 = pneg %p35
      %p149 = pneg %p32
      %p150 = pneg %p56
      %p151 = pneg %p53
      %p152 = pneg %p77
      %p153 = pneg %p74
      %p154 = pneg %p103
      %p155 = pneg %p100
      %p156 = scmp.lt.s32.totalorder %s14, 1
      %s157 = scalar_select %p156, %s14, 1
      %s158 = smul.addr %s157, 57
      %s159 = smul.addr %s158, 4
      %s160 = scalar_lea.vmem %s3, %s159
      %p161 = scmp.lt.s32.totalorder %s14, 1
      %s162 = scalar_select %p161, %s14, 1
      %s163 = smul.addr %s162, 57
      %s164 = smul.addr %s163, 8
      %s165 = scalar_lea.vmem %s0, %s164
      %p166 = scmp.lt.s32.totalorder %s14, 1
      %s167 = scalar_select %p166, %s14, 1
      %s168 = smul.addr %s167, 57
      %s169 = smul.addr %s168, 4
      %s170 = scalar_lea.vmem %s3, %s169
      %v172 = vld [vmem:[%s165] sm:$0xff]
      %v173 = vld [vmem:[%s165 + $0x8] sm:$0xff]
      %v174 = vld [vmem:[%s165 + $0x10] sm:$0xff]
      %v175 = vld [vmem:[%s165 + $0x18] sm:$0xff]
      %v176 = vld [vmem:[%s165 + $0x20] sm:$0xff]
      %v177 = vld [vmem:[%s165 + $0x28] sm:$0xff]
      %v178 = vld [vmem:[%s165 + $0x30] sm:$0xff]
      %v179 = vld [vmem:[%s165 + $0x38] sm:$0xff]
      %v180 = vld [vmem:[%s165 + $0x40] sm:$0xff]
      %v181 = vld [vmem:[%s165 + $0x48] sm:$0xff]
      %v182 = vld [vmem:[%s165 + $0x50] sm:$0xff]
      %v183 = vld [vmem:[%s165 + $0x58] sm:$0xff]
      %v184 = vld [vmem:[%s165 + $0x60] sm:$0xff]
      %v185 = vld [vmem:[%s165 + $0x68] sm:$0xff]
      %v186 = vld [vmem:[%s165 + $0x70] sm:$0xff]
      %v187 = vld [vmem:[%s165 + $0x78] sm:$0xff]
      %v188 = vld [vmem:[%s165 + $0x80] sm:$0xff]
      %v189 = vld [vmem:[%s165 + $0x88] sm:$0xff]
      %v190 = vld [vmem:[%s165 + $0x90] sm:$0xff]
      %v191 = vld [vmem:[%s165 + $0x98] sm:$0xff]
      %v192 = vld [vmem:[%s165 + $0xa0] sm:$0xff]
      %v193 = vld [vmem:[%s165 + $0xa8] sm:$0xff]
      %v194 = vld [vmem:[%s165 + $0xb0] sm:$0xff]
      %v195 = vld [vmem:[%s165 + $0xb8] sm:$0xff]
      %v196 = vld [vmem:[%s165 + $0xc0] sm:$0xff]
      %v197 = vld [vmem:[%s165 + $0xc8] sm:$0xff]
      %v198 = vld [vmem:[%s165 + $0xd0] sm:$0xff]
      %v199 = vld [vmem:[%s165 + $0xd8] sm:$0xff]
      %v200 = vld [vmem:[%s165 + $0xe0] sm:$0xff]
      %v201 = vld [vmem:[%s165 + $0xe8] sm:$0xff]
      %v202 = vld [vmem:[%s165 + $0xf0] sm:$0xff]
      %v203 = vld [vmem:[%s165 + $0xf8] sm:$0xff]
      %v204 = vld [vmem:[%s165 + $0x100] sm:$0xff]
      %v205 = vld [vmem:[%s165 + $0x108] sm:$0xff]
      %v206 = vld [vmem:[%s165 + $0x110] sm:$0xff]
      %v207 = vld [vmem:[%s165 + $0x118] sm:$0xff]
      %v208 = vld [vmem:[%s165 + $0x120] sm:$0xff]
      %v209 = vld [vmem:[%s165 + $0x128] sm:$0xff]
      %v210 = vld [vmem:[%s165 + $0x130] sm:$0xff]
      %v211 = vld [vmem:[%s165 + $0x138] sm:$0xff]
      %v212 = vld [vmem:[%s165 + $0x140] sm:$0xff]
      %v213 = vld [vmem:[%s165 + $0x148] sm:$0xff]
      %v214 = vld [vmem:[%s165 + $0x150] sm:$0xff]
      %v215 = vld [vmem:[%s165 + $0x158] sm:$0xff]
      %v216 = vld [vmem:[%s165 + $0x160] sm:$0xff]
      %v217 = vld [vmem:[%s165 + $0x168] sm:$0xff]
      %v218 = vld [vmem:[%s165 + $0x170] sm:$0xff]
      %v219 = vld [vmem:[%s165 + $0x178] sm:$0xff]
      %v220 = vpack.c.bf16 %v173, %v172
      %v221 = vpack.c.bf16 %v175, %v174
      %v222 = vpack.c.bf16 %v177, %v176
      %v223 = vpack.c.bf16 %v179, %v178
      %v224 = vpack.c.bf16 %v181, %v180
      %v225 = vpack.c.bf16 %v183, %v182
      %v226 = vpack.c.bf16 %v185, %v184
      %v227 = vpack.c.bf16 %v187, %v186
      %v228 = vpack.c.bf16 %v189, %v188
      %v229 = vpack.c.bf16 %v191, %v190
      %v230 = vpack.c.bf16 %v193, %v192
      %v231 = vpack.c.bf16 %v195, %v194
      %v232 = vpack.c.bf16 %v197, %v196
      %v233 = vpack.c.bf16 %v199, %v198
      %v234 = vpack.c.bf16 %v201, %v200
      %v235 = vpack.c.bf16 %v203, %v202
      %v236 = vpack.c.bf16 %v205, %v204
      %v237 = vpack.c.bf16 %v207, %v206
      %v238 = vpack.c.bf16 %v209, %v208
      %v239 = vpack.c.bf16 %v211, %v210
      %v240 = vpack.c.bf16 %v213, %v212
      %v241 = vpack.c.bf16 %v215, %v214
      %v242 = vpack.c.bf16 %v217, %v216
      %v243 = vpack.c.bf16 %v219, %v218
      %v244 = vld [vmem:[%s1] sm:$0x3]
      %v245 = vld [vmem:[%s165 + $0x1] sm:$0xff]
      %v246 = vld [vmem:[%s165 + $0x9] sm:$0xff]
      %v247 = vld [vmem:[%s165 + $0x11] sm:$0xff]
      %v248 = vld [vmem:[%s165 + $0x19] sm:$0xff]
      %v249 = vld [vmem:[%s165 + $0x21] sm:$0xff]
      %v250 = vld [vmem:[%s165 + $0x29] sm:$0xff]
      %v251 = vld [vmem:[%s165 + $0x31] sm:$0xff]
      %v252 = vld [vmem:[%s165 + $0x39] sm:$0xff]
      %v253 = vld [vmem:[%s165 + $0x41] sm:$0xff]
      %v254 = vld [vmem:[%s165 + $0x49] sm:$0xff]
      %v255 = vld [vmem:[%s165 + $0x51] sm:$0xff]
      %v256 = vld [vmem:[%s165 + $0x59] sm:$0xff]
      %v257 = vld [vmem:[%s165 + $0x61] sm:$0xff]
      %v258 = vld [vmem:[%s165 + $0x69] sm:$0xff]
      %v259 = vld [vmem:[%s165 + $0x71] sm:$0xff]
      %v260 = vld [vmem:[%s165 + $0x79] sm:$0xff]
      %v261 = vld [vmem:[%s165 + $0x81] sm:$0xff]
      %v262 = vld [vmem:[%s165 + $0x89] sm:$0xff]
      %v263 = vld [vmem:[%s165 + $0x91] sm:$0xff]
      %v264 = vld [vmem:[%s165 + $0x99] sm:$0xff]
      %v265 = vld [vmem:[%s165 + $0xa1] sm:$0xff]
      %v266 = vld [vmem:[%s165 + $0xa9] sm:$0xff]
      %v267 = vld [vmem:[%s165 + $0xb1] sm:$0xff]
      %v268 = vld [vmem:[%s165 + $0xb9] sm:$0xff]
      %v269 = vld [vmem:[%s165 + $0xc1] sm:$0xff]
      %v270 = vld [vmem:[%s165 + $0xc9] sm:$0xff]
      %v271 = vld [vmem:[%s165 + $0xd1] sm:$0xff]
      %v272 = vld [vmem:[%s165 + $0xd9] sm:$0xff]
      %v273 = vld [vmem:[%s165 + $0xe1] sm:$0xff]
      %v274 = vld [vmem:[%s165 + $0xe9] sm:$0xff]
      %v275 = vld [vmem:[%s165 + $0xf1] sm:$0xff]
      %v276 = vld [vmem:[%s165 + $0xf9] sm:$0xff]
      %v277 = vld [vmem:[%s165 + $0x101] sm:$0xff]
      %v278 = vld [vmem:[%s165 + $0x109] sm:$0xff]
      %v279 = vld [vmem:[%s165 + $0x111] sm:$0xff]
      %v280 = vld [vmem:[%s165 + $0x119] sm:$0xff]
      %v281 = vld [vmem:[%s165 + $0x121] sm:$0xff]
      %v282 = vld [vmem:[%s165 + $0x129] sm:$0xff]
      %v283 = vld [vmem:[%s165 + $0x131] sm:$0xff]
      %v284 = vld [vmem:[%s165 + $0x139] sm:$0xff]
      %v285 = vld [vmem:[%s165 + $0x141] sm:$0xff]
      %v286 = vld [vmem:[%s165 + $0x149] sm:$0xff]
      %v287 = vld [vmem:[%s165 + $0x151] sm:$0xff]
      %v288 = vld [vmem:[%s165 + $0x159] sm:$0xff]
      %v289 = vld [vmem:[%s165 + $0x161] sm:$0xff]
      %v290 = vld [vmem:[%s165 + $0x169] sm:$0xff]
      %v291 = vld [vmem:[%s165 + $0x171] sm:$0xff]
      %v292 = vld [vmem:[%s165 + $0x179] sm:$0xff]
      %v293 = vpack.c.bf16 %v246, %v245
      %v294 = vpack.c.bf16 %v248, %v247
      %v295 = vpack.c.bf16 %v250, %v249
      %v296 = vpack.c.bf16 %v252, %v251
      %v297 = vpack.c.bf16 %v254, %v253
      %v298 = vpack.c.bf16 %v256, %v255
      %v299 = vpack.c.bf16 %v258, %v257
      %v300 = vpack.c.bf16 %v260, %v259
      %v301 = vpack.c.bf16 %v262, %v261
      %v302 = vpack.c.bf16 %v264, %v263
      %v303 = vpack.c.bf16 %v266, %v265
      %v304 = vpack.c.bf16 %v268, %v267
      %v305 = vpack.c.bf16 %v270, %v269
      %v306 = vpack.c.bf16 %v272, %v271
      %v307 = vpack.c.bf16 %v274, %v273
      %v308 = vpack.c.bf16 %v276, %v275
      %v309 = vpack.c.bf16 %v278, %v277
      %v310 = vpack.c.bf16 %v280, %v279
      %v311 = vpack.c.bf16 %v282, %v281
      %v312 = vpack.c.bf16 %v284, %v283
      %v313 = vpack.c.bf16 %v286, %v285
      %v314 = vpack.c.bf16 %v288, %v287
      %v315 = vpack.c.bf16 %v290, %v289
      %v316 = vpack.c.bf16 %v292, %v291
      %s317 = scalar_lea.vmem %s1, 2
      %v318 = vld [vmem:[%s317] sm:$0x3]
      %vm319 = vcmask 23552
      %v321 = vsel %vm319, %v293, 0
      %v324 = vsel %vm319, %v294, 0
      %v327 = vsel %vm319, %v295, 0
      %v330 = vsel %vm319, %v296, 0
      %v333 = vsel %vm319, %v297, 0
      %v336 = vsel %vm319, %v298, 0
      %v339 = vsel %vm319, %v299, 0
      %v342 = vsel %vm319, %v300, 0
      %v345 = vsel %vm319, %v301, 0
      %v348 = vsel %vm319, %v302, 0
      %v351 = vsel %vm319, %v303, 0
      %v354 = vsel %vm319, %v304, 0
      %v357 = vsel %vm319, %v305, 0
      %v360 = vsel %vm319, %v306, 0
      %v363 = vsel %vm319, %v307, 0
      %v366 = vsel %vm319, %v308, 0
      %v369 = vsel %vm319, %v309, 0
      %v372 = vsel %vm319, %v310, 0
      %v375 = vsel %vm319, %v311, 0
      %v378 = vsel %vm319, %v312, 0
      %v381 = vsel %vm319, %v313, 0
      %v384 = vsel %vm319, %v314, 0
      %v387 = vsel %vm319, %v315, 0
      %v390 = vsel %vm319, %v316, 0
      %vm392 = vcmask 1040384
      %vm393 = vcmask 1041408
      %v394 = vsel %vm392, 4294967295, 65535
      %v395 = vsel %vm393, %v394, 0
      %v397 = vand.u32 %v318, %v395
      %399 = vmatprep.subr.bf16.mxu0 0
      %400 = vmatpush1.bf16.msra.mxu0 %v397
      %401 = vmatprep.subr.bf16.mxu0 0
      %402 = vmatpush1.bf16.msra.mxu0 0
      %403 = vmatprep.subr.bf16.mxu0 0
      %404 = vmatpush1.bf16.msra.mxu0 0
      %405 = vmatprep.subr.bf16.mxu0 0
      %406 = vmatpush1.bf16.msra.mxu0 0
      %407 = vmatprep.subr.bf16.mxu0 0
      %408 = vmatpush1.bf16.msra.mxu0 0
      %409 = vmatprep.subr.bf16.mxu0 0
      %410 = vmatpush1.bf16.msra.mxu0 0
      %411 = vmatprep.subr.bf16.mxu0 0
      %412 = vmatpush1.bf16.msra.mxu0 0
      %413 = vmatprep.subr.bf16.mxu0 0
      %414 = vmatpush1.bf16.msra.mxu0 0
      %415 = vmatprep.subr.bf16.mxu0 0
      %416 = vmatpush1.bf16.msra.mxu0 0
      %417 = vmatprep.subr.bf16.mxu0 0
      %418 = vmatpush1.bf16.msra.mxu0 0
      %419 = vmatprep.subr.bf16.mxu0 0
      %420 = vmatpush1.bf16.msra.mxu0 0
      %421 = vmatprep.subr.bf16.mxu0 0
      %422 = vmatpush1.bf16.msra.mxu0 0
      %423 = vmatprep.subr.bf16.mxu0 0
      %424 = vmatpush1.bf16.msra.mxu0 0
      %425 = vmatprep.subr.bf16.mxu0 0
      %426 = vmatpush1.bf16.msra.mxu0 0
      %427 = vmatprep.subr.bf16.mxu0 0
      %428 = vmatpush1.bf16.msra.mxu0 0
      %429 = vmatprep.subr.bf16.mxu0 0
      %430 = vmatpush1.bf16.msra.mxu0 0
      %431 = vmatprep.mubr.bf16.mxu0 0
      %432 = vmatmul.mubr.bf16.gmra.mrb[0].mxu0 %v321
      %v433 = vpop.f32.mrb[0].mxu0
      %v434 = vadd.f32 0.0, %v433
      %v435 = vpop.f32.mrb[0].mxu0
      %v436 = vpop.f32.mrb[0].mxu0
      %v437 = vadd.f32 0.0, %v436
      %v438 = vpop.f32.mrb[0].mxu0
      %439 = vmatprep.mubr.bf16.mxu0 0
      %440 = vmatmul.mubr.bf16.gmra.mrb[0].mxu0 %v324
      %v441 = vpop.f32.mrb[0].mxu0
      %v442 = vpop.f32.mrb[0].mxu0
      %v443 = vpop.f32.mrb[0].mxu0
      %v444 = vadd.f32 0.0, %v443
      %v445 = vpop.f32.mrb[0].mxu0
      %446 = vmatprep.mubr.bf16.mxu0 0
      %447 = vmatmul.mubr.bf16.gmra.mrb[0].mxu0 %v327
      %v448 = vpop.f32.mrb[0].mxu0
      %v449 = vadd.f32 0.0, %v448
      %v450 = vpop.f32.mrb[0].mxu0
      %v451 = vpop.f32.mrb[0].mxu0
      %v452 = vpop.f32.mrb[0].mxu0
      %453 = vmatprep.mubr.bf16.mxu0 0
      %454 = vmatmul.mubr.bf16.gmra.mrb[0].mxu0 %v330
      %v455 = vpop.f32.mrb[0].mxu0
      %v456 = vadd.f32 0.0, %v455
      %v457 = vpop.f32.mrb[0].mxu0
      %v458 = vpop.f32.mrb[0].mxu0
      %v459 = vadd.f32 0.0, %v458
      %v460 = vpop.f32.mrb[0].mxu0
      %461 = vmatprep.mubr.bf16.mxu0 0
      %462 = vmatmul.mubr.bf16.gmra.mrb[0].mxu0 %v333
      %v463 = vpop.f32.mrb[0].mxu0
      %v464 = vpop.f32.mrb[0].mxu0
      %v465 = vpop.f32.mrb[0].mxu0
      %v466 = vadd.f32 0.0, %v465
      %v467 = vpop.f32.mrb[0].mxu0
      %468 = vmatprep.mubr.bf16.mxu0 0
      %469 = vmatmul.mubr.bf16.gmra.mrb[0].mxu0 %v336
      %v470 = vpop.f32.mrb[0].mxu0
      %v471 = vadd.f32 0.0, %v470
      %v472 = vpop.f32.mrb[0].mxu0
      %v473 = vpop.f32.mrb[0].mxu0
      %v474 = vpop.f32.mrb[0].mxu0
      %475 = vmatprep.mubr.bf16.mxu0 0
      %476 = vmatmul.mubr.bf16.gmra.mrb[0].mxu0 %v339
      %v477 = vpop.f32.mrb[0].mxu0
      %v478 = vadd.f32 0.0, %v477
      %v479 = vpop.f32.mrb[0].mxu0
      %v480 = vpop.f32.mrb[0].mxu0
      %v481 = vadd.f32 0.0, %v480
      %v482 = vpop.f32.mrb[0].mxu0
      %483 = vmatprep.mubr.bf16.mxu0 0
      %484 = vmatmul.mubr.bf16.gmra.mrb[0].mxu0 %v342
      %v485 = vpop.f32.mrb[0].mxu0
      %v486 = vpop.f32.mrb[0].mxu0
      %v487 = vpop.f32.mrb[0].mxu0
      %v488 = vadd.f32 0.0, %v487
      %v489 = vpop.f32.mrb[0].mxu0
      %490 = vmatprep.mubr.bf16.mxu0 0
      %491 = vmatmul.mubr.bf16.gmra.mrb[0].mxu0 %v345
      %v492 = vpop.f32.mrb[0].mxu0
      %v493 = vadd.f32 0.0, %v492
      %v494 = vpop.f32.mrb[0].mxu0
      %v495 = vpop.f32.mrb[0].mxu0
      %v496 = vpop.f32.mrb[0].mxu0
      %497 = vmatprep.mubr.bf16.mxu0 0
      %498 = vmatmul.mubr.bf16.gmra.mrb[0].mxu0 %v348
      %v499 = vpop.f32.mrb[0].mxu0
      %v500 = vadd.f32 0.0, %v499
      %v501 = vpop.f32.mrb[0].mxu0
      %v502 = vpop.f32.mrb[0].mxu0
      %v503 = vadd.f32 0.0, %v502
      %v504 = vpop.f32.mrb[0].mxu0
      %505 = vmatprep.mubr.bf16.mxu0 0
      %506 = vmatmul.mubr.bf16.gmra.mrb[0].mxu0 %v351
      %v507 = vpop.f32.mrb[0].mxu0
      %v508 = vpop.f32.mrb[0].mxu0
      %v509 = vpop.f32.mrb[0].mxu0
      %v510 = vadd.f32 0.0, %v509
      %v511 = vpop.f32.mrb[0].mxu0
      %512 = vmatprep.mubr.bf16.mxu0 0
      %513 = vmatmul.mubr.bf16.gmra.mrb[0].mxu0 %v354
      %v514 = vpop.f32.mrb[0].mxu0
      %v515 = vadd.f32 0.0, %v514
      %v516 = vpop.f32.mrb[0].mxu0
      %v517 = vpop.f32.mrb[0].mxu0
      %v518 = vpop.f32.mrb[0].mxu0
      %519 = vmatprep.mubr.bf16.mxu0 0
      %520 = vmatmul.mubr.bf16.gmra.mrb[0].mxu0 %v357
      %v521 = vpop.f32.mrb[0].mxu0
      %v522 = vadd.f32 0.0, %v521
      %v523 = vpop.f32.mrb[0].mxu0
      %v524 = vpop.f32.mrb[0].mxu0
      %v525 = vadd.f32 0.0, %v524
      %v526 = vpop.f32.mrb[0].mxu0
      %527 = vmatprep.mubr.bf16.mxu0 0
      %528 = vmatmul.mubr.bf16.gmra.mrb[0].mxu0 %v360
      %v529 = vpop.f32.mrb[0].mxu0
      %v530 = vpop.f32.mrb[0].mxu0
      %v531 = vpop.f32.mrb[0].mxu0
      %v532 = vadd.f32 0.0, %v531
      %v533 = vpop.f32.mrb[0].mxu0
      %534 = vmatprep.mubr.bf16.mxu0 0
      %535 = vmatmul.mubr.bf16.gmra.mrb[0].mxu0 %v363
      %v536 = vpop.f32.mrb[0].mxu0
      %v537 = vadd.f32 0.0, %v536
      %v538 = vpop.f32.mrb[0].mxu0
      %v539 = vpop.f32.mrb[0].mxu0
      %v540 = vpop.f32.mrb[0].mxu0
      %541 = vmatprep.mubr.bf16.mxu0 0
      %542 = vmatmul.mubr.bf16.gmra.mrb[0].mxu0 %v366
      %v543 = vpop.f32.mrb[0].mxu0
      %v544 = vadd.f32 0.0, %v543
      %v545 = vpop.f32.mrb[0].mxu0
      %v546 = vpop.f32.mrb[0].mxu0
      %v547 = vadd.f32 0.0, %v546
      %v548 = vpop.f32.mrb[0].mxu0
      %549 = vmatprep.mubr.bf16.mxu0 0
      %550 = vmatmul.mubr.bf16.gmra.mrb[0].mxu0 %v369
      %v551 = vpop.f32.mrb[0].mxu0
      %v552 = vpop.f32.mrb[0].mxu0
      %v553 = vpop.f32.mrb[0].mxu0
      %v554 = vadd.f32 0.0, %v553
      %v555 = vpop.f32.mrb[0].mxu0
      %556 = vmatprep.mubr.bf16.mxu0 0
      %557 = vmatmul.mubr.bf16.gmra.mrb[0].mxu0 %v372
      %v558 = vpop.f32.mrb[0].mxu0
      %v559 = vadd.f32 0.0, %v558
      %v560 = vpop.f32.mrb[0].mxu0
      %v561 = vpop.f32.mrb[0].mxu0
      %v562 = vpop.f32.mrb[0].mxu0
      %563 = vmatprep.mubr.bf16.mxu0 0
      %564 = vmatmul.mubr.bf16.gmra.mrb[0].mxu0 %v375
      %v565 = vpop.f32.mrb[0].mxu0
      %v566 = vadd.f32 0.0, %v565
      %v567 = vpop.f32.mrb[0].mxu0
      %v568 = vpop.f32.mrb[0].mxu0
      %v569 = vadd.f32 0.0, %v568
      %v570 = vpop.f32.mrb[0].mxu0
      %571 = vmatprep.mubr.bf16.mxu0 0
      %572 = vmatmul.mubr.bf16.gmra.mrb[0].mxu0 %v378
      %v573 = vpop.f32.mrb[0].mxu0
      %v574 = vpop.f32.mrb[0].mxu0
      %v575 = vpop.f32.mrb[0].mxu0
      %v576 = vadd.f32 0.0, %v575
      %v577 = vpop.f32.mrb[0].mxu0
      %578 = vmatprep.mubr.bf16.mxu0 0
      %579 = vmatmul.mubr.bf16.gmra.mrb[0].mxu0 %v381
      %v580 = vpop.f32.mrb[0].mxu0
      %v581 = vadd.f32 0.0, %v580
      %v582 = vpop.f32.mrb[0].mxu0
      %v583 = vpop.f32.mrb[0].mxu0
      %v584 = vpop.f32.mrb[0].mxu0
      %585 = vmatprep.mubr.bf16.mxu0 0
      %586 = vmatmul.mubr.bf16.gmra.mrb[0].mxu0 %v384
      %v587 = vpop.f32.mrb[0].mxu0
      %v588 = vadd.f32 0.0, %v587
      %v589 = vpop.f32.mrb[0].mxu0
      %v590 = vpop.f32.mrb[0].mxu0
      %v591 = vadd.f32 0.0, %v590
      %v592 = vpop.f32.mrb[0].mxu0
      %593 = vmatprep.mubr.bf16.mxu0 0
      %594 = vmatmul.mubr.bf16.gmra.mrb[0].mxu0 %v387
      %v595 = vpop.f32.mrb[0].mxu0
      %v596 = vpop.f32.mrb[0].mxu0
      %v597 = vpop.f32.mrb[0].mxu0
      %v598 = vadd.f32 0.0, %v597
      %v599 = vpop.f32.mrb[0].mxu0
      %600 = vmatprep.mubr.bf16.mxu0 0
      %601 = vmatmul.mubr.bf16.gmra.mrb[0].mxu0 %v390
      %v602 = vpop.f32.mrb[0].mxu0
      %v603 = vadd.f32 0.0, %v602
      %v604 = vpop.f32.mrb[0].mxu0
      %v605 = vpop.f32.mrb[0].mxu0
      %v606 = vpop.f32.mrb[0].mxu0
      %607 = vdwg.mxu0
      %v609 = vsel %vm319, %v220, 0
      %v612 = vsel %vm319, %v221, 0
      %v615 = vsel %vm319, %v222, 0
      %v618 = vsel %vm319, %v223, 0
      %v621 = vsel %vm319, %v224, 0
      %v624 = vsel %vm319, %v225, 0
      %v627 = vsel %vm319, %v226, 0
      %v630 = vsel %vm319, %v227, 0
      %v633 = vsel %vm319, %v228, 0
      %v636 = vsel %vm319, %v229, 0
      %v639 = vsel %vm319, %v230, 0
      %v642 = vsel %vm319, %v231, 0
      %v645 = vsel %vm319, %v232, 0
      %v648 = vsel %vm319, %v233, 0
      %v651 = vsel %vm319, %v234, 0
      %v654 = vsel %vm319, %v235, 0
      %v657 = vsel %vm319, %v236, 0
      %v660 = vsel %vm319, %v237, 0
      %v663 = vsel %vm319, %v238, 0
      %v666 = vsel %vm319, %v239, 0
      %v669 = vsel %vm319, %v240, 0
      %v672 = vsel %vm319, %v241, 0
      %v675 = vsel %vm319, %v242, 0
      %v678 = vsel %vm319, %v243, 0
      %v681 = vand.u32 %v244, %v395
      %683 = vmatprep.subr.bf16.mxu0 0
      %684 = vmatpush1.bf16.msra.mxu0 %v681
      %685 = vmatprep.subr.bf16.mxu0 0
      %686 = vmatpush1.bf16.msra.mxu0 0
      %687 = vmatprep.subr.bf16.mxu0 0
      %688 = vmatpush1.bf16.msra.mxu0 0
      %689 = vmatprep.subr.bf16.mxu0 0
      %690 = vmatpush1.bf16.msra.mxu0 0
      %691 = vmatprep.subr.bf16.mxu0 0
      %692 = vmatpush1.bf16.msra.mxu0 0
      %693 = vmatprep.subr.bf16.mxu0 0
      %694 = vmatpush1.bf16.msra.mxu0 0
      %695 = vmatprep.subr.bf16.mxu0 0
      %696 = vmatpush1.bf16.msra.mxu0 0
      %697 = vmatprep.subr.bf16.mxu0 0
      %698 = vmatpush1.bf16.msra.mxu0 0
      %699 = vmatprep.subr.bf16.mxu0 0
      %700 = vmatpush1.bf16.msra.mxu0 0
      %701 = vmatprep.subr.bf16.mxu0 0
      %702 = vmatpush1.bf16.msra.mxu0 0
      %703 = vmatprep.subr.bf16.mxu0 0
      %704 = vmatpush1.bf16.msra.mxu0 0
      %705 = vmatprep.subr.bf16.mxu0 0
      %706 = vmatpush1.bf16.msra.mxu0 0
      %707 = vmatprep.subr.bf16.mxu0 0
      %708 = vmatpush1.bf16.msra.mxu0 0
      %709 = vmatprep.subr.bf16.mxu0 0
      %710 = vmatpush1.bf16.msra.mxu0 0
      %711 = vmatprep.subr.bf16.mxu0 0
      %712 = vmatpush1.bf16.msra.mxu0 0
      %713 = vmatprep.subr.bf16.mxu0 0
      %714 = vmatpush1.bf16.msra.mxu0 0
      %715 = vmatprep.mubr.bf16.mxu0 0
      %716 = vmatmul.mubr.bf16.gmra.mrb[0].mxu0 %v609
      %v717 = vpop.f32.mrb[0].mxu0
      %v718 = vadd.f32 %v434, %v717
      %v719 = vpop.f32.mrb[0].mxu0
      %v720 = vpop.f32.mrb[0].mxu0
      %v721 = vadd.f32 %v437, %v720
      %v722 = vpop.f32.mrb[0].mxu0
      %723 = vmatprep.mubr.bf16.mxu0 0
      %724 = vmatmul.mubr.bf16.gmra.mrb[0].mxu0 %v612
      %v725 = vpop.f32.mrb[0].mxu0
      %v726 = vpop.f32.mrb[0].mxu0
      %v727 = vpop.f32.mrb[0].mxu0
      %v728 = vadd.f32 %v444, %v727
      %v729 = vpop.f32.mrb[0].mxu0
      %730 = vmatprep.mubr.bf16.mxu0 0
      %731 = vmatmul.mubr.bf16.gmra.mrb[0].mxu0 %v615
      %v732 = vpop.f32.mrb[0].mxu0
      %v733 = vadd.f32 %v449, %v732
      %v734 = vpop.f32.mrb[0].mxu0
      %v735 = vpop.f32.mrb[0].mxu0
      %v736 = vpop.f32.mrb[0].mxu0
      %737 = vmatprep.mubr.bf16.mxu0 0
      %738 = vmatmul.mubr.bf16.gmra.mrb[0].mxu0 %v618
      %v739 = vpop.f32.mrb[0].mxu0
      %v740 = vadd.f32 %v456, %v739
      %v741 = vpop.f32.mrb[0].mxu0
      %v742 = vpop.f32.mrb[0].mxu0
      %v743 = vadd.f32 %v459, %v742
      %v744 = vpop.f32.mrb[0].mxu0
      %745 = vmatprep.mubr.bf16.mxu0 0
      %746 = vmatmul.mubr.bf16.gmra.mrb[0].mxu0 %v621
      %v747 = vpop.f32.mrb[0].mxu0
      %v748 = vpop.f32.mrb[0].mxu0
      %v749 = vpop.f32.mrb[0].mxu0
      %v750 = vadd.f32 %v466, %v749
      %v751 = vpop.f32.mrb[0].mxu0
      %752 = vmatprep.mubr.bf16.mxu0 0
      %753 = vmatmul.mubr.bf16.gmra.mrb[0].mxu0 %v624
      %v754 = vpop.f32.mrb[0].mxu0
      %v755 = vadd.f32 %v471, %v754
      %v756 = vpop.f32.mrb[0].mxu0
      %v757 = vpop.f32.mrb[0].mxu0
      %v758 = vpop.f32.mrb[0].mxu0
      %759 = vmatprep.mubr.bf16.mxu0 0
      %760 = vmatmul.mubr.bf16.gmra.mrb[0].mxu0 %v627
      %v761 = vpop.f32.mrb[0].mxu0
      %v762 = vadd.f32 %v478, %v761
      %v763 = vpop.f32.mrb[0].mxu0
      %v764 = vpop.f32.mrb[0].mxu0
      %v765 = vadd.f32 %v481, %v764
      %v766 = vpop.f32.mrb[0].mxu0
      %767 = vmatprep.mubr.bf16.mxu0 0
      %768 = vmatmul.mubr.bf16.gmra.mrb[0].mxu0 %v630
      %v769 = vpop.f32.mrb[0].mxu0
      %v770 = vpop.f32.mrb[0].mxu0
      %v771 = vpop.f32.mrb[0].mxu0
      %v772 = vadd.f32 %v488, %v771
      %v773 = vpop.f32.mrb[0].mxu0
      %774 = vmatprep.mubr.bf16.mxu0 0
      %775 = vmatmul.mubr.bf16.gmra.mrb[0].mxu0 %v633
      %v776 = vpop.f32.mrb[0].mxu0
      %v777 = vadd.f32 %v493, %v776
      %v778 = vpop.f32.mrb[0].mxu0
      %v779 = vpop.f32.mrb[0].mxu0
      %v780 = vpop.f32.mrb[0].mxu0
      %781 = vmatprep.mubr.bf16.mxu0 0
      %782 = vmatmul.mubr.bf16.gmra.mrb[0].mxu0 %v636
      %v783 = vpop.f32.mrb[0].mxu0
      %v784 = vadd.f32 %v500, %v783
      %v785 = vpop.f32.mrb[0].mxu0
      %v786 = vpop.f32.mrb[0].mxu0
      %v787 = vadd.f32 %v503, %v786
      %v788 = vpop.f32.mrb[0].mxu0
      %789 = vmatprep.mubr.bf16.mxu0 0
      %790 = vmatmul.mubr.bf16.gmra.mrb[0].mxu0 %v639
      %v791 = vpop.f32.mrb[0].mxu0
      %v792 = vpop.f32.mrb[0].mxu0
      %v793 = vpop.f32.mrb[0].mxu0
      %v794 = vadd.f32 %v510, %v793
      %v795 = vpop.f32.mrb[0].mxu0
      %796 = vmatprep.mubr.bf16.mxu0 0
      %797 = vmatmul.mubr.bf16.gmra.mrb[0].mxu0 %v642
      %v798 = vpop.f32.mrb[0].mxu0
      %v799 = vadd.f32 %v515, %v798
      %v800 = vpop.f32.mrb[0].mxu0
      %v801 = vpop.f32.mrb[0].mxu0
      %v802 = vpop.f32.mrb[0].mxu0
      %803 = vmatprep.mubr.bf16.mxu0 0
      %804 = vmatmul.mubr.bf16.gmra.mrb[0].mxu0 %v645
      %v805 = vpop.f32.mrb[0].mxu0
      %v806 = vadd.f32 %v522, %v805
      %v807 = vpop.f32.mrb[0].mxu0
      %v808 = vpop.f32.mrb[0].mxu0
      %v809 = vadd.f32 %v525, %v808
      %v810 = vpop.f32.mrb[0].mxu0
      %811 = vmatprep.mubr.bf16.mxu0 0
      %812 = vmatmul.mubr.bf16.gmra.mrb[0].mxu0 %v648
      %v813 = vpop.f32.mrb[0].mxu0
      %v814 = vpop.f32.mrb[0].mxu0
      %v815 = vpop.f32.mrb[0].mxu0
      %v816 = vadd.f32 %v532, %v815
      %v817 = vpop.f32.mrb[0].mxu0
      %818 = vmatprep.mubr.bf16.mxu0 0
      %819 = vmatmul.mubr.bf16.gmra.mrb[0].mxu0 %v651
      %v820 = vpop.f32.mrb[0].mxu0
      %v821 = vadd.f32 %v537, %v820
      %v822 = vpop.f32.mrb[0].mxu0
      %v823 = vpop.f32.mrb[0].mxu0
      %v824 = vpop.f32.mrb[0].mxu0
      %825 = vmatprep.mubr.bf16.mxu0 0
      %826 = vmatmul.mubr.bf16.gmra.mrb[0].mxu0 %v654
      %v827 = vpop.f32.mrb[0].mxu0
      %v828 = vadd.f32 %v544, %v827
      %v829 = vpop.f32.mrb[0].mxu0
      %v830 = vpop.f32.mrb[0].mxu0
      %v831 = vadd.f32 %v547, %v830
      %v832 = vpop.f32.mrb[0].mxu0
      %833 = vmatprep.mubr.bf16.mxu0 0
      %834 = vmatmul.mubr.bf16.gmra.mrb[0].mxu0 %v657
      %v835 = vpop.f32.mrb[0].mxu0
      %v836 = vpop.f32.mrb[0].mxu0
      %v837 = vpop.f32.mrb[0].mxu0
      %v838 = vadd.f32 %v554, %v837
      %v839 = vpop.f32.mrb[0].mxu0
      %840 = vmatprep.mubr.bf16.mxu0 0
      %841 = vmatmul.mubr.bf16.gmra.mrb[0].mxu0 %v660
      %v842 = vpop.f32.mrb[0].mxu0
      %v843 = vadd.f32 %v559, %v842
      %v844 = vpop.f32.mrb[0].mxu0
      %v845 = vpop.f32.mrb[0].mxu0
      %v846 = vpop.f32.mrb[0].mxu0
      %847 = vmatprep.mubr.bf16.mxu0 0
      %848 = vmatmul.mubr.bf16.gmra.mrb[0].mxu0 %v663
      %v849 = vpop.f32.mrb[0].mxu0
      %v850 = vadd.f32 %v566, %v849
      %v851 = vpop.f32.mrb[0].mxu0
      %v852 = vpop.f32.mrb[0].mxu0
      %v853 = vadd.f32 %v569, %v852
      %v854 = vpop.f32.mrb[0].mxu0
      %855 = vmatprep.mubr.bf16.mxu0 0
      %856 = vmatmul.mubr.bf16.gmra.mrb[0].mxu0 %v666
      %v857 = vpop.f32.mrb[0].mxu0
      %v858 = vpop.f32.mrb[0].mxu0
      %v859 = vpop.f32.mrb[0].mxu0
      %v860 = vadd.f32 %v576, %v859
      %v861 = vpop.f32.mrb[0].mxu0
      %862 = vmatprep.mubr.bf16.mxu0 0
      %863 = vmatmul.mubr.bf16.gmra.mrb[0].mxu0 %v669
      %v864 = vpop.f32.mrb[0].mxu0
      %v865 = vadd.f32 %v581, %v864
      %v866 = vpop.f32.mrb[0].mxu0
      %v867 = vpop.f32.mrb[0].mxu0
      %v868 = vpop.f32.mrb[0].mxu0
      %869 = vmatprep.mubr.bf16.mxu0 0
      %870 = vmatmul.mubr.bf16.gmra.mrb[0].mxu0 %v672
      %v871 = vpop.f32.mrb[0].mxu0
      %v872 = vadd.f32 %v588, %v871
      %v873 = vpop.f32.mrb[0].mxu0
      %v874 = vpop.f32.mrb[0].mxu0
      %v875 = vadd.f32 %v591, %v874
      %v876 = vpop.f32.mrb[0].mxu0
      %877 = vmatprep.mubr.bf16.mxu0 0
      %878 = vmatmul.mubr.bf16.gmra.mrb[0].mxu0 %v675
      %v879 = vpop.f32.mrb[0].mxu0
      %v880 = vpop.f32.mrb[0].mxu0
      %v881 = vpop.f32.mrb[0].mxu0
      %v882 = vadd.f32 %v598, %v881
      %v883 = vpop.f32.mrb[0].mxu0
      %884 = vmatprep.mubr.bf16.mxu0 0
      %885 = vmatmul.mubr.bf16.gmra.mrb[0].mxu0 %v678
      %v886 = vpop.f32.mrb[0].mxu0
      %v887 = vadd.f32 %v603, %v886
      %v888 = vpop.f32.mrb[0].mxu0
      %v889 = vpop.f32.mrb[0].mxu0
      %v890 = vpop.f32.mrb[0].mxu0
      %891 = vdwg.mxu0
      %v892 = vld [vmem:[%s165 + $0x2] sm:$0xff]
      %v893 = vld [vmem:[%s165 + $0xa] sm:$0xff]
      %v894 = vld [vmem:[%s165 + $0x12] sm:$0xff]
      %v895 = vld [vmem:[%s165 + $0x1a] sm:$0xff]
      %v896 = vld [vmem:[%s165 + $0x22] sm:$0xff]
      %v897 = vld [vmem:[%s165 + $0x2a] sm:$0xff]
      %v898 = vld [vmem:[%s165 + $0x32] sm:$0xff]
      %v899 = vld [vmem:[%s165 + $0x3a] sm:$0xff]
      %v900 = vld [vmem:[%s165 + $0x42] sm:$0xff]
      %v901 = vld [vmem:[%s165 + $0x4a] sm:$0xff]
      %v902 = vld [vmem:[%s165 + $0x52] sm:$0xff]
      %v903 = vld [vmem:[%s165 + $0x5a] sm:$0xff]
      %v904 = vld [vmem:[%s165 + $0x62] sm:$0xff]
      %v905 = vld [vmem:[%s165 + $0x6a] sm:$0xff]
      %v906 = vld [vmem:[%s165 + $0x72] sm:$0xff]
      %v907 = vld [vmem:[%s165 + $0x7a] sm:$0xff]
      %v908 = vld [vmem:[%s165 + $0x82] sm:$0xff]
      %v909 = vld [vmem:[%s165 + $0x8a] sm:$0xff]
      %v910 = vld [vmem:[%s165 + $0x92] sm:$0xff]
      %v911 = vld [vmem:[%s165 + $0x9a] sm:$0xff]
      %v912 = vld [vmem:[%s165 + $0xa2] sm:$0xff]
      %v913 = vld [vmem:[%s165 + $0xaa] sm:$0xff]
      %v914 = vld [vmem:[%s165 + $0xb2] sm:$0xff]
      %v915 = vld [vmem:[%s165 + $0xba] sm:$0xff]
      %v916 = vld [vmem:[%s165 + $0xc2] sm:$0xff]
      %v917 = vld [vmem:[%s165 + $0xca] sm:$0xff]
      %v918 = vld [vmem:[%s165 + $0xd2] sm:$0xff]
      %v919 = vld [vmem:[%s165 + $0xda] sm:$0xff]
      %v920 = vld [vmem:[%s165 + $0xe2] sm:$0xff]
      %v921 = vld [vmem:[%s165 + $0xea] sm:$0xff]
      %v922 = vld [vmem:[%s165 + $0xf2] sm:$0xff]
      %v923 = vld [vmem:[%s165 + $0xfa] sm:$0xff]
      %v924 = vld [vmem:[%s165 + $0x102] sm:$0xff]
      %v925 = vld [vmem:[%s165 + $0x10a] sm:$0xff]
      %v926 = vld [vmem:[%s165 + $0x112] sm:$0xff]
      %v927 = vld [vmem:[%s165 + $0x11a] sm:$0xff]
      %v928 = vld [vmem:[%s165 + $0x122] sm:$0xff]
      %v929 = vld [vmem:[%s165 + $0x12a] sm:$0xff]
      %v930 = vld [vmem:[%s165 + $0x132] sm:$0xff]
      %v931 = vld [vmem:[%s165 + $0x13a] sm:$0xff]
      %v932 = vld [vmem:[%s165 + $0x142] sm:$0xff]
      %v933 = vld [vmem:[%s165 + $0x14a] sm:$0xff]
      %v934 = vld [vmem:[%s165 + $0x152] sm:$0xff]
      %v935 = vld [vmem:[%s165 + $0x15a] sm:$0xff]
      %v936 = vld [vmem:[%s165 + $0x162] sm:$0xff]
      %v937 = vld [vmem:[%s165 + $0x16a] sm:$0xff]
      %v938 = vld [vmem:[%s165 + $0x172] sm:$0xff]
      %v939 = vld [vmem:[%s165 + $0x17a] sm:$0xff]
      %v940 = vpack.c.bf16 %v893, %v892
      %v941 = vpack.c.bf16 %v895, %v894
      %v942 = vpack.c.bf16 %v897, %v896
      %v943 = vpack.c.bf16 %v899, %v898
      %v944 = vpack.c.bf16 %v901, %v900
      %v945 = vpack.c.bf16 %v903, %v902
      %v946 = vpack.c.bf16 %v905, %v904
      %v947 = vpack.c.bf16 %v907, %v906
      %v948 = vpack.c.bf16 %v909, %v908
      %v949 = vpack.c.bf16 %v911, %v910
      %v950 = vpack.c.bf16 %v913, %v912
      %v951 = vpack.c.bf16 %v915, %v914
      %v952 = vpack.c.bf16 %v917, %v916
      %v953 = vpack.c.bf16 %v919, %v918
      %v954 = vpack.c.bf16 %v921, %v920
      %v955 = vpack.c.bf16 %v923, %v922
      %v956 = vpack.c.bf16 %v925, %v924
      %v957 = vpack.c.bf16 %v927, %v926
      %v958 = vpack.c.bf16 %v929, %v928
      %v959 = vpack.c.bf16 %v931, %v930
      %v960 = vpack.c.bf16 %v933, %v932
      %v961 = vpack.c.bf16 %v935, %v934
      %v962 = vpack.c.bf16 %v937, %v936
      %v963 = vpack.c.bf16 %v939, %v938
      %s964 = scalar_lea.vmem %s1, 4
      %v965 = vld [vmem:[%s964] sm:$0x3]
      %v967 = vsel %vm319, %v940, 0
      %v970 = vsel %vm319, %v941, 0
      %v973 = vsel %vm319, %v942, 0
      %v976 = vsel %vm319, %v943, 0
      %v979 = vsel %vm319, %v944, 0
      %v982 = vsel %vm319, %v945, 0
      %v985 = vsel %vm319, %v946, 0
      %v988 = vsel %vm319, %v947, 0
      %v991 = vsel %vm319, %v948, 0
      %v994 = vsel %vm319, %v949, 0
      %v997 = vsel %vm319, %v950, 0
      %v1000 = vsel %vm319, %v951, 0
      %v1003 = vsel %vm319, %v952, 0
      %v1006 = vsel %vm319, %v953, 0
      %v1009 = vsel %vm319, %v954, 0
      %v1012 = vsel %vm319, %v955, 0
      %v1015 = vsel %vm319, %v956, 0
      %v1018 = vsel %vm319, %v957, 0
      %v1021 = vsel %vm319, %v958, 0
      %v1024 = vsel %vm319, %v959, 0
      %v1027 = vsel %vm319, %v960, 0
      %v1030 = vsel %vm319, %v961, 0
      %v1033 = vsel %vm319, %v962, 0
      %v1036 = vsel %vm319, %v963, 0
      %v1039 = vand.u32 %v965, %v395
      %1041 = vmatprep.subr.bf16.mxu0 0
      %1042 = vmatpush1.bf16.msra.mxu0 %v1039
      %1043 = vmatprep.subr.bf16.mxu0 0
      %1044 = vmatpush1.bf16.msra.mxu0 0
      %1045 = vmatprep.subr.bf16.mxu0 0
      %1046 = vmatpush1.bf16.msra.mxu0 0
      %1047 = vmatprep.subr.bf16.mxu0 0
      %1048 = vmatpush1.bf16.msra.mxu0 0
      %1049 = vmatprep.subr.bf16.mxu0 0
      %1050 = vmatpush1.bf16.msra.mxu0 0
      %1051 = vmatprep.subr.bf16.mxu0 0
      %1052 = vmatpush1.bf16.msra.mxu0 0
      %1053 = vmatprep.subr.bf16.mxu0 0
      %1054 = vmatpush1.bf16.msra.mxu0 0
      %1055 = vmatprep.subr.bf16.mxu0 0
      %1056 = vmatpush1.bf16.msra.mxu0 0
      %1057 = vmatprep.subr.bf16.mxu0 0
      %1058 = vmatpush1.bf16.msra.mxu0 0
      %1059 = vmatprep.subr.bf16.mxu0 0
      %1060 = vmatpush1.bf16.msra.mxu0 0
      %1061 = vmatprep.subr.bf16.mxu0 0
      %1062 = vmatpush1.bf16.msra.mxu0 0
      %1063 = vmatprep.subr.bf16.mxu0 0
      %1064 = vmatpush1.bf16.msra.mxu0 0
      %1065 = vmatprep.subr.bf16.mxu0 0
      %1066 = vmatpush1.bf16.msra.mxu0 0
      %1067 = vmatprep.subr.bf16.mxu0 0
      %1068 = vmatpush1.bf16.msra.mxu0 0
      %1069 = vmatprep.subr.bf16.mxu0 0
      %1070 = vmatpush1.bf16.msra.mxu0 0
      %1071 = vmatprep.subr.bf16.mxu0 0
      %1072 = vmatpush1.bf16.msra.mxu0 0
      %1073 = vmatprep.mubr.bf16.mxu0 0
      %1074 = vmatmul.mubr.bf16.gmra.mrb[0].mxu0 %v967
      %v1075 = vpop.f32.mrb[0].mxu0
      %v1076 = vadd.f32 0.0, %v1075
      %v1077 = vpop.f32.mrb[0].mxu0
      %v1078 = vpop.f32.mrb[0].mxu0
      %v1079 = vadd.f32 0.0, %v1078
      %v1080 = vpop.f32.mrb[0].mxu0
      %1081 = vmatprep.mubr.bf16.mxu0 0
      %1082 = vmatmul.mubr.bf16.gmra.mrb[0].mxu0 %v970
      %v1083 = vpop.f32.mrb[0].mxu0
      %v1084 = vpop.f32.mrb[0].mxu0
      %v1085 = vpop.f32.mrb[0].mxu0
      %v1086 = vadd.f32 0.0, %v1085
      %v1087 = vpop.f32.mrb[0].mxu0
      %1088 = vmatprep.mubr.bf16.mxu0 0
      %1089 = vmatmul.mubr.bf16.gmra.mrb[0].mxu0 %v973
      %v1090 = vpop.f32.mrb[0].mxu0
      %v1091 = vadd.f32 0.0, %v1090
      %v1092 = vpop.f32.mrb[0].mxu0
      %v1093 = vpop.f32.mrb[0].mxu0
      %v1094 = vpop.f32.mrb[0].mxu0
      %1095 = vmatprep.mubr.bf16.mxu0 0
      %1096 = vmatmul.mubr.bf16.gmra.mrb[0].mxu0 %v976
      %v1097 = vpop.f32.mrb[0].mxu0
      %v1098 = vadd.f32 0.0, %v1097
      %v1099 = vpop.f32.mrb[0].mxu0
      %v1100 = vpop.f32.mrb[0].mxu0
      %v1101 = vadd.f32 0.0, %v1100
      %v1102 = vpop.f32.mrb[0].mxu0
      %1103 = vmatprep.mubr.bf16.mxu0 0
      %1104 = vmatmul.mubr.bf16.gmra.mrb[0].mxu0 %v979
      %v1105 = vpop.f32.mrb[0].mxu0
      %v1106 = vpop.f32.mrb[0].mxu0
      %v1107 = vpop.f32.mrb[0].mxu0
      %v1108 = vadd.f32 0.0, %v1107
      %v1109 = vpop.f32.mrb[0].mxu0
      %1110 = vmatprep.mubr.bf16.mxu0 0
      %1111 = vmatmul.mubr.bf16.gmra.mrb[0].mxu0 %v982
      %v1112 = vpop.f32.mrb[0].mxu0
      %v1113 = vadd.f32 0.0, %v1112
      %v1114 = vpop.f32.mrb[0].mxu0
      %v1115 = vpop.f32.mrb[0].mxu0
      %v1116 = vpop.f32.mrb[0].mxu0
      %1117 = vmatprep.mubr.bf16.mxu0 0
      %1118 = vmatmul.mubr.bf16.gmra.mrb[0].mxu0 %v985
      %v1119 = vpop.f32.mrb[0].mxu0
      %v1120 = vadd.f32 0.0, %v1119
      %v1121 = vpop.f32.mrb[0].mxu0
      %v1122 = vpop.f32.mrb[0].mxu0
      %v1123 = vadd.f32 0.0, %v1122
      %v1124 = vpop.f32.mrb[0].mxu0
      %1125 = vmatprep.mubr.bf16.mxu0 0
      %1126 = vmatmul.mubr.bf16.gmra.mrb[0].mxu0 %v988
      %v1127 = vpop.f32.mrb[0].mxu0
      %v1128 = vpop.f32.mrb[0].mxu0
      %v1129 = vpop.f32.mrb[0].mxu0
      %v1130 = vadd.f32 0.0, %v1129
      %v1131 = vpop.f32.mrb[0].mxu0
      %1132 = vmatprep.mubr.bf16.mxu0 0
      %1133 = vmatmul.mubr.bf16.gmra.mrb[0].mxu0 %v991
      %v1134 = vpop.f32.mrb[0].mxu0
      %v1135 = vadd.f32 0.0, %v1134
      %v1136 = vpop.f32.mrb[0].mxu0
      %v1137 = vpop.f32.mrb[0].mxu0
      %v1138 = vpop.f32.mrb[0].mxu0
      %1139 = vmatprep.mubr.bf16.mxu0 0
      %1140 = vmatmul.mubr.bf16.gmra.mrb[0].mxu0 %v994
      %v1141 = vpop.f32.mrb[0].mxu0
      %v1142 = vadd.f32 0.0, %v1141
      %v1143 = vpop.f32.mrb[0].mxu0
      %v1144 = vpop.f32.mrb[0].mxu0
      %v1145 = vadd.f32 0.0, %v1144
      %v1146 = vpop.f32.mrb[0].mxu0
      %1147 = vmatprep.mubr.bf16.mxu0 0
      %1148 = vmatmul.mubr.bf16.gmra.mrb[0].mxu0 %v997
      %v1149 = vpop.f32.mrb[0].mxu0
      %v1150 = vpop.f32.mrb[0].mxu0
      %v1151 = vpop.f32.mrb[0].mxu0
      %v1152 = vadd.f32 0.0, %v1151
      %v1153 = vpop.f32.mrb[0].mxu0
      %1154 = vmatprep.mubr.bf16.mxu0 0
      %1155 = vmatmul.mubr.bf16.gmra.mrb[0].mxu0 %v1000
      %v1156 = vpop.f32.mrb[0].mxu0
      %v1157 = vadd.f32 0.0, %v1156
      %v1158 = vpop.f32.mrb[0].mxu0
      %v1159 = vpop.f32.mrb[0].mxu0
      %v1160 = vpop.f32.mrb[0].mxu0
      %1161 = vmatprep.mubr.bf16.mxu0 0
      %1162 = vmatmul.mubr.bf16.gmra.mrb[0].mxu0 %v1003
      %v1163 = vpop.f32.mrb[0].mxu0
      %v1164 = vadd.f32 0.0, %v1163
      %v1165 = vpop.f32.mrb[0].mxu0
      %v1166 = vpop.f32.mrb[0].mxu0
      %v1167 = vadd.f32 0.0, %v1166
      %v1168 = vpop.f32.mrb[0].mxu0
      %1169 = vmatprep.mubr.bf16.mxu0 0
      %1170 = vmatmul.mubr.bf16.gmra.mrb[0].mxu0 %v1006
      %v1171 = vpop.f32.mrb[0].mxu0
      %v1172 = vpop.f32.mrb[0].mxu0
      %v1173 = vpop.f32.mrb[0].mxu0
      %v1174 = vadd.f32 0.0, %v1173
      %v1175 = vpop.f32.mrb[0].mxu0
      %1176 = vmatprep.mubr.bf16.mxu0 0
      %1177 = vmatmul.mubr.bf16.gmra.mrb[0].mxu0 %v1009
      %v1178 = vpop.f32.mrb[0].mxu0
      %v1179 = vadd.f32 0.0, %v1178
      %v1180 = vpop.f32.mrb[0].mxu0
      %v1181 = vpop.f32.mrb[0].mxu0
      %v1182 = vpop.f32.mrb[0].mxu0
      %1183 = vmatprep.mubr.bf16.mxu0 0
      %1184 = vmatmul.mubr.bf16.gmra.mrb[0].mxu0 %v1012
      %v1185 = vpop.f32.mrb[0].mxu0
      %v1186 = vadd.f32 0.0, %v1185
      %v1187 = vpop.f32.mrb[0].mxu0
      %v1188 = vpop.f32.mrb[0].mxu0
      %v1189 = vadd.f32 0.0, %v1188
      %v1190 = vpop.f32.mrb[0].mxu0
      %1191 = vmatprep.mubr.bf16.mxu0 0
      %1192 = vmatmul.mubr.bf16.gmra.mrb[0].mxu0 %v1015
      %v1193 = vpop.f32.mrb[0].mxu0
      %v1194 = vpop.f32.mrb[0].mxu0
      %v1195 = vpop.f32.mrb[0].mxu0
      %v1196 = vadd.f32 0.0, %v1195
      %v1197 = vpop.f32.mrb[0].mxu0
      %1198 = vmatprep.mubr.bf16.mxu0 0
      %1199 = vmatmul.mubr.bf16.gmra.mrb[0].mxu0 %v1018
      %v1200 = vpop.f32.mrb[0].mxu0
      %v1201 = vadd.f32 0.0, %v1200
      %v1202 = vpop.f32.mrb[0].mxu0
      %v1203 = vpop.f32.mrb[0].mxu0
      %v1204 = vpop.f32.mrb[0].mxu0
      %1205 = vmatprep.mubr.bf16.mxu0 0
      %1206 = vmatmul.mubr.bf16.gmra.mrb[0].mxu0 %v1021
      %v1207 = vpop.f32.mrb[0].mxu0
      %v1208 = vadd.f32 0.0, %v1207
      %v1209 = vpop.f32.mrb[0].mxu0
      %v1210 = vpop.f32.mrb[0].mxu0
      %v1211 = vadd.f32 0.0, %v1210
      %v1212 = vpop.f32.mrb[0].mxu0
      %1213 = vmatprep.mubr.bf16.mxu0 0
      %1214 = vmatmul.mubr.bf16.gmra.mrb[0].mxu0 %v1024
      %v1215 = vpop.f32.mrb[0].mxu0
      %v1216 = vpop.f32.mrb[0].mxu0
      %v1217 = vpop.f32.mrb[0].mxu0
      %v1218 = vadd.f32 0.0, %v1217
      %v1219 = vpop.f32.mrb[0].mxu0
      %1220 = vmatprep.mubr.bf16.mxu0 0
      %1221 = vmatmul.mubr.bf16.gmra.mrb[0].mxu0 %v1027
      %v1222 = vpop.f32.mrb[0].mxu0
      %v1223 = vadd.f32 0.0, %v1222
      %v1224 = vpop.f32.mrb[0].mxu0
      %v1225 = vpop.f32.mrb[0].mxu0
      %v1226 = vpop.f32.mrb[0].mxu0
      %1227 = vmatprep.mubr.bf16.mxu0 0
      %1228 = vmatmul.mubr.bf16.gmra.mrb[0].mxu0 %v1030
      %v1229 = vpop.f32.mrb[0].mxu0
      %v1230 = vadd.f32 0.0, %v1229
      %v1231 = vpop.f32.mrb[0].mxu0
      %v1232 = vpop.f32.mrb[0].mxu0
      %v1233 = vadd.f32 0.0, %v1232
      %v1234 = vpop.f32.mrb[0].mxu0
      %1235 = vmatprep.mubr.bf16.mxu0 0
      %1236 = vmatmul.mubr.bf16.gmra.mrb[0].mxu0 %v1033
      %v1237 = vpop.f32.mrb[0].mxu0
      %v1238 = vpop.f32.mrb[0].mxu0
      %v1239 = vpop.f32.mrb[0].mxu0
      %v1240 = vadd.f32 0.0, %v1239
      %v1241 = vpop.f32.mrb[0].mxu0
      %1242 = vmatprep.mubr.bf16.mxu0 0
      %1243 = vmatmul.mubr.bf16.gmra.mrb[0].mxu0 %v1036
      %v1244 = vpop.f32.mrb[0].mxu0
      %v1245 = vadd.f32 0.0, %v1244
      %v1246 = vpop.f32.mrb[0].mxu0
      %v1247 = vpop.f32.mrb[0].mxu0
      %v1248 = vpop.f32.mrb[0].mxu0
      %1249 = vdwg.mxu0
      %v1250 = vadd.f32 %v718, %v1076
      %v1251 = vadd.f32 %v721, %v1079
      %v1252 = vadd.f32 %v728, %v1086
      %v1253 = vadd.f32 %v733, %v1091
      %v1254 = vadd.f32 %v740, %v1098
      %v1255 = vadd.f32 %v743, %v1101
      %v1256 = vadd.f32 %v750, %v1108
      %v1257 = vadd.f32 %v755, %v1113
      %v1258 = vadd.f32 %v762, %v1120
      %v1259 = vadd.f32 %v765, %v1123
      %v1260 = vadd.f32 %v772, %v1130
      %v1261 = vadd.f32 %v777, %v1135
      %v1262 = vadd.f32 %v784, %v1142
      %v1263 = vadd.f32 %v787, %v1145
      %v1264 = vadd.f32 %v794, %v1152
      %v1265 = vadd.f32 %v799, %v1157
      %v1266 = vadd.f32 %v806, %v1164
      %v1267 = vadd.f32 %v809, %v1167
      %v1268 = vadd.f32 %v816, %v1174
      %v1269 = vadd.f32 %v821, %v1179
      %v1270 = vadd.f32 %v828, %v1186
      %v1271 = vadd.f32 %v831, %v1189
      %v1272 = vadd.f32 %v838, %v1196
      %v1273 = vadd.f32 %v843, %v1201
      %v1274 = vadd.f32 %v850, %v1208
      %v1275 = vadd.f32 %v853, %v1211
      %v1276 = vadd.f32 %v860, %v1218
      %v1277 = vadd.f32 %v865, %v1223
      %v1278 = vadd.f32 %v872, %v1230
      %v1279 = vadd.f32 %v875, %v1233
      %v1280 = vadd.f32 %v882, %v1240
      %v1281 = vadd.f32 %v887, %v1245
      %v1282 = vld [vmem:[%s165 + $0x18] sm:$0xff]
      %v1283 = vld [vmem:[%s165 + $0x20] sm:$0xff]
      %v1284 = vld [vmem:[%s165 + $0x28] sm:$0xff]
      %v1285 = vld [vmem:[%s165 + $0x30] sm:$0xff]
      %v1286 = vld [vmem:[%s165 + $0x38] sm:$0xff]
      %v1287 = vld [vmem:[%s165 + $0x40] sm:$0xff]
      %v1288 = vld [vmem:[%s165 + $0x48] sm:$0xff]
      %v1289 = vld [vmem:[%s165 + $0x50] sm:$0xff]
      %v1290 = vld [vmem:[%s165 + $0x58] sm:$0xff]
      %v1291 = vld [vmem:[%s165 + $0x60] sm:$0xff]
      %v1292 = vld [vmem:[%s165 + $0x68] sm:$0xff]
      %v1293 = vld [vmem:[%s165 + $0x70] sm:$0xff]
      %v1294 = vld [vmem:[%s165 + $0x78] sm:$0xff]
      %v1295 = vld [vmem:[%s165 + $0x80] sm:$0xff]
      %v1296 = vld [vmem:[%s165 + $0x88] sm:$0xff]
      %v1297 = vld [vmem:[%s165 + $0x90] sm:$0xff]
      %v1298 = vld [vmem:[%s165 + $0x98] sm:$0xff]
      %v1299 = vld [vmem:[%s165 + $0xa0] sm:$0xff]
      %v1300 = vld [vmem:[%s165 + $0xa8] sm:$0xff]
      %v1301 = vld [vmem:[%s165 + $0xb0] sm:$0xff]
      %v1302 = vld [vmem:[%s165 + $0xb8] sm:$0xff]
      %v1303 = vld [vmem:[%s165 + $0xc0] sm:$0xff]
      %v1304 = vld [vmem:[%s165 + $0xc8] sm:$0xff]
      %v1305 = vld [vmem:[%s165 + $0xd0] sm:$0xff]
      %v1306 = vld [vmem:[%s165 + $0xd8] sm:$0xff]
      %v1307 = vld [vmem:[%s165 + $0xe0] sm:$0xff]
      %v1308 = vld [vmem:[%s165 + $0xe8] sm:$0xff]
      %v1309 = vld [vmem:[%s165 + $0xf0] sm:$0xff]
      %v1310 = vld [vmem:[%s165 + $0xf8] sm:$0xff]
      %v1311 = vld [vmem:[%s165 + $0x100] sm:$0xff]
      %v1312 = vld [vmem:[%s165 + $0x108] sm:$0xff]
      %v1313 = vld [vmem:[%s165 + $0x110] sm:$0xff]
      %v1314 = vld [vmem:[%s165 + $0x118] sm:$0xff]
      %v1315 = vld [vmem:[%s165 + $0x120] sm:$0xff]
      %v1316 = vld [vmem:[%s165 + $0x128] sm:$0xff]
      %v1317 = vld [vmem:[%s165 + $0x130] sm:$0xff]
      %v1318 = vld [vmem:[%s165 + $0x138] sm:$0xff]
      %v1319 = vld [vmem:[%s165 + $0x140] sm:$0xff]
      %v1320 = vld [vmem:[%s165 + $0x148] sm:$0xff]
      %v1321 = vld [vmem:[%s165 + $0x150] sm:$0xff]
      %v1322 = vld [vmem:[%s165 + $0x158] sm:$0xff]
      %v1323 = vld [vmem:[%s165 + $0x160] sm:$0xff]
      %v1324 = vld [vmem:[%s165 + $0x168] sm:$0xff]
      %v1325 = vld [vmem:[%s165 + $0x170] sm:$0xff]
      %v1326 = vld [vmem:[%s165 + $0x178] sm:$0xff]
      %v1327 = vld [vmem:[%s165 + $0x180] sm:$0xff]
      %v1328 = vld [vmem:[%s165 + $0x188] sm:$0xff]
      %v1329 = vld [vmem:[%s165 + $0x190] sm:$0xff]
      %v1330 = vpack.c.bf16 %v1283, %v1282
      %v1331 = vpack.c.bf16 %v1285, %v1284
      %v1332 = vpack.c.bf16 %v1287, %v1286
      %v1333 = vpack.c.bf16 %v1289, %v1288
      %v1334 = vpack.c.bf16 %v1291, %v1290
      %v1335 = vpack.c.bf16 %v1293, %v1292
      %v1336 = vpack.c.bf16 %v1295, %v1294
      %v1337 = vpack.c.bf16 %v1297, %v1296
      %v1338 = vpack.c.bf16 %v1299, %v1298
      %v1339 = vpack.c.bf16 %v1301, %v1300
      %v1340 = vpack.c.bf16 %v1303, %v1302
      %v1341 = vpack.c.bf16 %v1305, %v1304
      %v1342 = vpack.c.bf16 %v1307, %v1306
      %v1343 = vpack.c.bf16 %v1309, %v1308
      %v1344 = vpack.c.bf16 %v1311, %v1310
      %v1345 = vpack.c.bf16 %v1313, %v1312
      %v1346 = vpack.c.bf16 %v1315, %v1314
      %v1347 = vpack.c.bf16 %v1317, %v1316
      %v1348 = vpack.c.bf16 %v1319, %v1318
      %v1349 = vpack.c.bf16 %v1321, %v1320
      %v1350 = vpack.c.bf16 %v1323, %v1322
      %v1351 = vpack.c.bf16 %v1325, %v1324
      %v1352 = vpack.c.bf16 %v1327, %v1326
      %v1353 = vpack.c.bf16 %v1329, %v1328
      %s1354 = scalar_lea.vmem %s1, 6
      %v1355 = vld [vmem:[%s1354] sm:$0x3]
      %v1357 = vsel %vm319, %v1330, 0
      %v1360 = vsel %vm319, %v1331, 0
      %v1363 = vsel %vm319, %v1332, 0
      %v1366 = vsel %vm319, %v1333, 0
      %v1369 = vsel %vm319, %v1334, 0
      %v1372 = vsel %vm319, %v1335, 0
      %v1375 = vsel %vm319, %v1336, 0
      %v1378 = vsel %vm319, %v1337, 0
      %v1381 = vsel %vm319, %v1338, 0
      %v1384 = vsel %vm319, %v1339, 0
      %v1387 = vsel %vm319, %v1340, 0
      %v1390 = vsel %vm319, %v1341, 0
      %v1393 = vsel %vm319, %v1342, 0
      %v1396 = vsel %vm319, %v1343, 0
      %v1399 = vsel %vm319, %v1344, 0
      %v1402 = vsel %vm319, %v1345, 0
      %v1405 = vsel %vm319, %v1346, 0
      %v1408 = vsel %vm319, %v1347, 0
      %v1411 = vsel %vm319, %v1348, 0
      %v1414 = vsel %vm319, %v1349, 0
      %v1417 = vsel %vm319, %v1350, 0
      %v1420 = vsel %vm319, %v1351, 0
      %v1423 = vsel %vm319, %v1352, 0
      %v1426 = vsel %vm319, %v1353, 0
      %v1429 = vand.u32 %v1355, %v395
      %1431 = vmatprep.subr.bf16.mxu0 0
      %1432 = vmatpush1.bf16.msra.mxu0 %v1429
      %1433 = vmatprep.subr.bf16.mxu0 0
      %1434 = vmatpush1.bf16.msra.mxu0 0
      %1435 = vmatprep.subr.bf16.mxu0 0
      %1436 = vmatpush1.bf16.msra.mxu0 0
      %1437 = vmatprep.subr.bf16.mxu0 0
      %1438 = vmatpush1.bf16.msra.mxu0 0
      %1439 = vmatprep.subr.bf16.mxu0 0
      %1440 = vmatpush1.bf16.msra.mxu0 0
      %1441 = vmatprep.subr.bf16.mxu0 0
      %1442 = vmatpush1.bf16.msra.mxu0 0
      %1443 = vmatprep.subr.bf16.mxu0 0
      %1444 = vmatpush1.bf16.msra.mxu0 0
      %1445 = vmatprep.subr.bf16.mxu0 0
      %1446 = vmatpush1.bf16.msra.mxu0 0
      %1447 = vmatprep.subr.bf16.mxu0 0
      %1448 = vmatpush1.bf16.msra.mxu0 0
      %1449 = vmatprep.subr.bf16.mxu0 0
      %1450 = vmatpush1.bf16.msra.mxu0 0
      %1451 = vmatprep.subr.bf16.mxu0 0
      %1452 = vmatpush1.bf16.msra.mxu0 0
      %1453 = vmatprep.subr.bf16.mxu0 0
      %1454 = vmatpush1.bf16.msra.mxu0 0
      %1455 = vmatprep.subr.bf16.mxu0 0
      %1456 = vmatpush1.bf16.msra.mxu0 0
      %1457 = vmatprep.subr.bf16.mxu0 0
      %1458 = vmatpush1.bf16.msra.mxu0 0
      %1459 = vmatprep.subr.bf16.mxu0 0
      %1460 = vmatpush1.bf16.msra.mxu0 0
      %1461 = vmatprep.subr.bf16.mxu0 0
      %1462 = vmatpush1.bf16.msra.mxu0 0
      %1463 = vmatprep.mubr.bf16.mxu0 0
      %1464 = vmatmul.mubr.bf16.gmra.mrb[0].mxu0 %v1357
      %v1465 = vpop.f32.mrb[0].mxu0
      %v1466 = vadd.f32 0.0, %v1465
      %v1467 = vpop.f32.mrb[0].mxu0
      %v1468 = vpop.f32.mrb[0].mxu0
      %v1469 = vadd.f32 0.0, %v1468
      %v1470 = vpop.f32.mrb[0].mxu0
      %1471 = vmatprep.mubr.bf16.mxu0 0
      %1472 = vmatmul.mubr.bf16.gmra.mrb[0].mxu0 %v1360
      %v1473 = vpop.f32.mrb[0].mxu0
      %v1474 = vpop.f32.mrb[0].mxu0
      %v1475 = vpop.f32.mrb[0].mxu0
      %v1476 = vadd.f32 0.0, %v1475
      %v1477 = vpop.f32.mrb[0].mxu0
      %1478 = vmatprep.mubr.bf16.mxu0 0
      %1479 = vmatmul.mubr.bf16.gmra.mrb[0].mxu0 %v1363
      %v1480 = vpop.f32.mrb[0].mxu0
      %v1481 = vadd.f32 0.0, %v1480
      %v1482 = vpop.f32.mrb[0].mxu0
      %v1483 = vpop.f32.mrb[0].mxu0
      %v1484 = vpop.f32.mrb[0].mxu0
      %1485 = vmatprep.mubr.bf16.mxu0 0
      %1486 = vmatmul.mubr.bf16.gmra.mrb[0].mxu0 %v1366
      %v1487 = vpop.f32.mrb[0].mxu0
      %v1488 = vadd.f32 0.0, %v1487
      %v1489 = vpop.f32.mrb[0].mxu0
      %v1490 = vpop.f32.mrb[0].mxu0
      %v1491 = vadd.f32 0.0, %v1490
      %v1492 = vpop.f32.mrb[0].mxu0
      %1493 = vmatprep.mubr.bf16.mxu0 0
      %1494 = vmatmul.mubr.bf16.gmra.mrb[0].mxu0 %v1369
      %v1495 = vpop.f32.mrb[0].mxu0
      %v1496 = vpop.f32.mrb[0].mxu0
      %v1497 = vpop.f32.mrb[0].mxu0
      %v1498 = vadd.f32 0.0, %v1497
      %v1499 = vpop.f32.mrb[0].mxu0
      %1500 = vmatprep.mubr.bf16.mxu0 0
      %1501 = vmatmul.mubr.bf16.gmra.mrb[0].mxu0 %v1372
      %v1502 = vpop.f32.mrb[0].mxu0
      %v1503 = vadd.f32 0.0, %v1502
      %v1504 = vpop.f32.mrb[0].mxu0
      %v1505 = vpop.f32.mrb[0].mxu0
      %v1506 = vpop.f32.mrb[0].mxu0
      %1507 = vmatprep.mubr.bf16.mxu0 0
      %1508 = vmatmul.mubr.bf16.gmra.mrb[0].mxu0 %v1375
      %v1509 = vpop.f32.mrb[0].mxu0
      %v1510 = vadd.f32 0.0, %v1509
      %v1511 = vpop.f32.mrb[0].mxu0
      %v1512 = vpop.f32.mrb[0].mxu0
      %v1513 = vadd.f32 0.0, %v1512
      %v1514 = vpop.f32.mrb[0].mxu0
      %1515 = vmatprep.mubr.bf16.mxu0 0
      %1516 = vmatmul.mubr.bf16.gmra.mrb[0].mxu0 %v1378
      %v1517 = vpop.f32.mrb[0].mxu0
      %v1518 = vpop.f32.mrb[0].mxu0
      %v1519 = vpop.f32.mrb[0].mxu0
      %v1520 = vadd.f32 0.0, %v1519
      %v1521 = vpop.f32.mrb[0].mxu0
      %1522 = vmatprep.mubr.bf16.mxu0 0
      %1523 = vmatmul.mubr.bf16.gmra.mrb[0].mxu0 %v1381
      %v1524 = vpop.f32.mrb[0].mxu0
      %v1525 = vadd.f32 0.0, %v1524
      %v1526 = vpop.f32.mrb[0].mxu0
      %v1527 = vpop.f32.mrb[0].mxu0
      %v1528 = vpop.f32.mrb[0].mxu0
      %1529 = vmatprep.mubr.bf16.mxu0 0
      %1530 = vmatmul.mubr.bf16.gmra.mrb[0].mxu0 %v1384
      %v1531 = vpop.f32.mrb[0].mxu0
      %v1532 = vadd.f32 0.0, %v1531
      %v1533 = vpop.f32.mrb[0].mxu0
      %v1534 = vpop.f32.mrb[0].mxu0
      %v1535 = vadd.f32 0.0, %v1534
      %v1536 = vpop.f32.mrb[0].mxu0
      %1537 = vmatprep.mubr.bf16.mxu0 0
      %1538 = vmatmul.mubr.bf16.gmra.mrb[0].mxu0 %v1387
      %v1539 = vpop.f32.mrb[0].mxu0
      %v1540 = vpop.f32.mrb[0].mxu0
      %v1541 = vpop.f32.mrb[0].mxu0
      %v1542 = vadd.f32 0.0, %v1541
      %v1543 = vpop.f32.mrb[0].mxu0
      %1544 = vmatprep.mubr.bf16.mxu0 0
      %1545 = vmatmul.mubr.bf16.gmra.mrb[0].mxu0 %v1390
      %v1546 = vpop.f32.mrb[0].mxu0
      %v1547 = vadd.f32 0.0, %v1546
      %v1548 = vpop.f32.mrb[0].mxu0
      %v1549 = vpop.f32.mrb[0].mxu0
      %v1550 = vpop.f32.mrb[0].mxu0
      %1551 = vmatprep.mubr.bf16.mxu0 0
      %1552 = vmatmul.mubr.bf16.gmra.mrb[0].mxu0 %v1393
      %v1553 = vpop.f32.mrb[0].mxu0
      %v1554 = vadd.f32 0.0, %v1553
      %v1555 = vpop.f32.mrb[0].mxu0
      %v1556 = vpop.f32.mrb[0].mxu0
      %v1557 = vadd.f32 0.0, %v1556
      %v1558 = vpop.f32.mrb[0].mxu0
      %1559 = vmatprep.mubr.bf16.mxu0 0
      %1560 = vmatmul.mubr.bf16.gmra.mrb[0].mxu0 %v1396
      %v1561 = vpop.f32.mrb[0].mxu0
      %v1562 = vpop.f32.mrb[0].mxu0
      %v1563 = vpop.f32.mrb[0].mxu0
      %v1564 = vadd.f32 0.0, %v1563
      %v1565 = vpop.f32.mrb[0].mxu0
      %1566 = vmatprep.mubr.bf16.mxu0 0
      %1567 = vmatmul.mubr.bf16.gmra.mrb[0].mxu0 %v1399
      %v1568 = vpop.f32.mrb[0].mxu0
      %v1569 = vadd.f32 0.0, %v1568
      %v1570 = vpop.f32.mrb[0].mxu0
      %v1571 = vpop.f32.mrb[0].mxu0
      %v1572 = vpop.f32.mrb[0].mxu0
      %1573 = vmatprep.mubr.bf16.mxu0 0
      %1574 = vmatmul.mubr.bf16.gmra.mrb[0].mxu0 %v1402
      %v1575 = vpop.f32.mrb[0].mxu0
      %v1576 = vadd.f32 0.0, %v1575
      %v1577 = vpop.f32.mrb[0].mxu0
      %v1578 = vpop.f32.mrb[0].mxu0
      %v1579 = vadd.f32 0.0, %v1578
      %v1580 = vpop.f32.mrb[0].mxu0
      %1581 = vmatprep.mubr.bf16.mxu0 0
      %1582 = vmatmul.mubr.bf16.gmra.mrb[0].mxu0 %v1405
      %v1583 = vpop.f32.mrb[0].mxu0
      %v1584 = vpop.f32.mrb[0].mxu0
      %v1585 = vpop.f32.mrb[0].mxu0
      %v1586 = vadd.f32 0.0, %v1585
      %v1587 = vpop.f32.mrb[0].mxu0
      %1588 = vmatprep.mubr.bf16.mxu0 0
      %1589 = vmatmul.mubr.bf16.gmra.mrb[0].mxu0 %v1408
      %v1590 = vpop.f32.mrb[0].mxu0
      %v1591 = vadd.f32 0.0, %v1590
      %v1592 = vpop.f32.mrb[0].mxu0
      %v1593 = vpop.f32.mrb[0].mxu0
      %v1594 = vpop.f32.mrb[0].mxu0
      %1595 = vmatprep.mubr.bf16.mxu0 0
      %1596 = vmatmul.mubr.bf16.gmra.mrb[0].mxu0 %v1411
      %v1597 = vpop.f32.mrb[0].mxu0
      %v1598 = vadd.f32 0.0, %v1597
      %v1599 = vpop.f32.mrb[0].mxu0
      %v1600 = vpop.f32.mrb[0].mxu0
      %v1601 = vadd.f32 0.0, %v1600
      %v1602 = vpop.f32.mrb[0].mxu0
      %1603 = vmatprep.mubr.bf16.mxu0 0
      %1604 = vmatmul.mubr.bf16.gmra.mrb[0].mxu0 %v1414
      %v1605 = vpop.f32.mrb[0].mxu0
      %v1606 = vpop.f32.mrb[0].mxu0
      %v1607 = vpop.f32.mrb[0].mxu0
      %v1608 = vadd.f32 0.0, %v1607
      %v1609 = vpop.f32.mrb[0].mxu0
      %1610 = vmatprep.mubr.bf16.mxu0 0
      %1611 = vmatmul.mubr.bf16.gmra.mrb[0].mxu0 %v1417
      %v1612 = vpop.f32.mrb[0].mxu0
      %v1613 = vadd.f32 0.0, %v1612
      %v1614 = vpop.f32.mrb[0].mxu0
      %v1615 = vpop.f32.mrb[0].mxu0
      %v1616 = vpop.f32.mrb[0].mxu0
      %1617 = vmatprep.mubr.bf16.mxu0 0
      %1618 = vmatmul.mubr.bf16.gmra.mrb[0].mxu0 %v1420
      %v1619 = vpop.f32.mrb[0].mxu0
      %v1620 = vadd.f32 0.0, %v1619
      %v1621 = vpop.f32.mrb[0].mxu0
      %v1622 = vpop.f32.mrb[0].mxu0
      %v1623 = vadd.f32 0.0, %v1622
      %v1624 = vpop.f32.mrb[0].mxu0
      %1625 = vmatprep.mubr.bf16.mxu0 0
      %1626 = vmatmul.mubr.bf16.gmra.mrb[0].mxu0 %v1423
      %v1627 = vpop.f32.mrb[0].mxu0
      %v1628 = vpop.f32.mrb[0].mxu0
      %v1629 = vpop.f32.mrb[0].mxu0
      %v1630 = vadd.f32 0.0, %v1629
      %v1631 = vpop.f32.mrb[0].mxu0
      %1632 = vmatprep.mubr.bf16.mxu0 0
      %1633 = vmatmul.mubr.bf16.gmra.mrb[0].mxu0 %v1426
      %v1634 = vpop.f32.mrb[0].mxu0
      %v1635 = vadd.f32 0.0, %v1634
      %v1636 = vpop.f32.mrb[0].mxu0
      %v1637 = vpop.f32.mrb[0].mxu0
      %v1638 = vpop.f32.mrb[0].mxu0
      %1639 = vdwg.mxu0
      %v1640 = vadd.f32 %v1250, %v1466
      %v1641 = vadd.f32 %v1251, %v1469
      %v1642 = vadd.f32 %v1252, %v1476
      %v1643 = vadd.f32 %v1253, %v1481
      %v1644 = vadd.f32 %v1254, %v1488
      %v1645 = vadd.f32 %v1255, %v1491
      %v1646 = vadd.f32 %v1256, %v1498
      %v1647 = vadd.f32 %v1257, %v1503
      %v1648 = vadd.f32 %v1258, %v1510
      %v1649 = vadd.f32 %v1259, %v1513
      %v1650 = vadd.f32 %v1260, %v1520
      %v1651 = vadd.f32 %v1261, %v1525
      %v1652 = vadd.f32 %v1262, %v1532
      %v1653 = vadd.f32 %v1263, %v1535
      %v1654 = vadd.f32 %v1264, %v1542
      %v1655 = vadd.f32 %v1265, %v1547
      %v1656 = vadd.f32 %v1266, %v1554
      %v1657 = vadd.f32 %v1267, %v1557
      %v1658 = vadd.f32 %v1268, %v1564
      %v1659 = vadd.f32 %v1269, %v1569
      %v1660 = vadd.f32 %v1270, %v1576
      %v1661 = vadd.f32 %v1271, %v1579
      %v1662 = vadd.f32 %v1272, %v1586
      %v1663 = vadd.f32 %v1273, %v1591
      %v1664 = vadd.f32 %v1274, %v1598
      %v1665 = vadd.f32 %v1275, %v1601
      %v1666 = vadd.f32 %v1276, %v1608
      %v1667 = vadd.f32 %v1277, %v1613
      %v1668 = vadd.f32 %v1278, %v1620
      %v1669 = vadd.f32 %v1279, %v1623
      %v1670 = vadd.f32 %v1280, %v1630
      %v1671 = vadd.f32 %v1281, %v1635
      %v1672 = vld [vmem:[%s165 + $0x19] sm:$0xff]
      %v1673 = vld [vmem:[%s165 + $0x21] sm:$0xff]
      %v1674 = vld [vmem:[%s165 + $0x29] sm:$0xff]
      %v1675 = vld [vmem:[%s165 + $0x31] sm:$0xff]
      %v1676 = vld [vmem:[%s165 + $0x39] sm:$0xff]
      %v1677 = vld [vmem:[%s165 + $0x41] sm:$0xff]
      %v1678 = vld [vmem:[%s165 + $0x49] sm:$0xff]
      %v1679 = vld [vmem:[%s165 + $0x51] sm:$0xff]
      %v1680 = vld [vmem:[%s165 + $0x59] sm:$0xff]
      %v1681 = vld [vmem:[%s165 + $0x61] sm:$0xff]
      %v1682 = vld [vmem:[%s165 + $0x69] sm:$0xff]
      %v1683 = vld [vmem:[%s165 + $0x71] sm:$0xff]
      %v1684 = vld [vmem:[%s165 + $0x79] sm:$0xff]
      %v1685 = vld [vmem:[%s165 + $0x81] sm:$0xff]
      %v1686 = vld [vmem:[%s165 + $0x89] sm:$0xff]
      %v1687 = vld [vmem:[%s165 + $0x91] sm:$0xff]
      %v1688 = vld [vmem:[%s165 + $0x99] sm:$0xff]
      %v1689 = vld [vmem:[%s165 + $0xa1] sm:$0xff]
      %v1690 = vld [vmem:[%s165 + $0xa9] sm:$0xff]
      %v1691 = vld [vmem:[%s165 + $0xb1] sm:$0xff]
      %v1692 = vld [vmem:[%s165 + $0xb9] sm:$0xff]
      %v1693 = vld [vmem:[%s165 + $0xc1] sm:$0xff]
      %v1694 = vld [vmem:[%s165 + $0xc9] sm:$0xff]
      %v1695 = vld [vmem:[%s165 + $0xd1] sm:$0xff]
      %v1696 = vld [vmem:[%s165 + $0xd9] sm:$0xff]
      %v1697 = vld [vmem:[%s165 + $0xe1] sm:$0xff]
      %v1698 = vld [vmem:[%s165 + $0xe9] sm:$0xff]
      %v1699 = vld [vmem:[%s165 + $0xf1] sm:$0xff]
      %v1700 = vld [vmem:[%s165 + $0xf9] sm:$0xff]
      %v1701 = vld [vmem:[%s165 + $0x101] sm:$0xff]
      %v1702 = vld [vmem:[%s165 + $0x109] sm:$0xff]
      %v1703 = vld [vmem:[%s165 + $0x111] sm:$0xff]
      %v1704 = vld [vmem:[%s165 + $0x119] sm:$0xff]
      %v1705 = vld [vmem:[%s165 + $0x121] sm:$0xff]
      %v1706 = vld [vmem:[%s165 + $0x129] sm:$0xff]
      %v1707 = vld [vmem:[%s165 + $0x131] sm:$0xff]
      %v1708 = vld [vmem:[%s165 + $0x139] sm:$0xff]
      %v1709 = vld [vmem:[%s165 + $0x141] sm:$0xff]
      %v1710 = vld [vmem:[%s165 + $0x149] sm:$0xff]
      %v1711 = vld [vmem:[%s165 + $0x151] sm:$0xff]
      %v1712 = vld [vmem:[%s165 + $0x159] sm:$0xff]
      %v1713 = vld [vmem:[%s165 + $0x161] sm:$0xff]
      %v1714 = vld [vmem:[%s165 + $0x169] sm:$0xff]
      %v1715 = vld [vmem:[%s165 + $0x171] sm:$0xff]
      %v1716 = vld [vmem:[%s165 + $0x179] sm:$0xff]
      %v1717 = vld [vmem:[%s165 + $0x181] sm:$0xff]
      %v1718 = vld [vmem:[%s165 + $0x189] sm:$0xff]
      %v1719 = vld [vmem:[%s165 + $0x191] sm:$0xff]
      %v1720 = vpack.c.bf16 %v1673, %v1672
      %v1721 = vpack.c.bf16 %v1675, %v1674
      %v1722 = vpack.c.bf16 %v1677, %v1676
      %v1723 = vpack.c.bf16 %v1679, %v1678
      %v1724 = vpack.c.bf16 %v1681, %v1680
      %v1725 = vpack.c.bf16 %v1683, %v1682
      %v1726 = vpack.c.bf16 %v1685, %v1684
      %v1727 = vpack.c.bf16 %v1687, %v1686
      %v1728 = vpack.c.bf16 %v1689, %v1688
      %v1729 = vpack.c.bf16 %v1691, %v1690
      %v1730 = vpack.c.bf16 %v1693, %v1692
      %v1731 = vpack.c.bf16 %v1695, %v1694
      %v1732 = vpack.c.bf16 %v1697, %v1696
      %v1733 = vpack.c.bf16 %v1699, %v1698
      %v1734 = vpack.c.bf16 %v1701, %v1700
      %v1735 = vpack.c.bf16 %v1703, %v1702
      %v1736 = vpack.c.bf16 %v1705, %v1704
      %v1737 = vpack.c.bf16 %v1707, %v1706
      %v1738 = vpack.c.bf16 %v1709, %v1708
      %v1739 = vpack.c.bf16 %v1711, %v1710
      %v1740 = vpack.c.bf16 %v1713, %v1712
      %v1741 = vpack.c.bf16 %v1715, %v1714
      %v1742 = vpack.c.bf16 %v1717, %v1716
      %v1743 = vpack.c.bf16 %v1719, %v1718
      %s1744 = scalar_lea.vmem %s1, 8
      %v1745 = vld [vmem:[%s1744] sm:$0x3]
      %v1747 = vsel %vm319, %v1720, 0
      %v1750 = vsel %vm319, %v1721, 0
      %v1753 = vsel %vm319, %v1722, 0
      %v1756 = vsel %vm319, %v1723, 0
      %v1759 = vsel %vm319, %v1724, 0
      %v1762 = vsel %vm319, %v1725, 0
      %v1765 = vsel %vm319, %v1726, 0
      %v1768 = vsel %vm319, %v1727, 0
      %v1771 = vsel %vm319, %v1728, 0
      %v1774 = vsel %vm319, %v1729, 0
      %v1777 = vsel %vm319, %v1730, 0
      %v1780 = vsel %vm319, %v1731, 0
      %v1783 = vsel %vm319, %v1732, 0
      %v1786 = vsel %vm319, %v1733, 0
      %v1789 = vsel %vm319, %v1734, 0
      %v1792 = vsel %vm319, %v1735, 0
      %v1795 = vsel %vm319, %v1736, 0
      %v1798 = vsel %vm319, %v1737, 0
      %v1801 = vsel %vm319, %v1738, 0
      %v1804 = vsel %vm319, %v1739, 0
      %v1807 = vsel %vm319, %v1740, 0
      %v1810 = vsel %vm319, %v1741, 0
      %v1813 = vsel %vm319, %v1742, 0
      %v1816 = vsel %vm319, %v1743, 0
      %v1819 = vand.u32 %v1745, %v395
      %1821 = vmatprep.subr.bf16.mxu0 0
      %1822 = vmatpush1.bf16.msra.mxu0 %v1819
      %1823 = vmatprep.subr.bf16.mxu0 0
      %1824 = vmatpush1.bf16.msra.mxu0 0
      %1825 = vmatprep.subr.bf16.mxu0 0
      %1826 = vmatpush1.bf16.msra.mxu0 0
      %1827 = vmatprep.subr.bf16.mxu0 0
      %1828 = vmatpush1.bf16.msra.mxu0 0
      %1829 = vmatprep.subr.bf16.mxu0 0
      %1830 = vmatpush1.bf16.msra.mxu0 0
      %1831 = vmatprep.subr.bf16.mxu0 0
      %1832 = vmatpush1.bf16.msra.mxu0 0
      %1833 = vmatprep.subr.bf16.mxu0 0
      %1834 = vmatpush1.bf16.msra.mxu0 0
      %1835 = vmatprep.subr.bf16.mxu0 0
      %1836 = vmatpush1.bf16.msra.mxu0 0
      %1837 = vmatprep.subr.bf16.mxu0 0
      %1838 = vmatpush1.bf16.msra.mxu0 0
      %1839 = vmatprep.subr.bf16.mxu0 0
      %1840 = vmatpush1.bf16.msra.mxu0 0
      %1841 = vmatprep.subr.bf16.mxu0 0
      %1842 = vmatpush1.bf16.msra.mxu0 0
      %1843 = vmatprep.subr.bf16.mxu0 0
      %1844 = vmatpush1.bf16.msra.mxu0 0
      %1845 = vmatprep.subr.bf16.mxu0 0
      %1846 = vmatpush1.bf16.msra.mxu0 0
      %1847 = vmatprep.subr.bf16.mxu0 0
      %1848 = vmatpush1.bf16.msra.mxu0 0
      %1849 = vmatprep.subr.bf16.mxu0 0
      %1850 = vmatpush1.bf16.msra.mxu0 0
      %1851 = vmatprep.subr.bf16.mxu0 0
      %1852 = vmatpush1.bf16.msra.mxu0 0
      %1853 = vmatprep.mubr.bf16.mxu0 0
      %1854 = vmatmul.mubr.bf16.gmra.mrb[0].mxu0 %v1747
      %v1855 = vpop.f32.mrb[0].mxu0
      %v1856 = vadd.f32 0.0, %v1855
      %v1857 = vpop.f32.mrb[0].mxu0
      %v1858 = vpop.f32.mrb[0].mxu0
      %v1859 = vadd.f32 0.0, %v1858
      %v1860 = vpop.f32.mrb[0].mxu0
      %1861 = vmatprep.mubr.bf16.mxu0 0
      %1862 = vmatmul.mubr.bf16.gmra.mrb[0].mxu0 %v1750
      %v1863 = vpop.f32.mrb[0].mxu0
      %v1864 = vpop.f32.mrb[0].mxu0
      %v1865 = vpop.f32.mrb[0].mxu0
      %v1866 = vadd.f32 0.0, %v1865
      %v1867 = vpop.f32.mrb[0].mxu0
      %1868 = vmatprep.mubr.bf16.mxu0 0
      %1869 = vmatmul.mubr.bf16.gmra.mrb[0].mxu0 %v1753
      %v1870 = vpop.f32.mrb[0].mxu0
      %v1871 = vadd.f32 0.0, %v1870
      %v1872 = vpop.f32.mrb[0].mxu0
      %v1873 = vpop.f32.mrb[0].mxu0
      %v1874 = vpop.f32.mrb[0].mxu0
      %1875 = vmatprep.mubr.bf16.mxu0 0
      %1876 = vmatmul.mubr.bf16.gmra.mrb[0].mxu0 %v1756
      %v1877 = vpop.f32.mrb[0].mxu0
      %v1878 = vadd.f32 0.0, %v1877
      %v1879 = vpop.f32.mrb[0].mxu0
      %v1880 = vpop.f32.mrb[0].mxu0
      %v1881 = vadd.f32 0.0, %v1880
      %v1882 = vpop.f32.mrb[0].mxu0
      %1883 = vmatprep.mubr.bf16.mxu0 0
      %1884 = vmatmul.mubr.bf16.gmra.mrb[0].mxu0 %v1759
      %v1885 = vpop.f32.mrb[0].mxu0
      %v1886 = vpop.f32.mrb[0].mxu0
      %v1887 = vpop.f32.mrb[0].mxu0
      %v1888 = vadd.f32 0.0, %v1887
      %v1889 = vpop.f32.mrb[0].mxu0
      %1890 = vmatprep.mubr.bf16.mxu0 0
      %1891 = vmatmul.mubr.bf16.gmra.mrb[0].mxu0 %v1762
      %v1892 = vpop.f32.mrb[0].mxu0
      %v1893 = vadd.f32 0.0, %v1892
      %v1894 = vpop.f32.mrb[0].mxu0
      %v1895 = vpop.f32.mrb[0].mxu0
      %v1896 = vpop.f32.mrb[0].mxu0
      %1897 = vmatprep.mubr.bf16.mxu0 0
      %1898 = vmatmul.mubr.bf16.gmra.mrb[0].mxu0 %v1765
      %v1899 = vpop.f32.mrb[0].mxu0
      %v1900 = vadd.f32 0.0, %v1899
      %v1901 = vpop.f32.mrb[0].mxu0
      %v1902 = vpop.f32.mrb[0].mxu0
      %v1903 = vadd.f32 0.0, %v1902
      %v1904 = vpop.f32.mrb[0].mxu0
      %1905 = vmatprep.mubr.bf16.mxu0 0
      %1906 = vmatmul.mubr.bf16.gmra.mrb[0].mxu0 %v1768
      %v1907 = vpop.f32.mrb[0].mxu0
      %v1908 = vpop.f32.mrb[0].mxu0
      %v1909 = vpop.f32.mrb[0].mxu0
      %v1910 = vadd.f32 0.0, %v1909
      %v1911 = vpop.f32.mrb[0].mxu0
      %1912 = vmatprep.mubr.bf16.mxu0 0
      %1913 = vmatmul.mubr.bf16.gmra.mrb[0].mxu0 %v1771
      %v1914 = vpop.f32.mrb[0].mxu0
      %v1915 = vadd.f32 0.0, %v1914
      %v1916 = vpop.f32.mrb[0].mxu0
      %v1917 = vpop.f32.mrb[0].mxu0
      %v1918 = vpop.f32.mrb[0].mxu0
      %1919 = vmatprep.mubr.bf16.mxu0 0
      %1920 = vmatmul.mubr.bf16.gmra.mrb[0].mxu0 %v1774
      %v1921 = vpop.f32.mrb[0].mxu0
      %v1922 = vadd.f32 0.0, %v1921
      %v1923 = vpop.f32.mrb[0].mxu0
      %v1924 = vpop.f32.mrb[0].mxu0
      %v1925 = vadd.f32 0.0, %v1924
      %v1926 = vpop.f32.mrb[0].mxu0
      %1927 = vmatprep.mubr.bf16.mxu0 0
      %1928 = vmatmul.mubr.bf16.gmra.mrb[0].mxu0 %v1777
      %v1929 = vpop.f32.mrb[0].mxu0
      %v1930 = vpop.f32.mrb[0].mxu0
      %v1931 = vpop.f32.mrb[0].mxu0
      %v1932 = vadd.f32 0.0, %v1931
      %v1933 = vpop.f32.mrb[0].mxu0
      %1934 = vmatprep.mubr.bf16.mxu0 0
      %1935 = vmatmul.mubr.bf16.gmra.mrb[0].mxu0 %v1780
      %v1936 = vpop.f32.mrb[0].mxu0
      %v1937 = vadd.f32 0.0, %v1936
      %v1938 = vpop.f32.mrb[0].mxu0
      %v1939 = vpop.f32.mrb[0].mxu0
      %v1940 = vpop.f32.mrb[0].mxu0
      %1941 = vmatprep.mubr.bf16.mxu0 0
      %1942 = vmatmul.mubr.bf16.gmra.mrb[0].mxu0 %v1783
      %v1943 = vpop.f32.mrb[0].mxu0
      %v1944 = vadd.f32 0.0, %v1943
      %v1945 = vpop.f32.mrb[0].mxu0
      %v1946 = vpop.f32.mrb[0].mxu0
      %v1947 = vadd.f32 0.0, %v1946
      %v1948 = vpop.f32.mrb[0].mxu0
      %1949 = vmatprep.mubr.bf16.mxu0 0
      %1950 = vmatmul.mubr.bf16.gmra.mrb[0].mxu0 %v1786
      %v1951 = vpop.f32.mrb[0].mxu0
      %v1952 = vpop.f32.mrb[0].mxu0
      %v1953 = vpop.f32.mrb[0].mxu0
      %v1954 = vadd.f32 0.0, %v1953
      %v1955 = vpop.f32.mrb[0].mxu0
      %1956 = vmatprep.mubr.bf16.mxu0 0
      %1957 = vmatmul.mubr.bf16.gmra.mrb[0].mxu0 %v1789
      %v1958 = vpop.f32.mrb[0].mxu0
      %v1959 = vadd.f32 0.0, %v1958
      %v1960 = vpop.f32.mrb[0].mxu0
      %v1961 = vpop.f32.mrb[0].mxu0
      %v1962 = vpop.f32.mrb[0].mxu0
      %1963 = vmatprep.mubr.bf16.mxu0 0
      %1964 = vmatmul.mubr.bf16.gmra.mrb[0].mxu0 %v1792
      %v1965 = vpop.f32.mrb[0].mxu0
      %v1966 = vadd.f32 0.0, %v1965
      %v1967 = vpop.f32.mrb[0].mxu0
      %v1968 = vpop.f32.mrb[0].mxu0
      %v1969 = vadd.f32 0.0, %v1968
      %v1970 = vpop.f32.mrb[0].mxu0
      %1971 = vmatprep.mubr.bf16.mxu0 0
      %1972 = vmatmul.mubr.bf16.gmra.mrb[0].mxu0 %v1795
      %v1973 = vpop.f32.mrb[0].mxu0
      %v1974 = vpop.f32.mrb[0].mxu0
      %v1975 = vpop.f32.mrb[0].mxu0
      %v1976 = vadd.f32 0.0, %v1975
      %v1977 = vpop.f32.mrb[0].mxu0
      %1978 = vmatprep.mubr.bf16.mxu0 0
      %1979 = vmatmul.mubr.bf16.gmra.mrb[0].mxu0 %v1798
      %v1980 = vpop.f32.mrb[0].mxu0
      %v1981 = vadd.f32 0.0, %v1980
      %v1982 = vpop.f32.mrb[0].mxu0
      %v1983 = vpop.f32.mrb[0].mxu0
      %v1984 = vpop.f32.mrb[0].mxu0
      %1985 = vmatprep.mubr.bf16.mxu0 0
      %1986 = vmatmul.mubr.bf16.gmra.mrb[0].mxu0 %v1801
      %v1987 = vpop.f32.mrb[0].mxu0
      %v1988 = vadd.f32 0.0, %v1987
      %v1989 = vpop.f32.mrb[0].mxu0
      %v1990 = vpop.f32.mrb[0].mxu0
      %v1991 = vadd.f32 0.0, %v1990
      %v1992 = vpop.f32.mrb[0].mxu0
      %1993 = vmatprep.mubr.bf16.mxu0 0
      %1994 = vmatmul.mubr.bf16.gmra.mrb[0].mxu0 %v1804
      %v1995 = vpop.f32.mrb[0].mxu0
      %v1996 = vpop.f32.mrb[0].mxu0
      %v1997 = vpop.f32.mrb[0].mxu0
      %v1998 = vadd.f32 0.0, %v1997
      %v1999 = vpop.f32.mrb[0].mxu0
      %2000 = vmatprep.mubr.bf16.mxu0 0
      %2001 = vmatmul.mubr.bf16.gmra.mrb[0].mxu0 %v1807
      %v2002 = vpop.f32.mrb[0].mxu0
      %v2003 = vadd.f32 0.0, %v2002
      %v2004 = vpop.f32.mrb[0].mxu0
      %v2005 = vpop.f32.mrb[0].mxu0
      %v2006 = vpop.f32.mrb[0].mxu0
      %2007 = vmatprep.mubr.bf16.mxu0 0
      %2008 = vmatmul.mubr.bf16.gmra.mrb[0].mxu0 %v1810
      %v2009 = vpop.f32.mrb[0].mxu0
      %v2010 = vadd.f32 0.0, %v2009
      %v2011 = vpop.f32.mrb[0].mxu0
      %v2012 = vpop.f32.mrb[0].mxu0
      %v2013 = vadd.f32 0.0, %v2012
      %v2014 = vpop.f32.mrb[0].mxu0
      %2015 = vmatprep.mubr.bf16.mxu0 0
      %2016 = vmatmul.mubr.bf16.gmra.mrb[0].mxu0 %v1813
      %v2017 = vpop.f32.mrb[0].mxu0
      %v2018 = vpop.f32.mrb[0].mxu0
      %v2019 = vpop.f32.mrb[0].mxu0
      %v2020 = vadd.f32 0.0, %v2019
      %v2021 = vpop.f32.mrb[0].mxu0
      %2022 = vmatprep.mubr.bf16.mxu0 0
      %2023 = vmatmul.mubr.bf16.gmra.mrb[0].mxu0 %v1816
      %v2024 = vpop.f32.mrb[0].mxu0
      %v2025 = vadd.f32 0.0, %v2024
      %v2026 = vpop.f32.mrb[0].mxu0
      %v2027 = vpop.f32.mrb[0].mxu0
      %v2028 = vpop.f32.mrb[0].mxu0
      %2029 = vdwg.mxu0
      %v2030 = vadd.f32 %v1640, %v1856
      %v2031 = vadd.f32 %v1641, %v1859
      %v2032 = vadd.f32 %v1642, %v1866
      %v2033 = vadd.f32 %v1643, %v1871
      %v2034 = vadd.f32 %v1644, %v1878
      %v2035 = vadd.f32 %v1645, %v1881
      %v2036 = vadd.f32 %v1646, %v1888
      %v2037 = vadd.f32 %v1647, %v1893
      %v2038 = vadd.f32 %v1648, %v1900
      %v2039 = vadd.f32 %v1649, %v1903
      %v2040 = vadd.f32 %v1650, %v1910
      %v2041 = vadd.f32 %v1651, %v1915
      %v2042 = vadd.f32 %v1652, %v1922
      %v2043 = vadd.f32 %v1653, %v1925
      %v2044 = vadd.f32 %v1654, %v1932
      %v2045 = vadd.f32 %v1655, %v1937
      %v2046 = vadd.f32 %v1656, %v1944
      %v2047 = vadd.f32 %v1657, %v1947
      %v2048 = vadd.f32 %v1658, %v1954
      %v2049 = vadd.f32 %v1659, %v1959
      %v2050 = vadd.f32 %v1660, %v1966
      %v2051 = vadd.f32 %v1661, %v1969
      %v2052 = vadd.f32 %v1662, %v1976
      %v2053 = vadd.f32 %v1663, %v1981
      %v2054 = vadd.f32 %v1664, %v1988
      %v2055 = vadd.f32 %v1665, %v1991
      %v2056 = vadd.f32 %v1666, %v1998
      %v2057 = vadd.f32 %v1667, %v2003
      %v2058 = vadd.f32 %v1668, %v2010
      %v2059 = vadd.f32 %v1669, %v2013
      %v2060 = vadd.f32 %v1670, %v2020
      %v2061 = vadd.f32 %v1671, %v2025
      %v2062 = vld [vmem:[%s165 + $0x1a] sm:$0xff]
      %v2063 = vld [vmem:[%s165 + $0x22] sm:$0xff]
      %v2064 = vld [vmem:[%s165 + $0x2a] sm:$0xff]
      %v2065 = vld [vmem:[%s165 + $0x32] sm:$0xff]
      %v2066 = vld [vmem:[%s165 + $0x3a] sm:$0xff]
      %v2067 = vld [vmem:[%s165 + $0x42] sm:$0xff]
      %v2068 = vld [vmem:[%s165 + $0x4a] sm:$0xff]
      %v2069 = vld [vmem:[%s165 + $0x52] sm:$0xff]
      %v2070 = vld [vmem:[%s165 + $0x5a] sm:$0xff]
      %v2071 = vld [vmem:[%s165 + $0x62] sm:$0xff]
      %v2072 = vld [vmem:[%s165 + $0x6a] sm:$0xff]
      %v2073 = vld [vmem:[%s165 + $0x72] sm:$0xff]
      %v2074 = vld [vmem:[%s165 + $0x7a] sm:$0xff]
      %v2075 = vld [vmem:[%s165 + $0x82] sm:$0xff]
      %v2076 = vld [vmem:[%s165 + $0x8a] sm:$0xff]
      %v2077 = vld [vmem:[%s165 + $0x92] sm:$0xff]
      %v2078 = vld [vmem:[%s165 + $0x9a] sm:$0xff]
      %v2079 = vld [vmem:[%s165 + $0xa2] sm:$0xff]
      %v2080 = vld [vmem:[%s165 + $0xaa] sm:$0xff]
      %v2081 = vld [vmem:[%s165 + $0xb2] sm:$0xff]
      %v2082 = vld [vmem:[%s165 + $0xba] sm:$0xff]
      %v2083 = vld [vmem:[%s165 + $0xc2] sm:$0xff]
      %v2084 = vld [vmem:[%s165 + $0xca] sm:$0xff]
      %v2085 = vld [vmem:[%s165 + $0xd2] sm:$0xff]
      %v2086 = vld [vmem:[%s165 + $0xda] sm:$0xff]
      %v2087 = vld [vmem:[%s165 + $0xe2] sm:$0xff]
      %v2088 = vld [vmem:[%s165 + $0xea] sm:$0xff]
      %v2089 = vld [vmem:[%s165 + $0xf2] sm:$0xff]
      %v2090 = vld [vmem:[%s165 + $0xfa] sm:$0xff]
      %v2091 = vld [vmem:[%s165 + $0x102] sm:$0xff]
      %v2092 = vld [vmem:[%s165 + $0x10a] sm:$0xff]
      %v2093 = vld [vmem:[%s165 + $0x112] sm:$0xff]
      %v2094 = vld [vmem:[%s165 + $0x11a] sm:$0xff]
      %v2095 = vld [vmem:[%s165 + $0x122] sm:$0xff]
      %v2096 = vld [vmem:[%s165 + $0x12a] sm:$0xff]
      %v2097 = vld [vmem:[%s165 + $0x132] sm:$0xff]
      %v2098 = vld [vmem:[%s165 + $0x13a] sm:$0xff]
      %v2099 = vld [vmem:[%s165 + $0x142] sm:$0xff]
      %v2100 = vld [vmem:[%s165 + $0x14a] sm:$0xff]
      %v2101 = vld [vmem:[%s165 + $0x152] sm:$0xff]
      %v2102 = vld [vmem:[%s165 + $0x15a] sm:$0xff]
      %v2103 = vld [vmem:[%s165 + $0x162] sm:$0xff]
      %v2104 = vld [vmem:[%s165 + $0x16a] sm:$0xff]
      %v2105 = vld [vmem:[%s165 + $0x172] sm:$0xff]
      %v2106 = vld [vmem:[%s165 + $0x17a] sm:$0xff]
      %v2107 = vld [vmem:[%s165 + $0x182] sm:$0xff]
      %v2108 = vld [vmem:[%s165 + $0x18a] sm:$0xff]
      %v2109 = vld [vmem:[%s165 + $0x192] sm:$0xff]
      %v2110 = vpack.c.bf16 %v2063, %v2062
      %v2111 = vpack.c.bf16 %v2065, %v2064
      %v2112 = vpack.c.bf16 %v2067, %v2066
      %v2113 = vpack.c.bf16 %v2069, %v2068
      %v2114 = vpack.c.bf16 %v2071, %v2070
      %v2115 = vpack.c.bf16 %v2073, %v2072
      %v2116 = vpack.c.bf16 %v2075, %v2074
      %v2117 = vpack.c.bf16 %v2077, %v2076
      %v2118 = vpack.c.bf16 %v2079, %v2078
      %v2119 = vpack.c.bf16 %v2081, %v2080
      %v2120 = vpack.c.bf16 %v2083, %v2082
      %v2121 = vpack.c.bf16 %v2085, %v2084
      %v2122 = vpack.c.bf16 %v2087, %v2086
      %v2123 = vpack.c.bf16 %v2089, %v2088
      %v2124 = vpack.c.bf16 %v2091, %v2090
      %v2125 = vpack.c.bf16 %v2093, %v2092
      %v2126 = vpack.c.bf16 %v2095, %v2094
      %v2127 = vpack.c.bf16 %v2097, %v2096
      %v2128 = vpack.c.bf16 %v2099, %v2098
      %v2129 = vpack.c.bf16 %v2101, %v2100
      %v2130 = vpack.c.bf16 %v2103, %v2102
      %v2131 = vpack.c.bf16 %v2105, %v2104
      %v2132 = vpack.c.bf16 %v2107, %v2106
      %v2133 = vpack.c.bf16 %v2109, %v2108
      %s2134 = scalar_lea.vmem %s1, 10
      %v2135 = vld [vmem:[%s2134] sm:$0x3]
      %v2137 = vsel %vm319, %v2110, 0
      %v2140 = vsel %vm319, %v2111, 0
      %v2143 = vsel %vm319, %v2112, 0
      %v2146 = vsel %vm319, %v2113, 0
      %v2149 = vsel %vm319, %v2114, 0
      %v2152 = vsel %vm319, %v2115, 0
      %v2155 = vsel %vm319, %v2116, 0
      %v2158 = vsel %vm319, %v2117, 0
      %v2161 = vsel %vm319, %v2118, 0
      %v2164 = vsel %vm319, %v2119, 0
      %v2167 = vsel %vm319, %v2120, 0
      %v2170 = vsel %vm319, %v2121, 0
      %v2173 = vsel %vm319, %v2122, 0
      %v2176 = vsel %vm319, %v2123, 0
      %v2179 = vsel %vm319, %v2124, 0
      %v2182 = vsel %vm319, %v2125, 0
      %v2185 = vsel %vm319, %v2126, 0
      %v2188 = vsel %vm319, %v2127, 0
      %v2191 = vsel %vm319, %v2128, 0
      %v2194 = vsel %vm319, %v2129, 0
      %v2197 = vsel %vm319, %v2130, 0
      %v2200 = vsel %vm319, %v2131, 0
      %v2203 = vsel %vm319, %v2132, 0
      %v2206 = vsel %vm319, %v2133, 0
      %v2209 = vand.u32 %v2135, %v395
      %2211 = vmatprep.subr.bf16.mxu0 0
      %2212 = vmatpush1.bf16.msra.mxu0 %v2209
      %2213 = vmatprep.subr.bf16.mxu0 0
      %2214 = vmatpush1.bf16.msra.mxu0 0
      %2215 = vmatprep.subr.bf16.mxu0 0
      %2216 = vmatpush1.bf16.msra.mxu0 0
      %2217 = vmatprep.subr.bf16.mxu0 0
      %2218 = vmatpush1.bf16.msra.mxu0 0
      %2219 = vmatprep.subr.bf16.mxu0 0
      %2220 = vmatpush1.bf16.msra.mxu0 0
      %2221 = vmatprep.subr.bf16.mxu0 0
      %2222 = vmatpush1.bf16.msra.mxu0 0
      %2223 = vmatprep.subr.bf16.mxu0 0
      %2224 = vmatpush1.bf16.msra.mxu0 0
      %2225 = vmatprep.subr.bf16.mxu0 0
      %2226 = vmatpush1.bf16.msra.mxu0 0
      %2227 = vmatprep.subr.bf16.mxu0 0
      %2228 = vmatpush1.bf16.msra.mxu0 0
      %2229 = vmatprep.subr.bf16.mxu0 0
      %2230 = vmatpush1.bf16.msra.mxu0 0
      %2231 = vmatprep.subr.bf16.mxu0 0
      %2232 = vmatpush1.bf16.msra.mxu0 0
      %2233 = vmatprep.subr.bf16.mxu0 0
      %2234 = vmatpush1.bf16.msra.mxu0 0
      %2235 = vmatprep.subr.bf16.mxu0 0
      %2236 = vmatpush1.bf16.msra.mxu0 0
      %2237 = vmatprep.subr.bf16.mxu0 0
      %2238 = vmatpush1.bf16.msra.mxu0 0
      %2239 = vmatprep.subr.bf16.mxu0 0
      %2240 = vmatpush1.bf16.msra.mxu0 0
      %2241 = vmatprep.subr.bf16.mxu0 0
      %2242 = vmatpush1.bf16.msra.mxu0 0
      %2243 = vmatprep.mubr.bf16.mxu0 0
      %2244 = vmatmul.mubr.bf16.gmra.mrb[0].mxu0 %v2137
      %v2245 = vpop.f32.mrb[0].mxu0
      %v2246 = vadd.f32 0.0, %v2245
      %v2247 = vpop.f32.mrb[0].mxu0
      %v2248 = vpop.f32.mrb[0].mxu0
      %v2249 = vadd.f32 0.0, %v2248
      %v2250 = vpop.f32.mrb[0].mxu0
      %2251 = vmatprep.mubr.bf16.mxu0 0
      %2252 = vmatmul.mubr.bf16.gmra.mrb[0].mxu0 %v2140
      %v2253 = vpop.f32.mrb[0].mxu0
      %v2254 = vpop.f32.mrb[0].mxu0
      %v2255 = vpop.f32.mrb[0].mxu0
      %v2256 = vadd.f32 0.0, %v2255
      %v2257 = vpop.f32.mrb[0].mxu0
      %2258 = vmatprep.mubr.bf16.mxu0 0
      %2259 = vmatmul.mubr.bf16.gmra.mrb[0].mxu0 %v2143
      %v2260 = vpop.f32.mrb[0].mxu0
      %v2261 = vadd.f32 0.0, %v2260
      %v2262 = vpop.f32.mrb[0].mxu0
      %v2263 = vpop.f32.mrb[0].mxu0
      %v2264 = vpop.f32.mrb[0].mxu0
      %2265 = vmatprep.mubr.bf16.mxu0 0
      %2266 = vmatmul.mubr.bf16.gmra.mrb[0].mxu0 %v2146
      %v2267 = vpop.f32.mrb[0].mxu0
      %v2268 = vadd.f32 0.0, %v2267
      %v2269 = vpop.f32.mrb[0].mxu0
      %v2270 = vpop.f32.mrb[0].mxu0
      %v2271 = vadd.f32 0.0, %v2270
      %v2272 = vpop.f32.mrb[0].mxu0
      %2273 = vmatprep.mubr.bf16.mxu0 0
      %2274 = vmatmul.mubr.bf16.gmra.mrb[0].mxu0 %v2149
      %v2275 = vpop.f32.mrb[0].mxu0
      %v2276 = vpop.f32.mrb[0].mxu0
      %v2277 = vpop.f32.mrb[0].mxu0
      %v2278 = vadd.f32 0.0, %v2277
      %v2279 = vpop.f32.mrb[0].mxu0
      %2280 = vmatprep.mubr.bf16.mxu0 0
      %2281 = vmatmul.mubr.bf16.gmra.mrb[0].mxu0 %v2152
      %v2282 = vpop.f32.mrb[0].mxu0
      %v2283 = vadd.f32 0.0, %v2282
      %v2284 = vpop.f32.mrb[0].mxu0
      %v2285 = vpop.f32.mrb[0].mxu0
      %v2286 = vpop.f32.mrb[0].mxu0
      %2287 = vmatprep.mubr.bf16.mxu0 0
      %2288 = vmatmul.mubr.bf16.gmra.mrb[0].mxu0 %v2155
      %v2289 = vpop.f32.mrb[0].mxu0
      %v2290 = vadd.f32 0.0, %v2289
      %v2291 = vpop.f32.mrb[0].mxu0
      %v2292 = vpop.f32.mrb[0].mxu0
      %v2293 = vadd.f32 0.0, %v2292
      %v2294 = vpop.f32.mrb[0].mxu0
      %2295 = vmatprep.mubr.bf16.mxu0 0
      %2296 = vmatmul.mubr.bf16.gmra.mrb[0].mxu0 %v2158
      %v2297 = vpop.f32.mrb[0].mxu0
      %v2298 = vpop.f32.mrb[0].mxu0
      %v2299 = vpop.f32.mrb[0].mxu0
      %v2300 = vadd.f32 0.0, %v2299
      %v2301 = vpop.f32.mrb[0].mxu0
      %2302 = vmatprep.mubr.bf16.mxu0 0
      %2303 = vmatmul.mubr.bf16.gmra.mrb[0].mxu0 %v2161
      %v2304 = vpop.f32.mrb[0].mxu0
      %v2305 = vadd.f32 0.0, %v2304
      %v2306 = vpop.f32.mrb[0].mxu0
      %v2307 = vpop.f32.mrb[0].mxu0
      %v2308 = vpop.f32.mrb[0].mxu0
      %2309 = vmatprep.mubr.bf16.mxu0 0
      %2310 = vmatmul.mubr.bf16.gmra.mrb[0].mxu0 %v2164
      %v2311 = vpop.f32.mrb[0].mxu0
      %v2312 = vadd.f32 0.0, %v2311
      %v2313 = vpop.f32.mrb[0].mxu0
      %v2314 = vpop.f32.mrb[0].mxu0
      %v2315 = vadd.f32 0.0, %v2314
      %v2316 = vpop.f32.mrb[0].mxu0
      %2317 = vmatprep.mubr.bf16.mxu0 0
      %2318 = vmatmul.mubr.bf16.gmra.mrb[0].mxu0 %v2167
      %v2319 = vpop.f32.mrb[0].mxu0
      %v2320 = vpop.f32.mrb[0].mxu0
      %v2321 = vpop.f32.mrb[0].mxu0
      %v2322 = vadd.f32 0.0, %v2321
      %v2323 = vpop.f32.mrb[0].mxu0
      %2324 = vmatprep.mubr.bf16.mxu0 0
      %2325 = vmatmul.mubr.bf16.gmra.mrb[0].mxu0 %v2170
      %v2326 = vpop.f32.mrb[0].mxu0
      %v2327 = vadd.f32 0.0, %v2326
      %v2328 = vpop.f32.mrb[0].mxu0
      %v2329 = vpop.f32.mrb[0].mxu0
      %v2330 = vpop.f32.mrb[0].mxu0
      %2331 = vmatprep.mubr.bf16.mxu0 0
      %2332 = vmatmul.mubr.bf16.gmra.mrb[0].mxu0 %v2173
      %v2333 = vpop.f32.mrb[0].mxu0
      %v2334 = vadd.f32 0.0, %v2333
      %v2335 = vpop.f32.mrb[0].mxu0
      %v2336 = vpop.f32.mrb[0].mxu0
      %v2337 = vadd.f32 0.0, %v2336
      %v2338 = vpop.f32.mrb[0].mxu0
      %2339 = vmatprep.mubr.bf16.mxu0 0
      %2340 = vmatmul.mubr.bf16.gmra.mrb[0].mxu0 %v2176
      %v2341 = vpop.f32.mrb[0].mxu0
      %v2342 = vpop.f32.mrb[0].mxu0
      %v2343 = vpop.f32.mrb[0].mxu0
      %v2344 = vadd.f32 0.0, %v2343
      %v2345 = vpop.f32.mrb[0].mxu0
      %2346 = vmatprep.mubr.bf16.mxu0 0
      %2347 = vmatmul.mubr.bf16.gmra.mrb[0].mxu0 %v2179
      %v2348 = vpop.f32.mrb[0].mxu0
      %v2349 = vadd.f32 0.0, %v2348
      %v2350 = vpop.f32.mrb[0].mxu0
      %v2351 = vpop.f32.mrb[0].mxu0
      %v2352 = vpop.f32.mrb[0].mxu0
      %2353 = vmatprep.mubr.bf16.mxu0 0
      %2354 = vmatmul.mubr.bf16.gmra.mrb[0].mxu0 %v2182
      %v2355 = vpop.f32.mrb[0].mxu0
      %v2356 = vadd.f32 0.0, %v2355
      %v2357 = vpop.f32.mrb[0].mxu0
      %v2358 = vpop.f32.mrb[0].mxu0
      %v2359 = vadd.f32 0.0, %v2358
      %v2360 = vpop.f32.mrb[0].mxu0
      %2361 = vmatprep.mubr.bf16.mxu0 0
      %2362 = vmatmul.mubr.bf16.gmra.mrb[0].mxu0 %v2185
      %v2363 = vpop.f32.mrb[0].mxu0
      %v2364 = vpop.f32.mrb[0].mxu0
      %v2365 = vpop.f32.mrb[0].mxu0
      %v2366 = vadd.f32 0.0, %v2365
      %v2367 = vpop.f32.mrb[0].mxu0
      %2368 = vmatprep.mubr.bf16.mxu0 0
      %2369 = vmatmul.mubr.bf16.gmra.mrb[0].mxu0 %v2188
      %v2370 = vpop.f32.mrb[0].mxu0
      %v2371 = vadd.f32 0.0, %v2370
      %v2372 = vpop.f32.mrb[0].mxu0
      %v2373 = vpop.f32.mrb[0].mxu0
      %v2374 = vpop.f32.mrb[0].mxu0
      %2375 = vmatprep.mubr.bf16.mxu0 0
      %2376 = vmatmul.mubr.bf16.gmra.mrb[0].mxu0 %v2191
      %v2377 = vpop.f32.mrb[0].mxu0
      %v2378 = vadd.f32 0.0, %v2377
      %v2379 = vpop.f32.mrb[0].mxu0
      %v2380 = vpop.f32.mrb[0].mxu0
      %v2381 = vadd.f32 0.0, %v2380
      %v2382 = vpop.f32.mrb[0].mxu0
      %2383 = vmatprep.mubr.bf16.mxu0 0
      %2384 = vmatmul.mubr.bf16.gmra.mrb[0].mxu0 %v2194
      %v2385 = vpop.f32.mrb[0].mxu0
      %v2386 = vpop.f32.mrb[0].mxu0
      %v2387 = vpop.f32.mrb[0].mxu0
      %v2388 = vadd.f32 0.0, %v2387
      %v2389 = vpop.f32.mrb[0].mxu0
      %2390 = vmatprep.mubr.bf16.mxu0 0
      %2391 = vmatmul.mubr.bf16.gmra.mrb[0].mxu0 %v2197
      %v2392 = vpop.f32.mrb[0].mxu0
      %v2393 = vadd.f32 0.0, %v2392
      %v2394 = vpop.f32.mrb[0].mxu0
      %v2395 = vpop.f32.mrb[0].mxu0
      %v2396 = vpop.f32.mrb[0].mxu0
      %2397 = vmatprep.mubr.bf16.mxu0 0
      %2398 = vmatmul.mubr.bf16.gmra.mrb[0].mxu0 %v2200
      %v2399 = vpop.f32.mrb[0].mxu0
      %v2400 = vadd.f32 0.0, %v2399
      %v2401 = vpop.f32.mrb[0].mxu0
      %v2402 = vpop.f32.mrb[0].mxu0
      %v2403 = vadd.f32 0.0, %v2402
      %v2404 = vpop.f32.mrb[0].mxu0
      %2405 = vmatprep.mubr.bf16.mxu0 0
      %2406 = vmatmul.mubr.bf16.gmra.mrb[0].mxu0 %v2203
      %v2407 = vpop.f32.mrb[0].mxu0
      %v2408 = vpop.f32.mrb[0].mxu0
      %v2409 = vpop.f32.mrb[0].mxu0
      %v2410 = vadd.f32 0.0, %v2409
      %v2411 = vpop.f32.mrb[0].mxu0
      %2412 = vmatprep.mubr.bf16.mxu0 0
      %2413 = vmatmul.mubr.bf16.gmra.mrb[0].mxu0 %v2206
      %v2414 = vpop.f32.mrb[0].mxu0
      %v2415 = vadd.f32 0.0, %v2414
      %v2416 = vpop.f32.mrb[0].mxu0
      %v2417 = vpop.f32.mrb[0].mxu0
      %v2418 = vpop.f32.mrb[0].mxu0
      %2419 = vdwg.mxu0
      %v2420 = vadd.f32 %v2030, %v2246
      %v2421 = vadd.f32 %v2031, %v2249
      %v2422 = vadd.f32 %v2032, %v2256
      %v2423 = vadd.f32 %v2033, %v2261
      %v2424 = vadd.f32 %v2034, %v2268
      %v2425 = vadd.f32 %v2035, %v2271
      %v2426 = vadd.f32 %v2036, %v2278
      %v2427 = vadd.f32 %v2037, %v2283
      %v2428 = vadd.f32 %v2038, %v2290
      %v2429 = vadd.f32 %v2039, %v2293
      %v2430 = vadd.f32 %v2040, %v2300
      %v2431 = vadd.f32 %v2041, %v2305
      %v2432 = vadd.f32 %v2042, %v2312
      %v2433 = vadd.f32 %v2043, %v2315
      %v2434 = vadd.f32 %v2044, %v2322
      %v2435 = vadd.f32 %v2045, %v2327
      %v2436 = vadd.f32 %v2046, %v2334
      %v2437 = vadd.f32 %v2047, %v2337
      %v2438 = vadd.f32 %v2048, %v2344
      %v2439 = vadd.f32 %v2049, %v2349
      %v2440 = vadd.f32 %v2050, %v2356
      %v2441 = vadd.f32 %v2051, %v2359
      %v2442 = vadd.f32 %v2052, %v2366
      %v2443 = vadd.f32 %v2053, %v2371
      %v2444 = vadd.f32 %v2054, %v2378
      %v2445 = vadd.f32 %v2055, %v2381
      %v2446 = vadd.f32 %v2056, %v2388
      %v2447 = vadd.f32 %v2057, %v2393
      %v2448 = vadd.f32 %v2058, %v2400
      %v2449 = vadd.f32 %v2059, %v2403
      %v2450 = vadd.f32 %v2060, %v2410
      %v2451 = vadd.f32 %v2061, %v2415
      %v2452 = vld [vmem:[%s165 + $0x30] sm:$0xff]
      %v2453 = vld [vmem:[%s165 + $0x38] sm:$0xff]
      %v2454 = vld [vmem:[%s165 + $0x40] sm:$0xff]
      %v2455 = vld [vmem:[%s165 + $0x48] sm:$0xff]
      %v2456 = vld [vmem:[%s165 + $0x50] sm:$0xff]
      %v2457 = vld [vmem:[%s165 + $0x58] sm:$0xff]
      %v2458 = vld [vmem:[%s165 + $0x60] sm:$0xff]
      %v2459 = vld [vmem:[%s165 + $0x68] sm:$0xff]
      %v2460 = vld [vmem:[%s165 + $0x70] sm:$0xff]
      %v2461 = vld [vmem:[%s165 + $0x78] sm:$0xff]
      %v2462 = vld [vmem:[%s165 + $0x80] sm:$0xff]
      %v2463 = vld [vmem:[%s165 + $0x88] sm:$0xff]
      %v2464 = vld [vmem:[%s165 + $0x90] sm:$0xff]
      %v2465 = vld [vmem:[%s165 + $0x98] sm:$0xff]
      %v2466 = vld [vmem:[%s165 + $0xa0] sm:$0xff]
      %v2467 = vld [vmem:[%s165 + $0xa8] sm:$0xff]
      %v2468 = vld [vmem:[%s165 + $0xb0] sm:$0xff]
      %v2469 = vld [vmem:[%s165 + $0xb8] sm:$0xff]
      %v2470 = vld [vmem:[%s165 + $0xc0] sm:$0xff]
      %v2471 = vld [vmem:[%s165 + $0xc8] sm:$0xff]
      %v2472 = vld [vmem:[%s165 + $0xd0] sm:$0xff]
      %v2473 = vld [vmem:[%s165 + $0xd8] sm:$0xff]
      %v2474 = vld [vmem:[%s165 + $0xe0] sm:$0xff]
      %v2475 = vld [vmem:[%s165 + $0xe8] sm:$0xff]
      %v2476 = vld [vmem:[%s165 + $0xf0] sm:$0xff]
      %v2477 = vld [vmem:[%s165 + $0xf8] sm:$0xff]
      %v2478 = vld [vmem:[%s165 + $0x100] sm:$0xff]
      %v2479 = vld [vmem:[%s165 + $0x108] sm:$0xff]
      %v2480 = vld [vmem:[%s165 + $0x110] sm:$0xff]
      %v2481 = vld [vmem:[%s165 + $0x118] sm:$0xff]
      %v2482 = vld [vmem:[%s165 + $0x120] sm:$0xff]
      %v2483 = vld [vmem:[%s165 + $0x128] sm:$0xff]
      %v2484 = vld [vmem:[%s165 + $0x130] sm:$0xff]
      %v2485 = vld [vmem:[%s165 + $0x138] sm:$0xff]
      %v2486 = vld [vmem:[%s165 + $0x140] sm:$0xff]
      %v2487 = vld [vmem:[%s165 + $0x148] sm:$0xff]
      %v2488 = vld [vmem:[%s165 + $0x150] sm:$0xff]
      %v2489 = vld [vmem:[%s165 + $0x158] sm:$0xff]
      %v2490 = vld [vmem:[%s165 + $0x160] sm:$0xff]
      %v2491 = vld [vmem:[%s165 + $0x168] sm:$0xff]
      %v2492 = vld [vmem:[%s165 + $0x170] sm:$0xff]
      %v2493 = vld [vmem:[%s165 + $0x178] sm:$0xff]
      %v2494 = vld [vmem:[%s165 + $0x180] sm:$0xff]
      %v2495 = vld [vmem:[%s165 + $0x188] sm:$0xff]
      %v2496 = vld [vmem:[%s165 + $0x190] sm:$0xff]
      %v2497 = vld [vmem:[%s165 + $0x198] sm:$0xff]
      %v2498 = vld [vmem:[%s165 + $0x1a0] sm:$0xff]
      %v2499 = vld [vmem:[%s165 + $0x1a8] sm:$0xff]
      %v2500 = vpack.c.bf16 %v2453, %v2452
      %v2501 = vpack.c.bf16 %v2455, %v2454
      %v2502 = vpack.c.bf16 %v2457, %v2456
      %v2503 = vpack.c.bf16 %v2459, %v2458
      %v2504 = vpack.c.bf16 %v2461, %v2460
      %v2505 = vpack.c.bf16 %v2463, %v2462
      %v2506 = vpack.c.bf16 %v2465, %v2464
      %v2507 = vpack.c.bf16 %v2467, %v2466
      %v2508 = vpack.c.bf16 %v2469, %v2468
      %v2509 = vpack.c.bf16 %v2471, %v2470
      %v2510 = vpack.c.bf16 %v2473, %v2472
      %v2511 = vpack.c.bf16 %v2475, %v2474
      %v2512 = vpack.c.bf16 %v2477, %v2476
      %v2513 = vpack.c.bf16 %v2479, %v2478
      %v2514 = vpack.c.bf16 %v2481, %v2480
      %v2515 = vpack.c.bf16 %v2483, %v2482
      %v2516 = vpack.c.bf16 %v2485, %v2484
      %v2517 = vpack.c.bf16 %v2487, %v2486
      %v2518 = vpack.c.bf16 %v2489, %v2488
      %v2519 = vpack.c.bf16 %v2491, %v2490
      %v2520 = vpack.c.bf16 %v2493, %v2492
      %v2521 = vpack.c.bf16 %v2495, %v2494
      %v2522 = vpack.c.bf16 %v2497, %v2496
      %v2523 = vpack.c.bf16 %v2499, %v2498
      %s2524 = scalar_lea.vmem %s1, 12
      %v2525 = vld [vmem:[%s2524] sm:$0x3]
      %v2527 = vsel %vm319, %v2500, 0
      %v2530 = vsel %vm319, %v2501, 0
      %v2533 = vsel %vm319, %v2502, 0
      %v2536 = vsel %vm319, %v2503, 0
      %v2539 = vsel %vm319, %v2504, 0
      %v2542 = vsel %vm319, %v2505, 0
      %v2545 = vsel %vm319, %v2506, 0
      %v2548 = vsel %vm319, %v2507, 0
      %v2551 = vsel %vm319, %v2508, 0
      %v2554 = vsel %vm319, %v2509, 0
      %v2557 = vsel %vm319, %v2510, 0
      %v2560 = vsel %vm319, %v2511, 0
      %v2563 = vsel %vm319, %v2512, 0
      %v2566 = vsel %vm319, %v2513, 0
      %v2569 = vsel %vm319, %v2514, 0
      %v2572 = vsel %vm319, %v2515, 0
      %v2575 = vsel %vm319, %v2516, 0
      %v2578 = vsel %vm319, %v2517, 0
      %v2581 = vsel %vm319, %v2518, 0
      %v2584 = vsel %vm319, %v2519, 0
      %v2587 = vsel %vm319, %v2520, 0
      %v2590 = vsel %vm319, %v2521, 0
      %v2593 = vsel %vm319, %v2522, 0
      %v2596 = vsel %vm319, %v2523, 0
      %v2599 = vand.u32 %v2525, %v395
      %2601 = vmatprep.subr.bf16.mxu0 0
      %2602 = vmatpush1.bf16.msra.mxu0 %v2599
      %2603 = vmatprep.subr.bf16.mxu0 0
      %2604 = vmatpush1.bf16.msra.mxu0 0
      %2605 = vmatprep.subr.bf16.mxu0 0
      %2606 = vmatpush1.bf16.msra.mxu0 0
      %2607 = vmatprep.subr.bf16.mxu0 0
      %2608 = vmatpush1.bf16.msra.mxu0 0
      %2609 = vmatprep.subr.bf16.mxu0 0
      %2610 = vmatpush1.bf16.msra.mxu0 0
      %2611 = vmatprep.subr.bf16.mxu0 0
      %2612 = vmatpush1.bf16.msra.mxu0 0
      %2613 = vmatprep.subr.bf16.mxu0 0
      %2614 = vmatpush1.bf16.msra.mxu0 0
      %2615 = vmatprep.subr.bf16.mxu0 0
      %2616 = vmatpush1.bf16.msra.mxu0 0
      %2617 = vmatprep.subr.bf16.mxu0 0
      %2618 = vmatpush1.bf16.msra.mxu0 0
      %2619 = vmatprep.subr.bf16.mxu0 0
      %2620 = vmatpush1.bf16.msra.mxu0 0
      %2621 = vmatprep.subr.bf16.mxu0 0
      %2622 = vmatpush1.bf16.msra.mxu0 0
      %2623 = vmatprep.subr.bf16.mxu0 0
      %2624 = vmatpush1.bf16.msra.mxu0 0
      %2625 = vmatprep.subr.bf16.mxu0 0
      %2626 = vmatpush1.bf16.msra.mxu0 0
      %2627 = vmatprep.subr.bf16.mxu0 0
      %2628 = vmatpush1.bf16.msra.mxu0 0
      %2629 = vmatprep.subr.bf16.mxu0 0
      %2630 = vmatpush1.bf16.msra.mxu0 0
      %2631 = vmatprep.subr.bf16.mxu0 0
      %2632 = vmatpush1.bf16.msra.mxu0 0
      %2633 = vmatprep.mubr.bf16.mxu0 0
      %2634 = vmatmul.mubr.bf16.gmra.mrb[0].mxu0 %v2527
      %v2635 = vpop.f32.mrb[0].mxu0
      %v2636 = vadd.f32 0.0, %v2635
      %v2637 = vpop.f32.mrb[0].mxu0
      %v2638 = vpop.f32.mrb[0].mxu0
      %v2639 = vadd.f32 0.0, %v2638
      %v2640 = vpop.f32.mrb[0].mxu0
      %2641 = vmatprep.mubr.bf16.mxu0 0
      %2642 = vmatmul.mubr.bf16.gmra.mrb[0].mxu0 %v2530
      %v2643 = vpop.f32.mrb[0].mxu0
      %v2644 = vpop.f32.mrb[0].mxu0
      %v2645 = vpop.f32.mrb[0].mxu0
      %v2646 = vadd.f32 0.0, %v2645
      %v2647 = vpop.f32.mrb[0].mxu0
      %2648 = vmatprep.mubr.bf16.mxu0 0
      %2649 = vmatmul.mubr.bf16.gmra.mrb[0].mxu0 %v2533
      %v2650 = vpop.f32.mrb[0].mxu0
      %v2651 = vadd.f32 0.0, %v2650
      %v2652 = vpop.f32.mrb[0].mxu0
      %v2653 = vpop.f32.mrb[0].mxu0
      %v2654 = vpop.f32.mrb[0].mxu0
      %2655 = vmatprep.mubr.bf16.mxu0 0
      %2656 = vmatmul.mubr.bf16.gmra.mrb[0].mxu0 %v2536
      %v2657 = vpop.f32.mrb[0].mxu0
      %v2658 = vadd.f32 0.0, %v2657
      %v2659 = vpop.f32.mrb[0].mxu0
      %v2660 = vpop.f32.mrb[0].mxu0
      %v2661 = vadd.f32 0.0, %v2660
      %v2662 = vpop.f32.mrb[0].mxu0
      %2663 = vmatprep.mubr.bf16.mxu0 0
      %2664 = vmatmul.mubr.bf16.gmra.mrb[0].mxu0 %v2539
      %v2665 = vpop.f32.mrb[0].mxu0
      %v2666 = vpop.f32.mrb[0].mxu0
      %v2667 = vpop.f32.mrb[0].mxu0
      %v2668 = vadd.f32 0.0, %v2667
      %v2669 = vpop.f32.mrb[0].mxu0
      %2670 = vmatprep.mubr.bf16.mxu0 0
      %2671 = vmatmul.mubr.bf16.gmra.mrb[0].mxu0 %v2542
      %v2672 = vpop.f32.mrb[0].mxu0
      %v2673 = vadd.f32 0.0, %v2672
      %v2674 = vpop.f32.mrb[0].mxu0
      %v2675 = vpop.f32.mrb[0].mxu0
      %v2676 = vpop.f32.mrb[0].mxu0
      %2677 = vmatprep.mubr.bf16.mxu0 0
      %2678 = vmatmul.mubr.bf16.gmra.mrb[0].mxu0 %v2545
      %v2679 = vpop.f32.mrb[0].mxu0
      %v2680 = vadd.f32 0.0, %v2679
      %v2681 = vpop.f32.mrb[0].mxu0
      %v2682 = vpop.f32.mrb[0].mxu0
      %v2683 = vadd.f32 0.0, %v2682
      %v2684 = vpop.f32.mrb[0].mxu0
      %2685 = vmatprep.mubr.bf16.mxu0 0
      %2686 = vmatmul.mubr.bf16.gmra.mrb[0].mxu0 %v2548
      %v2687 = vpop.f32.mrb[0].mxu0
      %v2688 = vpop.f32.mrb[0].mxu0
      %v2689 = vpop.f32.mrb[0].mxu0
      %v2690 = vadd.f32 0.0, %v2689
      %v2691 = vpop.f32.mrb[0].mxu0
      %2692 = vmatprep.mubr.bf16.mxu0 0
      %2693 = vmatmul.mubr.bf16.gmra.mrb[0].mxu0 %v2551
      %v2694 = vpop.f32.mrb[0].mxu0
      %v2695 = vadd.f32 0.0, %v2694
      %v2696 = vpop.f32.mrb[0].mxu0
      %v2697 = vpop.f32.mrb[0].mxu0
      %v2698 = vpop.f32.mrb[0].mxu0
      %2699 = vmatprep.mubr.bf16.mxu0 0
      %2700 = vmatmul.mubr.bf16.gmra.mrb[0].mxu0 %v2554
      %v2701 = vpop.f32.mrb[0].mxu0
      %v2702 = vadd.f32 0.0, %v2701
      %v2703 = vpop.f32.mrb[0].mxu0
      %v2704 = vpop.f32.mrb[0].mxu0
      %v2705 = vadd.f32 0.0, %v2704
      %v2706 = vpop.f32.mrb[0].mxu0
      %2707 = vmatprep.mubr.bf16.mxu0 0
      %2708 = vmatmul.mubr.bf16.gmra.mrb[0].mxu0 %v2557
      %v2709 = vpop.f32.mrb[0].mxu0
      %v2710 = vpop.f32.mrb[0].mxu0
      %v2711 = vpop.f32.mrb[0].mxu0
      %v2712 = vadd.f32 0.0, %v2711
      %v2713 = vpop.f32.mrb[0].mxu0
      %2714 = vmatprep.mubr.bf16.mxu0 0
      %2715 = vmatmul.mubr.bf16.gmra.mrb[0].mxu0 %v2560
      %v2716 = vpop.f32.mrb[0].mxu0
      %v2717 = vadd.f32 0.0, %v2716
      %v2718 = vpop.f32.mrb[0].mxu0
      %v2719 = vpop.f32.mrb[0].mxu0
      %v2720 = vpop.f32.mrb[0].mxu0
      %2721 = vmatprep.mubr.bf16.mxu0 0
      %2722 = vmatmul.mubr.bf16.gmra.mrb[0].mxu0 %v2563
      %v2723 = vpop.f32.mrb[0].mxu0
      %v2724 = vadd.f32 0.0, %v2723
      %v2725 = vpop.f32.mrb[0].mxu0
      %v2726 = vpop.f32.mrb[0].mxu0
      %v2727 = vadd.f32 0.0, %v2726
      %v2728 = vpop.f32.mrb[0].mxu0
      %2729 = vmatprep.mubr.bf16.mxu0 0
      %2730 = vmatmul.mubr.bf16.gmra.mrb[0].mxu0 %v2566
      %v2731 = vpop.f32.mrb[0].mxu0
      %v2732 = vpop.f32.mrb[0].mxu0
      %v2733 = vpop.f32.mrb[0].mxu0
      %v2734 = vadd.f32 0.0, %v2733
      %v2735 = vpop.f32.mrb[0].mxu0
      %2736 = vmatprep.mubr.bf16.mxu0 0
      %2737 = vmatmul.mubr.bf16.gmra.mrb[0].mxu0 %v2569
      %v2738 = vpop.f32.mrb[0].mxu0
      %v2739 = vadd.f32 0.0, %v2738
      %v2740 = vpop.f32.mrb[0].mxu0
      %v2741 = vpop.f32.mrb[0].mxu0
      %v2742 = vpop.f32.mrb[0].mxu0
      %2743 = vmatprep.mubr.bf16.mxu0 0
      %2744 = vmatmul.mubr.bf16.gmra.mrb[0].mxu0 %v2572
      %v2745 = vpop.f32.mrb[0].mxu0
      %v2746 = vadd.f32 0.0, %v2745
      %v2747 = vpop.f32.mrb[0].mxu0
      %v2748 = vpop.f32.mrb[0].mxu0
      %v2749 = vadd.f32 0.0, %v2748
      %v2750 = vpop.f32.mrb[0].mxu0
      %2751 = vmatprep.mubr.bf16.mxu0 0
      %2752 = vmatmul.mubr.bf16.gmra.mrb[0].mxu0 %v2575
      %v2753 = vpop.f32.mrb[0].mxu0
      %v2754 = vpop.f32.mrb[0].mxu0
      %v2755 = vpop.f32.mrb[0].mxu0
      %v2756 = vadd.f32 0.0, %v2755
      %v2757 = vpop.f32.mrb[0].mxu0
      %2758 = vmatprep.mubr.bf16.mxu0 0
      %2759 = vmatmul.mubr.bf16.gmra.mrb[0].mxu0 %v2578
      %v2760 = vpop.f32.mrb[0].mxu0
      %v2761 = vadd.f32 0.0, %v2760
      %v2762 = vpop.f32.mrb[0].mxu0
      %v2763 = vpop.f32.mrb[0].mxu0
      %v2764 = vpop.f32.mrb[0].mxu0
      %2765 = vmatprep.mubr.bf16.mxu0 0
      %2766 = vmatmul.mubr.bf16.gmra.mrb[0].mxu0 %v2581
      %v2767 = vpop.f32.mrb[0].mxu0
      %v2768 = vadd.f32 0.0, %v2767
      %v2769 = vpop.f32.mrb[0].mxu0
      %v2770 = vpop.f32.mrb[0].mxu0
      %v2771 = vadd.f32 0.0, %v2770
      %v2772 = vpop.f32.mrb[0].mxu0
      %2773 = vmatprep.mubr.bf16.mxu0 0
      %2774 = vmatmul.mubr.bf16.gmra.mrb[0].mxu0 %v2584
      %v2775 = vpop.f32.mrb[0].mxu0
      %v2776 = vpop.f32.mrb[0].mxu0
      %v2777 = vpop.f32.mrb[0].mxu0
      %v2778 = vadd.f32 0.0, %v2777
      %v2779 = vpop.f32.mrb[0].mxu0
      %2780 = vmatprep.mubr.bf16.mxu0 0
      %2781 = vmatmul.mubr.bf16.gmra.mrb[0].mxu0 %v2587
      %v2782 = vpop.f32.mrb[0].mxu0
      %v2783 = vadd.f32 0.0, %v2782
      %v2784 = vpop.f32.mrb[0].mxu0
      %v2785 = vpop.f32.mrb[0].mxu0
      %v2786 = vpop.f32.mrb[0].mxu0
      %2787 = vmatprep.mubr.bf16.mxu0 0
      %2788 = vmatmul.mubr.bf16.gmra.mrb[0].mxu0 %v2590
      %v2789 = vpop.f32.mrb[0].mxu0
      %v2790 = vadd.f32 0.0, %v2789
      %v2791 = vpop.f32.mrb[0].mxu0
      %v2792 = vpop.f32.mrb[0].mxu0
      %v2793 = vadd.f32 0.0, %v2792
      %v2794 = vpop.f32.mrb[0].mxu0
      %2795 = vmatprep.mubr.bf16.mxu0 0
      %2796 = vmatmul.mubr.bf16.gmra.mrb[0].mxu0 %v2593
      %v2797 = vpop.f32.mrb[0].mxu0
      %v2798 = vpop.f32.mrb[0].mxu0
      %v2799 = vpop.f32.mrb[0].mxu0
      %v2800 = vadd.f32 0.0, %v2799
      %v2801 = vpop.f32.mrb[0].mxu0
      %2802 = vmatprep.mubr.bf16.mxu0 0
      %2803 = vmatmul.mubr.bf16.gmra.mrb[0].mxu0 %v2596
      %v2804 = vpop.f32.mrb[0].mxu0
      %v2805 = vadd.f32 0.0, %v2804
      %v2806 = vpop.f32.mrb[0].mxu0
      %v2807 = vpop.f32.mrb[0].mxu0
      %v2808 = vpop.f32.mrb[0].mxu0
      %2809 = vdwg.mxu0
      %v2810 = vadd.f32 %v2420, %v2636
      %v2811 = vadd.f32 %v2421, %v2639
      %v2812 = vadd.f32 %v2422, %v2646
      %v2813 = vadd.f32 %v2423, %v2651
      %v2814 = vadd.f32 %v2424, %v2658
      %v2815 = vadd.f32 %v2425, %v2661
      %v2816 = vadd.f32 %v2426, %v2668
      %v2817 = vadd.f32 %v2427, %v2673
      %v2818 = vadd.f32 %v2428, %v2680
      %v2819 = vadd.f32 %v2429, %v2683
      %v2820 = vadd.f32 %v2430, %v2690
      %v2821 = vadd.f32 %v2431, %v2695
      %v2822 = vadd.f32 %v2432, %v2702
      %v2823 = vadd.f32 %v2433, %v2705
      %v2824 = vadd.f32 %v2434, %v2712
      %v2825 = vadd.f32 %v2435, %v2717
      %v2826 = vadd.f32 %v2436, %v2724
      %v2827 = vadd.f32 %v2437, %v2727
      %v2828 = vadd.f32 %v2438, %v2734
      %v2829 = vadd.f32 %v2439, %v2739
      %v2830 = vadd.f32 %v2440, %v2746
      %v2831 = vadd.f32 %v2441, %v2749
      %v2832 = vadd.f32 %v2442, %v2756
      %v2833 = vadd.f32 %v2443, %v2761
      %v2834 = vadd.f32 %v2444, %v2768
      %v2835 = vadd.f32 %v2445, %v2771
      %v2836 = vadd.f32 %v2446, %v2778
      %v2837 = vadd.f32 %v2447, %v2783
      %v2838 = vadd.f32 %v2448, %v2790
      %v2839 = vadd.f32 %v2449, %v2793
      %v2840 = vadd.f32 %v2450, %v2800
      %v2841 = vadd.f32 %v2451, %v2805
      %v2842 = vld [vmem:[%s165 + $0x31] sm:$0xff]
      %v2843 = vld [vmem:[%s165 + $0x39] sm:$0xff]
      %v2844 = vld [vmem:[%s165 + $0x41] sm:$0xff]
      %v2845 = vld [vmem:[%s165 + $0x49] sm:$0xff]
      %v2846 = vld [vmem:[%s165 + $0x51] sm:$0xff]
      %v2847 = vld [vmem:[%s165 + $0x59] sm:$0xff]
      %v2848 = vld [vmem:[%s165 + $0x61] sm:$0xff]
      %v2849 = vld [vmem:[%s165 + $0x69] sm:$0xff]
      %v2850 = vld [vmem:[%s165 + $0x71] sm:$0xff]
      %v2851 = vld [vmem:[%s165 + $0x79] sm:$0xff]
      %v2852 = vld [vmem:[%s165 + $0x81] sm:$0xff]
      %v2853 = vld [vmem:[%s165 + $0x89] sm:$0xff]
      %v2854 = vld [vmem:[%s165 + $0x91] sm:$0xff]
      %v2855 = vld [vmem:[%s165 + $0x99] sm:$0xff]
      %v2856 = vld [vmem:[%s165 + $0xa1] sm:$0xff]
      %v2857 = vld [vmem:[%s165 + $0xa9] sm:$0xff]
      %v2858 = vld [vmem:[%s165 + $0xb1] sm:$0xff]
      %v2859 = vld [vmem:[%s165 + $0xb9] sm:$0xff]
      %v2860 = vld [vmem:[%s165 + $0xc1] sm:$0xff]
      %v2861 = vld [vmem:[%s165 + $0xc9] sm:$0xff]
      %v2862 = vld [vmem:[%s165 + $0xd1] sm:$0xff]
      %v2863 = vld [vmem:[%s165 + $0xd9] sm:$0xff]
      %v2864 = vld [vmem:[%s165 + $0xe1] sm:$0xff]
      %v2865 = vld [vmem:[%s165 + $0xe9] sm:$0xff]
      %v2866 = vld [vmem:[%s165 + $0xf1] sm:$0xff]
      %v2867 = vld [vmem:[%s165 + $0xf9] sm:$0xff]
      %v2868 = vld [vmem:[%s165 + $0x101] sm:$0xff]
      %v2869 = vld [vmem:[%s165 + $0x109] sm:$0xff]
      %v2870 = vld [vmem:[%s165 + $0x111] sm:$0xff]
      %v2871 = vld [vmem:[%s165 + $0x119] sm:$0xff]
      %v2872 = vld [vmem:[%s165 + $0x121] sm:$0xff]
      %v2873 = vld [vmem:[%s165 + $0x129] sm:$0xff]
      %v2874 = vld [vmem:[%s165 + $0x131] sm:$0xff]
      %v2875 = vld [vmem:[%s165 + $0x139] sm:$0xff]
      %v2876 = vld [vmem:[%s165 + $0x141] sm:$0xff]
      %v2877 = vld [vmem:[%s165 + $0x149] sm:$0xff]
      %v2878 = vld [vmem:[%s165 + $0x151] sm:$0xff]
      %v2879 = vld [vmem:[%s165 + $0x159] sm:$0xff]
      %v2880 = vld [vmem:[%s165 + $0x161] sm:$0xff]
      %v2881 = vld [vmem:[%s165 + $0x169] sm:$0xff]
      %v2882 = vld [vmem:[%s165 + $0x171] sm:$0xff]
      %v2883 = vld [vmem:[%s165 + $0x179] sm:$0xff]
      %v2884 = vld [vmem:[%s165 + $0x181] sm:$0xff]
      %v2885 = vld [vmem:[%s165 + $0x189] sm:$0xff]
      %v2886 = vld [vmem:[%s165 + $0x191] sm:$0xff]
      %v2887 = vld [vmem:[%s165 + $0x199] sm:$0xff]
      %v2888 = vld [vmem:[%s165 + $0x1a1] sm:$0xff]
      %v2889 = vld [vmem:[%s165 + $0x1a9] sm:$0xff]
      %v2890 = vpack.c.bf16 %v2843, %v2842
      %v2891 = vpack.c.bf16 %v2845, %v2844
      %v2892 = vpack.c.bf16 %v2847, %v2846
      %v2893 = vpack.c.bf16 %v2849, %v2848
      %v2894 = vpack.c.bf16 %v2851, %v2850
      %v2895 = vpack.c.bf16 %v2853, %v2852
      %v2896 = vpack.c.bf16 %v2855, %v2854
      %v2897 = vpack.c.bf16 %v2857, %v2856
      %v2898 = vpack.c.bf16 %v2859, %v2858
      %v2899 = vpack.c.bf16 %v2861, %v2860
      %v2900 = vpack.c.bf16 %v2863, %v2862
      %v2901 = vpack.c.bf16 %v2865, %v2864
      %v2902 = vpack.c.bf16 %v2867, %v2866
      %v2903 = vpack.c.bf16 %v2869, %v2868
      %v2904 = vpack.c.bf16 %v2871, %v2870
      %v2905 = vpack.c.bf16 %v2873, %v2872
      %v2906 = vpack.c.bf16 %v2875, %v2874
      %v2907 = vpack.c.bf16 %v2877, %v2876
      %v2908 = vpack.c.bf16 %v2879, %v2878
      %v2909 = vpack.c.bf16 %v2881, %v2880
      %v2910 = vpack.c.bf16 %v2883, %v2882
      %v2911 = vpack.c.bf16 %v2885, %v2884
      %v2912 = vpack.c.bf16 %v2887, %v2886
      %v2913 = vpack.c.bf16 %v2889, %v2888
      %s2914 = scalar_lea.vmem %s1, 14
      %v2915 = vld [vmem:[%s2914] sm:$0x3]
      %v2917 = vsel %vm319, %v2890, 0
      %v2920 = vsel %vm319, %v2891, 0
      %v2923 = vsel %vm319, %v2892, 0
      %v2926 = vsel %vm319, %v2893, 0
      %v2929 = vsel %vm319, %v2894, 0
      %v2932 = vsel %vm319, %v2895, 0
      %v2935 = vsel %vm319, %v2896, 0
      %v2938 = vsel %vm319, %v2897, 0
      %v2941 = vsel %vm319, %v2898, 0
      %v2944 = vsel %vm319, %v2899, 0
      %v2947 = vsel %vm319, %v2900, 0
      %v2950 = vsel %vm319, %v2901, 0
      %v2953 = vsel %vm319, %v2902, 0
      %v2956 = vsel %vm319, %v2903, 0
      %v2959 = vsel %vm319, %v2904, 0
      %v2962 = vsel %vm319, %v2905, 0
      %v2965 = vsel %vm319, %v2906, 0
      %v2968 = vsel %vm319, %v2907, 0
      %v2971 = vsel %vm319, %v2908, 0
      %v2974 = vsel %vm319, %v2909, 0
      %v2977 = vsel %vm319, %v2910, 0
      %v2980 = vsel %vm319, %v2911, 0
      %v2983 = vsel %vm319, %v2912, 0
      %v2986 = vsel %vm319, %v2913, 0
      %v2989 = vand.u32 %v2915, %v395
      %2991 = vmatprep.subr.bf16.mxu0 0
      %2992 = vmatpush1.bf16.msra.mxu0 %v2989
      %2993 = vmatprep.subr.bf16.mxu0 0
      %2994 = vmatpush1.bf16.msra.mxu0 0
      %2995 = vmatprep.subr.bf16.mxu0 0
      %2996 = vmatpush1.bf16.msra.mxu0 0
      %2997 = vmatprep.subr.bf16.mxu0 0
      %2998 = vmatpush1.bf16.msra.mxu0 0
      %2999 = vmatprep.subr.bf16.mxu0 0
      %3000 = vmatpush1.bf16.msra.mxu0 0
      %3001 = vmatprep.subr.bf16.mxu0 0
      %3002 = vmatpush1.bf16.msra.mxu0 0
      %3003 = vmatprep.subr.bf16.mxu0 0
      %3004 = vmatpush1.bf16.msra.mxu0 0
      %3005 = vmatprep.subr.bf16.mxu0 0
      %3006 = vmatpush1.bf16.msra.mxu0 0
      %3007 = vmatprep.subr.bf16.mxu0 0
      %3008 = vmatpush1.bf16.msra.mxu0 0
      %3009 = vmatprep.subr.bf16.mxu0 0
      %3010 = vmatpush1.bf16.msra.mxu0 0
      %3011 = vmatprep.subr.bf16.mxu0 0
      %3012 = vmatpush1.bf16.msra.mxu0 0
      %3013 = vmatprep.subr.bf16.mxu0 0
      %3014 = vmatpush1.bf16.msra.mxu0 0
      %3015 = vmatprep.subr.bf16.mxu0 0
      %3016 = vmatpush1.bf16.msra.mxu0 0
      %3017 = vmatprep.subr.bf16.mxu0 0
      %3018 = vmatpush1.bf16.msra.mxu0 0
      %3019 = vmatprep.subr.bf16.mxu0 0
      %3020 = vmatpush1.bf16.msra.mxu0 0
      %3021 = vmatprep.subr.bf16.mxu0 0
      %3022 = vmatpush1.bf16.msra.mxu0 0
      %3023 = vmatprep.mubr.bf16.mxu0 0
      %3024 = vmatmul.mubr.bf16.gmra.mrb[0].mxu0 %v2917
      %v3025 = vpop.f32.mrb[0].mxu0
      %v3026 = vadd.f32 0.0, %v3025
      %v3027 = vpop.f32.mrb[0].mxu0
      %v3028 = vpop.f32.mrb[0].mxu0
      %v3029 = vadd.f32 0.0, %v3028
      %v3030 = vpop.f32.mrb[0].mxu0
      %3031 = vmatprep.mubr.bf16.mxu0 0
      %3032 = vmatmul.mubr.bf16.gmra.mrb[0].mxu0 %v2920
      %v3033 = vpop.f32.mrb[0].mxu0
      %v3034 = vpop.f32.mrb[0].mxu0
      %v3035 = vpop.f32.mrb[0].mxu0
      %v3036 = vadd.f32 0.0, %v3035
      %v3037 = vpop.f32.mrb[0].mxu0
      %3038 = vmatprep.mubr.bf16.mxu0 0
      %3039 = vmatmul.mubr.bf16.gmra.mrb[0].mxu0 %v2923
      %v3040 = vpop.f32.mrb[0].mxu0
      %v3041 = vadd.f32 0.0, %v3040
      %v3042 = vpop.f32.mrb[0].mxu0
      %v3043 = vpop.f32.mrb[0].mxu0
      %v3044 = vpop.f32.mrb[0].mxu0
      %3045 = vmatprep.mubr.bf16.mxu0 0
      %3046 = vmatmul.mubr.bf16.gmra.mrb[0].mxu0 %v2926
      %v3047 = vpop.f32.mrb[0].mxu0
      %v3048 = vadd.f32 0.0, %v3047
      %v3049 = vpop.f32.mrb[0].mxu0
      %v3050 = vpop.f32.mrb[0].mxu0
      %v3051 = vadd.f32 0.0, %v3050
      %v3052 = vpop.f32.mrb[0].mxu0
      %3053 = vmatprep.mubr.bf16.mxu0 0
      %3054 = vmatmul.mubr.bf16.gmra.mrb[0].mxu0 %v2929
      %v3055 = vpop.f32.mrb[0].mxu0
      %v3056 = vpop.f32.mrb[0].mxu0
      %v3057 = vpop.f32.mrb[0].mxu0
      %v3058 = vadd.f32 0.0, %v3057
      %v3059 = vpop.f32.mrb[0].mxu0
      %3060 = vmatprep.mubr.bf16.mxu0 0
      %3061 = vmatmul.mubr.bf16.gmra.mrb[0].mxu0 %v2932
      %v3062 = vpop.f32.mrb[0].mxu0
      %v3063 = vadd.f32 0.0, %v3062
      %v3064 = vpop.f32.mrb[0].mxu0
      %v3065 = vpop.f32.mrb[0].mxu0
      %v3066 = vpop.f32.mrb[0].mxu0
      %3067 = vmatprep.mubr.bf16.mxu0 0
      %3068 = vmatmul.mubr.bf16.gmra.mrb[0].mxu0 %v2935
      %v3069 = vpop.f32.mrb[0].mxu0
      %v3070 = vadd.f32 0.0, %v3069
      %v3071 = vpop.f32.mrb[0].mxu0
      %v3072 = vpop.f32.mrb[0].mxu0
      %v3073 = vadd.f32 0.0, %v3072
      %v3074 = vpop.f32.mrb[0].mxu0
      %3075 = vmatprep.mubr.bf16.mxu0 0
      %3076 = vmatmul.mubr.bf16.gmra.mrb[0].mxu0 %v2938
      %v3077 = vpop.f32.mrb[0].mxu0
      %v3078 = vpop.f32.mrb[0].mxu0
      %v3079 = vpop.f32.mrb[0].mxu0
      %v3080 = vadd.f32 0.0, %v3079
      %v3081 = vpop.f32.mrb[0].mxu0
      %3082 = vmatprep.mubr.bf16.mxu0 0
      %3083 = vmatmul.mubr.bf16.gmra.mrb[0].mxu0 %v2941
      %v3084 = vpop.f32.mrb[0].mxu0
      %v3085 = vadd.f32 0.0, %v3084
      %v3086 = vpop.f32.mrb[0].mxu0
      %v3087 = vpop.f32.mrb[0].mxu0
      %v3088 = vpop.f32.mrb[0].mxu0
      %3089 = vmatprep.mubr.bf16.mxu0 0
      %3090 = vmatmul.mubr.bf16.gmra.mrb[0].mxu0 %v2944
      %v3091 = vpop.f32.mrb[0].mxu0
      %v3092 = vadd.f32 0.0, %v3091
      %v3093 = vpop.f32.mrb[0].mxu0
      %v3094 = vpop.f32.mrb[0].mxu0
      %v3095 = vadd.f32 0.0, %v3094
      %v3096 = vpop.f32.mrb[0].mxu0
      %3097 = vmatprep.mubr.bf16.mxu0 0
      %3098 = vmatmul.mubr.bf16.gmra.mrb[0].mxu0 %v2947
      %v3099 = vpop.f32.mrb[0].mxu0
      %v3100 = vpop.f32.mrb[0].mxu0
      %v3101 = vpop.f32.mrb[0].mxu0
      %v3102 = vadd.f32 0.0, %v3101
      %v3103 = vpop.f32.mrb[0].mxu0
      %3104 = vmatprep.mubr.bf16.mxu0 0
      %3105 = vmatmul.mubr.bf16.gmra.mrb[0].mxu0 %v2950
      %v3106 = vpop.f32.mrb[0].mxu0
      %v3107 = vadd.f32 0.0, %v3106
      %v3108 = vpop.f32.mrb[0].mxu0
      %v3109 = vpop.f32.mrb[0].mxu0
      %v3110 = vpop.f32.mrb[0].mxu0
      %3111 = vmatprep.mubr.bf16.mxu0 0
      %3112 = vmatmul.mubr.bf16.gmra.mrb[0].mxu0 %v2953
      %v3113 = vpop.f32.mrb[0].mxu0
      %v3114 = vadd.f32 0.0, %v3113
      %v3115 = vpop.f32.mrb[0].mxu0
      %v3116 = vpop.f32.mrb[0].mxu0
      %v3117 = vadd.f32 0.0, %v3116
      %v3118 = vpop.f32.mrb[0].mxu0
      %3119 = vmatprep.mubr.bf16.mxu0 0
      %3120 = vmatmul.mubr.bf16.gmra.mrb[0].mxu0 %v2956
      %v3121 = vpop.f32.mrb[0].mxu0
      %v3122 = vpop.f32.mrb[0].mxu0
      %v3123 = vpop.f32.mrb[0].mxu0
      %v3124 = vadd.f32 0.0, %v3123
      %v3125 = vpop.f32.mrb[0].mxu0
      %3126 = vmatprep.mubr.bf16.mxu0 0
      %3127 = vmatmul.mubr.bf16.gmra.mrb[0].mxu0 %v2959
      %v3128 = vpop.f32.mrb[0].mxu0
      %v3129 = vadd.f32 0.0, %v3128
      %v3130 = vpop.f32.mrb[0].mxu0
      %v3131 = vpop.f32.mrb[0].mxu0
      %v3132 = vpop.f32.mrb[0].mxu0
      %3133 = vmatprep.mubr.bf16.mxu0 0
      %3134 = vmatmul.mubr.bf16.gmra.mrb[0].mxu0 %v2962
      %v3135 = vpop.f32.mrb[0].mxu0
      %v3136 = vadd.f32 0.0, %v3135
      %v3137 = vpop.f32.mrb[0].mxu0
      %v3138 = vpop.f32.mrb[0].mxu0
      %v3139 = vadd.f32 0.0, %v3138
      %v3140 = vpop.f32.mrb[0].mxu0
      %3141 = vmatprep.mubr.bf16.mxu0 0
      %3142 = vmatmul.mubr.bf16.gmra.mrb[0].mxu0 %v2965
      %v3143 = vpop.f32.mrb[0].mxu0
      %v3144 = vpop.f32.mrb[0].mxu0
      %v3145 = vpop.f32.mrb[0].mxu0
      %v3146 = vadd.f32 0.0, %v3145
      %v3147 = vpop.f32.mrb[0].mxu0
      %3148 = vmatprep.mubr.bf16.mxu0 0
      %3149 = vmatmul.mubr.bf16.gmra.mrb[0].mxu0 %v2968
      %v3150 = vpop.f32.mrb[0].mxu0
      %v3151 = vadd.f32 0.0, %v3150
      %v3152 = vpop.f32.mrb[0].mxu0
      %v3153 = vpop.f32.mrb[0].mxu0
      %v3154 = vpop.f32.mrb[0].mxu0
      %3155 = vmatprep.mubr.bf16.mxu0 0
      %3156 = vmatmul.mubr.bf16.gmra.mrb[0].mxu0 %v2971
      %v3157 = vpop.f32.mrb[0].mxu0
      %v3158 = vadd.f32 0.0, %v3157
      %v3159 = vpop.f32.mrb[0].mxu0
      %v3160 = vpop.f32.mrb[0].mxu0
      %v3161 = vadd.f32 0.0, %v3160
      %v3162 = vpop.f32.mrb[0].mxu0
      %3163 = vmatprep.mubr.bf16.mxu0 0
      %3164 = vmatmul.mubr.bf16.gmra.mrb[0].mxu0 %v2974
      %v3165 = vpop.f32.mrb[0].mxu0
      %v3166 = vpop.f32.mrb[0].mxu0
      %v3167 = vpop.f32.mrb[0].mxu0
      %v3168 = vadd.f32 0.0, %v3167
      %v3169 = vpop.f32.mrb[0].mxu0
      %3170 = vmatprep.mubr.bf16.mxu0 0
      %3171 = vmatmul.mubr.bf16.gmra.mrb[0].mxu0 %v2977
      %v3172 = vpop.f32.mrb[0].mxu0
      %v3173 = vadd.f32 0.0, %v3172
      %v3174 = vpop.f32.mrb[0].mxu0
      %v3175 = vpop.f32.mrb[0].mxu0
      %v3176 = vpop.f32.mrb[0].mxu0
      %3177 = vmatprep.mubr.bf16.mxu0 0
      %3178 = vmatmul.mubr.bf16.gmra.mrb[0].mxu0 %v2980
      %v3179 = vpop.f32.mrb[0].mxu0
      %v3180 = vadd.f32 0.0, %v3179
      %v3181 = vpop.f32.mrb[0].mxu0
      %v3182 = vpop.f32.mrb[0].mxu0
      %v3183 = vadd.f32 0.0, %v3182
      %v3184 = vpop.f32.mrb[0].mxu0
      %3185 = vmatprep.mubr.bf16.mxu0 0
      %3186 = vmatmul.mubr.bf16.gmra.mrb[0].mxu0 %v2983
      %v3187 = vpop.f32.mrb[0].mxu0
      %v3188 = vpop.f32.mrb[0].mxu0
      %v3189 = vpop.f32.mrb[0].mxu0
      %v3190 = vadd.f32 0.0, %v3189
      %v3191 = vpop.f32.mrb[0].mxu0
      %3192 = vmatprep.mubr.bf16.mxu0 0
      %3193 = vmatmul.mubr.bf16.gmra.mrb[0].mxu0 %v2986
      %v3194 = vpop.f32.mrb[0].mxu0
      %v3195 = vadd.f32 0.0, %v3194
      %v3196 = vpop.f32.mrb[0].mxu0
      %v3197 = vpop.f32.mrb[0].mxu0
      %v3198 = vpop.f32.mrb[0].mxu0
      %3199 = vdwg.mxu0
      %v3200 = vadd.f32 %v2810, %v3026
      %v3201 = vadd.f32 %v2811, %v3029
      %v3202 = vadd.f32 %v2812, %v3036
      %v3203 = vadd.f32 %v2813, %v3041
      %v3204 = vadd.f32 %v2814, %v3048
      %v3205 = vadd.f32 %v2815, %v3051
      %v3206 = vadd.f32 %v2816, %v3058
      %v3207 = vadd.f32 %v2817, %v3063
      %v3208 = vadd.f32 %v2818, %v3070
      %v3209 = vadd.f32 %v2819, %v3073
      %v3210 = vadd.f32 %v2820, %v3080
      %v3211 = vadd.f32 %v2821, %v3085
      %v3212 = vadd.f32 %v2822, %v3092
      %v3213 = vadd.f32 %v2823, %v3095
      %v3214 = vadd.f32 %v2824, %v3102
      %v3215 = vadd.f32 %v2825, %v3107
      %v3216 = vadd.f32 %v2826, %v3114
      %v3217 = vadd.f32 %v2827, %v3117
      %v3218 = vadd.f32 %v2828, %v3124
      %v3219 = vadd.f32 %v2829, %v3129
      %v3220 = vadd.f32 %v2830, %v3136
      %v3221 = vadd.f32 %v2831, %v3139
      %v3222 = vadd.f32 %v2832, %v3146
      %v3223 = vadd.f32 %v2833, %v3151
      %v3224 = vadd.f32 %v2834, %v3158
      %v3225 = vadd.f32 %v2835, %v3161
      %v3226 = vadd.f32 %v2836, %v3168
      %v3227 = vadd.f32 %v2837, %v3173
      %v3228 = vadd.f32 %v2838, %v3180
      %v3229 = vadd.f32 %v2839, %v3183
      %v3230 = vadd.f32 %v2840, %v3190
      %v3231 = vadd.f32 %v2841, %v3195
      %v3232 = vld [vmem:[%s165 + $0x32] sm:$0xff]
      %v3233 = vld [vmem:[%s165 + $0x3a] sm:$0xff]
      %v3234 = vld [vmem:[%s165 + $0x42] sm:$0xff]
      %v3235 = vld [vmem:[%s165 + $0x4a] sm:$0xff]
      %v3236 = vld [vmem:[%s165 + $0x52] sm:$0xff]
      %v3237 = vld [vmem:[%s165 + $0x5a] sm:$0xff]
      %v3238 = vld [vmem:[%s165 + $0x62] sm:$0xff]
      %v3239 = vld [vmem:[%s165 + $0x6a] sm:$0xff]
      %v3240 = vld [vmem:[%s165 + $0x72] sm:$0xff]
      %v3241 = vld [vmem:[%s165 + $0x7a] sm:$0xff]
      %v3242 = vld [vmem:[%s165 + $0x82] sm:$0xff]
      %v3243 = vld [vmem:[%s165 + $0x8a] sm:$0xff]
      %v3244 = vld [vmem:[%s165 + $0x92] sm:$0xff]
      %v3245 = vld [vmem:[%s165 + $0x9a] sm:$0xff]
      %v3246 = vld [vmem:[%s165 + $0xa2] sm:$0xff]
      %v3247 = vld [vmem:[%s165 + $0xaa] sm:$0xff]
      %v3248 = vld [vmem:[%s165 + $0xb2] sm:$0xff]
      %v3249 = vld [vmem:[%s165 + $0xba] sm:$0xff]
      %v3250 = vld [vmem:[%s165 + $0xc2] sm:$0xff]
      %v3251 = vld [vmem:[%s165 + $0xca] sm:$0xff]
      %v3252 = vld [vmem:[%s165 + $0xd2] sm:$0xff]
      %v3253 = vld [vmem:[%s165 + $0xda] sm:$0xff]
      %v3254 = vld [vmem:[%s165 + $0xe2] sm:$0xff]
      %v3255 = vld [vmem:[%s165 + $0xea] sm:$0xff]
      %v3256 = vld [vmem:[%s165 + $0xf2] sm:$0xff]
      %v3257 = vld [vmem:[%s165 + $0xfa] sm:$0xff]
      %v3258 = vld [vmem:[%s165 + $0x102] sm:$0xff]
      %v3259 = vld [vmem:[%s165 + $0x10a] sm:$0xff]
      %v3260 = vld [vmem:[%s165 + $0x112] sm:$0xff]
      %v3261 = vld [vmem:[%s165 + $0x11a] sm:$0xff]
      %v3262 = vld [vmem:[%s165 + $0x122] sm:$0xff]
      %v3263 = vld [vmem:[%s165 + $0x12a] sm:$0xff]
      %v3264 = vld [vmem:[%s165 + $0x132] sm:$0xff]
      %v3265 = vld [vmem:[%s165 + $0x13a] sm:$0xff]
      %v3266 = vld [vmem:[%s165 + $0x142] sm:$0xff]
      %v3267 = vld [vmem:[%s165 + $0x14a] sm:$0xff]
      %v3268 = vld [vmem:[%s165 + $0x152] sm:$0xff]
      %v3269 = vld [vmem:[%s165 + $0x15a] sm:$0xff]
      %v3270 = vld [vmem:[%s165 + $0x162] sm:$0xff]
      %v3271 = vld [vmem:[%s165 + $0x16a] sm:$0xff]
      %v3272 = vld [vmem:[%s165 + $0x172] sm:$0xff]
      %v3273 = vld [vmem:[%s165 + $0x17a] sm:$0xff]
      %v3274 = vld [vmem:[%s165 + $0x182] sm:$0xff]
      %v3275 = vld [vmem:[%s165 + $0x18a] sm:$0xff]
      %v3276 = vld [vmem:[%s165 + $0x192] sm:$0xff]
      %v3277 = vld [vmem:[%s165 + $0x19a] sm:$0xff]
      %v3278 = vld [vmem:[%s165 + $0x1a2] sm:$0xff]
      %v3279 = vld [vmem:[%s165 + $0x1aa] sm:$0xff]
      %v3280 = vpack.c.bf16 %v3233, %v3232
      %v3281 = vpack.c.bf16 %v3235, %v3234
      %v3282 = vpack.c.bf16 %v3237, %v3236
      %v3283 = vpack.c.bf16 %v3239, %v3238
      %v3284 = vpack.c.bf16 %v3241, %v3240
      %v3285 = vpack.c.bf16 %v3243, %v3242
      %v3286 = vpack.c.bf16 %v3245, %v3244
      %v3287 = vpack.c.bf16 %v3247, %v3246
      %v3288 = vpack.c.bf16 %v3249, %v3248
      %v3289 = vpack.c.bf16 %v3251, %v3250
      %v3290 = vpack.c.bf16 %v3253, %v3252
      %v3291 = vpack.c.bf16 %v3255, %v3254
      %v3292 = vpack.c.bf16 %v3257, %v3256
      %v3293 = vpack.c.bf16 %v3259, %v3258
      %v3294 = vpack.c.bf16 %v3261, %v3260
      %v3295 = vpack.c.bf16 %v3263, %v3262
      %v3296 = vpack.c.bf16 %v3265, %v3264
      %v3297 = vpack.c.bf16 %v3267, %v3266
      %v3298 = vpack.c.bf16 %v3269, %v3268
      %v3299 = vpack.c.bf16 %v3271, %v3270
      %v3300 = vpack.c.bf16 %v3273, %v3272
      %v3301 = vpack.c.bf16 %v3275, %v3274
      %v3302 = vpack.c.bf16 %v3277, %v3276
      %v3303 = vpack.c.bf16 %v3279, %v3278
      %s3304 = scalar_lea.vmem %s1, 16
      %v3305 = vld [vmem:[%s3304] sm:$0x3]
      %v3307 = vsel %vm319, %v3280, 0
      %v3310 = vsel %vm319, %v3281, 0
      %v3313 = vsel %vm319, %v3282, 0
      %v3316 = vsel %vm319, %v3283, 0
      %v3319 = vsel %vm319, %v3284, 0
      %v3322 = vsel %vm319, %v3285, 0
      %v3325 = vsel %vm319, %v3286, 0
      %v3328 = vsel %vm319, %v3287, 0
      %v3331 = vsel %vm319, %v3288, 0
      %v3334 = vsel %vm319, %v3289, 0
      %v3337 = vsel %vm319, %v3290, 0
      %v3340 = vsel %vm319, %v3291, 0
      %v3343 = vsel %vm319, %v3292, 0
      %v3346 = vsel %vm319, %v3293, 0
      %v3349 = vsel %vm319, %v3294, 0
      %v3352 = vsel %vm319, %v3295, 0
      %v3355 = vsel %vm319, %v3296, 0
      %v3358 = vsel %vm319, %v3297, 0
      %v3361 = vsel %vm319, %v3298, 0
      %v3364 = vsel %vm319, %v3299, 0
      %v3367 = vsel %vm319, %v3300, 0
      %v3370 = vsel %vm319, %v3301, 0
      %v3373 = vsel %vm319, %v3302, 0
      %v3376 = vsel %vm319, %v3303, 0
      %v3379 = vand.u32 %v3305, %v395
      %3381 = vmatprep.subr.bf16.mxu0 0
      %3382 = vmatpush1.bf16.msra.mxu0 %v3379
      %3383 = vmatprep.subr.bf16.mxu0 0
      %3384 = vmatpush1.bf16.msra.mxu0 0
      %3385 = vmatprep.subr.bf16.mxu0 0
      %3386 = vmatpush1.bf16.msra.mxu0 0
      %3387 = vmatprep.subr.bf16.mxu0 0
      %3388 = vmatpush1.bf16.msra.mxu0 0
      %3389 = vmatprep.subr.bf16.mxu0 0
      %3390 = vmatpush1.bf16.msra.mxu0 0
      %3391 = vmatprep.subr.bf16.mxu0 0
      %3392 = vmatpush1.bf16.msra.mxu0 0
      %3393 = vmatprep.subr.bf16.mxu0 0
      %3394 = vmatpush1.bf16.msra.mxu0 0
      %3395 = vmatprep.subr.bf16.mxu0 0
      %3396 = vmatpush1.bf16.msra.mxu0 0
      %3397 = vmatprep.subr.bf16.mxu0 0
      %3398 = vmatpush1.bf16.msra.mxu0 0
      %3399 = vmatprep.subr.bf16.mxu0 0
      %3400 = vmatpush1.bf16.msra.mxu0 0
      %3401 = vmatprep.subr.bf16.mxu0 0
      %3402 = vmatpush1.bf16.msra.mxu0 0
      %3403 = vmatprep.subr.bf16.mxu0 0
      %3404 = vmatpush1.bf16.msra.mxu0 0
      %3405 = vmatprep.subr.bf16.mxu0 0
      %3406 = vmatpush1.bf16.msra.mxu0 0
      %3407 = vmatprep.subr.bf16.mxu0 0
      %3408 = vmatpush1.bf16.msra.mxu0 0
      %3409 = vmatprep.subr.bf16.mxu0 0
      %3410 = vmatpush1.bf16.msra.mxu0 0
      %3411 = vmatprep.subr.bf16.mxu0 0
      %3412 = vmatpush1.bf16.msra.mxu0 0
      %3413 = vmatprep.mubr.bf16.mxu0 0
      %3414 = vmatmul.mubr.bf16.gmra.mrb[0].mxu0 %v3307
      %v3415 = vpop.f32.mrb[0].mxu0
      %v3416 = vadd.f32 0.0, %v3415
      %v3417 = vpop.f32.mrb[0].mxu0
      %v3418 = vpop.f32.mrb[0].mxu0
      %v3419 = vadd.f32 0.0, %v3418
      %v3420 = vpop.f32.mrb[0].mxu0
      %3421 = vmatprep.mubr.bf16.mxu0 0
      %3422 = vmatmul.mubr.bf16.gmra.mrb[0].mxu0 %v3310
      %v3423 = vpop.f32.mrb[0].mxu0
      %v3424 = vpop.f32.mrb[0].mxu0
      %v3425 = vpop.f32.mrb[0].mxu0
      %v3426 = vadd.f32 0.0, %v3425
      %v3427 = vpop.f32.mrb[0].mxu0
      %3428 = vmatprep.mubr.bf16.mxu0 0
      %3429 = vmatmul.mubr.bf16.gmra.mrb[0].mxu0 %v3313
      %v3430 = vpop.f32.mrb[0].mxu0
      %v3431 = vadd.f32 0.0, %v3430
      %v3432 = vpop.f32.mrb[0].mxu0
      %v3433 = vpop.f32.mrb[0].mxu0
      %v3434 = vpop.f32.mrb[0].mxu0
      %3435 = vmatprep.mubr.bf16.mxu0 0
      %3436 = vmatmul.mubr.bf16.gmra.mrb[0].mxu0 %v3316
      %v3437 = vpop.f32.mrb[0].mxu0
      %v3438 = vadd.f32 0.0, %v3437
      %v3439 = vpop.f32.mrb[0].mxu0
      %v3440 = vpop.f32.mrb[0].mxu0
      %v3441 = vadd.f32 0.0, %v3440
      %v3442 = vpop.f32.mrb[0].mxu0
      %3443 = vmatprep.mubr.bf16.mxu0 0
      %3444 = vmatmul.mubr.bf16.gmra.mrb[0].mxu0 %v3319
      %v3445 = vpop.f32.mrb[0].mxu0
      %v3446 = vpop.f32.mrb[0].mxu0
      %v3447 = vpop.f32.mrb[0].mxu0
      %v3448 = vadd.f32 0.0, %v3447
      %v3449 = vpop.f32.mrb[0].mxu0
      %3450 = vmatprep.mubr.bf16.mxu0 0
      %3451 = vmatmul.mubr.bf16.gmra.mrb[0].mxu0 %v3322
      %v3452 = vpop.f32.mrb[0].mxu0
      %v3453 = vadd.f32 0.0, %v3452
      %v3454 = vpop.f32.mrb[0].mxu0
      %v3455 = vpop.f32.mrb[0].mxu0
      %v3456 = vpop.f32.mrb[0].mxu0
      %3457 = vmatprep.mubr.bf16.mxu0 0
      %3458 = vmatmul.mubr.bf16.gmra.mrb[0].mxu0 %v3325
      %v3459 = vpop.f32.mrb[0].mxu0
      %v3460 = vadd.f32 0.0, %v3459
      %v3461 = vpop.f32.mrb[0].mxu0
      %v3462 = vpop.f32.mrb[0].mxu0
      %v3463 = vadd.f32 0.0, %v3462
      %v3464 = vpop.f32.mrb[0].mxu0
      %3465 = vmatprep.mubr.bf16.mxu0 0
      %3466 = vmatmul.mubr.bf16.gmra.mrb[0].mxu0 %v3328
      %v3467 = vpop.f32.mrb[0].mxu0
      %v3468 = vpop.f32.mrb[0].mxu0
      %v3469 = vpop.f32.mrb[0].mxu0
      %v3470 = vadd.f32 0.0, %v3469
      %v3471 = vpop.f32.mrb[0].mxu0
      %3472 = vmatprep.mubr.bf16.mxu0 0
      %3473 = vmatmul.mubr.bf16.gmra.mrb[0].mxu0 %v3331
      %v3474 = vpop.f32.mrb[0].mxu0
      %v3475 = vadd.f32 0.0, %v3474
      %v3476 = vpop.f32.mrb[0].mxu0
      %v3477 = vpop.f32.mrb[0].mxu0
      %v3478 = vpop.f32.mrb[0].mxu0
      %3479 = vmatprep.mubr.bf16.mxu0 0
      %3480 = vmatmul.mubr.bf16.gmra.mrb[0].mxu0 %v3334
      %v3481 = vpop.f32.mrb[0].mxu0
      %v3482 = vadd.f32 0.0, %v3481
      %v3483 = vpop.f32.mrb[0].mxu0
      %v3484 = vpop.f32.mrb[0].mxu0
      %v3485 = vadd.f32 0.0, %v3484
      %v3486 = vpop.f32.mrb[0].mxu0
      %3487 = vmatprep.mubr.bf16.mxu0 0
      %3488 = vmatmul.mubr.bf16.gmra.mrb[0].mxu0 %v3337
      %v3489 = vpop.f32.mrb[0].mxu0
      %v3490 = vpop.f32.mrb[0].mxu0
      %v3491 = vpop.f32.mrb[0].mxu0
      %v3492 = vadd.f32 0.0, %v3491
      %v3493 = vpop.f32.mrb[0].mxu0
      %3494 = vmatprep.mubr.bf16.mxu0 0
      %3495 = vmatmul.mubr.bf16.gmra.mrb[0].mxu0 %v3340
      %v3496 = vpop.f32.mrb[0].mxu0
      %v3497 = vadd.f32 0.0, %v3496
      %v3498 = vpop.f32.mrb[0].mxu0
      %v3499 = vpop.f32.mrb[0].mxu0
      %v3500 = vpop.f32.mrb[0].mxu0
      %3501 = vmatprep.mubr.bf16.mxu0 0
      %3502 = vmatmul.mubr.bf16.gmra.mrb[0].mxu0 %v3343
      %v3503 = vpop.f32.mrb[0].mxu0
      %v3504 = vadd.f32 0.0, %v3503
      %v3505 = vpop.f32.mrb[0].mxu0
      %v3506 = vpop.f32.mrb[0].mxu0
      %v3507 = vadd.f32 0.0, %v3506
      %v3508 = vpop.f32.mrb[0].mxu0
      %3509 = vmatprep.mubr.bf16.mxu0 0
      %3510 = vmatmul.mubr.bf16.gmra.mrb[0].mxu0 %v3346
      %v3511 = vpop.f32.mrb[0].mxu0
      %v3512 = vpop.f32.mrb[0].mxu0
      %v3513 = vpop.f32.mrb[0].mxu0
      %v3514 = vadd.f32 0.0, %v3513
      %v3515 = vpop.f32.mrb[0].mxu0
      %3516 = vmatprep.mubr.bf16.mxu0 0
      %3517 = vmatmul.mubr.bf16.gmra.mrb[0].mxu0 %v3349
      %v3518 = vpop.f32.mrb[0].mxu0
      %v3519 = vadd.f32 0.0, %v3518
      %v3520 = vpop.f32.mrb[0].mxu0
      %v3521 = vpop.f32.mrb[0].mxu0
      %v3522 = vpop.f32.mrb[0].mxu0
      %3523 = vmatprep.mubr.bf16.mxu0 0
      %3524 = vmatmul.mubr.bf16.gmra.mrb[0].mxu0 %v3352
      %v3525 = vpop.f32.mrb[0].mxu0
      %v3526 = vadd.f32 0.0, %v3525
      %v3527 = vpop.f32.mrb[0].mxu0
      %v3528 = vpop.f32.mrb[0].mxu0
      %v3529 = vadd.f32 0.0, %v3528
      %v3530 = vpop.f32.mrb[0].mxu0
      %3531 = vmatprep.mubr.bf16.mxu0 0
      %3532 = vmatmul.mubr.bf16.gmra.mrb[0].mxu0 %v3355
      %v3533 = vpop.f32.mrb[0].mxu0
      %v3534 = vpop.f32.mrb[0].mxu0
      %v3535 = vpop.f32.mrb[0].mxu0
      %v3536 = vadd.f32 0.0, %v3535
      %v3537 = vpop.f32.mrb[0].mxu0
      %3538 = vmatprep.mubr.bf16.mxu0 0
      %3539 = vmatmul.mubr.bf16.gmra.mrb[0].mxu0 %v3358
      %v3540 = vpop.f32.mrb[0].mxu0
      %v3541 = vadd.f32 0.0, %v3540
      %v3542 = vpop.f32.mrb[0].mxu0
      %v3543 = vpop.f32.mrb[0].mxu0
      %v3544 = vpop.f32.mrb[0].mxu0
      %3545 = vmatprep.mubr.bf16.mxu0 0
      %3546 = vmatmul.mubr.bf16.gmra.mrb[0].mxu0 %v3361
      %v3547 = vpop.f32.mrb[0].mxu0
      %v3548 = vadd.f32 0.0, %v3547
      %v3549 = vpop.f32.mrb[0].mxu0
      %v3550 = vpop.f32.mrb[0].mxu0
      %v3551 = vadd.f32 0.0, %v3550
      %v3552 = vpop.f32.mrb[0].mxu0
      %3553 = vmatprep.mubr.bf16.mxu0 0
      %3554 = vmatmul.mubr.bf16.gmra.mrb[0].mxu0 %v3364
      %v3555 = vpop.f32.mrb[0].mxu0
      %v3556 = vpop.f32.mrb[0].mxu0
      %v3557 = vpop.f32.mrb[0].mxu0
      %v3558 = vadd.f32 0.0, %v3557
      %v3559 = vpop.f32.mrb[0].mxu0
      %3560 = vmatprep.mubr.bf16.mxu0 0
      %3561 = vmatmul.mubr.bf16.gmra.mrb[0].mxu0 %v3367
      %v3562 = vpop.f32.mrb[0].mxu0
      %v3563 = vadd.f32 0.0, %v3562
      %v3564 = vpop.f32.mrb[0].mxu0
      %v3565 = vpop.f32.mrb[0].mxu0
      %v3566 = vpop.f32.mrb[0].mxu0
      %3567 = vmatprep.mubr.bf16.mxu0 0
      %3568 = vmatmul.mubr.bf16.gmra.mrb[0].mxu0 %v3370
      %v3569 = vpop.f32.mrb[0].mxu0
      %v3570 = vadd.f32 0.0, %v3569
      %v3571 = vpop.f32.mrb[0].mxu0
      %v3572 = vpop.f32.mrb[0].mxu0
      %v3573 = vadd.f32 0.0, %v3572
      %v3574 = vpop.f32.mrb[0].mxu0
      %3575 = vmatprep.mubr.bf16.mxu0 0
      %3576 = vmatmul.mubr.bf16.gmra.mrb[0].mxu0 %v3373
      %v3577 = vpop.f32.mrb[0].mxu0
      %v3578 = vpop.f32.mrb[0].mxu0
      %v3579 = vpop.f32.mrb[0].mxu0
      %v3580 = vadd.f32 0.0, %v3579
      %v3581 = vpop.f32.mrb[0].mxu0
      %3582 = vmatprep.mubr.bf16.mxu0 0
      %3583 = vmatmul.mubr.bf16.gmra.mrb[0].mxu0 %v3376
      %v3584 = vpop.f32.mrb[0].mxu0
      %v3585 = vadd.f32 0.0, %v3584
      %v3586 = vpop.f32.mrb[0].mxu0
      %v3587 = vpop.f32.mrb[0].mxu0
      %v3588 = vpop.f32.mrb[0].mxu0
      %3589 = vdwg.mxu0
      %v3590 = vadd.f32 %v3200, %v3416
      %v3591 = vadd.f32 %v3201, %v3419
      %v3592 = vadd.f32 %v3202, %v3426
      %v3593 = vadd.f32 %v3203, %v3431
      %v3594 = vadd.f32 %v3204, %v3438
      %v3595 = vadd.f32 %v3205, %v3441
      %v3596 = vadd.f32 %v3206, %v3448
      %v3597 = vadd.f32 %v3207, %v3453
      %v3598 = vadd.f32 %v3208, %v3460
      %v3599 = vadd.f32 %v3209, %v3463
      %v3600 = vadd.f32 %v3210, %v3470
      %v3601 = vadd.f32 %v3211, %v3475
      %v3602 = vadd.f32 %v3212, %v3482
      %v3603 = vadd.f32 %v3213, %v3485
      %v3604 = vadd.f32 %v3214, %v3492
      %v3605 = vadd.f32 %v3215, %v3497
      %v3606 = vadd.f32 %v3216, %v3504
      %v3607 = vadd.f32 %v3217, %v3507
      %v3608 = vadd.f32 %v3218, %v3514
      %v3609 = vadd.f32 %v3219, %v3519
      %v3610 = vadd.f32 %v3220, %v3526
      %v3611 = vadd.f32 %v3221, %v3529
      %v3612 = vadd.f32 %v3222, %v3536
      %v3613 = vadd.f32 %v3223, %v3541
      %v3614 = vadd.f32 %v3224, %v3548
      %v3615 = vadd.f32 %v3225, %v3551
      %v3616 = vadd.f32 %v3226, %v3558
      %v3617 = vadd.f32 %v3227, %v3563
      %v3618 = vadd.f32 %v3228, %v3570
      %v3619 = vadd.f32 %v3229, %v3573
      %v3620 = vadd.f32 %v3230, %v3580
      %v3621 = vadd.f32 %v3231, %v3585
      %v3622 = vld [vmem:[%s2] sm:$0x1]
      %v3624 = vlaneseq
      %v3625 = vshrl.u32 %v3624, 7
      %v3626 = vsub.s32 0, %v3625
      %v3627 = vrot.slane %v3622, %v3626
      %v3629 = vadd.f32 %v3590, %v3627
      %v3630 = vadd.f32 %v3591, %v3627
      %v3631 = vadd.f32 %v3592, %v3627
      %v3632 = vadd.f32 %v3593, %v3627
      %v3633 = vadd.f32 %v3594, %v3627
      %v3634 = vadd.f32 %v3595, %v3627
      %v3635 = vadd.f32 %v3596, %v3627
      %v3636 = vadd.f32 %v3597, %v3627
      %v3637 = vadd.f32 %v3598, %v3627
      %v3638 = vadd.f32 %v3599, %v3627
      %v3639 = vadd.f32 %v3600, %v3627
      %v3640 = vadd.f32 %v3601, %v3627
      %v3641 = vadd.f32 %v3602, %v3627
      %v3642 = vadd.f32 %v3603, %v3627
      %v3643 = vadd.f32 %v3604, %v3627
      %v3644 = vadd.f32 %v3605, %v3627
      %v3645 = vadd.f32 %v3606, %v3627
      %v3646 = vadd.f32 %v3607, %v3627
      %v3647 = vadd.f32 %v3608, %v3627
      %v3648 = vadd.f32 %v3609, %v3627
      %v3649 = vadd.f32 %v3610, %v3627
      %v3650 = vadd.f32 %v3611, %v3627
      %v3651 = vadd.f32 %v3612, %v3627
      %v3652 = vadd.f32 %v3613, %v3627
      %v3653 = vadd.f32 %v3614, %v3627
      %v3654 = vadd.f32 %v3615, %v3627
      %v3655 = vadd.f32 %v3616, %v3627
      %v3656 = vadd.f32 %v3617, %v3627
      %v3657 = vadd.f32 %v3618, %v3627
      %v3658 = vadd.f32 %v3619, %v3627
      %v3659 = vadd.f32 %v3620, %v3627
      %v3660 = vadd.f32 %v3621, %v3627
      %v3661 = vmax.f32 %v3629, 0.0
      %v3662 = vmax.f32 %v3630, 0.0
      %v3663 = vmax.f32 %v3631, 0.0
      %v3664 = vmax.f32 %v3632, 0.0
      %v3665 = vmax.f32 %v3633, 0.0
      %v3666 = vmax.f32 %v3634, 0.0
      %v3667 = vmax.f32 %v3635, 0.0
      %v3668 = vmax.f32 %v3636, 0.0
      %v3669 = vmax.f32 %v3637, 0.0
      %v3670 = vmax.f32 %v3638, 0.0
      %v3671 = vmax.f32 %v3639, 0.0
      %v3672 = vmax.f32 %v3640, 0.0
      %v3673 = vmax.f32 %v3641, 0.0
      %v3674 = vmax.f32 %v3642, 0.0
      %v3675 = vmax.f32 %v3643, 0.0
      %v3676 = vmax.f32 %v3644, 0.0
      %v3677 = vmax.f32 %v3645, 0.0
      %v3678 = vmax.f32 %v3646, 0.0
      %v3679 = vmax.f32 %v3647, 0.0
      %v3680 = vmax.f32 %v3648, 0.0
      %v3681 = vmax.f32 %v3649, 0.0
      %v3682 = vmax.f32 %v3650, 0.0
      %v3683 = vmax.f32 %v3651, 0.0
      %v3684 = vmax.f32 %v3652, 0.0
      %v3685 = vmax.f32 %v3653, 0.0
      %v3686 = vmax.f32 %v3654, 0.0
      %v3687 = vmax.f32 %v3655, 0.0
      %v3688 = vmax.f32 %v3656, 0.0
      %v3689 = vmax.f32 %v3657, 0.0
      %v3690 = vmax.f32 %v3658, 0.0
      %v3691 = vmax.f32 %v3659, 0.0
      %v3692 = vmax.f32 %v3660, 0.0
      %v3693 = vpack.c.bf16 %v3662, %v3661
      %v3694 = vpack.c.bf16 %v3664, %v3663
      %v3695 = vpack.c.bf16 %v3666, %v3665
      %v3696 = vpack.c.bf16 %v3668, %v3667
      %v3697 = vpack.c.bf16 %v3670, %v3669
      %v3698 = vpack.c.bf16 %v3672, %v3671
      %v3699 = vpack.c.bf16 %v3674, %v3673
      %v3700 = vpack.c.bf16 %v3676, %v3675
      %v3701 = vpack.c.bf16 %v3678, %v3677
      %v3702 = vpack.c.bf16 %v3680, %v3679
      %v3703 = vpack.c.bf16 %v3682, %v3681
      %v3704 = vpack.c.bf16 %v3684, %v3683
      %v3705 = vpack.c.bf16 %v3686, %v3685
      %v3706 = vpack.c.bf16 %v3688, %v3687
      %v3707 = vpack.c.bf16 %v3690, %v3689
      %v3708 = vpack.c.bf16 %v3692, %v3691
      %vm3709 = vcmask 519168
      %3710 = vst.msk [vmem:[%s170] sm:$0xf] %vm3709, 0
      %3711 = vst.msk [vmem:[%s170 + $0x4] sm:$0xf] %vm3709, 0
      %3712 = vst.msk [vmem:[%s170 + $0x8] sm:$0xf] %vm3709, 0
      %3713 = vst.msk [vmem:[%s170 + $0xc] sm:$0xf] %vm3709, 0
      %3714 = vst.msk [vmem:[%s170 + $0x10] sm:$0xf] %vm3709, 0
      %3715 = vst.msk [vmem:[%s170 + $0x14] sm:$0xf] %vm3709, 0
      %3716 = vst.msk [vmem:[%s170 + $0x18] sm:$0xf] %vm3709, 0
      %3717 = vst.msk [vmem:[%s170 + $0x1c] sm:$0xf] %vm3709, 0
      %3718 = vst.msk [vmem:[%s170 + $0x20] sm:$0xf] %vm3709, 0
      %3719 = vst.msk [vmem:[%s170 + $0x24] sm:$0xf] %vm3709, 0
      %3720 = vst.msk [vmem:[%s170 + $0x28] sm:$0xf] %vm3709, 0
      %3721 = vst.msk [vmem:[%s170 + $0x2c] sm:$0xf] %vm3709, 0
      %3722 = vst.msk [vmem:[%s170 + $0x30] sm:$0xf] %vm3709, 0
      %3723 = vst.msk [vmem:[%s170 + $0x34] sm:$0xf] %vm3709, 0
      %3724 = vst.msk [vmem:[%s170 + $0x38] sm:$0xf] %vm3709, 0
      %3725 = vst.msk [vmem:[%s170 + $0x3c] sm:$0xf] %vm3709, 0
      %3726 = vst.msk [vmem:[%s170 + $0x40] sm:$0xf] %vm3709, 0
      %3727 = vst.msk [vmem:[%s170 + $0x44] sm:$0xf] %vm3709, 0
      %3728 = vst.msk [vmem:[%s170 + $0x48] sm:$0xf] %vm3709, 0
      %3729 = vst.msk [vmem:[%s170 + $0x4c] sm:$0xf] %vm3709, 0
      %3730 = vst.msk [vmem:[%s170 + $0x50] sm:$0xf] %vm3709, 0
      %3731 = vst.msk [vmem:[%s170 + $0x54] sm:$0xf] %vm3709, 0
      %3732 = vst.msk [vmem:[%s170 + $0x58] sm:$0xf] %vm3709, 0
      %3733 = vst.msk [vmem:[%s170 + $0x5c] sm:$0xf] %vm3709, 0
      %3734 = vst.msk [vmem:[%s170 + $0x60] sm:$0xf] %vm3709, 0
      %3735 = vst.msk [vmem:[%s170 + $0x64] sm:$0xf] %vm3709, 0
      %3736 = vst.msk [vmem:[%s170 + $0x68] sm:$0xf] %vm3709, 0
      %3737 = vst.msk [vmem:[%s170 + $0x6c] sm:$0xf] %vm3709, 0
      %3738 = vst.msk [vmem:[%s170 + $0x70] sm:$0xf] %vm3709, 0
      %3739 = vst.msk [vmem:[%s170 + $0x74] sm:$0xf] %vm3709, 0
      %3740 = vst.msk [vmem:[%s170 + $0x78] sm:$0xf] %vm3709, 0
      %3741 = vst.msk [vmem:[%s170 + $0x7c] sm:$0xf] %vm3709, 0
      %3742 = vst.msk [vmem:[%s170 + $0x80] sm:$0xf] %vm3709, 0
      %3743 = vst.msk [vmem:[%s170 + $0x84] sm:$0xf] %vm3709, 0
      %3744 = vst.msk [vmem:[%s170 + $0x88] sm:$0xf] %vm3709, 0
      %3745 = vst.msk [vmem:[%s170 + $0x8c] sm:$0xf] %vm3709, 0
      %3746 = vst.msk [vmem:[%s170 + $0x90] sm:$0xf] %vm3709, 0
      %3747 = vst.msk [vmem:[%s170 + $0x94] sm:$0xf] %vm3709, 0
      %3748 = vst.msk [vmem:[%s170 + $0x98] sm:$0xf] %vm3709, 0
      %3749 = vst.msk [vmem:[%s170 + $0x9c] sm:$0xf] %vm3709, 0
      %3750 = vst.msk [vmem:[%s170 + $0xa0] sm:$0xf] %vm3709, 0
      %3751 = vst.msk [vmem:[%s170 + $0xa4] sm:$0xf] %vm3709, 0
      %3752 = vst.msk [vmem:[%s170 + $0xa8] sm:$0xf] %vm3709, 0
      %3753 = vst.msk [vmem:[%s170 + $0xac] sm:$0xf] %vm3709, 0
      %3754 = vst.msk [vmem:[%s170 + $0xb0] sm:$0xf] %vm3709, 0
      %3755 = vst.msk [vmem:[%s170 + $0xb4] sm:$0xf] %vm3709, 0
      %3756 = vst.msk [vmem:[%s170 + $0xb8] sm:$0xf] %vm3709, 0
      %3757 = vst.msk [vmem:[%s170 + $0xbc] sm:$0xf] %vm3709, 0
      %3758 = vst.msk [vmem:[%s170 + $0xc0] sm:$0xf] %vm3709, 0
      %3759 = vst.msk [vmem:[%s170 + $0xc4] sm:$0xf] %vm3709, 0
      %3760 = vst.msk [vmem:[%s170 + $0xc8] sm:$0xf] %vm3709, 0
      %3761 = vst.msk [vmem:[%s170 + $0xcc] sm:$0xf] %vm3709, 0
      %3762 = vst.msk [vmem:[%s170 + $0xd0] sm:$0xf] %vm3709, 0
      %3763 = vst.msk [vmem:[%s170 + $0xd4] sm:$0xf] %vm3709, 0
      %3764 = vst.msk [vmem:[%s170 + $0xd8] sm:$0xf] %vm3709, 0
      %3765 = vst.msk [vmem:[%s170 + $0xdc] sm:$0xf] %vm3709, 0
      %3766 = vst.msk [vmem:[%s170 + $0xe0] sm:$0xf] %vm3709, 0
      %v3783 = vunpack.c.l.b16 %v3693
      %v3784 = vunpack.c.h.b16 %v3693
      %v3785 = vunpack.c.l.b16 %v3694
      %v3786 = vunpack.c.h.b16 %v3694
      %v3787 = vunpack.c.l.b16 %v3695
      %v3788 = vunpack.c.h.b16 %v3695
      %v3789 = vunpack.c.l.b16 %v3696
      %v3790 = vunpack.c.h.b16 %v3696
      %v3791 = vunpack.c.l.b16 %v3697
      %v3792 = vunpack.c.h.b16 %v3697
      %v3793 = vunpack.c.l.b16 %v3698
      %v3794 = vunpack.c.h.b16 %v3698
      %v3795 = vunpack.c.l.b16 %v3699
      %v3796 = vunpack.c.h.b16 %v3699
      %v3797 = vunpack.c.l.b16 %v3700
      %v3798 = vunpack.c.h.b16 %v3700
      %v3799 = vunpack.c.l.b16 %v3701
      %v3800 = vunpack.c.h.b16 %v3701
      %v3801 = vunpack.c.l.b16 %v3702
      %v3802 = vunpack.c.h.b16 %v3702
      %v3803 = vunpack.c.l.b16 %v3703
      %v3804 = vunpack.c.h.b16 %v3703
      %v3805 = vunpack.c.l.b16 %v3704
      %v3806 = vunpack.c.h.b16 %v3704
      %v3807 = vunpack.c.l.b16 %v3705
      %v3808 = vunpack.c.h.b16 %v3705
      %v3809 = vunpack.c.l.b16 %v3706
      %v3810 = vunpack.c.h.b16 %v3706
      %v3811 = vunpack.c.l.b16 %v3707
      %v3812 = vunpack.c.h.b16 %v3707
      %v3813 = vunpack.c.l.b16 %v3708
      %v3814 = vunpack.c.h.b16 %v3708
      %v3815 = vpack.c.b16 %v3783, %v3783
      %v3816 = vpack.c.b16 %v3784, %v3784
      %v3817 = vpack.c.b16 %v3785, %v3785
      %v3818 = vpack.c.b16 %v3786, %v3786
      %v3819 = vpack.c.b16 %v3787, %v3787
      %v3820 = vpack.c.b16 %v3788, %v3788
      %v3821 = vpack.c.b16 %v3789, %v3789
      %v3822 = vpack.c.b16 %v3790, %v3790
      %v3823 = vpack.c.b16 %v3791, %v3791
      %v3824 = vpack.c.b16 %v3792, %v3792
      %v3825 = vpack.c.b16 %v3793, %v3793
      %v3826 = vpack.c.b16 %v3794, %v3794
      %v3827 = vpack.c.b16 %v3795, %v3795
      %v3828 = vpack.c.b16 %v3796, %v3796
      %v3829 = vpack.c.b16 %v3797, %v3797
      %v3830 = vpack.c.b16 %v3798, %v3798
      %v3831 = vpack.c.b16 %v3799, %v3799
      %v3832 = vpack.c.b16 %v3800, %v3800
      %v3833 = vpack.c.b16 %v3801, %v3801
      %v3834 = vpack.c.b16 %v3802, %v3802
      %v3835 = vpack.c.b16 %v3803, %v3803
      %v3836 = vpack.c.b16 %v3804, %v3804
      %v3837 = vpack.c.b16 %v3805, %v3805
      %v3838 = vpack.c.b16 %v3806, %v3806
      %v3839 = vpack.c.b16 %v3807, %v3807
      %v3840 = vpack.c.b16 %v3808, %v3808
      %v3841 = vpack.c.b16 %v3809, %v3809
      %v3842 = vpack.c.b16 %v3810, %v3810
      %v3843 = vpack.c.b16 %v3811, %v3811
      %v3844 = vpack.c.b16 %v3812, %v3812
      %v3845 = vpack.c.b16 %v3813, %v3813
      %v3846 = vpack.c.b16 %v3814, %v3814
      %vm3847 = vsmask.f32 256
      %vm3848 = vsmask.f32 4368
      %vm3849 = vmor %vm3847, %vm3848
      %v3851 = vshrl.u32 %v3815, 16
      %v3853 = vrot.slane %v3851, 7
      %v3854 = vshll.u32 %v3815, 16
      %v3856 = vor.u32 %v3853, %v3854
      %v3857 = vrot.slane %v3853, 4
      %v3859 = vshrl.u32 %v3816, 16
      %v3861 = vrot.slane %v3859, 7
      %v3862 = vshll.u32 %v3816, 16
      %v3864 = vor.u32 %v3861, %v3862
      %v3865 = vsel %vm3849, %v3857, %v3864
      %v3866 = vrot.slane %v3861, 4
      %v3868 = vshrl.u32 %v3817, 16
      %v3870 = vrot.slane %v3868, 7
      %v3871 = vshll.u32 %v3817, 16
      %v3873 = vor.u32 %v3870, %v3871
      %v3874 = vrot.slane %v3870, 4
      %v3876 = vshrl.u32 %v3818, 16
      %v3878 = vrot.slane %v3876, 7
      %v3879 = vshll.u32 %v3818, 16
      %v3881 = vor.u32 %v3878, %v3879
      %v3882 = vsel %vm3849, %v3874, %v3881
      %v3883 = vrot.slane %v3878, 4
      %v3885 = vshrl.u32 %v3819, 16
      %v3887 = vrot.slane %v3885, 7
      %v3888 = vshll.u32 %v3819, 16
      %v3890 = vor.u32 %v3887, %v3888
      %v3891 = vrot.slane %v3887, 4
      %v3893 = vshrl.u32 %v3820, 16
      %v3895 = vrot.slane %v3893, 7
      %v3896 = vshll.u32 %v3820, 16
      %v3898 = vor.u32 %v3895, %v3896
      %v3899 = vsel %vm3849, %v3891, %v3898
      %v3900 = vrot.slane %v3895, 4
      %v3902 = vshrl.u32 %v3821, 16
      %v3904 = vrot.slane %v3902, 7
      %v3905 = vshll.u32 %v3821, 16
      %v3907 = vor.u32 %v3904, %v3905
      %v3908 = vrot.slane %v3904, 4
      %v3910 = vshrl.u32 %v3822, 16
      %v3912 = vrot.slane %v3910, 7
      %v3913 = vshll.u32 %v3822, 16
      %v3915 = vor.u32 %v3912, %v3913
      %v3916 = vsel %vm3849, %v3908, %v3915
      %v3917 = vrot.slane %v3912, 4
      %v3919 = vshrl.u32 %v3823, 16
      %v3921 = vrot.slane %v3919, 7
      %v3922 = vshll.u32 %v3823, 16
      %v3924 = vor.u32 %v3921, %v3922
      %v3925 = vrot.slane %v3921, 4
      %v3927 = vshrl.u32 %v3824, 16
      %v3929 = vrot.slane %v3927, 7
      %v3930 = vshll.u32 %v3824, 16
      %v3932 = vor.u32 %v3929, %v3930
      %v3933 = vsel %vm3849, %v3925, %v3932
      %v3934 = vrot.slane %v3929, 4
      %v3936 = vshrl.u32 %v3825, 16
      %v3938 = vrot.slane %v3936, 7
      %v3939 = vshll.u32 %v3825, 16
      %v3941 = vor.u32 %v3938, %v3939
      %v3942 = vrot.slane %v3938, 4
      %v3944 = vshrl.u32 %v3826, 16
      %v3946 = vrot.slane %v3944, 7
      %v3947 = vshll.u32 %v3826, 16
      %v3949 = vor.u32 %v3946, %v3947
      %v3950 = vsel %vm3849, %v3942, %v3949
      %v3951 = vrot.slane %v3946, 4
      %v3953 = vshrl.u32 %v3827, 16
      %v3955 = vrot.slane %v3953, 7
      %v3956 = vshll.u32 %v3827, 16
      %v3958 = vor.u32 %v3955, %v3956
      %v3959 = vrot.slane %v3955, 4
      %v3961 = vshrl.u32 %v3828, 16
      %v3963 = vrot.slane %v3961, 7
      %v3964 = vshll.u32 %v3828, 16
      %v3966 = vor.u32 %v3963, %v3964
      %v3967 = vsel %vm3849, %v3959, %v3966
      %v3968 = vrot.slane %v3963, 4
      %v3970 = vshrl.u32 %v3829, 16
      %v3972 = vrot.slane %v3970, 7
      %v3973 = vshll.u32 %v3829, 16
      %v3975 = vor.u32 %v3972, %v3973
      %v3976 = vrot.slane %v3972, 4
      %v3978 = vshrl.u32 %v3830, 16
      %v3980 = vrot.slane %v3978, 7
      %v3981 = vshll.u32 %v3830, 16
      %v3983 = vor.u32 %v3980, %v3981
      %v3984 = vsel %vm3849, %v3976, %v3983
      %v3985 = vrot.slane %v3980, 4
      %v3987 = vshrl.u32 %v3831, 16
      %v3989 = vrot.slane %v3987, 7
      %v3990 = vshll.u32 %v3831, 16
      %v3992 = vor.u32 %v3989, %v3990
      %v3993 = vrot.slane %v3989, 4
      %v3995 = vshrl.u32 %v3832, 16
      %v3997 = vrot.slane %v3995, 7
      %v3998 = vshll.u32 %v3832, 16
      %v4000 = vor.u32 %v3997, %v3998
      %v4001 = vsel %vm3849, %v3993, %v4000
      %v4002 = vrot.slane %v3997, 4
      %v4004 = vshrl.u32 %v3833, 16
      %v4006 = vrot.slane %v4004, 7
      %v4007 = vshll.u32 %v3833, 16
      %v4009 = vor.u32 %v4006, %v4007
      %v4010 = vrot.slane %v4006, 4
      %v4012 = vshrl.u32 %v3834, 16
      %v4014 = vrot.slane %v4012, 7
      %v4015 = vshll.u32 %v3834, 16
      %v4017 = vor.u32 %v4014, %v4015
      %v4018 = vsel %vm3849, %v4010, %v4017
      %v4019 = vrot.slane %v4014, 4
      %v4021 = vshrl.u32 %v3835, 16
      %v4023 = vrot.slane %v4021, 7
      %v4024 = vshll.u32 %v3835, 16
      %v4026 = vor.u32 %v4023, %v4024
      %v4027 = vrot.slane %v4023, 4
      %v4029 = vshrl.u32 %v3836, 16
      %v4031 = vrot.slane %v4029, 7
      %v4032 = vshll.u32 %v3836, 16
      %v4034 = vor.u32 %v4031, %v4032
      %v4035 = vsel %vm3849, %v4027, %v4034
      %v4036 = vrot.slane %v4031, 4
      %v4038 = vshrl.u32 %v3837, 16
      %v4040 = vrot.slane %v4038, 7
      %v4041 = vshll.u32 %v3837, 16
      %v4043 = vor.u32 %v4040, %v4041
      %v4044 = vrot.slane %v4040, 4
      %v4046 = vshrl.u32 %v3838, 16
      %v4048 = vrot.slane %v4046, 7
      %v4049 = vshll.u32 %v3838, 16
      %v4051 = vor.u32 %v4048, %v4049
      %v4052 = vsel %vm3849, %v4044, %v4051
      %v4053 = vrot.slane %v4048, 4
      %v4055 = vshrl.u32 %v3839, 16
      %v4057 = vrot.slane %v4055, 7
      %v4058 = vshll.u32 %v3839, 16
      %v4060 = vor.u32 %v4057, %v4058
      %v4061 = vrot.slane %v4057, 4
      %v4063 = vshrl.u32 %v3840, 16
      %v4065 = vrot.slane %v4063, 7
      %v4066 = vshll.u32 %v3840, 16
      %v4068 = vor.u32 %v4065, %v4066
      %v4069 = vsel %vm3849, %v4061, %v4068
      %v4070 = vrot.slane %v4065, 4
      %v4072 = vshrl.u32 %v3841, 16
      %v4074 = vrot.slane %v4072, 7
      %v4075 = vshll.u32 %v3841, 16
      %v4077 = vor.u32 %v4074, %v4075
      %v4078 = vrot.slane %v4074, 4
      %v4080 = vshrl.u32 %v3842, 16
      %v4082 = vrot.slane %v4080, 7
      %v4083 = vshll.u32 %v3842, 16
      %v4085 = vor.u32 %v4082, %v4083
      %v4086 = vsel %vm3849, %v4078, %v4085
      %v4087 = vrot.slane %v4082, 4
      %v4089 = vshrl.u32 %v3843, 16
      %v4091 = vrot.slane %v4089, 7
      %v4092 = vshll.u32 %v3843, 16
      %v4094 = vor.u32 %v4091, %v4092
      %v4095 = vrot.slane %v4091, 4
      %v4097 = vshrl.u32 %v3844, 16
      %v4099 = vrot.slane %v4097, 7
      %v4100 = vshll.u32 %v3844, 16
      %v4102 = vor.u32 %v4099, %v4100
      %v4103 = vsel %vm3849, %v4095, %v4102
      %v4104 = vrot.slane %v4099, 4
      %v4106 = vshrl.u32 %v3845, 16
      %v4108 = vrot.slane %v4106, 7
      %v4109 = vshll.u32 %v3845, 16
      %v4111 = vor.u32 %v4108, %v4109
      %v4112 = vrot.slane %v4108, 4
      %v4114 = vshrl.u32 %v3846, 16
      %v4116 = vrot.slane %v4114, 7
      %v4117 = vshll.u32 %v3846, 16
      %v4119 = vor.u32 %v4116, %v4117
      %v4120 = vsel %vm3849, %v4112, %v4119
      %v4121 = vrot.slane %v4116, 4
      %s4170 = scalar_lea.vmem %s170, 12
      %vm4171 = vcmask 519168
      %vm4172 = vsmask.f32 7938
      %vm4173 = vmand %vm4171, %vm4172
      %v4174 = vld [vmem:[%s4170] sm:$0xf]
      %v4175 = vsel %vm4173, %v3856, %v4174
      %4176 = vst [vmem:[%s4170] sm:$0xf] %v4175
      %4177 = vst.msk [vmem:[%s4170 + $0x4] sm:$0xf] %vm3709, %v3865
      %vm4178 = vcmask 516096
      %vm4179 = vmand %vm4178, %vm3847
      %v4180 = vld [vmem:[%s4170 + $0x8] sm:$0x1]
      %v4181 = vsel %vm4179, %v3866, %v4180
      %4182 = vst [vmem:[%s4170 + $0x8] sm:$0x1] %v4181
      %v4183 = vld [vmem:[%s4170 + $0xc] sm:$0xf]
      %v4184 = vsel %vm4173, %v3873, %v4183
      %4185 = vst [vmem:[%s4170 + $0xc] sm:$0xf] %v4184
      %4186 = vst.msk [vmem:[%s4170 + $0x10] sm:$0xf] %vm3709, %v3882
      %v4187 = vld [vmem:[%s4170 + $0x14] sm:$0x1]
      %v4188 = vsel %vm4179, %v3883, %v4187
      %4189 = vst [vmem:[%s4170 + $0x14] sm:$0x1] %v4188
      %v4190 = vld [vmem:[%s4170 + $0x18] sm:$0xf]
      %v4191 = vsel %vm4173, %v3890, %v4190
      %4192 = vst [vmem:[%s4170 + $0x18] sm:$0xf] %v4191
      %4193 = vst.msk [vmem:[%s4170 + $0x1c] sm:$0xf] %vm3709, %v3899
      %v4194 = vld [vmem:[%s4170 + $0x20] sm:$0x1]
      %v4195 = vsel %vm4179, %v3900, %v4194
      %4196 = vst [vmem:[%s4170 + $0x20] sm:$0x1] %v4195
      %v4197 = vld [vmem:[%s4170 + $0x24] sm:$0xf]
      %v4198 = vsel %vm4173, %v3907, %v4197
      %4199 = vst [vmem:[%s4170 + $0x24] sm:$0xf] %v4198
      %4200 = vst.msk [vmem:[%s4170 + $0x28] sm:$0xf] %vm3709, %v3916
      %v4201 = vld [vmem:[%s4170 + $0x2c] sm:$0x1]
      %v4202 = vsel %vm4179, %v3917, %v4201
      %4203 = vst [vmem:[%s4170 + $0x2c] sm:$0x1] %v4202
      %v4204 = vld [vmem:[%s4170 + $0x30] sm:$0xf]
      %v4205 = vsel %vm4173, %v3924, %v4204
      %4206 = vst [vmem:[%s4170 + $0x30] sm:$0xf] %v4205
      %4207 = vst.msk [vmem:[%s4170 + $0x34] sm:$0xf] %vm3709, %v3933
      %v4208 = vld [vmem:[%s4170 + $0x38] sm:$0x1]
      %v4209 = vsel %vm4179, %v3934, %v4208
      %4210 = vst [vmem:[%s4170 + $0x38] sm:$0x1] %v4209
      %v4211 = vld [vmem:[%s4170 + $0x3c] sm:$0xf]
      %v4212 = vsel %vm4173, %v3941, %v4211
      %4213 = vst [vmem:[%s4170 + $0x3c] sm:$0xf] %v4212
      %4214 = vst.msk [vmem:[%s4170 + $0x40] sm:$0xf] %vm3709, %v3950
      %v4215 = vld [vmem:[%s4170 + $0x44] sm:$0x1]
      %v4216 = vsel %vm4179, %v3951, %v4215
      %4217 = vst [vmem:[%s4170 + $0x44] sm:$0x1] %v4216
      %v4218 = vld [vmem:[%s4170 + $0x48] sm:$0xf]
      %v4219 = vsel %vm4173, %v3958, %v4218
      %4220 = vst [vmem:[%s4170 + $0x48] sm:$0xf] %v4219
      %4221 = vst.msk [vmem:[%s4170 + $0x4c] sm:$0xf] %vm3709, %v3967
      %v4222 = vld [vmem:[%s4170 + $0x50] sm:$0x1]
      %v4223 = vsel %vm4179, %v3968, %v4222
      %4224 = vst [vmem:[%s4170 + $0x50] sm:$0x1] %v4223
      %v4225 = vld [vmem:[%s4170 + $0x54] sm:$0xf]
      %v4226 = vsel %vm4173, %v3975, %v4225
      %4227 = vst [vmem:[%s4170 + $0x54] sm:$0xf] %v4226
      %4228 = vst.msk [vmem:[%s4170 + $0x58] sm:$0xf] %vm3709, %v3984
      %v4229 = vld [vmem:[%s4170 + $0x5c] sm:$0x1]
      %v4230 = vsel %vm4179, %v3985, %v4229
      %4231 = vst [vmem:[%s4170 + $0x5c] sm:$0x1] %v4230
      %v4232 = vld [vmem:[%s4170 + $0x60] sm:$0xf]
      %v4233 = vsel %vm4173, %v3992, %v4232
      %4234 = vst [vmem:[%s4170 + $0x60] sm:$0xf] %v4233
      %4235 = vst.msk [vmem:[%s4170 + $0x64] sm:$0xf] %vm3709, %v4001
      %v4236 = vld [vmem:[%s4170 + $0x68] sm:$0x1]
      %v4237 = vsel %vm4179, %v4002, %v4236
      %4238 = vst [vmem:[%s4170 + $0x68] sm:$0x1] %v4237
      %v4239 = vld [vmem:[%s4170 + $0x6c] sm:$0xf]
      %v4240 = vsel %vm4173, %v4009, %v4239
      %4241 = vst [vmem:[%s4170 + $0x6c] sm:$0xf] %v4240
      %4242 = vst.msk [vmem:[%s4170 + $0x70] sm:$0xf] %vm3709, %v4018
      %v4243 = vld [vmem:[%s4170 + $0x74] sm:$0x1]
      %v4244 = vsel %vm4179, %v4019, %v4243
      %4245 = vst [vmem:[%s4170 + $0x74] sm:$0x1] %v4244
      %v4246 = vld [vmem:[%s4170 + $0x78] sm:$0xf]
      %v4247 = vsel %vm4173, %v4026, %v4246
      %4248 = vst [vmem:[%s4170 + $0x78] sm:$0xf] %v4247
      %4249 = vst.msk [vmem:[%s4170 + $0x7c] sm:$0xf] %vm3709, %v4035
      %v4250 = vld [vmem:[%s4170 + $0x80] sm:$0x1]
      %v4251 = vsel %vm4179, %v4036, %v4250
      %4252 = vst [vmem:[%s4170 + $0x80] sm:$0x1] %v4251
      %v4253 = vld [vmem:[%s4170 + $0x84] sm:$0xf]
      %v4254 = vsel %vm4173, %v4043, %v4253
      %4255 = vst [vmem:[%s4170 + $0x84] sm:$0xf] %v4254
      %4256 = vst.msk [vmem:[%s4170 + $0x88] sm:$0xf] %vm3709, %v4052
      %v4257 = vld [vmem:[%s4170 + $0x8c] sm:$0x1]
      %v4258 = vsel %vm4179, %v4053, %v4257
      %4259 = vst [vmem:[%s4170 + $0x8c] sm:$0x1] %v4258
      %v4260 = vld [vmem:[%s4170 + $0x90] sm:$0xf]
      %v4261 = vsel %vm4173, %v4060, %v4260
      %4262 = vst [vmem:[%s4170 + $0x90] sm:$0xf] %v4261
      %4263 = vst.msk [vmem:[%s4170 + $0x94] sm:$0xf] %vm3709, %v4069
      %v4264 = vld [vmem:[%s4170 + $0x98] sm:$0x1]
      %v4265 = vsel %vm4179, %v4070, %v4264
      %4266 = vst [vmem:[%s4170 + $0x98] sm:$0x1] %v4265
      %v4267 = vld [vmem:[%s4170 + $0x9c] sm:$0xf]
      %v4268 = vsel %vm4173, %v4077, %v4267
      %4269 = vst [vmem:[%s4170 + $0x9c] sm:$0xf] %v4268
      %4270 = vst.msk [vmem:[%s4170 + $0xa0] sm:$0xf] %vm3709, %v4086
      %v4271 = vld [vmem:[%s4170 + $0xa4] sm:$0x1]
      %v4272 = vsel %vm4179, %v4087, %v4271
      %4273 = vst [vmem:[%s4170 + $0xa4] sm:$0x1] %v4272
      %v4274 = vld [vmem:[%s4170 + $0xa8] sm:$0xf]
      %v4275 = vsel %vm4173, %v4094, %v4274
      %4276 = vst [vmem:[%s4170 + $0xa8] sm:$0xf] %v4275
      %4277 = vst.msk [vmem:[%s4170 + $0xac] sm:$0xf] %vm3709, %v4103
      %v4278 = vld [vmem:[%s4170 + $0xb0] sm:$0x1]
      %v4279 = vsel %vm4179, %v4104, %v4278
      %4280 = vst [vmem:[%s4170 + $0xb0] sm:$0x1] %v4279
      %v4281 = vld [vmem:[%s4170 + $0xb4] sm:$0xf]
      %v4282 = vsel %vm4173, %v4111, %v4281
      %4283 = vst [vmem:[%s4170 + $0xb4] sm:$0xf] %v4282
      %4284 = vst.msk [vmem:[%s4170 + $0xb8] sm:$0xf] %vm3709, %v4120
      %v4285 = vld [vmem:[%s4170 + $0xbc] sm:$0x1]
      %v4286 = vsel %vm4179, %v4121, %v4285
      %4287 = vst [vmem:[%s4170 + $0xbc] sm:$0x1] %v4286
      %p4288 = scmp.lt.s32.totalorder %s14, 1
      %s4289 = scalar_select %p4288, %s14, 1
      %s4290 = smul.addr %s4289, 57
      %s4291 = smul.addr %s4290, 4
      %s4292 = scalar_lea.vmem %s3, %s4291
      // Predicated region
      $region33: #{netf_forward.4} parent=31 // pred_check
        %p4293 = pneg %p100
      $region34: #{netf_forward.4} parent=31 // pred_check_branch
        %4295 = sbr.rel (%p4293) target = $region36
      $region35: #{netf_forward.4} parent=31 // pred_region
        _
      $region36: #{netf_forward.4} parent=31 // pred_fallthru
        _
    $region32: #{netf_forward.4} parent=5 // pred_fallthru
      _
    %p4296 = scmp.le.s32.totalorder 2, %s9
    // Predicated region
    $region37: #{netf_forward.4} parent=5 // pred_check
      %p4297 = pneg %p4296
    $region38: #{netf_forward.4} parent=5 // pred_check_branch
      %4299 = sbr.rel (%p4297) target = $region40
    $region39: #{netf_forward.4} parent=5 // pred_region
      %s4300 = ssub.s32 %s9, 2
      // Predicated region
      $region41: #{netf_forward.4} parent=39 // pred_check
        %p4301 = pneg %p106
      $region42: #{netf_forward.4} parent=39 // pred_check_branch
        %4303 = sbr.rel (%p4301) target = $region44
      $region43: #{netf_forward.4} parent=39 // pred_region
        %p4304 = scmp.lt.s32.totalorder %s15, 1
        %s4305 = scalar_select %p4304, %s15, 1
        %s4306 = smul.addr %s4305, 57
        %s4307 = smul.addr %s4306, 4
        %s4308 = scalar_lea.vmem %s3, %s4307
      $region44: #{netf_forward.4} parent=39 // pred_fallthru
        _
    $region40: #{netf_forward.4} parent=5 // pred_fallthru
      _
  $region6: #{netf_forward.4} parent=0 // loop_footer
    %s13 = sadd.s32 1, %s9
  $region7: #{netf_forward.4} parent=0 // loop_footer_branch
    %8 = sbr.rel target = $region3
  $region8: #{netf_forward.4} parent=0 // loop_exit
    _

// kernel: netf_forward.5
$region0: #{netf_forward.5}
  #allocation0 [shape = 'u32[]', space=smem, size = 0x4, offset = 0x4, fixed_abs, tag = 'smem constant byte address 0x4 - core index']
  #allocation1 [shape = 'u32[144,128]{1,0:T(1,128)}', space=vmem, size = 0x12000, scoped, tag = 'internal scratch']
  %s0 = inlined_call_operand.vmem [shape: bf16[2,456,64], index: 0, kind: input, shape index: {}]
  %s1 = inlined_call_operand.vmem [shape: bf16[3,192,64], index: 1, kind: input, shape index: {}]
  %s2 = inlined_call_operand.vmem [shape: f32[1,64], index: 2, kind: input, shape index: {}]
  %s3 = inlined_call_operand.vmem [shape: bf16[2,11,16,64], index: 3, kind: output, shape index: {}]
  %s4 = sld [smem:[#allocation0]]
  $region45: #{netf_forward.5} parent=0
    _
  %s6 = ssub.s32 1, %s4
  %s7 = scalar_select 0, %s6, %s4
  loop: start=0, step=1, limit=4
  $region2: #{netf_forward.5} parent=0 // loop_pre_header
    _
  $region3: #{netf_forward.5} parent=0 // loop_header
    %s9 = sphi 0, %s13
    %p10 = scmp.ge.s32.totalorder %s9, 4
    %s19 = sphi 0, %s21
    %s22 = sphi 0, %s19
    %s23 = sphi 0, %s22
    %s39 = sphi 0, %s23
    %s43 = sphi 0, %s43
    %s45 = sphi 0, %s43
    %s46 = sphi 0, %s45
    %s60 = sphi 0, %s46
    %s64 = sphi 0, %s64
    %s66 = sphi 0, %s64
    %s67 = sphi 0, %s66
    %s81 = sphi 0, %s67
    %s87 = sphi 0, %s89
    %s90 = sphi 0, %s87
    %s91 = sphi 0, %s90
    %s107 = sphi 0, %s91
  $region4: #{netf_forward.5} parent=0 // loop_header_branch
    %12 = sbr.rel (%p10) target = $region8
  $region5: #{netf_forward.5} parent=0 // loop_body
    %s14 = ssub.s32 %s9, 1
    %s15 = ssub.s32 %s9, 2
    %s16 = sadd.s32 %s9, 1
    %s17 = ssub.s32 %s9, %s16
    %p18 = scmp.eq.s32.totalorder %s17, 0
    %s20 = sadd.s32 %s19, 1
    %s21 = scalar_select %p18, %s19, %s20
    %p24 = pneg %p18
    %p25 = scmp.eq.s32.totalorder %s9, 1
    %p26 = por %p24, %p25
    %p27 = scmp.ne.s32.totalorder %s19, %s22
    %p28 = scmp.eq.s32.totalorder %s9, 0
    %p29 = por %p27, %p28
    %p30 = scmp.ne.s32.totalorder %s19, %s22
    %p31 = scmp.eq.s32.totalorder %s14, 1
    %p32 = por %p30, %p31
    %p33 = scmp.ne.s32.totalorder %s22, %s23
    %p34 = scmp.eq.s32.totalorder %s14, 0
    %p35 = por %p33, %p34
    %p36 = scmp.ne.s32.totalorder %s22, %s23
    %p37 = scmp.eq.s32.totalorder %s15, 1
    %p38 = por %p36, %p37
    %p40 = scmp.ne.s32.totalorder %s23, %s39
    %p41 = scmp.eq.s32.totalorder %s15, 0
    %p42 = por %p40, %p41
    %s44 = sadd.s32 %s43, 1
    %p47 = scmp.eq.s32.totalorder %s9, 1
    %p48 = scmp.ne.s32.totalorder %s43, %s45
    %p49 = scmp.eq.s32.totalorder %s9, 0
    %p50 = por %p48, %p49
    %p51 = scmp.ne.s32.totalorder %s43, %s45
    %p52 = scmp.eq.s32.totalorder %s14, 1
    %p53 = por %p51, %p52
    %p54 = scmp.ne.s32.totalorder %s45, %s46
    %p55 = scmp.eq.s32.totalorder %s14, 0
    %p56 = por %p54, %p55
    %p57 = scmp.ne.s32.totalorder %s45, %s46
    %p58 = scmp.eq.s32.totalorder %s15, 1
    %p59 = por %p57, %p58
    %p61 = scmp.ne.s32.totalorder %s46, %s60
    %p62 = scmp.eq.s32.totalorder %s15, 0
    %p63 = por %p61, %p62
    %s65 = sadd.s32 %s64, 1
    %p68 = scmp.eq.s32.totalorder %s9, 1
    %p69 = scmp.ne.s32.totalorder %s64, %s66
    %p70 = scmp.eq.s32.totalorder %s9, 0
    %p71 = por %p69, %p70
    %p72 = scmp.ne.s32.totalorder %s64, %s66
    %p73 = scmp.eq.s32.totalorder %s14, 1
    %p74 = por %p72, %p73
    %p75 = scmp.ne.s32.totalorder %s66, %s67
    %p76 = scmp.eq.s32.totalorder %s14, 0
    %p77 = por %p75, %p76
    %p78 = scmp.ne.s32.totalorder %s66, %s67
    %p79 = scmp.eq.s32.totalorder %s15, 1
    %p80 = por %p78, %p79
    %p82 = scmp.ne.s32.totalorder %s67, %s81
    %p83 = scmp.eq.s32.totalorder %s15, 0
    %p84 = por %p82, %p83
    %s85 = ssub.s32 %s9, %s16
    %p86 = scmp.eq.s32.totalorder %s85, 0
    %s88 = sadd.s32 %s87, 1
    %s89 = scalar_select %p86, %s87, %s88
    %p92 = pneg %p86
    %p93 = scmp.eq.s32.totalorder %s9, 1
    %p94 = por %p92, %p93
    %p95 = scmp.ne.s32.totalorder %s87, %s90
    %p96 = scmp.eq.s32.totalorder %s9, 0
    %p97 = por %p95, %p96
    %p98 = scmp.ne.s32.totalorder %s87, %s90
    %p99 = scmp.eq.s32.totalorder %s14, 1
    %p100 = por %p98, %p99
    %p101 = scmp.ne.s32.totalorder %s90, %s91
    %p102 = scmp.eq.s32.totalorder %s14, 0
    %p103 = por %p101, %p102
    %p104 = scmp.ne.s32.totalorder %s90, %s91
    %p105 = scmp.eq.s32.totalorder %s15, 1
    %p106 = por %p104, %p105
    %p108 = scmp.ne.s32.totalorder %s91, %s107
    %p109 = scmp.eq.s32.totalorder %s15, 0
    %p110 = por %p108, %p109
    %p111 = scmp.le.s32.totalorder 1, %s9
    %p112 = scmp.lt.s32.totalorder %s9, 3
    %p113 = pnand %p111, %p112
    %p114 = pneg %p113
    // Predicated region
    $region9: #{netf_forward.5} parent=5 // pred_check
      _
    $region10: #{netf_forward.5} parent=5 // pred_check_branch
      %116 = sbr.rel (%p113) target = $region12
    $region11: #{netf_forward.5} parent=5 // pred_region
      %s117 = ssub.s32 %s9, 1
      // Predicated region
      $region13: #{netf_forward.5} parent=11 // pred_check
        %p118 = pneg %p56
      $region14: #{netf_forward.5} parent=11 // pred_check_branch
        %120 = sbr.rel (%p118) target = $region16
      $region15: #{netf_forward.5} parent=11 // pred_region
        _
      $region16: #{netf_forward.5} parent=11 // pred_fallthru
        _
      // Predicated region
      $region17: #{netf_forward.5} parent=11 // pred_check
        %p121 = pneg %p77
      $region18: #{netf_forward.5} parent=11 // pred_check_branch
        %123 = sbr.rel (%p121) target = $region20
      $region19: #{netf_forward.5} parent=11 // pred_region
        _
      $region20: #{netf_forward.5} parent=11 // pred_fallthru
        _
    $region12: #{netf_forward.5} parent=5 // pred_fallthru
      _
    %p124 = scmp.lt.s32.totalorder %s9, 2
    // Predicated region
    $region21: #{netf_forward.5} parent=5 // pred_check
      %p125 = pneg %p124
    $region22: #{netf_forward.5} parent=5 // pred_check_branch
      %127 = sbr.rel (%p125) target = $region24
    $region23: #{netf_forward.5} parent=5 // pred_region
      // Predicated region
      $region25: #{netf_forward.5} parent=23 // pred_check
        %p128 = pneg %p29
      $region26: #{netf_forward.5} parent=23 // pred_check_branch
        %130 = sbr.rel (%p128) target = $region28
      $region27: #{netf_forward.5} parent=23 // pred_region
        %p131 = scmp.lt.s32.totalorder %s9, 1
        %s132 = scalar_select %p131, %s9, 1
        %s133 = smul.addr %s132, 57
        %s134 = smul.addr %s133, 4
        %s135 = scalar_lea.vmem %s0, %s134
      $region28: #{netf_forward.5} parent=23 // pred_fallthru
        _
    $region24: #{netf_forward.5} parent=5 // pred_fallthru
      _
    %p136 = scmp.le.s32.totalorder 1, %s9
    %p137 = scmp.lt.s32.totalorder %s9, 3
    %p138 = pnand %p136, %p137
    %p139 = pneg %p138
    // Predicated region
    $region29: #{netf_forward.5} parent=5 // pred_check
      _
    $region30: #{netf_forward.5} parent=5 // pred_check_branch
      %141 = sbr.rel (%p138) target = $region32
    $region31: #{netf_forward.5} parent=5 // pred_region
      %s142 = ssub.s32 %s9, 1
      %p143 = scmp.lt.s32.totalorder %s14, 1
      %s144 = scalar_select %p143, %s14, 1
      %s145 = smul.addr %s144, 57
      %s146 = smul.addr %s145, 4
      %s147 = scalar_lea.vmem %s0, %s146
      %p148 = pneg %p35
      %p149 = pneg %p32
      %p150 = pneg %p56
      %p151 = pneg %p53
      %p152 = pneg %p77
      %p153 = pneg %p74
      %p154 = pneg %p103
      %p155 = pneg %p100
      %p156 = scmp.lt.s32.totalorder %s14, 1
      %s157 = scalar_select %p156, %s14, 1
      %s158 = smul.addr %s157, 22
      %s159 = smul.addr %s158, 4
      %s160 = scalar_lea.vmem %s3, %s159
      %p161 = scmp.lt.s32.totalorder %s14, 1
      %s162 = scalar_select %p161, %s14, 1
      %s163 = smul.addr %s162, 57
      %s164 = smul.addr %s163, 4
      %s165 = scalar_lea.vmem %s0, %s164
      %p166 = scmp.lt.s32.totalorder %s14, 1
      %s167 = scalar_select %p166, %s14, 1
      %s168 = smul.addr %s167, 22
      %s169 = smul.addr %s168, 4
      %s170 = scalar_lea.vmem %s3, %s169
      %v172 = vld [vmem:[%s165] sm:$0xf]
      %v173 = vld [vmem:[%s165 + $0x4] sm:$0xf]
      %v174 = vld [vmem:[%s165 + $0x8] sm:$0xf]
      %v175 = vld [vmem:[%s165 + $0xc] sm:$0xf]
      %v176 = vld [vmem:[%s165 + $0x10] sm:$0xf]
      %v177 = vld [vmem:[%s165 + $0x14] sm:$0xf]
      %v178 = vld [vmem:[%s165 + $0x18] sm:$0xf]
      %v179 = vld [vmem:[%s165 + $0x1c] sm:$0xf]
      %v180 = vld [vmem:[%s165 + $0x20] sm:$0xf]
      %v181 = vld [vmem:[%s165 + $0x24] sm:$0xf]
      %v182 = vld [vmem:[%s165 + $0x28] sm:$0xf]
      %v183 = vld [vmem:[%s165 + $0x2c] sm:$0xf]
      %v184 = vld [vmem:[%s165 + $0x30] sm:$0xf]
      %v185 = vld [vmem:[%s165 + $0x34] sm:$0xf]
      %v186 = vld [vmem:[%s165 + $0x38] sm:$0xf]
      %v187 = vld [vmem:[%s165 + $0x3c] sm:$0xf]
      %v188 = vld [vmem:[%s165 + $0x40] sm:$0xf]
      %v189 = vld [vmem:[%s165 + $0x44] sm:$0xf]
      %v190 = vld [vmem:[%s165 + $0x48] sm:$0xf]
      %v191 = vld [vmem:[%s165 + $0x4c] sm:$0xf]
      %v192 = vld [vmem:[%s165 + $0x50] sm:$0xf]
      %v193 = vld [vmem:[%s165 + $0x54] sm:$0xf]
      %v194 = vld [vmem:[%s165 + $0x58] sm:$0xf]
      %v195 = vld [vmem:[%s165 + $0x5c] sm:$0xf]
      %v196 = vld [vmem:[%s165 + $0x60] sm:$0xf]
      %v197 = vld [vmem:[%s165 + $0x64] sm:$0xf]
      %v198 = vld [vmem:[%s165 + $0x68] sm:$0xf]
      %v199 = vld [vmem:[%s165 + $0x6c] sm:$0xf]
      %v200 = vld [vmem:[%s165 + $0x70] sm:$0xf]
      %v201 = vld [vmem:[%s165 + $0x74] sm:$0xf]
      %v202 = vld [vmem:[%s165 + $0x78] sm:$0xf]
      %v203 = vld [vmem:[%s165 + $0x7c] sm:$0xf]
      %v204 = vld [vmem:[%s165 + $0x80] sm:$0xf]
      %v205 = vld [vmem:[%s165 + $0x84] sm:$0xf]
      %v206 = vld [vmem:[%s165 + $0x88] sm:$0xf]
      %v207 = vld [vmem:[%s165 + $0x8c] sm:$0xf]
      %v208 = vld [vmem:[%s165 + $0x90] sm:$0xf]
      %v209 = vld [vmem:[%s165 + $0x94] sm:$0xf]
      %v210 = vld [vmem:[%s165 + $0x98] sm:$0xf]
      %v211 = vld [vmem:[%s165 + $0x9c] sm:$0xf]
      %v212 = vld [vmem:[%s165 + $0xa0] sm:$0xf]
      %v213 = vld [vmem:[%s165 + $0xa4] sm:$0xf]
      %v214 = vld [vmem:[%s165 + $0xa8] sm:$0xf]
      %v215 = vld [vmem:[%s165 + $0xac] sm:$0xf]
      %v216 = vld [vmem:[%s165 + $0xb0] sm:$0xf]
      %v217 = vld [vmem:[%s165 + $0xb4] sm:$0xf]
      %v218 = vld [vmem:[%s165 + $0xb8] sm:$0xf]
      %v219 = vld [vmem:[%s165 + $0xbc] sm:$0xf]
      %v220 = vld [vmem:[%s165 + $0xc0] sm:$0x1]
      %v221 = vld [vmem:[%s165] sm:$0xe]
      %v270 = vunpack.c.l.b16 %v172
      %v271 = vunpack.c.l.b16 %v173
      %v272 = vunpack.c.l.b16 %v174
      %v273 = vunpack.c.l.b16 %v175
      %v274 = vunpack.c.l.b16 %v176
      %v275 = vunpack.c.l.b16 %v177
      %v276 = vunpack.c.l.b16 %v178
      %v277 = vunpack.c.l.b16 %v179
      %v278 = vunpack.c.l.b16 %v180
      %v279 = vunpack.c.l.b16 %v181
      %v280 = vunpack.c.l.b16 %v182
      %v281 = vunpack.c.l.b16 %v183
      %v282 = vunpack.c.l.b16 %v184
      %v283 = vunpack.c.l.b16 %v185
      %v284 = vunpack.c.l.b16 %v186
      %v285 = vunpack.c.l.b16 %v187
      %v286 = vunpack.c.l.b16 %v188
      %v287 = vunpack.c.l.b16 %v189
      %v288 = vunpack.c.l.b16 %v190
      %v289 = vunpack.c.l.b16 %v191
      %v290 = vunpack.c.l.b16 %v192
      %v291 = vunpack.c.l.b16 %v193
      %v292 = vunpack.c.l.b16 %v194
      %v293 = vunpack.c.l.b16 %v195
      %v294 = vunpack.c.l.b16 %v196
      %v295 = vunpack.c.l.b16 %v197
      %v296 = vunpack.c.l.b16 %v198
      %v297 = vunpack.c.l.b16 %v199
      %v298 = vunpack.c.l.b16 %v200
      %v299 = vunpack.c.l.b16 %v201
      %v300 = vunpack.c.l.b16 %v202
      %v301 = vunpack.c.l.b16 %v203
      %v302 = vunpack.c.l.b16 %v204
      %v303 = vunpack.c.l.b16 %v205
      %v304 = vunpack.c.l.b16 %v206
      %v305 = vunpack.c.l.b16 %v207
      %v306 = vunpack.c.l.b16 %v208
      %v307 = vunpack.c.l.b16 %v209
      %v308 = vunpack.c.l.b16 %v210
      %v309 = vunpack.c.l.b16 %v211
      %v310 = vunpack.c.l.b16 %v212
      %v311 = vunpack.c.l.b16 %v213
      %v312 = vunpack.c.l.b16 %v214
      %v313 = vunpack.c.l.b16 %v215
      %v314 = vunpack.c.l.b16 %v216
      %v315 = vunpack.c.l.b16 %v217
      %v316 = vunpack.c.l.b16 %v218
      %v317 = vunpack.c.l.b16 %v219
      %v318 = vpack.c.b16 %v271, %v270
      %v319 = vpack.c.b16 %v273, %v272
      %v320 = vpack.c.b16 %v275, %v274
      %v321 = vpack.c.b16 %v277, %v276
      %v322 = vpack.c.b16 %v279, %v278
      %v323 = vpack.c.b16 %v281, %v280
      %v324 = vpack.c.b16 %v283, %v282
      %v325 = vpack.c.b16 %v285, %v284
      %v326 = vpack.c.b16 %v287, %v286
      %v327 = vpack.c.b16 %v289, %v288
      %v328 = vpack.c.b16 %v291, %v290
      %v329 = vpack.c.b16 %v293, %v292
      %v330 = vpack.c.b16 %v295, %v294
      %v331 = vpack.c.b16 %v297, %v296
      %v332 = vpack.c.b16 %v299, %v298
      %v333 = vpack.c.b16 %v301, %v300
      %v334 = vpack.c.b16 %v303, %v302
      %v335 = vpack.c.b16 %v305, %v304
      %v336 = vpack.c.b16 %v307, %v306
      %v337 = vpack.c.b16 %v309, %v308
      %v338 = vpack.c.b16 %v311, %v310
      %v339 = vpack.c.b16 %v313, %v312
      %v340 = vpack.c.b16 %v315, %v314
      %v341 = vpack.c.b16 %v317, %v316
      %v343 = vunpack.c.l.b16 %v220
      %v344 = vpack.c.b16 %v343, %v343
      %vm345 = vsmask.f32 7424
      %v347 = vshrl.u32 %v318, 16
      %v349 = vshll.u32 %v318, 16
      %v351 = vrot.slane %v349, 1
      %v352 = vor.u32 %v347, %v351
      %v354 = vshll.u32 %v319, 16
      %v356 = vrot.slane %v354, 1
      %v357 = vsel %vm345, %v352, %v356
      %v358 = vshrl.u32 %v319, 16
      %v360 = vor.u32 %v358, %v356
      %v362 = vshll.u32 %v320, 16
      %v364 = vrot.slane %v362, 1
      %v365 = vsel %vm345, %v360, %v364
      %v366 = vshrl.u32 %v320, 16
      %v368 = vor.u32 %v366, %v364
      %v370 = vshll.u32 %v321, 16
      %v372 = vrot.slane %v370, 1
      %v373 = vsel %vm345, %v368, %v372
      %v374 = vshrl.u32 %v321, 16
      %v376 = vor.u32 %v374, %v372
      %v378 = vshll.u32 %v322, 16
      %v380 = vrot.slane %v378, 1
      %v381 = vsel %vm345, %v376, %v380
      %v382 = vshrl.u32 %v322, 16
      %v384 = vor.u32 %v382, %v380
      %v386 = vshll.u32 %v323, 16
      %v388 = vrot.slane %v386, 1
      %v389 = vsel %vm345, %v384, %v388
      %v390 = vshrl.u32 %v323, 16
      %v392 = vor.u32 %v390, %v388
      %v394 = vshll.u32 %v324, 16
      %v396 = vrot.slane %v394, 1
      %v397 = vsel %vm345, %v392, %v396
      %v398 = vshrl.u32 %v324, 16
      %v400 = vor.u32 %v398, %v396
      %v402 = vshll.u32 %v325, 16
      %v404 = vrot.slane %v402, 1
      %v405 = vsel %vm345, %v400, %v404
      %v406 = vshrl.u32 %v325, 16
      %v408 = vor.u32 %v406, %v404
      %v410 = vshll.u32 %v326, 16
      %v412 = vrot.slane %v410, 1
      %v413 = vsel %vm345, %v408, %v412
      %v414 = vshrl.u32 %v326, 16
      %v416 = vor.u32 %v414, %v412
      %v418 = vshll.u32 %v327, 16
      %v420 = vrot.slane %v418, 1
      %v421 = vsel %vm345, %v416, %v420
      %v422 = vshrl.u32 %v327, 16
      %v424 = vor.u32 %v422, %v420
      %v426 = vshll.u32 %v328, 16
      %v428 = vrot.slane %v426, 1
      %v429 = vsel %vm345, %v424, %v428
      %v430 = vshrl.u32 %v328, 16
      %v432 = vor.u32 %v430, %v428
      %v434 = vshll.u32 %v329, 16
      %v436 = vrot.slane %v434, 1
      %v437 = vsel %vm345, %v432, %v436
      %v438 = vshrl.u32 %v329, 16
      %v440 = vor.u32 %v438, %v436
      %v442 = vshll.u32 %v330, 16
      %v444 = vrot.slane %v442, 1
      %v445 = vsel %vm345, %v440, %v444
      %v446 = vshrl.u32 %v330, 16
      %v448 = vor.u32 %v446, %v444
      %v450 = vshll.u32 %v331, 16
      %v452 = vrot.slane %v450, 1
      %v453 = vsel %vm345, %v448, %v452
      %v454 = vshrl.u32 %v331, 16
      %v456 = vor.u32 %v454, %v452
      %v458 = vshll.u32 %v332, 16
      %v460 = vrot.slane %v458, 1
      %v461 = vsel %vm345, %v456, %v460
      %v462 = vshrl.u32 %v332, 16
      %v464 = vor.u32 %v462, %v460
      %v466 = vshll.u32 %v333, 16
      %v468 = vrot.slane %v466, 1
      %v469 = vsel %vm345, %v464, %v468
      %v470 = vshrl.u32 %v333, 16
      %v472 = vor.u32 %v470, %v468
      %v474 = vshll.u32 %v334, 16
      %v476 = vrot.slane %v474, 1
      %v477 = vsel %vm345, %v472, %v476
      %v478 = vshrl.u32 %v334, 16
      %v480 = vor.u32 %v478, %v476
      %v482 = vshll.u32 %v335, 16
      %v484 = vrot.slane %v482, 1
      %v485 = vsel %vm345, %v480, %v484
      %v486 = vshrl.u32 %v335, 16
      %v488 = vor.u32 %v486, %v484
      %v490 = vshll.u32 %v336, 16
      %v492 = vrot.slane %v490, 1
      %v493 = vsel %vm345, %v488, %v492
      %v494 = vshrl.u32 %v336, 16
      %v496 = vor.u32 %v494, %v492
      %v498 = vshll.u32 %v337, 16
      %v500 = vrot.slane %v498, 1
      %v501 = vsel %vm345, %v496, %v500
      %v502 = vshrl.u32 %v337, 16
      %v504 = vor.u32 %v502, %v500
      %v506 = vshll.u32 %v338, 16
      %v508 = vrot.slane %v506, 1
      %v509 = vsel %vm345, %v504, %v508
      %v510 = vshrl.u32 %v338, 16
      %v512 = vor.u32 %v510, %v508
      %v514 = vshll.u32 %v339, 16
      %v516 = vrot.slane %v514, 1
      %v517 = vsel %vm345, %v512, %v516
      %v518 = vshrl.u32 %v339, 16
      %v520 = vor.u32 %v518, %v516
      %v522 = vshll.u32 %v340, 16
      %v524 = vrot.slane %v522, 1
      %v525 = vsel %vm345, %v520, %v524
      %v526 = vshrl.u32 %v340, 16
      %v528 = vor.u32 %v526, %v524
      %v530 = vshll.u32 %v341, 16
      %v532 = vrot.slane %v530, 1
      %v533 = vsel %vm345, %v528, %v532
      %v534 = vshrl.u32 %v341, 16
      %v536 = vor.u32 %v534, %v532
      %v538 = vshll.u32 %v344, 16
      %v540 = vrot.slane %v538, 1
      %v541 = vsel %vm345, %v536, %v540
      %542 = vrot.lane.b32.xlu0 %v357, 64
      %v543 = vpop.permute.xlu0 %542
      %544 = vrot.lane.b32.xlu0 %v365, 64
      %v545 = vpop.permute.xlu0 %544
      %546 = vrot.lane.b32.xlu0 %v373, 64
      %v547 = vpop.permute.xlu0 %546
      %548 = vrot.lane.b32.xlu0 %v381, 64
      %v549 = vpop.permute.xlu0 %548
      %550 = vrot.lane.b32.xlu0 %v389, 64
      %v551 = vpop.permute.xlu0 %550
      %552 = vrot.lane.b32.xlu0 %v397, 64
      %v553 = vpop.permute.xlu0 %552
      %554 = vrot.lane.b32.xlu0 %v405, 64
      %v555 = vpop.permute.xlu0 %554
      %556 = vrot.lane.b32.xlu0 %v413, 64
      %v557 = vpop.permute.xlu0 %556
      %558 = vrot.lane.b32.xlu0 %v421, 64
      %v559 = vpop.permute.xlu0 %558
      %560 = vrot.lane.b32.xlu0 %v429, 64
      %v561 = vpop.permute.xlu0 %560
      %562 = vrot.lane.b32.xlu0 %v437, 64
      %v563 = vpop.permute.xlu0 %562
      %564 = vrot.lane.b32.xlu0 %v445, 64
      %v565 = vpop.permute.xlu0 %564
      %566 = vrot.lane.b32.xlu0 %v453, 64
      %v567 = vpop.permute.xlu0 %566
      %568 = vrot.lane.b32.xlu0 %v461, 64
      %v569 = vpop.permute.xlu0 %568
      %570 = vrot.lane.b32.xlu0 %v469, 64
      %v571 = vpop.permute.xlu0 %570
      %572 = vrot.lane.b32.xlu0 %v477, 64
      %v573 = vpop.permute.xlu0 %572
      %574 = vrot.lane.b32.xlu0 %v485, 64
      %v575 = vpop.permute.xlu0 %574
      %576 = vrot.lane.b32.xlu0 %v493, 64
      %v577 = vpop.permute.xlu0 %576
      %578 = vrot.lane.b32.xlu0 %v501, 64
      %v579 = vpop.permute.xlu0 %578
      %580 = vrot.lane.b32.xlu0 %v509, 64
      %v581 = vpop.permute.xlu0 %580
      %582 = vrot.lane.b32.xlu0 %v517, 64
      %v583 = vpop.permute.xlu0 %582
      %584 = vrot.lane.b32.xlu0 %v525, 64
      %v585 = vpop.permute.xlu0 %584
      %586 = vrot.lane.b32.xlu0 %v533, 64
      %v587 = vpop.permute.xlu0 %586
      %588 = vrot.lane.b32.xlu0 %v541, 64
      %v589 = vpop.permute.xlu0 %588
      %v591 = vunpack.c.l.b16 %v221
      %v592 = vpack.c.b16 %v271, %v591
      %vm593 = vcmask 1046528
      %v594 = vrot.slane %v592, 1
      %v595 = vrot.slane %v319, 1
      %v596 = vsel %vm593, %v594, %v595
      %v597 = vrot.slane %v320, 1
      %v598 = vsel %vm593, %v595, %v597
      %v599 = vrot.slane %v321, 1
      %v600 = vsel %vm593, %v597, %v599
      %v601 = vrot.slane %v322, 1
      %v602 = vsel %vm593, %v599, %v601
      %v603 = vrot.slane %v323, 1
      %v604 = vsel %vm593, %v601, %v603
      %v605 = vrot.slane %v324, 1
      %v606 = vsel %vm593, %v603, %v605
      %v607 = vrot.slane %v325, 1
      %v608 = vsel %vm593, %v605, %v607
      %v609 = vrot.slane %v326, 1
      %v610 = vsel %vm593, %v607, %v609
      %v611 = vrot.slane %v327, 1
      %v612 = vsel %vm593, %v609, %v611
      %v613 = vrot.slane %v328, 1
      %v614 = vsel %vm593, %v611, %v613
      %v615 = vrot.slane %v329, 1
      %v616 = vsel %vm593, %v613, %v615
      %v617 = vrot.slane %v330, 1
      %v618 = vsel %vm593, %v615, %v617
      %v619 = vrot.slane %v331, 1
      %v620 = vsel %vm593, %v617, %v619
      %v621 = vrot.slane %v332, 1
      %v622 = vsel %vm593, %v619, %v621
      %v623 = vrot.slane %v333, 1
      %v624 = vsel %vm593, %v621, %v623
      %v625 = vrot.slane %v334, 1
      %v626 = vsel %vm593, %v623, %v625
      %v627 = vrot.slane %v335, 1
      %v628 = vsel %vm593, %v625, %v627
      %v629 = vrot.slane %v336, 1
      %v630 = vsel %vm593, %v627, %v629
      %v631 = vrot.slane %v337, 1
      %v632 = vsel %vm593, %v629, %v631
      %v633 = vrot.slane %v338, 1
      %v634 = vsel %vm593, %v631, %v633
      %v635 = vrot.slane %v339, 1
      %v636 = vsel %vm593, %v633, %v635
      %v637 = vrot.slane %v340, 1
      %v638 = vsel %vm593, %v635, %v637
      %v639 = vrot.slane %v341, 1
      %v640 = vsel %vm593, %v637, %v639
      %v641 = vrot.slane %v344, 1
      %v642 = vsel %vm593, %v639, %v641
      %vm643 = vcmask 523264
      %v645 = vsel %vm643, %v318, %v543
      %v648 = vsel %vm643, %v319, %v545
      %v651 = vsel %vm643, %v320, %v547
      %v654 = vsel %vm643, %v321, %v549
      %v657 = vsel %vm643, %v322, %v551
      %v660 = vsel %vm643, %v323, %v553
      %v663 = vsel %vm643, %v324, %v555
      %v666 = vsel %vm643, %v325, %v557
      %v669 = vsel %vm643, %v326, %v559
      %v672 = vsel %vm643, %v327, %v561
      %v675 = vsel %vm643, %v328, %v563
      %v678 = vsel %vm643, %v329, %v565
      %v681 = vsel %vm643, %v330, %v567
      %v684 = vsel %vm643, %v331, %v569
      %v687 = vsel %vm643, %v332, %v571
      %v690 = vsel %vm643, %v333, %v573
      %v693 = vsel %vm643, %v334, %v575
      %v696 = vsel %vm643, %v335, %v577
      %v699 = vsel %vm643, %v336, %v579
      %v702 = vsel %vm643, %v337, %v581
      %v705 = vsel %vm643, %v338, %v583
      %v708 = vsel %vm643, %v339, %v585
      %v711 = vsel %vm643, %v340, %v587
      %v714 = vsel %vm643, %v341, %v589
      %v716 = vld [vmem:[%s1] sm:$0xf]
      %v717 = vld [vmem:[%s1 + $0x4] sm:$0xf]
      %v718 = vld [vmem:[%s1 + $0x8] sm:$0xf]
      %v719 = vld [vmem:[%s1 + $0xc] sm:$0xf]
      %v720 = vld [vmem:[%s1 + $0x10] sm:$0xf]
      %v721 = vld [vmem:[%s1 + $0x14] sm:$0xf]
      %v722 = vld [vmem:[%s1 + $0x18] sm:$0xf]
      %v723 = vld [vmem:[%s1 + $0x1c] sm:$0xf]
      %v724 = vld [vmem:[%s1 + $0x20] sm:$0xf]
      %v725 = vld [vmem:[%s1 + $0x24] sm:$0xf]
      %v726 = vld [vmem:[%s1 + $0x28] sm:$0xf]
      %v727 = vld [vmem:[%s1 + $0x2c] sm:$0xf]
      %v728 = vld [vmem:[%s1 + $0x30] sm:$0xf]
      %v729 = vld [vmem:[%s1 + $0x34] sm:$0xf]
      %v730 = vld [vmem:[%s1 + $0x38] sm:$0xf]
      %v731 = vld [vmem:[%s1 + $0x3c] sm:$0xf]
      %v732 = vld [vmem:[%s1 + $0x40] sm:$0xf]
      %v733 = vld [vmem:[%s1 + $0x44] sm:$0xf]
      %v734 = vld [vmem:[%s1 + $0x48] sm:$0xf]
      %v735 = vld [vmem:[%s1 + $0x4c] sm:$0xf]
      %v736 = vld [vmem:[%s1 + $0x50] sm:$0xf]
      %v737 = vld [vmem:[%s1 + $0x54] sm:$0xf]
      %v738 = vld [vmem:[%s1 + $0x58] sm:$0xf]
      %v739 = vld [vmem:[%s1 + $0x5c] sm:$0xf]
      %v740 = vld [vmem:[%s165 + $0xc0] sm:$0xf]
      %v741 = vld [vmem:[%s165 + $0xc4] sm:$0xf]
      %v742 = vld [vmem:[%s165 + $0xc8] sm:$0xf]
      %v743 = vld [vmem:[%s165 + $0xcc] sm:$0x1]
      %v744 = vld [vmem:[%s165 + $0xc] sm:$0xe]
      %v748 = vunpack.c.l.b16 %v740
      %v749 = vunpack.c.l.b16 %v741
      %v750 = vunpack.c.l.b16 %v742
      %v751 = vpack.c.b16 %v274, %v273
      %v752 = vpack.c.b16 %v276, %v275
      %v753 = vpack.c.b16 %v278, %v277
      %v754 = vpack.c.b16 %v280, %v279
      %v755 = vpack.c.b16 %v282, %v281
      %v756 = vpack.c.b16 %v284, %v283
      %v757 = vpack.c.b16 %v286, %v285
      %v758 = vpack.c.b16 %v288, %v287
      %v759 = vpack.c.b16 %v290, %v289
      %v760 = vpack.c.b16 %v292, %v291
      %v761 = vpack.c.b16 %v294, %v293
      %v762 = vpack.c.b16 %v296, %v295
      %v763 = vpack.c.b16 %v298, %v297
      %v764 = vpack.c.b16 %v300, %v299
      %v765 = vpack.c.b16 %v302, %v301
      %v766 = vpack.c.b16 %v304, %v303
      %v767 = vpack.c.b16 %v306, %v305
      %v768 = vpack.c.b16 %v308, %v307
      %v769 = vpack.c.b16 %v310, %v309
      %v770 = vpack.c.b16 %v312, %v311
      %v771 = vpack.c.b16 %v314, %v313
      %v772 = vpack.c.b16 %v316, %v315
      %v773 = vpack.c.b16 %v748, %v317
      %v774 = vpack.c.b16 %v750, %v749
      %v776 = vunpack.c.l.b16 %v743
      %v777 = vpack.c.b16 %v776, %v776
      %v779 = vshrl.u32 %v751, 16
      %v781 = vshll.u32 %v751, 16
      %v783 = vrot.slane %v781, 1
      %v784 = vor.u32 %v779, %v783
      %v786 = vshll.u32 %v752, 16
      %v788 = vrot.slane %v786, 1
      %v789 = vsel %vm345, %v784, %v788
      %v790 = vshrl.u32 %v752, 16
      %v792 = vor.u32 %v790, %v788
      %v794 = vshll.u32 %v753, 16
      %v796 = vrot.slane %v794, 1
      %v797 = vsel %vm345, %v792, %v796
      %v798 = vshrl.u32 %v753, 16
      %v800 = vor.u32 %v798, %v796
      %v802 = vshll.u32 %v754, 16
      %v804 = vrot.slane %v802, 1
      %v805 = vsel %vm345, %v800, %v804
      %v806 = vshrl.u32 %v754, 16
      %v808 = vor.u32 %v806, %v804
      %v810 = vshll.u32 %v755, 16
      %v812 = vrot.slane %v810, 1
      %v813 = vsel %vm345, %v808, %v812
      %v814 = vshrl.u32 %v755, 16
      %v816 = vor.u32 %v814, %v812
      %v818 = vshll.u32 %v756, 16
      %v820 = vrot.slane %v818, 1
      %v821 = vsel %vm345, %v816, %v820
      %v822 = vshrl.u32 %v756, 16
      %v824 = vor.u32 %v822, %v820
      %v826 = vshll.u32 %v757, 16
      %v828 = vrot.slane %v826, 1
      %v829 = vsel %vm345, %v824, %v828
      %v830 = vshrl.u32 %v757, 16
      %v832 = vor.u32 %v830, %v828
      %v834 = vshll.u32 %v758, 16
      %v836 = vrot.slane %v834, 1
      %v837 = vsel %vm345, %v832, %v836
      %v838 = vshrl.u32 %v758, 16
      %v840 = vor.u32 %v838, %v836
      %v842 = vshll.u32 %v759, 16
      %v844 = vrot.slane %v842, 1
      %v845 = vsel %vm345, %v840, %v844
      %v846 = vshrl.u32 %v759, 16
      %v848 = vor.u32 %v846, %v844
      %v850 = vshll.u32 %v760, 16
      %v852 = vrot.slane %v850, 1
      %v853 = vsel %vm345, %v848, %v852
      %v854 = vshrl.u32 %v760, 16
      %v856 = vor.u32 %v854, %v852
      %v858 = vshll.u32 %v761, 16
      %v860 = vrot.slane %v858, 1
      %v861 = vsel %vm345, %v856, %v860
      %v862 = vshrl.u32 %v761, 16
      %v864 = vor.u32 %v862, %v860
      %v866 = vshll.u32 %v762, 16
      %v868 = vrot.slane %v866, 1
      %v869 = vsel %vm345, %v864, %v868
      %v870 = vshrl.u32 %v762, 16
      %v872 = vor.u32 %v870, %v868
      %v874 = vshll.u32 %v763, 16
      %v876 = vrot.slane %v874, 1
      %v877 = vsel %vm345, %v872, %v876
      %v878 = vshrl.u32 %v763, 16
      %v880 = vor.u32 %v878, %v876
      %v882 = vshll.u32 %v764, 16
      %v884 = vrot.slane %v882, 1
      %v885 = vsel %vm345, %v880, %v884
      %v886 = vshrl.u32 %v764, 16
      %v888 = vor.u32 %v886, %v884
      %v890 = vshll.u32 %v765, 16
      %v892 = vrot.slane %v890, 1
      %v893 = vsel %vm345, %v888, %v892
      %v894 = vshrl.u32 %v765, 16
      %v896 = vor.u32 %v894, %v892
      %v898 = vshll.u32 %v766, 16
      %v900 = vrot.slane %v898, 1
      %v901 = vsel %vm345, %v896, %v900
      %v902 = vshrl.u32 %v766, 16
      %v904 = vor.u32 %v902, %v900
      %v906 = vshll.u32 %v767, 16
      %v908 = vrot.slane %v906, 1
      %v909 = vsel %vm345, %v904, %v908
      %v910 = vshrl.u32 %v767, 16
      %v912 = vor.u32 %v910, %v908
      %v914 = vshll.u32 %v768, 16
      %v916 = vrot.slane %v914, 1
      %v917 = vsel %vm345, %v912, %v916
      %v918 = vshrl.u32 %v768, 16
      %v920 = vor.u32 %v918, %v916
      %v922 = vshll.u32 %v769, 16
      %v924 = vrot.slane %v922, 1
      %v925 = vsel %vm345, %v920, %v924
      %v926 = vshrl.u32 %v769, 16
      %v928 = vor.u32 %v926, %v924
      %v930 = vshll.u32 %v770, 16
      %v932 = vrot.slane %v930, 1
      %v933 = vsel %vm345, %v928, %v932
      %v934 = vshrl.u32 %v770, 16
      %v936 = vor.u32 %v934, %v932
      %v938 = vshll.u32 %v771, 16
      %v940 = vrot.slane %v938, 1
      %v941 = vsel %vm345, %v936, %v940
      %v942 = vshrl.u32 %v771, 16
      %v944 = vor.u32 %v942, %v940
      %v946 = vshll.u32 %v772, 16
      %v948 = vrot.slane %v946, 1
      %v949 = vsel %vm345, %v944, %v948
      %v950 = vshrl.u32 %v772, 16
      %v952 = vor.u32 %v950, %v948
      %v954 = vshll.u32 %v773, 16
      %v956 = vrot.slane %v954, 1
      %v957 = vsel %vm345, %v952, %v956
      %v958 = vshrl.u32 %v773, 16
      %v960 = vor.u32 %v958, %v956
      %v962 = vshll.u32 %v774, 16
      %v964 = vrot.slane %v962, 1
      %v965 = vsel %vm345, %v960, %v964
      %v966 = vshrl.u32 %v774, 16
      %v968 = vor.u32 %v966, %v964
      %v970 = vshll.u32 %v777, 16
      %v972 = vrot.slane %v970, 1
      %v973 = vsel %vm345, %v968, %v972
      %974 = vrot.lane.b32.xlu0 %v789, 64
      %v975 = vpop.permute.xlu0 %974
      %976 = vrot.lane.b32.xlu0 %v797, 64
      %v977 = vpop.permute.xlu0 %976
      %978 = vrot.lane.b32.xlu0 %v805, 64
      %v979 = vpop.permute.xlu0 %978
      %980 = vrot.lane.b32.xlu0 %v813, 64
      %v981 = vpop.permute.xlu0 %980
      %982 = vrot.lane.b32.xlu0 %v821, 64
      %v983 = vpop.permute.xlu0 %982
      %984 = vrot.lane.b32.xlu0 %v829, 64
      %v985 = vpop.permute.xlu0 %984
      %986 = vrot.lane.b32.xlu0 %v837, 64
      %v987 = vpop.permute.xlu0 %986
      %988 = vrot.lane.b32.xlu0 %v845, 64
      %v989 = vpop.permute.xlu0 %988
      %990 = vrot.lane.b32.xlu0 %v853, 64
      %v991 = vpop.permute.xlu0 %990
      %992 = vrot.lane.b32.xlu0 %v861, 64
      %v993 = vpop.permute.xlu0 %992
      %994 = vrot.lane.b32.xlu0 %v869, 64
      %v995 = vpop.permute.xlu0 %994
      %996 = vrot.lane.b32.xlu0 %v877, 64
      %v997 = vpop.permute.xlu0 %996
      %998 = vrot.lane.b32.xlu0 %v885, 64
      %v999 = vpop.permute.xlu0 %998
      %1000 = vrot.lane.b32.xlu0 %v893, 64
      %v1001 = vpop.permute.xlu0 %1000
      %1002 = vrot.lane.b32.xlu0 %v901, 64
      %v1003 = vpop.permute.xlu0 %1002
      %1004 = vrot.lane.b32.xlu0 %v909, 64
      %v1005 = vpop.permute.xlu0 %1004
      %1006 = vrot.lane.b32.xlu0 %v917, 64
      %v1007 = vpop.permute.xlu0 %1006
      %1008 = vrot.lane.b32.xlu0 %v925, 64
      %v1009 = vpop.permute.xlu0 %1008
      %1010 = vrot.lane.b32.xlu0 %v933, 64
      %v1011 = vpop.permute.xlu0 %1010
      %1012 = vrot.lane.b32.xlu0 %v941, 64
      %v1013 = vpop.permute.xlu0 %1012
      %1014 = vrot.lane.b32.xlu0 %v949, 64
      %v1015 = vpop.permute.xlu0 %1014
      %1016 = vrot.lane.b32.xlu0 %v957, 64
      %v1017 = vpop.permute.xlu0 %1016
      %1018 = vrot.lane.b32.xlu0 %v965, 64
      %v1019 = vpop.permute.xlu0 %1018
      %1020 = vrot.lane.b32.xlu0 %v973, 64
      %v1021 = vpop.permute.xlu0 %1020
      %v1023 = vunpack.c.l.b16 %v744
      %v1024 = vpack.c.b16 %v274, %v1023
      %v1025 = vrot.slane %v1024, 1
      %v1026 = vrot.slane %v752, 1
      %v1027 = vsel %vm593, %v1025, %v1026
      %v1028 = vrot.slane %v753, 1
      %v1029 = vsel %vm593, %v1026, %v1028
      %v1030 = vrot.slane %v754, 1
      %v1031 = vsel %vm593, %v1028, %v1030
      %v1032 = vrot.slane %v755, 1
      %v1033 = vsel %vm593, %v1030, %v1032
      %v1034 = vrot.slane %v756, 1
      %v1035 = vsel %vm593, %v1032, %v1034
      %v1036 = vrot.slane %v757, 1
      %v1037 = vsel %vm593, %v1034, %v1036
      %v1038 = vrot.slane %v758, 1
      %v1039 = vsel %vm593, %v1036, %v1038
      %v1040 = vrot.slane %v759, 1
      %v1041 = vsel %vm593, %v1038, %v1040
      %v1042 = vrot.slane %v760, 1
      %v1043 = vsel %vm593, %v1040, %v1042
      %v1044 = vrot.slane %v761, 1
      %v1045 = vsel %vm593, %v1042, %v1044
      %v1046 = vrot.slane %v762, 1
      %v1047 = vsel %vm593, %v1044, %v1046
      %v1048 = vrot.slane %v763, 1
      %v1049 = vsel %vm593, %v1046, %v1048
      %v1050 = vrot.slane %v764, 1
      %v1051 = vsel %vm593, %v1048, %v1050
      %v1052 = vrot.slane %v765, 1
      %v1053 = vsel %vm593, %v1050, %v1052
      %v1054 = vrot.slane %v766, 1
      %v1055 = vsel %vm593, %v1052, %v1054
      %v1056 = vrot.slane %v767, 1
      %v1057 = vsel %vm593, %v1054, %v1056
      %v1058 = vrot.slane %v768, 1
      %v1059 = vsel %vm593, %v1056, %v1058
      %v1060 = vrot.slane %v769, 1
      %v1061 = vsel %vm593, %v1058, %v1060
      %v1062 = vrot.slane %v770, 1
      %v1063 = vsel %vm593, %v1060, %v1062
      %v1064 = vrot.slane %v771, 1
      %v1065 = vsel %vm593, %v1062, %v1064
      %v1066 = vrot.slane %v772, 1
      %v1067 = vsel %vm593, %v1064, %v1066
      %v1068 = vrot.slane %v773, 1
      %v1069 = vsel %vm593, %v1066, %v1068
      %v1070 = vrot.slane %v774, 1
      %v1071 = vsel %vm593, %v1068, %v1070
      %v1072 = vrot.slane %v777, 1
      %v1073 = vsel %vm593, %v1070, %v1072
      %v1075 = vsel %vm643, %v751, %v975
      %v1078 = vsel %vm643, %v752, %v977
      %v1081 = vsel %vm643, %v753, %v979
      %v1084 = vsel %vm643, %v754, %v981
      %v1087 = vsel %vm643, %v755, %v983
      %v1090 = vsel %vm643, %v756, %v985
      %v1093 = vsel %vm643, %v757, %v987
      %v1096 = vsel %vm643, %v758, %v989
      %v1099 = vsel %vm643, %v759, %v991
      %v1102 = vsel %vm643, %v760, %v993
      %v1105 = vsel %vm643, %v761, %v995
      %v1108 = vsel %vm643, %v762, %v997
      %v1111 = vsel %vm643, %v763, %v999
      %v1114 = vsel %vm643, %v764, %v1001
      %v1117 = vsel %vm643, %v765, %v1003
      %v1120 = vsel %vm643, %v766, %v1005
      %v1123 = vsel %vm643, %v767, %v1007
      %v1126 = vsel %vm643, %v768, %v1009
      %v1129 = vsel %vm643, %v769, %v1011
      %v1132 = vsel %vm643, %v770, %v1013
      %v1135 = vsel %vm643, %v771, %v1015
      %v1138 = vsel %vm643, %v772, %v1017
      %v1141 = vsel %vm643, %v773, %v1019
      %v1144 = vsel %vm643, %v774, %v1021
      %s1146 = scalar_lea.vmem %s1, 96
      %v1147 = vld [vmem:[%s1146] sm:$0xf]
      %v1148 = vld [vmem:[%s1146 + $0x4] sm:$0xf]
      %v1149 = vld [vmem:[%s1146 + $0x8] sm:$0xf]
      %v1150 = vld [vmem:[%s1146 + $0xc] sm:$0xf]
      %v1151 = vld [vmem:[%s1146 + $0x10] sm:$0xf]
      %v1152 = vld [vmem:[%s1146 + $0x14] sm:$0xf]
      %v1153 = vld [vmem:[%s1146 + $0x18] sm:$0xf]
      %v1154 = vld [vmem:[%s1146 + $0x1c] sm:$0xf]
      %v1155 = vld [vmem:[%s1146 + $0x20] sm:$0xf]
      %v1156 = vld [vmem:[%s1146 + $0x24] sm:$0xf]
      %v1157 = vld [vmem:[%s1146 + $0x28] sm:$0xf]
      %v1158 = vld [vmem:[%s1146 + $0x2c] sm:$0xf]
      %v1159 = vld [vmem:[%s1146 + $0x30] sm:$0xf]
      %v1160 = vld [vmem:[%s1146 + $0x34] sm:$0xf]
      %v1161 = vld [vmem:[%s1146 + $0x38] sm:$0xf]
      %v1162 = vld [vmem:[%s1146 + $0x3c] sm:$0xf]
      %v1163 = vld [vmem:[%s1146 + $0x40] sm:$0xf]
      %v1164 = vld [vmem:[%s1146 + $0x44] sm:$0xf]
      %v1165 = vld [vmem:[%s1146 + $0x48] sm:$0xf]
      %v1166 = vld [vmem:[%s1146 + $0x4c] sm:$0xf]
      %v1167 = vld [vmem:[%s1146 + $0x50] sm:$0xf]
      %v1168 = vld [vmem:[%s1146 + $0x54] sm:$0xf]
      %v1169 = vld [vmem:[%s1146 + $0x58] sm:$0xf]
      %v1170 = vld [vmem:[%s1146 + $0x5c] sm:$0xf]
      %v1195 = vunpack.c.l.b16 %v1147
      %v1196 = vunpack.c.l.b16 %v1148
      %v1197 = vunpack.c.l.b16 %v1149
      %v1198 = vunpack.c.l.b16 %v1150
      %v1199 = vunpack.c.l.b16 %v1151
      %v1200 = vunpack.c.l.b16 %v1152
      %v1201 = vunpack.c.l.b16 %v1153
      %v1202 = vunpack.c.l.b16 %v1154
      %v1203 = vunpack.c.l.b16 %v1155
      %v1204 = vunpack.c.l.b16 %v1156
      %v1205 = vunpack.c.l.b16 %v1157
      %v1206 = vunpack.c.l.b16 %v1158
      %v1207 = vunpack.c.l.b16 %v1159
      %v1208 = vunpack.c.l.b16 %v1160
      %v1209 = vunpack.c.l.b16 %v1161
      %v1210 = vunpack.c.l.b16 %v1162
      %v1211 = vunpack.c.l.b16 %v1163
      %v1212 = vunpack.c.l.b16 %v1164
      %v1213 = vunpack.c.l.b16 %v1165
      %v1214 = vunpack.c.l.b16 %v1166
      %v1215 = vunpack.c.l.b16 %v1167
      %v1216 = vunpack.c.l.b16 %v1168
      %v1217 = vunpack.c.l.b16 %v1169
      %v1218 = vunpack.c.l.b16 %v1170
      %v1219 = vpack.c.b16 %v1196, %v1195
      %v1220 = vpack.c.b16 %v1198, %v1197
      %v1221 = vpack.c.b16 %v1200, %v1199
      %v1222 = vpack.c.b16 %v1202, %v1201
      %v1223 = vpack.c.b16 %v1204, %v1203
      %v1224 = vpack.c.b16 %v1206, %v1205
      %v1225 = vpack.c.b16 %v1208, %v1207
      %v1226 = vpack.c.b16 %v1210, %v1209
      %v1227 = vpack.c.b16 %v1212, %v1211
      %v1228 = vpack.c.b16 %v1214, %v1213
      %v1229 = vpack.c.b16 %v1216, %v1215
      %v1230 = vpack.c.b16 %v1218, %v1217
      %v1244 = vsel %vm643, %v1027, 0
      %v1247 = vsel %vm643, %v1029, 0
      %v1250 = vsel %vm643, %v1031, 0
      %v1253 = vsel %vm643, %v1033, 0
      %v1256 = vsel %vm643, %v1035, 0
      %v1259 = vsel %vm643, %v1037, 0
      %v1262 = vsel %vm643, %v1039, 0
      %v1265 = vsel %vm643, %v1041, 0
      %v1268 = vsel %vm643, %v1043, 0
      %v1271 = vsel %vm643, %v1045, 0
      %v1274 = vsel %vm643, %v1047, 0
      %v1277 = vsel %vm643, %v1049, 0
      %v1280 = vsel %vm643, %v1051, 0
      %v1283 = vsel %vm643, %v1053, 0
      %v1286 = vsel %vm643, %v1055, 0
      %v1289 = vsel %vm643, %v1057, 0
      %v1292 = vsel %vm643, %v1059, 0
      %v1295 = vsel %vm643, %v1061, 0
      %v1298 = vsel %vm643, %v1063, 0
      %v1301 = vsel %vm643, %v1065, 0
      %v1304 = vsel %vm643, %v1067, 0
      %v1307 = vsel %vm643, %v1069, 0
      %v1310 = vsel %vm643, %v1071, 0
      %v1313 = vsel %vm643, %v1073, 0
      %1315 = vmatprep.subr.bf16.mxu0 0
      %1316 = vmatpush1.bf16.msra.mxu0 %v1219
      %1317 = vmatprep.subr.bf16.mxu0 0
      %1318 = vmatpush1.bf16.msra.mxu0 %v1220
      %1319 = vmatprep.subr.bf16.mxu0 0
      %1320 = vmatpush1.bf16.msra.mxu0 %v1221
      %1321 = vmatprep.subr.bf16.mxu0 0
      %1322 = vmatpush1.bf16.msra.mxu0 %v1222
      %1323 = vmatprep.subr.bf16.mxu0 0
      %1324 = vmatpush1.bf16.msra.mxu0 %v1223
      %1325 = vmatprep.subr.bf16.mxu0 0
      %1326 = vmatpush1.bf16.msra.mxu0 %v1224
      %1327 = vmatprep.subr.bf16.mxu0 0
      %1328 = vmatpush1.bf16.msra.mxu0 %v1225
      %1329 = vmatprep.subr.bf16.mxu0 0
      %1330 = vmatpush1.bf16.msra.mxu0 %v1226
      %1331 = vmatprep.subr.bf16.mxu0 0
      %1332 = vmatpush1.bf16.msra.mxu0 %v1227
      %1333 = vmatprep.subr.bf16.mxu0 0
      %1334 = vmatpush1.bf16.msra.mxu0 %v1228
      %1335 = vmatprep.subr.bf16.mxu0 0
      %1336 = vmatpush1.bf16.msra.mxu0 %v1229
      %1337 = vmatprep.subr.bf16.mxu0 0
      %1338 = vmatpush1.bf16.msra.mxu0 %v1230
      %1339 = vmatprep.subr.bf16.mxu0 0
      %1340 = vmatpush1.bf16.msra.mxu0 0
      %1341 = vmatprep.subr.bf16.mxu0 0
      %1342 = vmatpush1.bf16.msra.mxu0 0
      %1343 = vmatprep.subr.bf16.mxu0 0
      %1344 = vmatpush1.bf16.msra.mxu0 0
      %1345 = vmatprep.subr.bf16.mxu0 0
      %1346 = vmatpush1.bf16.msra.mxu0 0
      %1347 = vmatprep.mubr.bf16.mxu0 %v1244
      %1348 = vmatmul.mubr.bf16.gmra.mrb[0].mxu0 %v1075
      %v1349 = vpop.f32.mrb[0].mxu0
      %v1350 = vadd.f32 0.0, %v1349
      %v1351 = vpop.f32.mrb[0].mxu0
      %v1352 = vpop.f32.mrb[0].mxu0
      %v1353 = vadd.f32 0.0, %v1352
      %v1354 = vpop.f32.mrb[0].mxu0
      %1355 = vmatprep.mubr.bf16.mxu0 %v1247
      %1356 = vmatmul.mubr.bf16.gmra.mrb[0].mxu0 %v1078
      %v1357 = vpop.f32.mrb[0].mxu0
      %v1358 = vpop.f32.mrb[0].mxu0
      %v1359 = vpop.f32.mrb[0].mxu0
      %v1360 = vadd.f32 0.0, %v1359
      %v1361 = vpop.f32.mrb[0].mxu0
      %1362 = vmatprep.mubr.bf16.mxu0 %v1250
      %1363 = vmatmul.mubr.bf16.gmra.mrb[0].mxu0 %v1081
      %v1364 = vpop.f32.mrb[0].mxu0
      %v1365 = vadd.f32 0.0, %v1364
      %v1366 = vpop.f32.mrb[0].mxu0
      %v1367 = vpop.f32.mrb[0].mxu0
      %v1368 = vpop.f32.mrb[0].mxu0
      %1369 = vmatprep.mubr.bf16.mxu0 %v1253
      %1370 = vmatmul.mubr.bf16.gmra.mrb[0].mxu0 %v1084
      %v1371 = vpop.f32.mrb[0].mxu0
      %v1372 = vadd.f32 0.0, %v1371
      %v1373 = vpop.f32.mrb[0].mxu0
      %v1374 = vpop.f32.mrb[0].mxu0
      %v1375 = vadd.f32 0.0, %v1374
      %v1376 = vpop.f32.mrb[0].mxu0
      %1377 = vmatprep.mubr.bf16.mxu0 %v1256
      %1378 = vmatmul.mubr.bf16.gmra.mrb[0].mxu0 %v1087
      %v1379 = vpop.f32.mrb[0].mxu0
      %v1380 = vpop.f32.mrb[0].mxu0
      %v1381 = vpop.f32.mrb[0].mxu0
      %v1382 = vadd.f32 0.0, %v1381
      %v1383 = vpop.f32.mrb[0].mxu0
      %1384 = vmatprep.mubr.bf16.mxu0 %v1259
      %1385 = vmatmul.mubr.bf16.gmra.mrb[0].mxu0 %v1090
      %v1386 = vpop.f32.mrb[0].mxu0
      %v1387 = vadd.f32 0.0, %v1386
      %v1388 = vpop.f32.mrb[0].mxu0
      %v1389 = vpop.f32.mrb[0].mxu0
      %v1390 = vpop.f32.mrb[0].mxu0
      %1391 = vmatprep.mubr.bf16.mxu0 %v1262
      %1392 = vmatmul.mubr.bf16.gmra.mrb[0].mxu0 %v1093
      %v1393 = vpop.f32.mrb[0].mxu0
      %v1394 = vadd.f32 0.0, %v1393
      %v1395 = vpop.f32.mrb[0].mxu0
      %v1396 = vpop.f32.mrb[0].mxu0
      %v1397 = vadd.f32 0.0, %v1396
      %v1398 = vpop.f32.mrb[0].mxu0
      %1399 = vmatprep.mubr.bf16.mxu0 %v1265
      %1400 = vmatmul.mubr.bf16.gmra.mrb[0].mxu0 %v1096
      %v1401 = vpop.f32.mrb[0].mxu0
      %v1402 = vpop.f32.mrb[0].mxu0
      %v1403 = vpop.f32.mrb[0].mxu0
      %v1404 = vadd.f32 0.0, %v1403
      %v1405 = vpop.f32.mrb[0].mxu0
      %1406 = vmatprep.mubr.bf16.mxu0 %v1268
      %1407 = vmatmul.mubr.bf16.gmra.mrb[0].mxu0 %v1099
      %v1408 = vpop.f32.mrb[0].mxu0
      %v1409 = vadd.f32 0.0, %v1408
      %v1410 = vpop.f32.mrb[0].mxu0
      %v1411 = vpop.f32.mrb[0].mxu0
      %v1412 = vpop.f32.mrb[0].mxu0
      %1413 = vmatprep.mubr.bf16.mxu0 %v1271
      %1414 = vmatmul.mubr.bf16.gmra.mrb[0].mxu0 %v1102
      %v1415 = vpop.f32.mrb[0].mxu0
      %v1416 = vadd.f32 0.0, %v1415
      %v1417 = vpop.f32.mrb[0].mxu0
      %v1418 = vpop.f32.mrb[0].mxu0
      %v1419 = vadd.f32 0.0, %v1418
      %v1420 = vpop.f32.mrb[0].mxu0
      %1421 = vmatprep.mubr.bf16.mxu0 %v1274
      %1422 = vmatmul.mubr.bf16.gmra.mrb[0].mxu0 %v1105
      %v1423 = vpop.f32.mrb[0].mxu0
      %v1424 = vpop.f32.mrb[0].mxu0
      %v1425 = vpop.f32.mrb[0].mxu0
      %v1426 = vadd.f32 0.0, %v1425
      %v1427 = vpop.f32.mrb[0].mxu0
      %1428 = vmatprep.mubr.bf16.mxu0 %v1277
      %1429 = vmatmul.mubr.bf16.gmra.mrb[0].mxu0 %v1108
      %v1430 = vpop.f32.mrb[0].mxu0
      %v1431 = vadd.f32 0.0, %v1430
      %v1432 = vpop.f32.mrb[0].mxu0
      %v1433 = vpop.f32.mrb[0].mxu0
      %v1434 = vpop.f32.mrb[0].mxu0
      %1435 = vmatprep.mubr.bf16.mxu0 %v1280
      %1436 = vmatmul.mubr.bf16.gmra.mrb[0].mxu0 %v1111
      %v1437 = vpop.f32.mrb[0].mxu0
      %v1438 = vadd.f32 0.0, %v1437
      %v1439 = vpop.f32.mrb[0].mxu0
      %v1440 = vpop.f32.mrb[0].mxu0
      %v1441 = vadd.f32 0.0, %v1440
      %v1442 = vpop.f32.mrb[0].mxu0
      %1443 = vmatprep.mubr.bf16.mxu0 %v1283
      %1444 = vmatmul.mubr.bf16.gmra.mrb[0].mxu0 %v1114
      %v1445 = vpop.f32.mrb[0].mxu0
      %v1446 = vpop.f32.mrb[0].mxu0
      %v1447 = vpop.f32.mrb[0].mxu0
      %v1448 = vadd.f32 0.0, %v1447
      %v1449 = vpop.f32.mrb[0].mxu0
      %1450 = vmatprep.mubr.bf16.mxu0 %v1286
      %1451 = vmatmul.mubr.bf16.gmra.mrb[0].mxu0 %v1117
      %v1452 = vpop.f32.mrb[0].mxu0
      %v1453 = vadd.f32 0.0, %v1452
      %v1454 = vpop.f32.mrb[0].mxu0
      %v1455 = vpop.f32.mrb[0].mxu0
      %v1456 = vpop.f32.mrb[0].mxu0
      %1457 = vmatprep.mubr.bf16.mxu0 %v1289
      %1458 = vmatmul.mubr.bf16.gmra.mrb[0].mxu0 %v1120
      %v1459 = vpop.f32.mrb[0].mxu0
      %v1460 = vadd.f32 0.0, %v1459
      %v1461 = vpop.f32.mrb[0].mxu0
      %v1462 = vpop.f32.mrb[0].mxu0
      %v1463 = vadd.f32 0.0, %v1462
      %v1464 = vpop.f32.mrb[0].mxu0
      %1465 = vmatprep.mubr.bf16.mxu0 %v1292
      %1466 = vmatmul.mubr.bf16.gmra.mrb[0].mxu0 %v1123
      %v1467 = vpop.f32.mrb[0].mxu0
      %v1468 = vpop.f32.mrb[0].mxu0
      %v1469 = vpop.f32.mrb[0].mxu0
      %v1470 = vadd.f32 0.0, %v1469
      %v1471 = vpop.f32.mrb[0].mxu0
      %1472 = vmatprep.mubr.bf16.mxu0 %v1295
      %1473 = vmatmul.mubr.bf16.gmra.mrb[0].mxu0 %v1126
      %v1474 = vpop.f32.mrb[0].mxu0
      %v1475 = vadd.f32 0.0, %v1474
      %v1476 = vpop.f32.mrb[0].mxu0
      %v1477 = vpop.f32.mrb[0].mxu0
      %v1478 = vpop.f32.mrb[0].mxu0
      %1479 = vmatprep.mubr.bf16.mxu0 %v1298
      %1480 = vmatmul.mubr.bf16.gmra.mrb[0].mxu0 %v1129
      %v1481 = vpop.f32.mrb[0].mxu0
      %v1482 = vadd.f32 0.0, %v1481
      %v1483 = vpop.f32.mrb[0].mxu0
      %v1484 = vpop.f32.mrb[0].mxu0
      %v1485 = vadd.f32 0.0, %v1484
      %v1486 = vpop.f32.mrb[0].mxu0
      %1487 = vmatprep.mubr.bf16.mxu0 %v1301
      %1488 = vmatmul.mubr.bf16.gmra.mrb[0].mxu0 %v1132
      %v1489 = vpop.f32.mrb[0].mxu0
      %v1490 = vpop.f32.mrb[0].mxu0
      %v1491 = vpop.f32.mrb[0].mxu0
      %v1492 = vadd.f32 0.0, %v1491
      %v1493 = vpop.f32.mrb[0].mxu0
      %1494 = vmatprep.mubr.bf16.mxu0 %v1304
      %1495 = vmatmul.mubr.bf16.gmra.mrb[0].mxu0 %v1135
      %v1496 = vpop.f32.mrb[0].mxu0
      %v1497 = vadd.f32 0.0, %v1496
      %v1498 = vpop.f32.mrb[0].mxu0
      %v1499 = vpop.f32.mrb[0].mxu0
      %v1500 = vpop.f32.mrb[0].mxu0
      %1501 = vmatprep.mubr.bf16.mxu0 %v1307
      %1502 = vmatmul.mubr.bf16.gmra.mrb[0].mxu0 %v1138
      %v1503 = vpop.f32.mrb[0].mxu0
      %v1504 = vadd.f32 0.0, %v1503
      %v1505 = vpop.f32.mrb[0].mxu0
      %v1506 = vpop.f32.mrb[0].mxu0
      %v1507 = vadd.f32 0.0, %v1506
      %v1508 = vpop.f32.mrb[0].mxu0
      %1509 = vmatprep.mubr.bf16.mxu0 %v1310
      %1510 = vmatmul.mubr.bf16.gmra.mrb[0].mxu0 %v1141
      %v1511 = vpop.f32.mrb[0].mxu0
      %v1512 = vpop.f32.mrb[0].mxu0
      %v1513 = vpop.f32.mrb[0].mxu0
      %v1514 = vadd.f32 0.0, %v1513
      %v1515 = vpop.f32.mrb[0].mxu0
      %1516 = vmatprep.mubr.bf16.mxu0 %v1313
      %1517 = vmatmul.mubr.bf16.gmra.mrb[0].mxu0 %v1144
      %v1518 = vpop.f32.mrb[0].mxu0
      %v1519 = vadd.f32 0.0, %v1518
      %v1520 = vpop.f32.mrb[0].mxu0
      %v1521 = vpop.f32.mrb[0].mxu0
      %v1522 = vpop.f32.mrb[0].mxu0
      %1523 = vdwg.mxu0
      %v1548 = vunpack.c.l.b16 %v716
      %v1549 = vunpack.c.l.b16 %v717
      %v1550 = vunpack.c.l.b16 %v718
      %v1551 = vunpack.c.l.b16 %v719
      %v1552 = vunpack.c.l.b16 %v720
      %v1553 = vunpack.c.l.b16 %v721
      %v1554 = vunpack.c.l.b16 %v722
      %v1555 = vunpack.c.l.b16 %v723
      %v1556 = vunpack.c.l.b16 %v724
      %v1557 = vunpack.c.l.b16 %v725
      %v1558 = vunpack.c.l.b16 %v726
      %v1559 = vunpack.c.l.b16 %v727
      %v1560 = vunpack.c.l.b16 %v728
      %v1561 = vunpack.c.l.b16 %v729
      %v1562 = vunpack.c.l.b16 %v730
      %v1563 = vunpack.c.l.b16 %v731
      %v1564 = vunpack.c.l.b16 %v732
      %v1565 = vunpack.c.l.b16 %v733
      %v1566 = vunpack.c.l.b16 %v734
      %v1567 = vunpack.c.l.b16 %v735
      %v1568 = vunpack.c.l.b16 %v736
      %v1569 = vunpack.c.l.b16 %v737
      %v1570 = vunpack.c.l.b16 %v738
      %v1571 = vunpack.c.l.b16 %v739
      %v1572 = vpack.c.b16 %v1549, %v1548
      %v1573 = vpack.c.b16 %v1551, %v1550
      %v1574 = vpack.c.b16 %v1553, %v1552
      %v1575 = vpack.c.b16 %v1555, %v1554
      %v1576 = vpack.c.b16 %v1557, %v1556
      %v1577 = vpack.c.b16 %v1559, %v1558
      %v1578 = vpack.c.b16 %v1561, %v1560
      %v1579 = vpack.c.b16 %v1563, %v1562
      %v1580 = vpack.c.b16 %v1565, %v1564
      %v1581 = vpack.c.b16 %v1567, %v1566
      %v1582 = vpack.c.b16 %v1569, %v1568
      %v1583 = vpack.c.b16 %v1571, %v1570
      %v1597 = vsel %vm643, %v596, 0
      %v1600 = vsel %vm643, %v598, 0
      %v1603 = vsel %vm643, %v600, 0
      %v1606 = vsel %vm643, %v602, 0
      %v1609 = vsel %vm643, %v604, 0
      %v1612 = vsel %vm643, %v606, 0
      %v1615 = vsel %vm643, %v608, 0
      %v1618 = vsel %vm643, %v610, 0
      %v1621 = vsel %vm643, %v612, 0
      %v1624 = vsel %vm643, %v614, 0
      %v1627 = vsel %vm643, %v616, 0
      %v1630 = vsel %vm643, %v618, 0
      %v1633 = vsel %vm643, %v620, 0
      %v1636 = vsel %vm643, %v622, 0
      %v1639 = vsel %vm643, %v624, 0
      %v1642 = vsel %vm643, %v626, 0
      %v1645 = vsel %vm643, %v628, 0
      %v1648 = vsel %vm643, %v630, 0
      %v1651 = vsel %vm643, %v632, 0
      %v1654 = vsel %vm643, %v634, 0
      %v1657 = vsel %vm643, %v636, 0
      %v1660 = vsel %vm643, %v638, 0
      %v1663 = vsel %vm643, %v640, 0
      %v1666 = vsel %vm643, %v642, 0
      %1668 = vmatprep.subr.bf16.mxu0 0
      %1669 = vmatpush1.bf16.msra.mxu0 %v1572
      %1670 = vmatprep.subr.bf16.mxu0 0
      %1671 = vmatpush1.bf16.msra.mxu0 %v1573
      %1672 = vmatprep.subr.bf16.mxu0 0
      %1673 = vmatpush1.bf16.msra.mxu0 %v1574
      %1674 = vmatprep.subr.bf16.mxu0 0
      %1675 = vmatpush1.bf16.msra.mxu0 %v1575
      %1676 = vmatprep.subr.bf16.mxu0 0
      %1677 = vmatpush1.bf16.msra.mxu0 %v1576
      %1678 = vmatprep.subr.bf16.mxu0 0
      %1679 = vmatpush1.bf16.msra.mxu0 %v1577
      %1680 = vmatprep.subr.bf16.mxu0 0
      %1681 = vmatpush1.bf16.msra.mxu0 %v1578
      %1682 = vmatprep.subr.bf16.mxu0 0
      %1683 = vmatpush1.bf16.msra.mxu0 %v1579
      %1684 = vmatprep.subr.bf16.mxu0 0
      %1685 = vmatpush1.bf16.msra.mxu0 %v1580
      %1686 = vmatprep.subr.bf16.mxu0 0
      %1687 = vmatpush1.bf16.msra.mxu0 %v1581
      %1688 = vmatprep.subr.bf16.mxu0 0
      %1689 = vmatpush1.bf16.msra.mxu0 %v1582
      %1690 = vmatprep.subr.bf16.mxu0 0
      %1691 = vmatpush1.bf16.msra.mxu0 %v1583
      %1692 = vmatprep.subr.bf16.mxu0 0
      %1693 = vmatpush1.bf16.msra.mxu0 0
      %1694 = vmatprep.subr.bf16.mxu0 0
      %1695 = vmatpush1.bf16.msra.mxu0 0
      %1696 = vmatprep.subr.bf16.mxu0 0
      %1697 = vmatpush1.bf16.msra.mxu0 0
      %1698 = vmatprep.subr.bf16.mxu0 0
      %1699 = vmatpush1.bf16.msra.mxu0 0
      %1700 = vmatprep.mubr.bf16.mxu0 %v1597
      %1701 = vmatmul.mubr.bf16.gmra.mrb[0].mxu0 %v645
      %v1702 = vpop.f32.mrb[0].mxu0
      %v1703 = vadd.f32 %v1350, %v1702
      %v1704 = vpop.f32.mrb[0].mxu0
      %v1705 = vpop.f32.mrb[0].mxu0
      %v1706 = vadd.f32 %v1353, %v1705
      %v1707 = vpop.f32.mrb[0].mxu0
      %1708 = vmatprep.mubr.bf16.mxu0 %v1600
      %1709 = vmatmul.mubr.bf16.gmra.mrb[0].mxu0 %v648
      %v1710 = vpop.f32.mrb[0].mxu0
      %v1711 = vpop.f32.mrb[0].mxu0
      %v1712 = vpop.f32.mrb[0].mxu0
      %v1713 = vadd.f32 %v1360, %v1712
      %v1714 = vpop.f32.mrb[0].mxu0
      %1715 = vmatprep.mubr.bf16.mxu0 %v1603
      %1716 = vmatmul.mubr.bf16.gmra.mrb[0].mxu0 %v651
      %v1717 = vpop.f32.mrb[0].mxu0
      %v1718 = vadd.f32 %v1365, %v1717
      %v1719 = vpop.f32.mrb[0].mxu0
      %v1720 = vpop.f32.mrb[0].mxu0
      %v1721 = vpop.f32.mrb[0].mxu0
      %1722 = vmatprep.mubr.bf16.mxu0 %v1606
      %1723 = vmatmul.mubr.bf16.gmra.mrb[0].mxu0 %v654
      %v1724 = vpop.f32.mrb[0].mxu0
      %v1725 = vadd.f32 %v1372, %v1724
      %v1726 = vpop.f32.mrb[0].mxu0
      %v1727 = vpop.f32.mrb[0].mxu0
      %v1728 = vadd.f32 %v1375, %v1727
      %v1729 = vpop.f32.mrb[0].mxu0
      %1730 = vmatprep.mubr.bf16.mxu0 %v1609
      %1731 = vmatmul.mubr.bf16.gmra.mrb[0].mxu0 %v657
      %v1732 = vpop.f32.mrb[0].mxu0
      %v1733 = vpop.f32.mrb[0].mxu0
      %v1734 = vpop.f32.mrb[0].mxu0
      %v1735 = vadd.f32 %v1382, %v1734
      %v1736 = vpop.f32.mrb[0].mxu0
      %1737 = vmatprep.mubr.bf16.mxu0 %v1612
      %1738 = vmatmul.mubr.bf16.gmra.mrb[0].mxu0 %v660
      %v1739 = vpop.f32.mrb[0].mxu0
      %v1740 = vadd.f32 %v1387, %v1739
      %v1741 = vpop.f32.mrb[0].mxu0
      %v1742 = vpop.f32.mrb[0].mxu0
      %v1743 = vpop.f32.mrb[0].mxu0
      %1744 = vmatprep.mubr.bf16.mxu0 %v1615
      %1745 = vmatmul.mubr.bf16.gmra.mrb[0].mxu0 %v663
      %v1746 = vpop.f32.mrb[0].mxu0
      %v1747 = vadd.f32 %v1394, %v1746
      %v1748 = vpop.f32.mrb[0].mxu0
      %v1749 = vpop.f32.mrb[0].mxu0
      %v1750 = vadd.f32 %v1397, %v1749
      %v1751 = vpop.f32.mrb[0].mxu0
      %1752 = vmatprep.mubr.bf16.mxu0 %v1618
      %1753 = vmatmul.mubr.bf16.gmra.mrb[0].mxu0 %v666
      %v1754 = vpop.f32.mrb[0].mxu0
      %v1755 = vpop.f32.mrb[0].mxu0
      %v1756 = vpop.f32.mrb[0].mxu0
      %v1757 = vadd.f32 %v1404, %v1756
      %v1758 = vpop.f32.mrb[0].mxu0
      %1759 = vmatprep.mubr.bf16.mxu0 %v1621
      %1760 = vmatmul.mubr.bf16.gmra.mrb[0].mxu0 %v669
      %v1761 = vpop.f32.mrb[0].mxu0
      %v1762 = vadd.f32 %v1409, %v1761
      %v1763 = vpop.f32.mrb[0].mxu0
      %v1764 = vpop.f32.mrb[0].mxu0
      %v1765 = vpop.f32.mrb[0].mxu0
      %1766 = vmatprep.mubr.bf16.mxu0 %v1624
      %1767 = vmatmul.mubr.bf16.gmra.mrb[0].mxu0 %v672
      %v1768 = vpop.f32.mrb[0].mxu0
      %v1769 = vadd.f32 %v1416, %v1768
      %v1770 = vpop.f32.mrb[0].mxu0
      %v1771 = vpop.f32.mrb[0].mxu0
      %v1772 = vadd.f32 %v1419, %v1771
      %v1773 = vpop.f32.mrb[0].mxu0
      %1774 = vmatprep.mubr.bf16.mxu0 %v1627
      %1775 = vmatmul.mubr.bf16.gmra.mrb[0].mxu0 %v675
      %v1776 = vpop.f32.mrb[0].mxu0
      %v1777 = vpop.f32.mrb[0].mxu0
      %v1778 = vpop.f32.mrb[0].mxu0
      %v1779 = vadd.f32 %v1426, %v1778
      %v1780 = vpop.f32.mrb[0].mxu0
      %1781 = vmatprep.mubr.bf16.mxu0 %v1630
      %1782 = vmatmul.mubr.bf16.gmra.mrb[0].mxu0 %v678
      %v1783 = vpop.f32.mrb[0].mxu0
      %v1784 = vadd.f32 %v1431, %v1783
      %v1785 = vpop.f32.mrb[0].mxu0
      %v1786 = vpop.f32.mrb[0].mxu0
      %v1787 = vpop.f32.mrb[0].mxu0
      %1788 = vmatprep.mubr.bf16.mxu0 %v1633
      %1789 = vmatmul.mubr.bf16.gmra.mrb[0].mxu0 %v681
      %v1790 = vpop.f32.mrb[0].mxu0
      %v1791 = vadd.f32 %v1438, %v1790
      %v1792 = vpop.f32.mrb[0].mxu0
      %v1793 = vpop.f32.mrb[0].mxu0
      %v1794 = vadd.f32 %v1441, %v1793
      %v1795 = vpop.f32.mrb[0].mxu0
      %1796 = vmatprep.mubr.bf16.mxu0 %v1636
      %1797 = vmatmul.mubr.bf16.gmra.mrb[0].mxu0 %v684
      %v1798 = vpop.f32.mrb[0].mxu0
      %v1799 = vpop.f32.mrb[0].mxu0
      %v1800 = vpop.f32.mrb[0].mxu0
      %v1801 = vadd.f32 %v1448, %v1800
      %v1802 = vpop.f32.mrb[0].mxu0
      %1803 = vmatprep.mubr.bf16.mxu0 %v1639
      %1804 = vmatmul.mubr.bf16.gmra.mrb[0].mxu0 %v687
      %v1805 = vpop.f32.mrb[0].mxu0
      %v1806 = vadd.f32 %v1453, %v1805
      %v1807 = vpop.f32.mrb[0].mxu0
      %v1808 = vpop.f32.mrb[0].mxu0
      %v1809 = vpop.f32.mrb[0].mxu0
      %1810 = vmatprep.mubr.bf16.mxu0 %v1642
      %1811 = vmatmul.mubr.bf16.gmra.mrb[0].mxu0 %v690
      %v1812 = vpop.f32.mrb[0].mxu0
      %v1813 = vadd.f32 %v1460, %v1812
      %v1814 = vpop.f32.mrb[0].mxu0
      %v1815 = vpop.f32.mrb[0].mxu0
      %v1816 = vadd.f32 %v1463, %v1815
      %v1817 = vpop.f32.mrb[0].mxu0
      %1818 = vmatprep.mubr.bf16.mxu0 %v1645
      %1819 = vmatmul.mubr.bf16.gmra.mrb[0].mxu0 %v693
      %v1820 = vpop.f32.mrb[0].mxu0
      %v1821 = vpop.f32.mrb[0].mxu0
      %v1822 = vpop.f32.mrb[0].mxu0
      %v1823 = vadd.f32 %v1470, %v1822
      %v1824 = vpop.f32.mrb[0].mxu0
      %1825 = vmatprep.mubr.bf16.mxu0 %v1648
      %1826 = vmatmul.mubr.bf16.gmra.mrb[0].mxu0 %v696
      %v1827 = vpop.f32.mrb[0].mxu0
      %v1828 = vadd.f32 %v1475, %v1827
      %v1829 = vpop.f32.mrb[0].mxu0
      %v1830 = vpop.f32.mrb[0].mxu0
      %v1831 = vpop.f32.mrb[0].mxu0
      %1832 = vmatprep.mubr.bf16.mxu0 %v1651
      %1833 = vmatmul.mubr.bf16.gmra.mrb[0].mxu0 %v699
      %v1834 = vpop.f32.mrb[0].mxu0
      %v1835 = vadd.f32 %v1482, %v1834
      %v1836 = vpop.f32.mrb[0].mxu0
      %v1837 = vpop.f32.mrb[0].mxu0
      %v1838 = vadd.f32 %v1485, %v1837
      %v1839 = vpop.f32.mrb[0].mxu0
      %1840 = vmatprep.mubr.bf16.mxu0 %v1654
      %1841 = vmatmul.mubr.bf16.gmra.mrb[0].mxu0 %v702
      %v1842 = vpop.f32.mrb[0].mxu0
      %v1843 = vpop.f32.mrb[0].mxu0
      %v1844 = vpop.f32.mrb[0].mxu0
      %v1845 = vadd.f32 %v1492, %v1844
      %v1846 = vpop.f32.mrb[0].mxu0
      %1847 = vmatprep.mubr.bf16.mxu0 %v1657
      %1848 = vmatmul.mubr.bf16.gmra.mrb[0].mxu0 %v705
      %v1849 = vpop.f32.mrb[0].mxu0
      %v1850 = vadd.f32 %v1497, %v1849
      %v1851 = vpop.f32.mrb[0].mxu0
      %v1852 = vpop.f32.mrb[0].mxu0
      %v1853 = vpop.f32.mrb[0].mxu0
      %1854 = vmatprep.mubr.bf16.mxu0 %v1660
      %1855 = vmatmul.mubr.bf16.gmra.mrb[0].mxu0 %v708
      %v1856 = vpop.f32.mrb[0].mxu0
      %v1857 = vadd.f32 %v1504, %v1856
      %v1858 = vpop.f32.mrb[0].mxu0
      %v1859 = vpop.f32.mrb[0].mxu0
      %v1860 = vadd.f32 %v1507, %v1859
      %v1861 = vpop.f32.mrb[0].mxu0
      %1862 = vmatprep.mubr.bf16.mxu0 %v1663
      %1863 = vmatmul.mubr.bf16.gmra.mrb[0].mxu0 %v711
      %v1864 = vpop.f32.mrb[0].mxu0
      %v1865 = vpop.f32.mrb[0].mxu0
      %v1866 = vpop.f32.mrb[0].mxu0
      %v1867 = vadd.f32 %v1514, %v1866
      %v1868 = vpop.f32.mrb[0].mxu0
      %1869 = vmatprep.mubr.bf16.mxu0 %v1666
      %1870 = vmatmul.mubr.bf16.gmra.mrb[0].mxu0 %v714
      %v1871 = vpop.f32.mrb[0].mxu0
      %v1872 = vadd.f32 %v1519, %v1871
      %v1873 = vpop.f32.mrb[0].mxu0
      %v1874 = vpop.f32.mrb[0].mxu0
      %v1875 = vpop.f32.mrb[0].mxu0
      %1876 = vdwg.mxu0
      %v1877 = vld [vmem:[%s165 + $0x18] sm:$0xf]
      %v1878 = vld [vmem:[%s165 + $0x1c] sm:$0xf]
      %v1879 = vld [vmem:[%s165 + $0x20] sm:$0xf]
      %v1880 = vld [vmem:[%s165 + $0x24] sm:$0xf]
      %v1881 = vld [vmem:[%s165 + $0x28] sm:$0xf]
      %v1882 = vld [vmem:[%s165 + $0x2c] sm:$0xf]
      %v1883 = vld [vmem:[%s165 + $0x30] sm:$0xf]
      %v1884 = vld [vmem:[%s165 + $0x34] sm:$0xf]
      %v1885 = vld [vmem:[%s165 + $0x38] sm:$0xf]
      %v1886 = vld [vmem:[%s165 + $0x3c] sm:$0xf]
      %v1887 = vld [vmem:[%s165 + $0x40] sm:$0xf]
      %v1888 = vld [vmem:[%s165 + $0x44] sm:$0xf]
      %v1889 = vld [vmem:[%s165 + $0x48] sm:$0xf]
      %v1890 = vld [vmem:[%s165 + $0x4c] sm:$0xf]
      %v1891 = vld [vmem:[%s165 + $0x50] sm:$0xf]
      %v1892 = vld [vmem:[%s165 + $0x54] sm:$0xf]
      %v1893 = vld [vmem:[%s165 + $0x58] sm:$0xf]
      %v1894 = vld [vmem:[%s165 + $0x5c] sm:$0xf]
      %v1895 = vld [vmem:[%s165 + $0x60] sm:$0xf]
      %v1896 = vld [vmem:[%s165 + $0x64] sm:$0xf]
      %v1897 = vld [vmem:[%s165 + $0x68] sm:$0xf]
      %v1898 = vld [vmem:[%s165 + $0x6c] sm:$0xf]
      %v1899 = vld [vmem:[%s165 + $0x70] sm:$0xf]
      %v1900 = vld [vmem:[%s165 + $0x74] sm:$0xf]
      %v1901 = vld [vmem:[%s165 + $0x78] sm:$0xf]
      %v1902 = vld [vmem:[%s165 + $0x7c] sm:$0xf]
      %v1903 = vld [vmem:[%s165 + $0x80] sm:$0xf]
      %v1904 = vld [vmem:[%s165 + $0x84] sm:$0xf]
      %v1905 = vld [vmem:[%s165 + $0x88] sm:$0xf]
      %v1906 = vld [vmem:[%s165 + $0x8c] sm:$0xf]
      %v1907 = vld [vmem:[%s165 + $0x90] sm:$0xf]
      %v1908 = vld [vmem:[%s165 + $0x94] sm:$0xf]
      %v1909 = vld [vmem:[%s165 + $0x98] sm:$0xf]
      %v1910 = vld [vmem:[%s165 + $0x9c] sm:$0xf]
      %v1911 = vld [vmem:[%s165 + $0xa0] sm:$0xf]
      %v1912 = vld [vmem:[%s165 + $0xa4] sm:$0xf]
      %v1913 = vld [vmem:[%s165 + $0xa8] sm:$0xf]
      %v1914 = vld [vmem:[%s165 + $0xac] sm:$0xf]
      %v1915 = vld [vmem:[%s165 + $0xb0] sm:$0xf]
      %v1916 = vld [vmem:[%s165 + $0xb4] sm:$0xf]
      %v1917 = vld [vmem:[%s165 + $0xb8] sm:$0xf]
      %v1918 = vld [vmem:[%s165 + $0xbc] sm:$0xf]
      %v1919 = vld [vmem:[%s165 + $0xc0] sm:$0xf]
      %v1920 = vld [vmem:[%s165 + $0xc4] sm:$0xf]
      %v1921 = vld [vmem:[%s165 + $0xc8] sm:$0xf]
      %v1922 = vld [vmem:[%s165 + $0xcc] sm:$0xf]
      %v1923 = vld [vmem:[%s165 + $0xd0] sm:$0xf]
      %v1924 = vld [vmem:[%s165 + $0xd4] sm:$0xf]
      %v1925 = vld [vmem:[%s165 + $0xd8] sm:$0x1]
      %v1926 = vld [vmem:[%s165 + $0x18] sm:$0xe]
      %v1975 = vunpack.c.l.b16 %v1877
      %v1976 = vunpack.c.l.b16 %v1878
      %v1977 = vunpack.c.l.b16 %v1879
      %v1978 = vunpack.c.l.b16 %v1880
      %v1979 = vunpack.c.l.b16 %v1881
      %v1980 = vunpack.c.l.b16 %v1882
      %v1981 = vunpack.c.l.b16 %v1883
      %v1982 = vunpack.c.l.b16 %v1884
      %v1983 = vunpack.c.l.b16 %v1885
      %v1984 = vunpack.c.l.b16 %v1886
      %v1985 = vunpack.c.l.b16 %v1887
      %v1986 = vunpack.c.l.b16 %v1888
      %v1987 = vunpack.c.l.b16 %v1889
      %v1988 = vunpack.c.l.b16 %v1890
      %v1989 = vunpack.c.l.b16 %v1891
      %v1990 = vunpack.c.l.b16 %v1892
      %v1991 = vunpack.c.l.b16 %v1893
      %v1992 = vunpack.c.l.b16 %v1894
      %v1993 = vunpack.c.l.b16 %v1895
      %v1994 = vunpack.c.l.b16 %v1896
      %v1995 = vunpack.c.l.b16 %v1897
      %v1996 = vunpack.c.l.b16 %v1898
      %v1997 = vunpack.c.l.b16 %v1899
      %v1998 = vunpack.c.l.b16 %v1900
      %v1999 = vunpack.c.l.b16 %v1901
      %v2000 = vunpack.c.l.b16 %v1902
      %v2001 = vunpack.c.l.b16 %v1903
      %v2002 = vunpack.c.l.b16 %v1904
      %v2003 = vunpack.c.l.b16 %v1905
      %v2004 = vunpack.c.l.b16 %v1906
      %v2005 = vunpack.c.l.b16 %v1907
      %v2006 = vunpack.c.l.b16 %v1908
      %v2007 = vunpack.c.l.b16 %v1909
      %v2008 = vunpack.c.l.b16 %v1910
      %v2009 = vunpack.c.l.b16 %v1911
      %v2010 = vunpack.c.l.b16 %v1912
      %v2011 = vunpack.c.l.b16 %v1913
      %v2012 = vunpack.c.l.b16 %v1914
      %v2013 = vunpack.c.l.b16 %v1915
      %v2014 = vunpack.c.l.b16 %v1916
      %v2015 = vunpack.c.l.b16 %v1917
      %v2016 = vunpack.c.l.b16 %v1918
      %v2017 = vunpack.c.l.b16 %v1919
      %v2018 = vunpack.c.l.b16 %v1920
      %v2019 = vunpack.c.l.b16 %v1921
      %v2020 = vunpack.c.l.b16 %v1922
      %v2021 = vunpack.c.l.b16 %v1923
      %v2022 = vunpack.c.l.b16 %v1924
      %v2023 = vpack.c.b16 %v1976, %v1975
      %v2024 = vpack.c.b16 %v1978, %v1977
      %v2025 = vpack.c.b16 %v1980, %v1979
      %v2026 = vpack.c.b16 %v1982, %v1981
      %v2027 = vpack.c.b16 %v1984, %v1983
      %v2028 = vpack.c.b16 %v1986, %v1985
      %v2029 = vpack.c.b16 %v1988, %v1987
      %v2030 = vpack.c.b16 %v1990, %v1989
      %v2031 = vpack.c.b16 %v1992, %v1991
      %v2032 = vpack.c.b16 %v1994, %v1993
      %v2033 = vpack.c.b16 %v1996, %v1995
      %v2034 = vpack.c.b16 %v1998, %v1997
      %v2035 = vpack.c.b16 %v2000, %v1999
      %v2036 = vpack.c.b16 %v2002, %v2001
      %v2037 = vpack.c.b16 %v2004, %v2003
      %v2038 = vpack.c.b16 %v2006, %v2005
      %v2039 = vpack.c.b16 %v2008, %v2007
      %v2040 = vpack.c.b16 %v2010, %v2009
      %v2041 = vpack.c.b16 %v2012, %v2011
      %v2042 = vpack.c.b16 %v2014, %v2013
      %v2043 = vpack.c.b16 %v2016, %v2015
      %v2044 = vpack.c.b16 %v2018, %v2017
      %v2045 = vpack.c.b16 %v2020, %v2019
      %v2046 = vpack.c.b16 %v2022, %v2021
      %v2048 = vunpack.c.l.b16 %v1925
      %v2049 = vpack.c.b16 %v2048, %v2048
      %v2051 = vshrl.u32 %v2023, 16
      %v2053 = vshll.u32 %v2023, 16
      %v2055 = vrot.slane %v2053, 1
      %v2056 = vor.u32 %v2051, %v2055
      %v2058 = vshll.u32 %v2024, 16
      %v2060 = vrot.slane %v2058, 1
      %v2061 = vsel %vm345, %v2056, %v2060
      %v2062 = vshrl.u32 %v2024, 16
      %v2064 = vor.u32 %v2062, %v2060
      %v2066 = vshll.u32 %v2025, 16
      %v2068 = vrot.slane %v2066, 1
      %v2069 = vsel %vm345, %v2064, %v2068
      %v2070 = vshrl.u32 %v2025, 16
      %v2072 = vor.u32 %v2070, %v2068
      %v2074 = vshll.u32 %v2026, 16
      %v2076 = vrot.slane %v2074, 1
      %v2077 = vsel %vm345, %v2072, %v2076
      %v2078 = vshrl.u32 %v2026, 16
      %v2080 = vor.u32 %v2078, %v2076
      %v2082 = vshll.u32 %v2027, 16
      %v2084 = vrot.slane %v2082, 1
      %v2085 = vsel %vm345, %v2080, %v2084
      %v2086 = vshrl.u32 %v2027, 16
      %v2088 = vor.u32 %v2086, %v2084
      %v2090 = vshll.u32 %v2028, 16
      %v2092 = vrot.slane %v2090, 1
      %v2093 = vsel %vm345, %v2088, %v2092
      %v2094 = vshrl.u32 %v2028, 16
      %v2096 = vor.u32 %v2094, %v2092
      %v2098 = vshll.u32 %v2029, 16
      %v2100 = vrot.slane %v2098, 1
      %v2101 = vsel %vm345, %v2096, %v2100
      %v2102 = vshrl.u32 %v2029, 16
      %v2104 = vor.u32 %v2102, %v2100
      %v2106 = vshll.u32 %v2030, 16
      %v2108 = vrot.slane %v2106, 1
      %v2109 = vsel %vm345, %v2104, %v2108
      %v2110 = vshrl.u32 %v2030, 16
      %v2112 = vor.u32 %v2110, %v2108
      %v2114 = vshll.u32 %v2031, 16
      %v2116 = vrot.slane %v2114, 1
      %v2117 = vsel %vm345, %v2112, %v2116
      %v2118 = vshrl.u32 %v2031, 16
      %v2120 = vor.u32 %v2118, %v2116
      %v2122 = vshll.u32 %v2032, 16
      %v2124 = vrot.slane %v2122, 1
      %v2125 = vsel %vm345, %v2120, %v2124
      %v2126 = vshrl.u32 %v2032, 16
      %v2128 = vor.u32 %v2126, %v2124
      %v2130 = vshll.u32 %v2033, 16
      %v2132 = vrot.slane %v2130, 1
      %v2133 = vsel %vm345, %v2128, %v2132
      %v2134 = vshrl.u32 %v2033, 16
      %v2136 = vor.u32 %v2134, %v2132
      %v2138 = vshll.u32 %v2034, 16
      %v2140 = vrot.slane %v2138, 1
      %v2141 = vsel %vm345, %v2136, %v2140
      %v2142 = vshrl.u32 %v2034, 16
      %v2144 = vor.u32 %v2142, %v2140
      %v2146 = vshll.u32 %v2035, 16
      %v2148 = vrot.slane %v2146, 1
      %v2149 = vsel %vm345, %v2144, %v2148
      %v2150 = vshrl.u32 %v2035, 16
      %v2152 = vor.u32 %v2150, %v2148
      %v2154 = vshll.u32 %v2036, 16
      %v2156 = vrot.slane %v2154, 1
      %v2157 = vsel %vm345, %v2152, %v2156
      %v2158 = vshrl.u32 %v2036, 16
      %v2160 = vor.u32 %v2158, %v2156
      %v2162 = vshll.u32 %v2037, 16
      %v2164 = vrot.slane %v2162, 1
      %v2165 = vsel %vm345, %v2160, %v2164
      %v2166 = vshrl.u32 %v2037, 16
      %v2168 = vor.u32 %v2166, %v2164
      %v2170 = vshll.u32 %v2038, 16
      %v2172 = vrot.slane %v2170, 1
      %v2173 = vsel %vm345, %v2168, %v2172
      %v2174 = vshrl.u32 %v2038, 16
      %v2176 = vor.u32 %v2174, %v2172
      %v2178 = vshll.u32 %v2039, 16
      %v2180 = vrot.slane %v2178, 1
      %v2181 = vsel %vm345, %v2176, %v2180
      %v2182 = vshrl.u32 %v2039, 16
      %v2184 = vor.u32 %v2182, %v2180
      %v2186 = vshll.u32 %v2040, 16
      %v2188 = vrot.slane %v2186, 1
      %v2189 = vsel %vm345, %v2184, %v2188
      %v2190 = vshrl.u32 %v2040, 16
      %v2192 = vor.u32 %v2190, %v2188
      %v2194 = vshll.u32 %v2041, 16
      %v2196 = vrot.slane %v2194, 1
      %v2197 = vsel %vm345, %v2192, %v2196
      %v2198 = vshrl.u32 %v2041, 16
      %v2200 = vor.u32 %v2198, %v2196
      %v2202 = vshll.u32 %v2042, 16
      %v2204 = vrot.slane %v2202, 1
      %v2205 = vsel %vm345, %v2200, %v2204
      %v2206 = vshrl.u32 %v2042, 16
      %v2208 = vor.u32 %v2206, %v2204
      %v2210 = vshll.u32 %v2043, 16
      %v2212 = vrot.slane %v2210, 1
      %v2213 = vsel %vm345, %v2208, %v2212
      %v2214 = vshrl.u32 %v2043, 16
      %v2216 = vor.u32 %v2214, %v2212
      %v2218 = vshll.u32 %v2044, 16
      %v2220 = vrot.slane %v2218, 1
      %v2221 = vsel %vm345, %v2216, %v2220
      %v2222 = vshrl.u32 %v2044, 16
      %v2224 = vor.u32 %v2222, %v2220
      %v2226 = vshll.u32 %v2045, 16
      %v2228 = vrot.slane %v2226, 1
      %v2229 = vsel %vm345, %v2224, %v2228
      %v2230 = vshrl.u32 %v2045, 16
      %v2232 = vor.u32 %v2230, %v2228
      %v2234 = vshll.u32 %v2046, 16
      %v2236 = vrot.slane %v2234, 1
      %v2237 = vsel %vm345, %v2232, %v2236
      %v2238 = vshrl.u32 %v2046, 16
      %v2240 = vor.u32 %v2238, %v2236
      %v2242 = vshll.u32 %v2049, 16
      %v2244 = vrot.slane %v2242, 1
      %v2245 = vsel %vm345, %v2240, %v2244
      %2246 = vrot.lane.b32.xlu0 %v2061, 64
      %v2247 = vpop.permute.xlu0 %2246
      %2248 = vrot.lane.b32.xlu0 %v2069, 64
      %v2249 = vpop.permute.xlu0 %2248
      %2250 = vrot.lane.b32.xlu0 %v2077, 64
      %v2251 = vpop.permute.xlu0 %2250
      %2252 = vrot.lane.b32.xlu0 %v2085, 64
      %v2253 = vpop.permute.xlu0 %2252
      %2254 = vrot.lane.b32.xlu0 %v2093, 64
      %v2255 = vpop.permute.xlu0 %2254
      %2256 = vrot.lane.b32.xlu0 %v2101, 64
      %v2257 = vpop.permute.xlu0 %2256
      %2258 = vrot.lane.b32.xlu0 %v2109, 64
      %v2259 = vpop.permute.xlu0 %2258
      %2260 = vrot.lane.b32.xlu0 %v2117, 64
      %v2261 = vpop.permute.xlu0 %2260
      %2262 = vrot.lane.b32.xlu0 %v2125, 64
      %v2263 = vpop.permute.xlu0 %2262
      %2264 = vrot.lane.b32.xlu0 %v2133, 64
      %v2265 = vpop.permute.xlu0 %2264
      %2266 = vrot.lane.b32.xlu0 %v2141, 64
      %v2267 = vpop.permute.xlu0 %2266
      %2268 = vrot.lane.b32.xlu0 %v2149, 64
      %v2269 = vpop.permute.xlu0 %2268
      %2270 = vrot.lane.b32.xlu0 %v2157, 64
      %v2271 = vpop.permute.xlu0 %2270
      %2272 = vrot.lane.b32.xlu0 %v2165, 64
      %v2273 = vpop.permute.xlu0 %2272
      %2274 = vrot.lane.b32.xlu0 %v2173, 64
      %v2275 = vpop.permute.xlu0 %2274
      %2276 = vrot.lane.b32.xlu0 %v2181, 64
      %v2277 = vpop.permute.xlu0 %2276
      %2278 = vrot.lane.b32.xlu0 %v2189, 64
      %v2279 = vpop.permute.xlu0 %2278
      %2280 = vrot.lane.b32.xlu0 %v2197, 64
      %v2281 = vpop.permute.xlu0 %2280
      %2282 = vrot.lane.b32.xlu0 %v2205, 64
      %v2283 = vpop.permute.xlu0 %2282
      %2284 = vrot.lane.b32.xlu0 %v2213, 64
      %v2285 = vpop.permute.xlu0 %2284
      %2286 = vrot.lane.b32.xlu0 %v2221, 64
      %v2287 = vpop.permute.xlu0 %2286
      %2288 = vrot.lane.b32.xlu0 %v2229, 64
      %v2289 = vpop.permute.xlu0 %2288
      %2290 = vrot.lane.b32.xlu0 %v2237, 64
      %v2291 = vpop.permute.xlu0 %2290
      %2292 = vrot.lane.b32.xlu0 %v2245, 64
      %v2293 = vpop.permute.xlu0 %2292
      %v2295 = vunpack.c.l.b16 %v1926
      %v2296 = vpack.c.b16 %v1976, %v2295
      %v2297 = vrot.slane %v2296, 1
      %v2298 = vrot.slane %v2024, 1
      %v2299 = vsel %vm593, %v2297, %v2298
      %v2300 = vrot.slane %v2025, 1
      %v2301 = vsel %vm593, %v2298, %v2300
      %v2302 = vrot.slane %v2026, 1
      %v2303 = vsel %vm593, %v2300, %v2302
      %v2304 = vrot.slane %v2027, 1
      %v2305 = vsel %vm593, %v2302, %v2304
      %v2306 = vrot.slane %v2028, 1
      %v2307 = vsel %vm593, %v2304, %v2306
      %v2308 = vrot.slane %v2029, 1
      %v2309 = vsel %vm593, %v2306, %v2308
      %v2310 = vrot.slane %v2030, 1
      %v2311 = vsel %vm593, %v2308, %v2310
      %v2312 = vrot.slane %v2031, 1
      %v2313 = vsel %vm593, %v2310, %v2312
      %v2314 = vrot.slane %v2032, 1
      %v2315 = vsel %vm593, %v2312, %v2314
      %v2316 = vrot.slane %v2033, 1
      %v2317 = vsel %vm593, %v2314, %v2316
      %v2318 = vrot.slane %v2034, 1
      %v2319 = vsel %vm593, %v2316, %v2318
      %v2320 = vrot.slane %v2035, 1
      %v2321 = vsel %vm593, %v2318, %v2320
      %v2322 = vrot.slane %v2036, 1
      %v2323 = vsel %vm593, %v2320, %v2322
      %v2324 = vrot.slane %v2037, 1
      %v2325 = vsel %vm593, %v2322, %v2324
      %v2326 = vrot.slane %v2038, 1
      %v2327 = vsel %vm593, %v2324, %v2326
      %v2328 = vrot.slane %v2039, 1
      %v2329 = vsel %vm593, %v2326, %v2328
      %v2330 = vrot.slane %v2040, 1
      %v2331 = vsel %vm593, %v2328, %v2330
      %v2332 = vrot.slane %v2041, 1
      %v2333 = vsel %vm593, %v2330, %v2332
      %v2334 = vrot.slane %v2042, 1
      %v2335 = vsel %vm593, %v2332, %v2334
      %v2336 = vrot.slane %v2043, 1
      %v2337 = vsel %vm593, %v2334, %v2336
      %v2338 = vrot.slane %v2044, 1
      %v2339 = vsel %vm593, %v2336, %v2338
      %v2340 = vrot.slane %v2045, 1
      %v2341 = vsel %vm593, %v2338, %v2340
      %v2342 = vrot.slane %v2046, 1
      %v2343 = vsel %vm593, %v2340, %v2342
      %v2344 = vrot.slane %v2049, 1
      %v2345 = vsel %vm593, %v2342, %v2344
      %v2347 = vsel %vm643, %v2023, %v2247
      %v2350 = vsel %vm643, %v2024, %v2249
      %v2353 = vsel %vm643, %v2025, %v2251
      %v2356 = vsel %vm643, %v2026, %v2253
      %v2359 = vsel %vm643, %v2027, %v2255
      %v2362 = vsel %vm643, %v2028, %v2257
      %v2365 = vsel %vm643, %v2029, %v2259
      %v2368 = vsel %vm643, %v2030, %v2261
      %v2371 = vsel %vm643, %v2031, %v2263
      %v2374 = vsel %vm643, %v2032, %v2265
      %v2377 = vsel %vm643, %v2033, %v2267
      %v2380 = vsel %vm643, %v2034, %v2269
      %v2383 = vsel %vm643, %v2035, %v2271
      %v2386 = vsel %vm643, %v2036, %v2273
      %v2389 = vsel %vm643, %v2037, %v2275
      %v2392 = vsel %vm643, %v2038, %v2277
      %v2395 = vsel %vm643, %v2039, %v2279
      %v2398 = vsel %vm643, %v2040, %v2281
      %v2401 = vsel %vm643, %v2041, %v2283
      %v2404 = vsel %vm643, %v2042, %v2285
      %v2407 = vsel %vm643, %v2043, %v2287
      %v2410 = vsel %vm643, %v2044, %v2289
      %v2413 = vsel %vm643, %v2045, %v2291
      %v2416 = vsel %vm643, %v2046, %v2293
      %s2418 = scalar_lea.vmem %s1, 192
      %v2419 = vld [vmem:[%s2418] sm:$0xf]
      %v2420 = vld [vmem:[%s2418 + $0x4] sm:$0xf]
      %v2421 = vld [vmem:[%s2418 + $0x8] sm:$0xf]
      %v2422 = vld [vmem:[%s2418 + $0xc] sm:$0xf]
      %v2423 = vld [vmem:[%s2418 + $0x10] sm:$0xf]
      %v2424 = vld [vmem:[%s2418 + $0x14] sm:$0xf]
      %v2425 = vld [vmem:[%s2418 + $0x18] sm:$0xf]
      %v2426 = vld [vmem:[%s2418 + $0x1c] sm:$0xf]
      %v2427 = vld [vmem:[%s2418 + $0x20] sm:$0xf]
      %v2428 = vld [vmem:[%s2418 + $0x24] sm:$0xf]
      %v2429 = vld [vmem:[%s2418 + $0x28] sm:$0xf]
      %v2430 = vld [vmem:[%s2418 + $0x2c] sm:$0xf]
      %v2431 = vld [vmem:[%s2418 + $0x30] sm:$0xf]
      %v2432 = vld [vmem:[%s2418 + $0x34] sm:$0xf]
      %v2433 = vld [vmem:[%s2418 + $0x38] sm:$0xf]
      %v2434 = vld [vmem:[%s2418 + $0x3c] sm:$0xf]
      %v2435 = vld [vmem:[%s2418 + $0x40] sm:$0xf]
      %v2436 = vld [vmem:[%s2418 + $0x44] sm:$0xf]
      %v2437 = vld [vmem:[%s2418 + $0x48] sm:$0xf]
      %v2438 = vld [vmem:[%s2418 + $0x4c] sm:$0xf]
      %v2439 = vld [vmem:[%s2418 + $0x50] sm:$0xf]
      %v2440 = vld [vmem:[%s2418 + $0x54] sm:$0xf]
      %v2441 = vld [vmem:[%s2418 + $0x58] sm:$0xf]
      %v2442 = vld [vmem:[%s2418 + $0x5c] sm:$0xf]
      %v2467 = vunpack.c.l.b16 %v2419
      %v2468 = vunpack.c.l.b16 %v2420
      %v2469 = vunpack.c.l.b16 %v2421
      %v2470 = vunpack.c.l.b16 %v2422
      %v2471 = vunpack.c.l.b16 %v2423
      %v2472 = vunpack.c.l.b16 %v2424
      %v2473 = vunpack.c.l.b16 %v2425
      %v2474 = vunpack.c.l.b16 %v2426
      %v2475 = vunpack.c.l.b16 %v2427
      %v2476 = vunpack.c.l.b16 %v2428
      %v2477 = vunpack.c.l.b16 %v2429
      %v2478 = vunpack.c.l.b16 %v2430
      %v2479 = vunpack.c.l.b16 %v2431
      %v2480 = vunpack.c.l.b16 %v2432
      %v2481 = vunpack.c.l.b16 %v2433
      %v2482 = vunpack.c.l.b16 %v2434
      %v2483 = vunpack.c.l.b16 %v2435
      %v2484 = vunpack.c.l.b16 %v2436
      %v2485 = vunpack.c.l.b16 %v2437
      %v2486 = vunpack.c.l.b16 %v2438
      %v2487 = vunpack.c.l.b16 %v2439
      %v2488 = vunpack.c.l.b16 %v2440
      %v2489 = vunpack.c.l.b16 %v2441
      %v2490 = vunpack.c.l.b16 %v2442
      %v2491 = vpack.c.b16 %v2468, %v2467
      %v2492 = vpack.c.b16 %v2470, %v2469
      %v2493 = vpack.c.b16 %v2472, %v2471
      %v2494 = vpack.c.b16 %v2474, %v2473
      %v2495 = vpack.c.b16 %v2476, %v2475
      %v2496 = vpack.c.b16 %v2478, %v2477
      %v2497 = vpack.c.b16 %v2480, %v2479
      %v2498 = vpack.c.b16 %v2482, %v2481
      %v2499 = vpack.c.b16 %v2484, %v2483
      %v2500 = vpack.c.b16 %v2486, %v2485
      %v2501 = vpack.c.b16 %v2488, %v2487
      %v2502 = vpack.c.b16 %v2490, %v2489
      %v2516 = vsel %vm643, %v2299, 0
      %v2519 = vsel %vm643, %v2301, 0
      %v2522 = vsel %vm643, %v2303, 0
      %v2525 = vsel %vm643, %v2305, 0
      %v2528 = vsel %vm643, %v2307, 0
      %v2531 = vsel %vm643, %v2309, 0
      %v2534 = vsel %vm643, %v2311, 0
      %v2537 = vsel %vm643, %v2313, 0
      %v2540 = vsel %vm643, %v2315, 0
      %v2543 = vsel %vm643, %v2317, 0
      %v2546 = vsel %vm643, %v2319, 0
      %v2549 = vsel %vm643, %v2321, 0
      %v2552 = vsel %vm643, %v2323, 0
      %v2555 = vsel %vm643, %v2325, 0
      %v2558 = vsel %vm643, %v2327, 0
      %v2561 = vsel %vm643, %v2329, 0
      %v2564 = vsel %vm643, %v2331, 0
      %v2567 = vsel %vm643, %v2333, 0
      %v2570 = vsel %vm643, %v2335, 0
      %v2573 = vsel %vm643, %v2337, 0
      %v2576 = vsel %vm643, %v2339, 0
      %v2579 = vsel %vm643, %v2341, 0
      %v2582 = vsel %vm643, %v2343, 0
      %v2585 = vsel %vm643, %v2345, 0
      %2587 = vmatprep.subr.bf16.mxu0 0
      %2588 = vmatpush1.bf16.msra.mxu0 %v2491
      %2589 = vmatprep.subr.bf16.mxu0 0
      %2590 = vmatpush1.bf16.msra.mxu0 %v2492
      %2591 = vmatprep.subr.bf16.mxu0 0
      %2592 = vmatpush1.bf16.msra.mxu0 %v2493
      %2593 = vmatprep.subr.bf16.mxu0 0
      %2594 = vmatpush1.bf16.msra.mxu0 %v2494
      %2595 = vmatprep.subr.bf16.mxu0 0
      %2596 = vmatpush1.bf16.msra.mxu0 %v2495
      %2597 = vmatprep.subr.bf16.mxu0 0
      %2598 = vmatpush1.bf16.msra.mxu0 %v2496
      %2599 = vmatprep.subr.bf16.mxu0 0
      %2600 = vmatpush1.bf16.msra.mxu0 %v2497
      %2601 = vmatprep.subr.bf16.mxu0 0
      %2602 = vmatpush1.bf16.msra.mxu0 %v2498
      %2603 = vmatprep.subr.bf16.mxu0 0
      %2604 = vmatpush1.bf16.msra.mxu0 %v2499
      %2605 = vmatprep.subr.bf16.mxu0 0
      %2606 = vmatpush1.bf16.msra.mxu0 %v2500
      %2607 = vmatprep.subr.bf16.mxu0 0
      %2608 = vmatpush1.bf16.msra.mxu0 %v2501
      %2609 = vmatprep.subr.bf16.mxu0 0
      %2610 = vmatpush1.bf16.msra.mxu0 %v2502
      %2611 = vmatprep.subr.bf16.mxu0 0
      %2612 = vmatpush1.bf16.msra.mxu0 0
      %2613 = vmatprep.subr.bf16.mxu0 0
      %2614 = vmatpush1.bf16.msra.mxu0 0
      %2615 = vmatprep.subr.bf16.mxu0 0
      %2616 = vmatpush1.bf16.msra.mxu0 0
      %2617 = vmatprep.subr.bf16.mxu0 0
      %2618 = vmatpush1.bf16.msra.mxu0 0
      %2619 = vmatprep.mubr.bf16.mxu0 %v2516
      %2620 = vmatmul.mubr.bf16.gmra.mrb[0].mxu0 %v2347
      %v2621 = vpop.f32.mrb[0].mxu0
      %v2622 = vadd.f32 0.0, %v2621
      %v2623 = vpop.f32.mrb[0].mxu0
      %v2624 = vpop.f32.mrb[0].mxu0
      %v2625 = vadd.f32 0.0, %v2624
      %v2626 = vpop.f32.mrb[0].mxu0
      %2627 = vmatprep.mubr.bf16.mxu0 %v2519
      %2628 = vmatmul.mubr.bf16.gmra.mrb[0].mxu0 %v2350
      %v2629 = vpop.f32.mrb[0].mxu0
      %v2630 = vpop.f32.mrb[0].mxu0
      %v2631 = vpop.f32.mrb[0].mxu0
      %v2632 = vadd.f32 0.0, %v2631
      %v2633 = vpop.f32.mrb[0].mxu0
      %2634 = vmatprep.mubr.bf16.mxu0 %v2522
      %2635 = vmatmul.mubr.bf16.gmra.mrb[0].mxu0 %v2353
      %v2636 = vpop.f32.mrb[0].mxu0
      %v2637 = vadd.f32 0.0, %v2636
      %v2638 = vpop.f32.mrb[0].mxu0
      %v2639 = vpop.f32.mrb[0].mxu0
      %v2640 = vpop.f32.mrb[0].mxu0
      %2641 = vmatprep.mubr.bf16.mxu0 %v2525
      %2642 = vmatmul.mubr.bf16.gmra.mrb[0].mxu0 %v2356
      %v2643 = vpop.f32.mrb[0].mxu0
      %v2644 = vadd.f32 0.0, %v2643
      %v2645 = vpop.f32.mrb[0].mxu0
      %v2646 = vpop.f32.mrb[0].mxu0
      %v2647 = vadd.f32 0.0, %v2646
      %v2648 = vpop.f32.mrb[0].mxu0
      %2649 = vmatprep.mubr.bf16.mxu0 %v2528
      %2650 = vmatmul.mubr.bf16.gmra.mrb[0].mxu0 %v2359
      %v2651 = vpop.f32.mrb[0].mxu0
      %v2652 = vpop.f32.mrb[0].mxu0
      %v2653 = vpop.f32.mrb[0].mxu0
      %v2654 = vadd.f32 0.0, %v2653
      %v2655 = vpop.f32.mrb[0].mxu0
      %2656 = vmatprep.mubr.bf16.mxu0 %v2531
      %2657 = vmatmul.mubr.bf16.gmra.mrb[0].mxu0 %v2362
      %v2658 = vpop.f32.mrb[0].mxu0
      %v2659 = vadd.f32 0.0, %v2658
      %v2660 = vpop.f32.mrb[0].mxu0
      %v2661 = vpop.f32.mrb[0].mxu0
      %v2662 = vpop.f32.mrb[0].mxu0
      %2663 = vmatprep.mubr.bf16.mxu0 %v2534
      %2664 = vmatmul.mubr.bf16.gmra.mrb[0].mxu0 %v2365
      %v2665 = vpop.f32.mrb[0].mxu0
      %v2666 = vadd.f32 0.0, %v2665
      %v2667 = vpop.f32.mrb[0].mxu0
      %v2668 = vpop.f32.mrb[0].mxu0
      %v2669 = vadd.f32 0.0, %v2668
      %v2670 = vpop.f32.mrb[0].mxu0
      %2671 = vmatprep.mubr.bf16.mxu0 %v2537
      %2672 = vmatmul.mubr.bf16.gmra.mrb[0].mxu0 %v2368
      %v2673 = vpop.f32.mrb[0].mxu0
      %v2674 = vpop.f32.mrb[0].mxu0
      %v2675 = vpop.f32.mrb[0].mxu0
      %v2676 = vadd.f32 0.0, %v2675
      %v2677 = vpop.f32.mrb[0].mxu0
      %2678 = vmatprep.mubr.bf16.mxu0 %v2540
      %2679 = vmatmul.mubr.bf16.gmra.mrb[0].mxu0 %v2371
      %v2680 = vpop.f32.mrb[0].mxu0
      %v2681 = vadd.f32 0.0, %v2680
      %v2682 = vpop.f32.mrb[0].mxu0
      %v2683 = vpop.f32.mrb[0].mxu0
      %v2684 = vpop.f32.mrb[0].mxu0
      %2685 = vmatprep.mubr.bf16.mxu0 %v2543
      %2686 = vmatmul.mubr.bf16.gmra.mrb[0].mxu0 %v2374
      %v2687 = vpop.f32.mrb[0].mxu0
      %v2688 = vadd.f32 0.0, %v2687
      %v2689 = vpop.f32.mrb[0].mxu0
      %v2690 = vpop.f32.mrb[0].mxu0
      %v2691 = vadd.f32 0.0, %v2690
      %v2692 = vpop.f32.mrb[0].mxu0
      %2693 = vmatprep.mubr.bf16.mxu0 %v2546
      %2694 = vmatmul.mubr.bf16.gmra.mrb[0].mxu0 %v2377
      %v2695 = vpop.f32.mrb[0].mxu0
      %v2696 = vpop.f32.mrb[0].mxu0
      %v2697 = vpop.f32.mrb[0].mxu0
      %v2698 = vadd.f32 0.0, %v2697
      %v2699 = vpop.f32.mrb[0].mxu0
      %2700 = vmatprep.mubr.bf16.mxu0 %v2549
      %2701 = vmatmul.mubr.bf16.gmra.mrb[0].mxu0 %v2380
      %v2702 = vpop.f32.mrb[0].mxu0
      %v2703 = vadd.f32 0.0, %v2702
      %v2704 = vpop.f32.mrb[0].mxu0
      %v2705 = vpop.f32.mrb[0].mxu0
      %v2706 = vpop.f32.mrb[0].mxu0
      %2707 = vmatprep.mubr.bf16.mxu0 %v2552
      %2708 = vmatmul.mubr.bf16.gmra.mrb[0].mxu0 %v2383
      %v2709 = vpop.f32.mrb[0].mxu0
      %v2710 = vadd.f32 0.0, %v2709
      %v2711 = vpop.f32.mrb[0].mxu0
      %v2712 = vpop.f32.mrb[0].mxu0
      %v2713 = vadd.f32 0.0, %v2712
      %v2714 = vpop.f32.mrb[0].mxu0
      %2715 = vmatprep.mubr.bf16.mxu0 %v2555
      %2716 = vmatmul.mubr.bf16.gmra.mrb[0].mxu0 %v2386
      %v2717 = vpop.f32.mrb[0].mxu0
      %v2718 = vpop.f32.mrb[0].mxu0
      %v2719 = vpop.f32.mrb[0].mxu0
      %v2720 = vadd.f32 0.0, %v2719
      %v2721 = vpop.f32.mrb[0].mxu0
      %2722 = vmatprep.mubr.bf16.mxu0 %v2558
      %2723 = vmatmul.mubr.bf16.gmra.mrb[0].mxu0 %v2389
      %v2724 = vpop.f32.mrb[0].mxu0
      %v2725 = vadd.f32 0.0, %v2724
      %v2726 = vpop.f32.mrb[0].mxu0
      %v2727 = vpop.f32.mrb[0].mxu0
      %v2728 = vpop.f32.mrb[0].mxu0
      %2729 = vmatprep.mubr.bf16.mxu0 %v2561
      %2730 = vmatmul.mubr.bf16.gmra.mrb[0].mxu0 %v2392
      %v2731 = vpop.f32.mrb[0].mxu0
      %v2732 = vadd.f32 0.0, %v2731
      %v2733 = vpop.f32.mrb[0].mxu0
      %v2734 = vpop.f32.mrb[0].mxu0
      %v2735 = vadd.f32 0.0, %v2734
      %v2736 = vpop.f32.mrb[0].mxu0
      %2737 = vmatprep.mubr.bf16.mxu0 %v2564
      %2738 = vmatmul.mubr.bf16.gmra.mrb[0].mxu0 %v2395
      %v2739 = vpop.f32.mrb[0].mxu0
      %v2740 = vpop.f32.mrb[0].mxu0
      %v2741 = vpop.f32.mrb[0].mxu0
      %v2742 = vadd.f32 0.0, %v2741
      %v2743 = vpop.f32.mrb[0].mxu0
      %2744 = vmatprep.mubr.bf16.mxu0 %v2567
      %2745 = vmatmul.mubr.bf16.gmra.mrb[0].mxu0 %v2398
      %v2746 = vpop.f32.mrb[0].mxu0
      %v2747 = vadd.f32 0.0, %v2746
      %v2748 = vpop.f32.mrb[0].mxu0
      %v2749 = vpop.f32.mrb[0].mxu0
      %v2750 = vpop.f32.mrb[0].mxu0
      %2751 = vmatprep.mubr.bf16.mxu0 %v2570
      %2752 = vmatmul.mubr.bf16.gmra.mrb[0].mxu0 %v2401
      %v2753 = vpop.f32.mrb[0].mxu0
      %v2754 = vadd.f32 0.0, %v2753
      %v2755 = vpop.f32.mrb[0].mxu0
      %v2756 = vpop.f32.mrb[0].mxu0
      %v2757 = vadd.f32 0.0, %v2756
      %v2758 = vpop.f32.mrb[0].mxu0
      %2759 = vmatprep.mubr.bf16.mxu0 %v2573
      %2760 = vmatmul.mubr.bf16.gmra.mrb[0].mxu0 %v2404
      %v2761 = vpop.f32.mrb[0].mxu0
      %v2762 = vpop.f32.mrb[0].mxu0
      %v2763 = vpop.f32.mrb[0].mxu0
      %v2764 = vadd.f32 0.0, %v2763
      %v2765 = vpop.f32.mrb[0].mxu0
      %2766 = vmatprep.mubr.bf16.mxu0 %v2576
      %2767 = vmatmul.mubr.bf16.gmra.mrb[0].mxu0 %v2407
      %v2768 = vpop.f32.mrb[0].mxu0
      %v2769 = vadd.f32 0.0, %v2768
      %v2770 = vpop.f32.mrb[0].mxu0
      %v2771 = vpop.f32.mrb[0].mxu0
      %v2772 = vpop.f32.mrb[0].mxu0
      %2773 = vmatprep.mubr.bf16.mxu0 %v2579
      %2774 = vmatmul.mubr.bf16.gmra.mrb[0].mxu0 %v2410
      %v2775 = vpop.f32.mrb[0].mxu0
      %v2776 = vadd.f32 0.0, %v2775
      %v2777 = vpop.f32.mrb[0].mxu0
      %v2778 = vpop.f32.mrb[0].mxu0
      %v2779 = vadd.f32 0.0, %v2778
      %v2780 = vpop.f32.mrb[0].mxu0
      %2781 = vmatprep.mubr.bf16.mxu0 %v2582
      %2782 = vmatmul.mubr.bf16.gmra.mrb[0].mxu0 %v2413
      %v2783 = vpop.f32.mrb[0].mxu0
      %v2784 = vpop.f32.mrb[0].mxu0
      %v2785 = vpop.f32.mrb[0].mxu0
      %v2786 = vadd.f32 0.0, %v2785
      %v2787 = vpop.f32.mrb[0].mxu0
      %2788 = vmatprep.mubr.bf16.mxu0 %v2585
      %2789 = vmatmul.mubr.bf16.gmra.mrb[0].mxu0 %v2416
      %v2790 = vpop.f32.mrb[0].mxu0
      %v2791 = vadd.f32 0.0, %v2790
      %v2792 = vpop.f32.mrb[0].mxu0
      %v2793 = vpop.f32.mrb[0].mxu0
      %v2794 = vpop.f32.mrb[0].mxu0
      %2795 = vdwg.mxu0
      %v2796 = vadd.f32 %v1703, %v2622
      %v2797 = vadd.f32 %v1706, %v2625
      %v2798 = vadd.f32 %v1713, %v2632
      %v2799 = vadd.f32 %v1718, %v2637
      %v2800 = vadd.f32 %v1725, %v2644
      %v2801 = vadd.f32 %v1728, %v2647
      %v2802 = vadd.f32 %v1735, %v2654
      %v2803 = vadd.f32 %v1740, %v2659
      %v2804 = vadd.f32 %v1747, %v2666
      %v2805 = vadd.f32 %v1750, %v2669
      %v2806 = vadd.f32 %v1757, %v2676
      %v2807 = vadd.f32 %v1762, %v2681
      %v2808 = vadd.f32 %v1769, %v2688
      %v2809 = vadd.f32 %v1772, %v2691
      %v2810 = vadd.f32 %v1779, %v2698
      %v2811 = vadd.f32 %v1784, %v2703
      %v2812 = vadd.f32 %v1791, %v2710
      %v2813 = vadd.f32 %v1794, %v2713
      %v2814 = vadd.f32 %v1801, %v2720
      %v2815 = vadd.f32 %v1806, %v2725
      %v2816 = vadd.f32 %v1813, %v2732
      %v2817 = vadd.f32 %v1816, %v2735
      %v2818 = vadd.f32 %v1823, %v2742
      %v2819 = vadd.f32 %v1828, %v2747
      %v2820 = vadd.f32 %v1835, %v2754
      %v2821 = vadd.f32 %v1838, %v2757
      %v2822 = vadd.f32 %v1845, %v2764
      %v2823 = vadd.f32 %v1850, %v2769
      %v2824 = vadd.f32 %v1857, %v2776
      %v2825 = vadd.f32 %v1860, %v2779
      %v2826 = vadd.f32 %v1867, %v2786
      %v2827 = vadd.f32 %v1872, %v2791
      %v2828 = vld [vmem:[%s2] sm:$0x1]
      %v2830 = vlaneseq
      %v2831 = vshrl.u32 %v2830, 7
      %v2832 = vsub.s32 0, %v2831
      %v2833 = vrot.slane %v2828, %v2832
      %v2835 = vadd.f32 %v2796, %v2833
      %v2836 = vadd.f32 %v2797, %v2833
      %v2837 = vadd.f32 %v2798, %v2833
      %v2838 = vadd.f32 %v2799, %v2833
      %v2839 = vadd.f32 %v2800, %v2833
      %v2840 = vadd.f32 %v2801, %v2833
      %v2841 = vadd.f32 %v2802, %v2833
      %v2842 = vadd.f32 %v2803, %v2833
      %v2843 = vadd.f32 %v2804, %v2833
      %v2844 = vadd.f32 %v2805, %v2833
      %v2845 = vadd.f32 %v2806, %v2833
      %v2846 = vadd.f32 %v2807, %v2833
      %v2847 = vadd.f32 %v2808, %v2833
      %v2848 = vadd.f32 %v2809, %v2833
      %v2849 = vadd.f32 %v2810, %v2833
      %v2850 = vadd.f32 %v2811, %v2833
      %v2851 = vadd.f32 %v2812, %v2833
      %v2852 = vadd.f32 %v2813, %v2833
      %v2853 = vadd.f32 %v2814, %v2833
      %v2854 = vadd.f32 %v2815, %v2833
      %v2855 = vadd.f32 %v2816, %v2833
      %v2856 = vadd.f32 %v2817, %v2833
      %v2857 = vadd.f32 %v2818, %v2833
      %v2858 = vadd.f32 %v2819, %v2833
      %v2859 = vadd.f32 %v2820, %v2833
      %v2860 = vadd.f32 %v2821, %v2833
      %v2861 = vadd.f32 %v2822, %v2833
      %v2862 = vadd.f32 %v2823, %v2833
      %v2863 = vadd.f32 %v2824, %v2833
      %v2864 = vadd.f32 %v2825, %v2833
      %v2865 = vadd.f32 %v2826, %v2833
      %v2866 = vadd.f32 %v2827, %v2833
      %v2867 = vmax.f32 %v2835, 0.0
      %v2868 = vmax.f32 %v2836, 0.0
      %v2869 = vmax.f32 %v2837, 0.0
      %v2870 = vmax.f32 %v2838, 0.0
      %v2871 = vmax.f32 %v2839, 0.0
      %v2872 = vmax.f32 %v2840, 0.0
      %v2873 = vmax.f32 %v2841, 0.0
      %v2874 = vmax.f32 %v2842, 0.0
      %v2875 = vmax.f32 %v2843, 0.0
      %v2876 = vmax.f32 %v2844, 0.0
      %v2877 = vmax.f32 %v2845, 0.0
      %v2878 = vmax.f32 %v2846, 0.0
      %v2879 = vmax.f32 %v2847, 0.0
      %v2880 = vmax.f32 %v2848, 0.0
      %v2881 = vmax.f32 %v2849, 0.0
      %v2882 = vmax.f32 %v2850, 0.0
      %v2883 = vmax.f32 %v2851, 0.0
      %v2884 = vmax.f32 %v2852, 0.0
      %v2885 = vmax.f32 %v2853, 0.0
      %v2886 = vmax.f32 %v2854, 0.0
      %v2887 = vmax.f32 %v2855, 0.0
      %v2888 = vmax.f32 %v2856, 0.0
      %v2889 = vmax.f32 %v2857, 0.0
      %v2890 = vmax.f32 %v2858, 0.0
      %v2891 = vmax.f32 %v2859, 0.0
      %v2892 = vmax.f32 %v2860, 0.0
      %v2893 = vmax.f32 %v2861, 0.0
      %v2894 = vmax.f32 %v2862, 0.0
      %v2895 = vmax.f32 %v2863, 0.0
      %v2896 = vmax.f32 %v2864, 0.0
      %v2897 = vmax.f32 %v2865, 0.0
      %v2898 = vmax.f32 %v2866, 0.0
      %v2931 = vcombine.high %v2867, %v2867
      %v2933 = vunpack.c.l.s4 1983009808
      %v2934 = vunpack.c.0.s8 %v2933
      %v2935 = vlaneseq
      %v2936 = vshrl.u32 %v2935, 7
      %v2937 = vsub.s32 %v2934, %v2936
      %v2938 = vrot.slane %v2867, %v2937
      %v2940 = vunpack.c.l.s4 1983009808
      %v2941 = vunpack.c.0.s8 %v2940
      %v2942 = vlaneseq
      %v2943 = vshrl.u32 %v2942, 7
      %v2944 = vsub.s32 %v2941, %v2943
      %v2945 = vrot.slane %v2931, %v2944
      %v2946 = vcombine.high %v2938, %v2938
      %v2947 = vcombine.high %v2945, %v2945
      %v2948 = vcombine.high %v2868, %v2868
      %v2950 = vunpack.c.l.s4 1983009808
      %v2951 = vunpack.c.0.s8 %v2950
      %v2952 = vlaneseq
      %v2953 = vshrl.u32 %v2952, 7
      %v2954 = vsub.s32 %v2951, %v2953
      %v2955 = vrot.slane %v2868, %v2954
      %v2957 = vunpack.c.l.s4 1983009808
      %v2958 = vunpack.c.0.s8 %v2957
      %v2959 = vlaneseq
      %v2960 = vshrl.u32 %v2959, 7
      %v2961 = vsub.s32 %v2958, %v2960
      %v2962 = vrot.slane %v2948, %v2961
      %v2963 = vcombine.high %v2955, %v2955
      %v2964 = vcombine.high %v2962, %v2962
      %v2965 = vcombine.high %v2869, %v2869
      %v2967 = vunpack.c.l.s4 1983009808
      %v2968 = vunpack.c.0.s8 %v2967
      %v2969 = vlaneseq
      %v2970 = vshrl.u32 %v2969, 7
      %v2971 = vsub.s32 %v2968, %v2970
      %v2972 = vrot.slane %v2869, %v2971
      %v2974 = vunpack.c.l.s4 1983009808
      %v2975 = vunpack.c.0.s8 %v2974
      %v2976 = vlaneseq
      %v2977 = vshrl.u32 %v2976, 7
      %v2978 = vsub.s32 %v2975, %v2977
      %v2979 = vrot.slane %v2965, %v2978
      %v2980 = vcombine.high %v2972, %v2972
      %v2981 = vcombine.high %v2979, %v2979
      %v2982 = vcombine.high %v2870, %v2870
      %v2984 = vunpack.c.l.s4 1983009808
      %v2985 = vunpack.c.0.s8 %v2984
      %v2986 = vlaneseq
      %v2987 = vshrl.u32 %v2986, 7
      %v2988 = vsub.s32 %v2985, %v2987
      %v2989 = vrot.slane %v2870, %v2988
      %v2991 = vunpack.c.l.s4 1983009808
      %v2992 = vunpack.c.0.s8 %v2991
      %v2993 = vlaneseq
      %v2994 = vshrl.u32 %v2993, 7
      %v2995 = vsub.s32 %v2992, %v2994
      %v2996 = vrot.slane %v2982, %v2995
      %v2997 = vcombine.high %v2989, %v2989
      %v2998 = vcombine.high %v2996, %v2996
      %v2999 = vcombine.high %v2871, %v2871
      %v3001 = vunpack.c.l.s4 1983009808
      %v3002 = vunpack.c.0.s8 %v3001
      %v3003 = vlaneseq
      %v3004 = vshrl.u32 %v3003, 7
      %v3005 = vsub.s32 %v3002, %v3004
      %v3006 = vrot.slane %v2871, %v3005
      %v3008 = vunpack.c.l.s4 1983009808
      %v3009 = vunpack.c.0.s8 %v3008
      %v3010 = vlaneseq
      %v3011 = vshrl.u32 %v3010, 7
      %v3012 = vsub.s32 %v3009, %v3011
      %v3013 = vrot.slane %v2999, %v3012
      %v3014 = vcombine.high %v3006, %v3006
      %v3015 = vcombine.high %v3013, %v3013
      %v3016 = vcombine.high %v2872, %v2872
      %v3018 = vunpack.c.l.s4 1983009808
      %v3019 = vunpack.c.0.s8 %v3018
      %v3020 = vlaneseq
      %v3021 = vshrl.u32 %v3020, 7
      %v3022 = vsub.s32 %v3019, %v3021
      %v3023 = vrot.slane %v2872, %v3022
      %v3025 = vunpack.c.l.s4 1983009808
      %v3026 = vunpack.c.0.s8 %v3025
      %v3027 = vlaneseq
      %v3028 = vshrl.u32 %v3027, 7
      %v3029 = vsub.s32 %v3026, %v3028
      %v3030 = vrot.slane %v3016, %v3029
      %v3031 = vcombine.high %v3023, %v3023
      %v3032 = vcombine.high %v3030, %v3030
      %v3033 = vcombine.high %v2873, %v2873
      %v3035 = vunpack.c.l.s4 1983009808
      %v3036 = vunpack.c.0.s8 %v3035
      %v3037 = vlaneseq
      %v3038 = vshrl.u32 %v3037, 7
      %v3039 = vsub.s32 %v3036, %v3038
      %v3040 = vrot.slane %v2873, %v3039
      %v3042 = vunpack.c.l.s4 1983009808
      %v3043 = vunpack.c.0.s8 %v3042
      %v3044 = vlaneseq
      %v3045 = vshrl.u32 %v3044, 7
      %v3046 = vsub.s32 %v3043, %v3045
      %v3047 = vrot.slane %v3033, %v3046
      %v3048 = vcombine.high %v3040, %v3040
      %v3049 = vcombine.high %v3047, %v3047
      %v3050 = vcombine.high %v2874, %v2874
      %v3052 = vunpack.c.l.s4 1983009808
      %v3053 = vunpack.c.0.s8 %v3052
      %v3054 = vlaneseq
      %v3055 = vshrl.u32 %v3054, 7
      %v3056 = vsub.s32 %v3053, %v3055
      %v3057 = vrot.slane %v2874, %v3056
      %v3059 = vunpack.c.l.s4 1983009808
      %v3060 = vunpack.c.0.s8 %v3059
      %v3061 = vlaneseq
      %v3062 = vshrl.u32 %v3061, 7
      %v3063 = vsub.s32 %v3060, %v3062
      %v3064 = vrot.slane %v3050, %v3063
      %v3065 = vcombine.high %v3057, %v3057
      %v3066 = vcombine.high %v3064, %v3064
      %v3067 = vcombine.high %v2875, %v2875
      %v3069 = vunpack.c.l.s4 1983009808
      %v3070 = vunpack.c.0.s8 %v3069
      %v3071 = vlaneseq
      %v3072 = vshrl.u32 %v3071, 7
      %v3073 = vsub.s32 %v3070, %v3072
      %v3074 = vrot.slane %v2875, %v3073
      %v3076 = vunpack.c.l.s4 1983009808
      %v3077 = vunpack.c.0.s8 %v3076
      %v3078 = vlaneseq
      %v3079 = vshrl.u32 %v3078, 7
      %v3080 = vsub.s32 %v3077, %v3079
      %v3081 = vrot.slane %v3067, %v3080
      %v3082 = vcombine.high %v3074, %v3074
      %v3083 = vcombine.high %v3081, %v3081
      %v3084 = vcombine.high %v2876, %v2876
      %v3086 = vunpack.c.l.s4 1983009808
      %v3087 = vunpack.c.0.s8 %v3086
      %v3088 = vlaneseq
      %v3089 = vshrl.u32 %v3088, 7
      %v3090 = vsub.s32 %v3087, %v3089
      %v3091 = vrot.slane %v2876, %v3090
      %v3093 = vunpack.c.l.s4 1983009808
      %v3094 = vunpack.c.0.s8 %v3093
      %v3095 = vlaneseq
      %v3096 = vshrl.u32 %v3095, 7
      %v3097 = vsub.s32 %v3094, %v3096
      %v3098 = vrot.slane %v3084, %v3097
      %v3099 = vcombine.high %v3091, %v3091
      %v3100 = vcombine.high %v3098, %v3098
      %v3101 = vcombine.high %v2877, %v2877
      %v3103 = vunpack.c.l.s4 1983009808
      %v3104 = vunpack.c.0.s8 %v3103
      %v3105 = vlaneseq
      %v3106 = vshrl.u32 %v3105, 7
      %v3107 = vsub.s32 %v3104, %v3106
      %v3108 = vrot.slane %v2877, %v3107
      %v3110 = vunpack.c.l.s4 1983009808
      %v3111 = vunpack.c.0.s8 %v3110
      %v3112 = vlaneseq
      %v3113 = vshrl.u32 %v3112, 7
      %v3114 = vsub.s32 %v3111, %v3113
      %v3115 = vrot.slane %v3101, %v3114
      %v3116 = vcombine.high %v3108, %v3108
      %v3117 = vcombine.high %v3115, %v3115
      %v3118 = vcombine.high %v2878, %v2878
      %v3120 = vunpack.c.l.s4 1983009808
      %v3121 = vunpack.c.0.s8 %v3120
      %v3122 = vlaneseq
      %v3123 = vshrl.u32 %v3122, 7
      %v3124 = vsub.s32 %v3121, %v3123
      %v3125 = vrot.slane %v2878, %v3124
      %v3127 = vunpack.c.l.s4 1983009808
      %v3128 = vunpack.c.0.s8 %v3127
      %v3129 = vlaneseq
      %v3130 = vshrl.u32 %v3129, 7
      %v3131 = vsub.s32 %v3128, %v3130
      %v3132 = vrot.slane %v3118, %v3131
      %v3133 = vcombine.high %v3125, %v3125
      %v3134 = vcombine.high %v3132, %v3132
      %v3135 = vcombine.high %v2879, %v2879
      %v3137 = vunpack.c.l.s4 1983009808
      %v3138 = vunpack.c.0.s8 %v3137
      %v3139 = vlaneseq
      %v3140 = vshrl.u32 %v3139, 7
      %v3141 = vsub.s32 %v3138, %v3140
      %v3142 = vrot.slane %v2879, %v3141
      %v3144 = vunpack.c.l.s4 1983009808
      %v3145 = vunpack.c.0.s8 %v3144
      %v3146 = vlaneseq
      %v3147 = vshrl.u32 %v3146, 7
      %v3148 = vsub.s32 %v3145, %v3147
      %v3149 = vrot.slane %v3135, %v3148
      %v3150 = vcombine.high %v3142, %v3142
      %v3151 = vcombine.high %v3149, %v3149
      %v3152 = vcombine.high %v2880, %v2880
      %v3154 = vunpack.c.l.s4 1983009808
      %v3155 = vunpack.c.0.s8 %v3154
      %v3156 = vlaneseq
      %v3157 = vshrl.u32 %v3156, 7
      %v3158 = vsub.s32 %v3155, %v3157
      %v3159 = vrot.slane %v2880, %v3158
      %v3161 = vunpack.c.l.s4 1983009808
      %v3162 = vunpack.c.0.s8 %v3161
      %v3163 = vlaneseq
      %v3164 = vshrl.u32 %v3163, 7
      %v3165 = vsub.s32 %v3162, %v3164
      %v3166 = vrot.slane %v3152, %v3165
      %v3167 = vcombine.high %v3159, %v3159
      %v3168 = vcombine.high %v3166, %v3166
      %v3169 = vcombine.high %v2881, %v2881
      %v3171 = vunpack.c.l.s4 1983009808
      %v3172 = vunpack.c.0.s8 %v3171
      %v3173 = vlaneseq
      %v3174 = vshrl.u32 %v3173, 7
      %v3175 = vsub.s32 %v3172, %v3174
      %v3176 = vrot.slane %v2881, %v3175
      %v3178 = vunpack.c.l.s4 1983009808
      %v3179 = vunpack.c.0.s8 %v3178
      %v3180 = vlaneseq
      %v3181 = vshrl.u32 %v3180, 7
      %v3182 = vsub.s32 %v3179, %v3181
      %v3183 = vrot.slane %v3169, %v3182
      %v3184 = vcombine.high %v3176, %v3176
      %v3185 = vcombine.high %v3183, %v3183
      %v3186 = vcombine.high %v2882, %v2882
      %v3188 = vunpack.c.l.s4 1983009808
      %v3189 = vunpack.c.0.s8 %v3188
      %v3190 = vlaneseq
      %v3191 = vshrl.u32 %v3190, 7
      %v3192 = vsub.s32 %v3189, %v3191
      %v3193 = vrot.slane %v2882, %v3192
      %v3195 = vunpack.c.l.s4 1983009808
      %v3196 = vunpack.c.0.s8 %v3195
      %v3197 = vlaneseq
      %v3198 = vshrl.u32 %v3197, 7
      %v3199 = vsub.s32 %v3196, %v3198
      %v3200 = vrot.slane %v3186, %v3199
      %v3201 = vcombine.high %v3193, %v3193
      %v3202 = vcombine.high %v3200, %v3200
      %v3203 = vcombine.high %v2883, %v2883
      %v3205 = vunpack.c.l.s4 1983009808
      %v3206 = vunpack.c.0.s8 %v3205
      %v3207 = vlaneseq
      %v3208 = vshrl.u32 %v3207, 7
      %v3209 = vsub.s32 %v3206, %v3208
      %v3210 = vrot.slane %v2883, %v3209
      %v3212 = vunpack.c.l.s4 1983009808
      %v3213 = vunpack.c.0.s8 %v3212
      %v3214 = vlaneseq
      %v3215 = vshrl.u32 %v3214, 7
      %v3216 = vsub.s32 %v3213, %v3215
      %v3217 = vrot.slane %v3203, %v3216
      %v3218 = vcombine.high %v3210, %v3210
      %v3219 = vcombine.high %v3217, %v3217
      %v3220 = vcombine.high %v2884, %v2884
      %v3222 = vunpack.c.l.s4 1983009808
      %v3223 = vunpack.c.0.s8 %v3222
      %v3224 = vlaneseq
      %v3225 = vshrl.u32 %v3224, 7
      %v3226 = vsub.s32 %v3223, %v3225
      %v3227 = vrot.slane %v2884, %v3226
      %v3229 = vunpack.c.l.s4 1983009808
      %v3230 = vunpack.c.0.s8 %v3229
      %v3231 = vlaneseq
      %v3232 = vshrl.u32 %v3231, 7
      %v3233 = vsub.s32 %v3230, %v3232
      %v3234 = vrot.slane %v3220, %v3233
      %v3235 = vcombine.high %v3227, %v3227
      %v3236 = vcombine.high %v3234, %v3234
      %v3237 = vcombine.high %v2885, %v2885
      %v3239 = vunpack.c.l.s4 1983009808
      %v3240 = vunpack.c.0.s8 %v3239
      %v3241 = vlaneseq
      %v3242 = vshrl.u32 %v3241, 7
      %v3243 = vsub.s32 %v3240, %v3242
      %v3244 = vrot.slane %v2885, %v3243
      %v3246 = vunpack.c.l.s4 1983009808
      %v3247 = vunpack.c.0.s8 %v3246
      %v3248 = vlaneseq
      %v3249 = vshrl.u32 %v3248, 7
      %v3250 = vsub.s32 %v3247, %v3249
      %v3251 = vrot.slane %v3237, %v3250
      %v3252 = vcombine.high %v3244, %v3244
      %v3253 = vcombine.high %v3251, %v3251
      %v3254 = vcombine.high %v2886, %v2886
      %v3256 = vunpack.c.l.s4 1983009808
      %v3257 = vunpack.c.0.s8 %v3256
      %v3258 = vlaneseq
      %v3259 = vshrl.u32 %v3258, 7
      %v3260 = vsub.s32 %v3257, %v3259
      %v3261 = vrot.slane %v2886, %v3260
      %v3263 = vunpack.c.l.s4 1983009808
      %v3264 = vunpack.c.0.s8 %v3263
      %v3265 = vlaneseq
      %v3266 = vshrl.u32 %v3265, 7
      %v3267 = vsub.s32 %v3264, %v3266
      %v3268 = vrot.slane %v3254, %v3267
      %v3269 = vcombine.high %v3261, %v3261
      %v3270 = vcombine.high %v3268, %v3268
      %v3271 = vcombine.high %v2887, %v2887
      %v3273 = vunpack.c.l.s4 1983009808
      %v3274 = vunpack.c.0.s8 %v3273
      %v3275 = vlaneseq
      %v3276 = vshrl.u32 %v3275, 7
      %v3277 = vsub.s32 %v3274, %v3276
      %v3278 = vrot.slane %v2887, %v3277
      %v3280 = vunpack.c.l.s4 1983009808
      %v3281 = vunpack.c.0.s8 %v3280
      %v3282 = vlaneseq
      %v3283 = vshrl.u32 %v3282, 7
      %v3284 = vsub.s32 %v3281, %v3283
      %v3285 = vrot.slane %v3271, %v3284
      %v3286 = vcombine.high %v3278, %v3278
      %v3287 = vcombine.high %v3285, %v3285
      %v3288 = vcombine.high %v2888, %v2888
      %v3290 = vunpack.c.l.s4 1983009808
      %v3291 = vunpack.c.0.s8 %v3290
      %v3292 = vlaneseq
      %v3293 = vshrl.u32 %v3292, 7
      %v3294 = vsub.s32 %v3291, %v3293
      %v3295 = vrot.slane %v2888, %v3294
      %v3297 = vunpack.c.l.s4 1983009808
      %v3298 = vunpack.c.0.s8 %v3297
      %v3299 = vlaneseq
      %v3300 = vshrl.u32 %v3299, 7
      %v3301 = vsub.s32 %v3298, %v3300
      %v3302 = vrot.slane %v3288, %v3301
      %v3303 = vcombine.high %v3295, %v3295
      %v3304 = vcombine.high %v3302, %v3302
      %v3305 = vcombine.high %v2889, %v2889
      %v3307 = vunpack.c.l.s4 1983009808
      %v3308 = vunpack.c.0.s8 %v3307
      %v3309 = vlaneseq
      %v3310 = vshrl.u32 %v3309, 7
      %v3311 = vsub.s32 %v3308, %v3310
      %v3312 = vrot.slane %v2889, %v3311
      %v3314 = vunpack.c.l.s4 1983009808
      %v3315 = vunpack.c.0.s8 %v3314
      %v3316 = vlaneseq
      %v3317 = vshrl.u32 %v3316, 7
      %v3318 = vsub.s32 %v3315, %v3317
      %v3319 = vrot.slane %v3305, %v3318
      %v3320 = vcombine.high %v3312, %v3312
      %v3321 = vcombine.high %v3319, %v3319
      %v3322 = vcombine.high %v2890, %v2890
      %v3324 = vunpack.c.l.s4 1983009808
      %v3325 = vunpack.c.0.s8 %v3324
      %v3326 = vlaneseq
      %v3327 = vshrl.u32 %v3326, 7
      %v3328 = vsub.s32 %v3325, %v3327
      %v3329 = vrot.slane %v2890, %v3328
      %v3331 = vunpack.c.l.s4 1983009808
      %v3332 = vunpack.c.0.s8 %v3331
      %v3333 = vlaneseq
      %v3334 = vshrl.u32 %v3333, 7
      %v3335 = vsub.s32 %v3332, %v3334
      %v3336 = vrot.slane %v3322, %v3335
      %v3337 = vcombine.high %v3329, %v3329
      %v3338 = vcombine.high %v3336, %v3336
      %v3339 = vcombine.high %v2891, %v2891
      %v3341 = vunpack.c.l.s4 1983009808
      %v3342 = vunpack.c.0.s8 %v3341
      %v3343 = vlaneseq
      %v3344 = vshrl.u32 %v3343, 7
      %v3345 = vsub.s32 %v3342, %v3344
      %v3346 = vrot.slane %v2891, %v3345
      %v3348 = vunpack.c.l.s4 1983009808
      %v3349 = vunpack.c.0.s8 %v3348
      %v3350 = vlaneseq
      %v3351 = vshrl.u32 %v3350, 7
      %v3352 = vsub.s32 %v3349, %v3351
      %v3353 = vrot.slane %v3339, %v3352
      %v3354 = vcombine.high %v3346, %v3346
      %v3355 = vcombine.high %v3353, %v3353
      %v3356 = vcombine.high %v2892, %v2892
      %v3358 = vunpack.c.l.s4 1983009808
      %v3359 = vunpack.c.0.s8 %v3358
      %v3360 = vlaneseq
      %v3361 = vshrl.u32 %v3360, 7
      %v3362 = vsub.s32 %v3359, %v3361
      %v3363 = vrot.slane %v2892, %v3362
      %v3365 = vunpack.c.l.s4 1983009808
      %v3366 = vunpack.c.0.s8 %v3365
      %v3367 = vlaneseq
      %v3368 = vshrl.u32 %v3367, 7
      %v3369 = vsub.s32 %v3366, %v3368
      %v3370 = vrot.slane %v3356, %v3369
      %v3371 = vcombine.high %v3363, %v3363
      %v3372 = vcombine.high %v3370, %v3370
      %v3373 = vcombine.high %v2893, %v2893
      %v3375 = vunpack.c.l.s4 1983009808
      %v3376 = vunpack.c.0.s8 %v3375
      %v3377 = vlaneseq
      %v3378 = vshrl.u32 %v3377, 7
      %v3379 = vsub.s32 %v3376, %v3378
      %v3380 = vrot.slane %v2893, %v3379
      %v3382 = vunpack.c.l.s4 1983009808
      %v3383 = vunpack.c.0.s8 %v3382
      %v3384 = vlaneseq
      %v3385 = vshrl.u32 %v3384, 7
      %v3386 = vsub.s32 %v3383, %v3385
      %v3387 = vrot.slane %v3373, %v3386
      %v3388 = vcombine.high %v3380, %v3380
      %v3389 = vcombine.high %v3387, %v3387
      %v3390 = vcombine.high %v2894, %v2894
      %v3392 = vunpack.c.l.s4 1983009808
      %v3393 = vunpack.c.0.s8 %v3392
      %v3394 = vlaneseq
      %v3395 = vshrl.u32 %v3394, 7
      %v3396 = vsub.s32 %v3393, %v3395
      %v3397 = vrot.slane %v2894, %v3396
      %v3399 = vunpack.c.l.s4 1983009808
      %v3400 = vunpack.c.0.s8 %v3399
      %v3401 = vlaneseq
      %v3402 = vshrl.u32 %v3401, 7
      %v3403 = vsub.s32 %v3400, %v3402
      %v3404 = vrot.slane %v3390, %v3403
      %v3405 = vcombine.high %v3397, %v3397
      %v3406 = vcombine.high %v3404, %v3404
      %v3407 = vcombine.high %v2895, %v2895
      %v3409 = vunpack.c.l.s4 1983009808
      %v3410 = vunpack.c.0.s8 %v3409
      %v3411 = vlaneseq
      %v3412 = vshrl.u32 %v3411, 7
      %v3413 = vsub.s32 %v3410, %v3412
      %v3414 = vrot.slane %v2895, %v3413
      %v3416 = vunpack.c.l.s4 1983009808
      %v3417 = vunpack.c.0.s8 %v3416
      %v3418 = vlaneseq
      %v3419 = vshrl.u32 %v3418, 7
      %v3420 = vsub.s32 %v3417, %v3419
      %v3421 = vrot.slane %v3407, %v3420
      %v3422 = vcombine.high %v3414, %v3414
      %v3423 = vcombine.high %v3421, %v3421
      %v3424 = vcombine.high %v2896, %v2896
      %v3426 = vunpack.c.l.s4 1983009808
      %v3427 = vunpack.c.0.s8 %v3426
      %v3428 = vlaneseq
      %v3429 = vshrl.u32 %v3428, 7
      %v3430 = vsub.s32 %v3427, %v3429
      %v3431 = vrot.slane %v2896, %v3430
      %v3433 = vunpack.c.l.s4 1983009808
      %v3434 = vunpack.c.0.s8 %v3433
      %v3435 = vlaneseq
      %v3436 = vshrl.u32 %v3435, 7
      %v3437 = vsub.s32 %v3434, %v3436
      %v3438 = vrot.slane %v3424, %v3437
      %v3439 = vcombine.high %v3431, %v3431
      %v3440 = vcombine.high %v3438, %v3438
      %v3441 = vcombine.high %v2897, %v2897
      %v3443 = vunpack.c.l.s4 1983009808
      %v3444 = vunpack.c.0.s8 %v3443
      %v3445 = vlaneseq
      %v3446 = vshrl.u32 %v3445, 7
      %v3447 = vsub.s32 %v3444, %v3446
      %v3448 = vrot.slane %v2897, %v3447
      %v3450 = vunpack.c.l.s4 1983009808
      %v3451 = vunpack.c.0.s8 %v3450
      %v3452 = vlaneseq
      %v3453 = vshrl.u32 %v3452, 7
      %v3454 = vsub.s32 %v3451, %v3453
      %v3455 = vrot.slane %v3441, %v3454
      %v3456 = vcombine.high %v3448, %v3448
      %v3457 = vcombine.high %v3455, %v3455
      %v3458 = vcombine.high %v2898, %v2898
      %v3460 = vunpack.c.l.s4 1983009808
      %v3461 = vunpack.c.0.s8 %v3460
      %v3462 = vlaneseq
      %v3463 = vshrl.u32 %v3462, 7
      %v3464 = vsub.s32 %v3461, %v3463
      %v3465 = vrot.slane %v2898, %v3464
      %v3467 = vunpack.c.l.s4 1983009808
      %v3468 = vunpack.c.0.s8 %v3467
      %v3469 = vlaneseq
      %v3470 = vshrl.u32 %v3469, 7
      %v3471 = vsub.s32 %v3468, %v3470
      %v3472 = vrot.slane %v3458, %v3471
      %v3473 = vcombine.high %v3465, %v3465
      %v3474 = vcombine.high %v3472, %v3472
      %vm3603 = vcmask 517120
      %v3604 = vsel %vm3603, %v2938, -inf
      %v3605 = vrot.slane %v3604, 4
      %v3606 = vmax.f32 %v3604, %v3605
      %v3607 = vrot.slane %v3606, 2
      %v3608 = vmax.f32 %v3606, %v3607
      %v3609 = vrot.slane %v3608, 1
      %v3610 = vmax.f32 %v3608, %v3609
      %v3611 = vsel %vm3603, %v2946, -inf
      %v3612 = vrot.slane %v3611, 4
      %v3613 = vmax.f32 %v3611, %v3612
      %v3614 = vrot.slane %v3613, 2
      %v3615 = vmax.f32 %v3613, %v3614
      %v3616 = vrot.slane %v3615, 1
      %v3617 = vmax.f32 %v3615, %v3616
      %v3618 = vsel %vm3603, %v2945, -inf
      %v3619 = vrot.slane %v3618, 4
      %v3620 = vmax.f32 %v3618, %v3619
      %v3621 = vrot.slane %v3620, 2
      %v3622 = vmax.f32 %v3620, %v3621
      %v3623 = vrot.slane %v3622, 1
      %v3624 = vmax.f32 %v3622, %v3623
      %v3625 = vsel %vm3603, %v2947, -inf
      %v3626 = vrot.slane %v3625, 4
      %v3627 = vmax.f32 %v3625, %v3626
      %v3628 = vrot.slane %v3627, 2
      %v3629 = vmax.f32 %v3627, %v3628
      %v3630 = vrot.slane %v3629, 1
      %v3631 = vmax.f32 %v3629, %v3630
      %v3632 = vsel %vm3603, %v2955, -inf
      %v3633 = vrot.slane %v3632, 4
      %v3634 = vmax.f32 %v3632, %v3633
      %v3635 = vrot.slane %v3634, 2
      %v3636 = vmax.f32 %v3634, %v3635
      %v3637 = vrot.slane %v3636, 1
      %v3638 = vmax.f32 %v3636, %v3637
      %v3639 = vsel %vm3603, %v2963, -inf
      %v3640 = vrot.slane %v3639, 4
      %v3641 = vmax.f32 %v3639, %v3640
      %v3642 = vrot.slane %v3641, 2
      %v3643 = vmax.f32 %v3641, %v3642
      %v3644 = vrot.slane %v3643, 1
      %v3645 = vmax.f32 %v3643, %v3644
      %v3646 = vsel %vm3603, %v2962, -inf
      %v3647 = vrot.slane %v3646, 4
      %v3648 = vmax.f32 %v3646, %v3647
      %v3649 = vrot.slane %v3648, 2
      %v3650 = vmax.f32 %v3648, %v3649
      %v3651 = vrot.slane %v3650, 1
      %v3652 = vmax.f32 %v3650, %v3651
      %v3653 = vsel %vm3603, %v2964, -inf
      %v3654 = vrot.slane %v3653, 4
      %v3655 = vmax.f32 %v3653, %v3654
      %v3656 = vrot.slane %v3655, 2
      %v3657 = vmax.f32 %v3655, %v3656
      %v3658 = vrot.slane %v3657, 1
      %v3659 = vmax.f32 %v3657, %v3658
      %v3660 = vsel %vm3603, %v2972, -inf
      %v3661 = vrot.slane %v3660, 4
      %v3662 = vmax.f32 %v3660, %v3661
      %v3663 = vrot.slane %v3662, 2
      %v3664 = vmax.f32 %v3662, %v3663
      %v3665 = vrot.slane %v3664, 1
      %v3666 = vmax.f32 %v3664, %v3665
      %v3667 = vsel %vm3603, %v2980, -inf
      %v3668 = vrot.slane %v3667, 4
      %v3669 = vmax.f32 %v3667, %v3668
      %v3670 = vrot.slane %v3669, 2
      %v3671 = vmax.f32 %v3669, %v3670
      %v3672 = vrot.slane %v3671, 1
      %v3673 = vmax.f32 %v3671, %v3672
      %v3674 = vsel %vm3603, %v2979, -inf
      %v3675 = vrot.slane %v3674, 4
      %v3676 = vmax.f32 %v3674, %v3675
      %v3677 = vrot.slane %v3676, 2
      %v3678 = vmax.f32 %v3676, %v3677
      %v3679 = vrot.slane %v3678, 1
      %v3680 = vmax.f32 %v3678, %v3679
      %v3681 = vsel %vm3603, %v2981, -inf
      %v3682 = vrot.slane %v3681, 4
      %v3683 = vmax.f32 %v3681, %v3682
      %v3684 = vrot.slane %v3683, 2
      %v3685 = vmax.f32 %v3683, %v3684
      %v3686 = vrot.slane %v3685, 1
      %v3687 = vmax.f32 %v3685, %v3686
      %v3688 = vsel %vm3603, %v2989, -inf
      %v3689 = vrot.slane %v3688, 4
      %v3690 = vmax.f32 %v3688, %v3689
      %v3691 = vrot.slane %v3690, 2
      %v3692 = vmax.f32 %v3690, %v3691
      %v3693 = vrot.slane %v3692, 1
      %v3694 = vmax.f32 %v3692, %v3693
      %v3695 = vsel %vm3603, %v2997, -inf
      %v3696 = vrot.slane %v3695, 4
      %v3697 = vmax.f32 %v3695, %v3696
      %v3698 = vrot.slane %v3697, 2
      %v3699 = vmax.f32 %v3697, %v3698
      %v3700 = vrot.slane %v3699, 1
      %v3701 = vmax.f32 %v3699, %v3700
      %v3702 = vsel %vm3603, %v2996, -inf
      %v3703 = vrot.slane %v3702, 4
      %v3704 = vmax.f32 %v3702, %v3703
      %v3705 = vrot.slane %v3704, 2
      %v3706 = vmax.f32 %v3704, %v3705
      %v3707 = vrot.slane %v3706, 1
      %v3708 = vmax.f32 %v3706, %v3707
      %v3709 = vsel %vm3603, %v2998, -inf
      %v3710 = vrot.slane %v3709, 4
      %v3711 = vmax.f32 %v3709, %v3710
      %v3712 = vrot.slane %v3711, 2
      %v3713 = vmax.f32 %v3711, %v3712
      %v3714 = vrot.slane %v3713, 1
      %v3715 = vmax.f32 %v3713, %v3714
      %v3716 = vsel %vm3603, %v3006, -inf
      %v3717 = vrot.slane %v3716, 4
      %v3718 = vmax.f32 %v3716, %v3717
      %v3719 = vrot.slane %v3718, 2
      %v3720 = vmax.f32 %v3718, %v3719
      %v3721 = vrot.slane %v3720, 1
      %v3722 = vmax.f32 %v3720, %v3721
      %v3723 = vsel %vm3603, %v3014, -inf
      %v3724 = vrot.slane %v3723, 4
      %v3725 = vmax.f32 %v3723, %v3724
      %v3726 = vrot.slane %v3725, 2
      %v3727 = vmax.f32 %v3725, %v3726
      %v3728 = vrot.slane %v3727, 1
      %v3729 = vmax.f32 %v3727, %v3728
      %v3730 = vsel %vm3603, %v3013, -inf
      %v3731 = vrot.slane %v3730, 4
      %v3732 = vmax.f32 %v3730, %v3731
      %v3733 = vrot.slane %v3732, 2
      %v3734 = vmax.f32 %v3732, %v3733
      %v3735 = vrot.slane %v3734, 1
      %v3736 = vmax.f32 %v3734, %v3735
      %v3737 = vsel %vm3603, %v3015, -inf
      %v3738 = vrot.slane %v3737, 4
      %v3739 = vmax.f32 %v3737, %v3738
      %v3740 = vrot.slane %v3739, 2
      %v3741 = vmax.f32 %v3739, %v3740
      %v3742 = vrot.slane %v3741, 1
      %v3743 = vmax.f32 %v3741, %v3742
      %v3744 = vsel %vm3603, %v3023, -inf
      %v3745 = vrot.slane %v3744, 4
      %v3746 = vmax.f32 %v3744, %v3745
      %v3747 = vrot.slane %v3746, 2
      %v3748 = vmax.f32 %v3746, %v3747
      %v3749 = vrot.slane %v3748, 1
      %v3750 = vmax.f32 %v3748, %v3749
      %v3751 = vsel %vm3603, %v3031, -inf
      %v3752 = vrot.slane %v3751, 4
      %v3753 = vmax.f32 %v3751, %v3752
      %v3754 = vrot.slane %v3753, 2
      %v3755 = vmax.f32 %v3753, %v3754
      %v3756 = vrot.slane %v3755, 1
      %v3757 = vmax.f32 %v3755, %v3756
      %v3758 = vsel %vm3603, %v3030, -inf
      %v3759 = vrot.slane %v3758, 4
      %v3760 = vmax.f32 %v3758, %v3759
      %v3761 = vrot.slane %v3760, 2
      %v3762 = vmax.f32 %v3760, %v3761
      %v3763 = vrot.slane %v3762, 1
      %v3764 = vmax.f32 %v3762, %v3763
      %v3765 = vsel %vm3603, %v3032, -inf
      %v3766 = vrot.slane %v3765, 4
      %v3767 = vmax.f32 %v3765, %v3766
      %v3768 = vrot.slane %v3767, 2
      %v3769 = vmax.f32 %v3767, %v3768
      %v3770 = vrot.slane %v3769, 1
      %v3771 = vmax.f32 %v3769, %v3770
      %v3772 = vsel %vm3603, %v3040, -inf
      %v3773 = vrot.slane %v3772, 4
      %v3774 = vmax.f32 %v3772, %v3773
      %v3775 = vrot.slane %v3774, 2
      %v3776 = vmax.f32 %v3774, %v3775
      %v3777 = vrot.slane %v3776, 1
      %v3778 = vmax.f32 %v3776, %v3777
      %v3779 = vsel %vm3603, %v3048, -inf
      %v3780 = vrot.slane %v3779, 4
      %v3781 = vmax.f32 %v3779, %v3780
      %v3782 = vrot.slane %v3781, 2
      %v3783 = vmax.f32 %v3781, %v3782
      %v3784 = vrot.slane %v3783, 1
      %v3785 = vmax.f32 %v3783, %v3784
      %v3786 = vsel %vm3603, %v3047, -inf
      %v3787 = vrot.slane %v3786, 4
      %v3788 = vmax.f32 %v3786, %v3787
      %v3789 = vrot.slane %v3788, 2
      %v3790 = vmax.f32 %v3788, %v3789
      %v3791 = vrot.slane %v3790, 1
      %v3792 = vmax.f32 %v3790, %v3791
      %v3793 = vsel %vm3603, %v3049, -inf
      %v3794 = vrot.slane %v3793, 4
      %v3795 = vmax.f32 %v3793, %v3794
      %v3796 = vrot.slane %v3795, 2
      %v3797 = vmax.f32 %v3795, %v3796
      %v3798 = vrot.slane %v3797, 1
      %v3799 = vmax.f32 %v3797, %v3798
      %v3800 = vsel %vm3603, %v3057, -inf
      %v3801 = vrot.slane %v3800, 4
      %v3802 = vmax.f32 %v3800, %v3801
      %v3803 = vrot.slane %v3802, 2
      %v3804 = vmax.f32 %v3802, %v3803
      %v3805 = vrot.slane %v3804, 1
      %v3806 = vmax.f32 %v3804, %v3805
      %v3807 = vsel %vm3603, %v3065, -inf
      %v3808 = vrot.slane %v3807, 4
      %v3809 = vmax.f32 %v3807, %v3808
      %v3810 = vrot.slane %v3809, 2
      %v3811 = vmax.f32 %v3809, %v3810
      %v3812 = vrot.slane %v3811, 1
      %v3813 = vmax.f32 %v3811, %v3812
      %v3814 = vsel %vm3603, %v3064, -inf
      %v3815 = vrot.slane %v3814, 4
      %v3816 = vmax.f32 %v3814, %v3815
      %v3817 = vrot.slane %v3816, 2
      %v3818 = vmax.f32 %v3816, %v3817
      %v3819 = vrot.slane %v3818, 1
      %v3820 = vmax.f32 %v3818, %v3819
      %v3821 = vsel %vm3603, %v3066, -inf
      %v3822 = vrot.slane %v3821, 4
      %v3823 = vmax.f32 %v3821, %v3822
      %v3824 = vrot.slane %v3823, 2
      %v3825 = vmax.f32 %v3823, %v3824
      %v3826 = vrot.slane %v3825, 1
      %v3827 = vmax.f32 %v3825, %v3826
      %v3828 = vsel %vm3603, %v3074, -inf
      %v3829 = vrot.slane %v3828, 4
      %v3830 = vmax.f32 %v3828, %v3829
      %v3831 = vrot.slane %v3830, 2
      %v3832 = vmax.f32 %v3830, %v3831
      %v3833 = vrot.slane %v3832, 1
      %v3834 = vmax.f32 %v3832, %v3833
      %v3835 = vsel %vm3603, %v3082, -inf
      %v3836 = vrot.slane %v3835, 4
      %v3837 = vmax.f32 %v3835, %v3836
      %v3838 = vrot.slane %v3837, 2
      %v3839 = vmax.f32 %v3837, %v3838
      %v3840 = vrot.slane %v3839, 1
      %v3841 = vmax.f32 %v3839, %v3840
      %v3842 = vsel %vm3603, %v3081, -inf
      %v3843 = vrot.slane %v3842, 4
      %v3844 = vmax.f32 %v3842, %v3843
      %v3845 = vrot.slane %v3844, 2
      %v3846 = vmax.f32 %v3844, %v3845
      %v3847 = vrot.slane %v3846, 1
      %v3848 = vmax.f32 %v3846, %v3847
      %v3849 = vsel %vm3603, %v3083, -inf
      %v3850 = vrot.slane %v3849, 4
      %v3851 = vmax.f32 %v3849, %v3850
      %v3852 = vrot.slane %v3851, 2
      %v3853 = vmax.f32 %v3851, %v3852
      %v3854 = vrot.slane %v3853, 1
      %v3855 = vmax.f32 %v3853, %v3854
      %v3856 = vsel %vm3603, %v3091, -inf
      %v3857 = vrot.slane %v3856, 4
      %v3858 = vmax.f32 %v3856, %v3857
      %v3859 = vrot.slane %v3858, 2
      %v3860 = vmax.f32 %v3858, %v3859
      %v3861 = vrot.slane %v3860, 1
      %v3862 = vmax.f32 %v3860, %v3861
      %v3863 = vsel %vm3603, %v3099, -inf
      %v3864 = vrot.slane %v3863, 4
      %v3865 = vmax.f32 %v3863, %v3864
      %v3866 = vrot.slane %v3865, 2
      %v3867 = vmax.f32 %v3865, %v3866
      %v3868 = vrot.slane %v3867, 1
      %v3869 = vmax.f32 %v3867, %v3868
      %v3870 = vsel %vm3603, %v3098, -inf
      %v3871 = vrot.slane %v3870, 4
      %v3872 = vmax.f32 %v3870, %v3871
      %v3873 = vrot.slane %v3872, 2
      %v3874 = vmax.f32 %v3872, %v3873
      %v3875 = vrot.slane %v3874, 1
      %v3876 = vmax.f32 %v3874, %v3875
      %v3877 = vsel %vm3603, %v3100, -inf
      %v3878 = vrot.slane %v3877, 4
      %v3879 = vmax.f32 %v3877, %v3878
      %v3880 = vrot.slane %v3879, 2
      %v3881 = vmax.f32 %v3879, %v3880
      %v3882 = vrot.slane %v3881, 1
      %v3883 = vmax.f32 %v3881, %v3882
      %v3884 = vsel %vm3603, %v3108, -inf
      %v3885 = vrot.slane %v3884, 4
      %v3886 = vmax.f32 %v3884, %v3885
      %v3887 = vrot.slane %v3886, 2
      %v3888 = vmax.f32 %v3886, %v3887
      %v3889 = vrot.slane %v3888, 1
      %v3890 = vmax.f32 %v3888, %v3889
      %v3891 = vsel %vm3603, %v3116, -inf
      %v3892 = vrot.slane %v3891, 4
      %v3893 = vmax.f32 %v3891, %v3892
      %v3894 = vrot.slane %v3893, 2
      %v3895 = vmax.f32 %v3893, %v3894
      %v3896 = vrot.slane %v3895, 1
      %v3897 = vmax.f32 %v3895, %v3896
      %v3898 = vsel %vm3603, %v3115, -inf
      %v3899 = vrot.slane %v3898, 4
      %v3900 = vmax.f32 %v3898, %v3899
      %v3901 = vrot.slane %v3900, 2
      %v3902 = vmax.f32 %v3900, %v3901
      %v3903 = vrot.slane %v3902, 1
      %v3904 = vmax.f32 %v3902, %v3903
      %v3905 = vsel %vm3603, %v3117, -inf
      %v3906 = vrot.slane %v3905, 4
      %v3907 = vmax.f32 %v3905, %v3906
      %v3908 = vrot.slane %v3907, 2
      %v3909 = vmax.f32 %v3907, %v3908
      %v3910 = vrot.slane %v3909, 1
      %v3911 = vmax.f32 %v3909, %v3910
      %v3912 = vsel %vm3603, %v3125, -inf
      %v3913 = vrot.slane %v3912, 4
      %v3914 = vmax.f32 %v3912, %v3913
      %v3915 = vrot.slane %v3914, 2
      %v3916 = vmax.f32 %v3914, %v3915
      %v3917 = vrot.slane %v3916, 1
      %v3918 = vmax.f32 %v3916, %v3917
      %v3919 = vsel %vm3603, %v3133, -inf
      %v3920 = vrot.slane %v3919, 4
      %v3921 = vmax.f32 %v3919, %v3920
      %v3922 = vrot.slane %v3921, 2
      %v3923 = vmax.f32 %v3921, %v3922
      %v3924 = vrot.slane %v3923, 1
      %v3925 = vmax.f32 %v3923, %v3924
      %v3926 = vsel %vm3603, %v3132, -inf
      %v3927 = vrot.slane %v3926, 4
      %v3928 = vmax.f32 %v3926, %v3927
      %v3929 = vrot.slane %v3928, 2
      %v3930 = vmax.f32 %v3928, %v3929
      %v3931 = vrot.slane %v3930, 1
      %v3932 = vmax.f32 %v3930, %v3931
      %v3933 = vsel %vm3603, %v3134, -inf
      %v3934 = vrot.slane %v3933, 4
      %v3935 = vmax.f32 %v3933, %v3934
      %v3936 = vrot.slane %v3935, 2
      %v3937 = vmax.f32 %v3935, %v3936
      %v3938 = vrot.slane %v3937, 1
      %v3939 = vmax.f32 %v3937, %v3938
      %v3940 = vsel %vm3603, %v3142, -inf
      %v3941 = vrot.slane %v3940, 4
      %v3942 = vmax.f32 %v3940, %v3941
      %v3943 = vrot.slane %v3942, 2
      %v3944 = vmax.f32 %v3942, %v3943
      %v3945 = vrot.slane %v3944, 1
      %v3946 = vmax.f32 %v3944, %v3945
      %v3947 = vsel %vm3603, %v3150, -inf
      %v3948 = vrot.slane %v3947, 4
      %v3949 = vmax.f32 %v3947, %v3948
      %v3950 = vrot.slane %v3949, 2
      %v3951 = vmax.f32 %v3949, %v3950
      %v3952 = vrot.slane %v3951, 1
      %v3953 = vmax.f32 %v3951, %v3952
      %v3954 = vsel %vm3603, %v3149, -inf
      %v3955 = vrot.slane %v3954, 4
      %v3956 = vmax.f32 %v3954, %v3955
      %v3957 = vrot.slane %v3956, 2
      %v3958 = vmax.f32 %v3956, %v3957
      %v3959 = vrot.slane %v3958, 1
      %v3960 = vmax.f32 %v3958, %v3959
      %v3961 = vsel %vm3603, %v3151, -inf
      %v3962 = vrot.slane %v3961, 4
      %v3963 = vmax.f32 %v3961, %v3962
      %v3964 = vrot.slane %v3963, 2
      %v3965 = vmax.f32 %v3963, %v3964
      %v3966 = vrot.slane %v3965, 1
      %v3967 = vmax.f32 %v3965, %v3966
      %v3968 = vsel %vm3603, %v3159, -inf
      %v3969 = vrot.slane %v3968, 4
      %v3970 = vmax.f32 %v3968, %v3969
      %v3971 = vrot.slane %v3970, 2
      %v3972 = vmax.f32 %v3970, %v3971
      %v3973 = vrot.slane %v3972, 1
      %v3974 = vmax.f32 %v3972, %v3973
      %v3975 = vsel %vm3603, %v3167, -inf
      %v3976 = vrot.slane %v3975, 4
      %v3977 = vmax.f32 %v3975, %v3976
      %v3978 = vrot.slane %v3977, 2
      %v3979 = vmax.f32 %v3977, %v3978
      %v3980 = vrot.slane %v3979, 1
      %v3981 = vmax.f32 %v3979, %v3980
      %v3982 = vsel %vm3603, %v3166, -inf
      %v3983 = vrot.slane %v3982, 4
      %v3984 = vmax.f32 %v3982, %v3983
      %v3985 = vrot.slane %v3984, 2
      %v3986 = vmax.f32 %v3984, %v3985
      %v3987 = vrot.slane %v3986, 1
      %v3988 = vmax.f32 %v3986, %v3987
      %v3989 = vsel %vm3603, %v3168, -inf
      %v3990 = vrot.slane %v3989, 4
      %v3991 = vmax.f32 %v3989, %v3990
      %v3992 = vrot.slane %v3991, 2
      %v3993 = vmax.f32 %v3991, %v3992
      %v3994 = vrot.slane %v3993, 1
      %v3995 = vmax.f32 %v3993, %v3994
      %v3996 = vsel %vm3603, %v3176, -inf
      %v3997 = vrot.slane %v3996, 4
      %v3998 = vmax.f32 %v3996, %v3997
      %v3999 = vrot.slane %v3998, 2
      %v4000 = vmax.f32 %v3998, %v3999
      %v4001 = vrot.slane %v4000, 1
      %v4002 = vmax.f32 %v4000, %v4001
      %v4003 = vsel %vm3603, %v3184, -inf
      %v4004 = vrot.slane %v4003, 4
      %v4005 = vmax.f32 %v4003, %v4004
      %v4006 = vrot.slane %v4005, 2
      %v4007 = vmax.f32 %v4005, %v4006
      %v4008 = vrot.slane %v4007, 1
      %v4009 = vmax.f32 %v4007, %v4008
      %v4010 = vsel %vm3603, %v3183, -inf
      %v4011 = vrot.slane %v4010, 4
      %v4012 = vmax.f32 %v4010, %v4011
      %v4013 = vrot.slane %v4012, 2
      %v4014 = vmax.f32 %v4012, %v4013
      %v4015 = vrot.slane %v4014, 1
      %v4016 = vmax.f32 %v4014, %v4015
      %v4017 = vsel %vm3603, %v3185, -inf
      %v4018 = vrot.slane %v4017, 4
      %v4019 = vmax.f32 %v4017, %v4018
      %v4020 = vrot.slane %v4019, 2
      %v4021 = vmax.f32 %v4019, %v4020
      %v4022 = vrot.slane %v4021, 1
      %v4023 = vmax.f32 %v4021, %v4022
      %v4024 = vsel %vm3603, %v3193, -inf
      %v4025 = vrot.slane %v4024, 4
      %v4026 = vmax.f32 %v4024, %v4025
      %v4027 = vrot.slane %v4026, 2
      %v4028 = vmax.f32 %v4026, %v4027
      %v4029 = vrot.slane %v4028, 1
      %v4030 = vmax.f32 %v4028, %v4029
      %v4031 = vsel %vm3603, %v3201, -inf
      %v4032 = vrot.slane %v4031, 4
      %v4033 = vmax.f32 %v4031, %v4032
      %v4034 = vrot.slane %v4033, 2
      %v4035 = vmax.f32 %v4033, %v4034
      %v4036 = vrot.slane %v4035, 1
      %v4037 = vmax.f32 %v4035, %v4036
      %v4038 = vsel %vm3603, %v3200, -inf
      %v4039 = vrot.slane %v4038, 4
      %v4040 = vmax.f32 %v4038, %v4039
      %v4041 = vrot.slane %v4040, 2
      %v4042 = vmax.f32 %v4040, %v4041
      %v4043 = vrot.slane %v4042, 1
      %v4044 = vmax.f32 %v4042, %v4043
      %v4045 = vsel %vm3603, %v3202, -inf
      %v4046 = vrot.slane %v4045, 4
      %v4047 = vmax.f32 %v4045, %v4046
      %v4048 = vrot.slane %v4047, 2
      %v4049 = vmax.f32 %v4047, %v4048
      %v4050 = vrot.slane %v4049, 1
      %v4051 = vmax.f32 %v4049, %v4050
      %v4052 = vsel %vm3603, %v3210, -inf
      %v4053 = vrot.slane %v4052, 4
      %v4054 = vmax.f32 %v4052, %v4053
      %v4055 = vrot.slane %v4054, 2
      %v4056 = vmax.f32 %v4054, %v4055
      %v4057 = vrot.slane %v4056, 1
      %v4058 = vmax.f32 %v4056, %v4057
      %v4059 = vsel %vm3603, %v3218, -inf
      %v4060 = vrot.slane %v4059, 4
      %v4061 = vmax.f32 %v4059, %v4060
      %v4062 = vrot.slane %v4061, 2
      %v4063 = vmax.f32 %v4061, %v4062
      %v4064 = vrot.slane %v4063, 1
      %v4065 = vmax.f32 %v4063, %v4064
      %v4066 = vsel %vm3603, %v3217, -inf
      %v4067 = vrot.slane %v4066, 4
      %v4068 = vmax.f32 %v4066, %v4067
      %v4069 = vrot.slane %v4068, 2
      %v4070 = vmax.f32 %v4068, %v4069
      %v4071 = vrot.slane %v4070, 1
      %v4072 = vmax.f32 %v4070, %v4071
      %v4073 = vsel %vm3603, %v3219, -inf
      %v4074 = vrot.slane %v4073, 4
      %v4075 = vmax.f32 %v4073, %v4074
      %v4076 = vrot.slane %v4075, 2
      %v4077 = vmax.f32 %v4075, %v4076
      %v4078 = vrot.slane %v4077, 1
      %v4079 = vmax.f32 %v4077, %v4078
      %v4080 = vsel %vm3603, %v3227, -inf
      %v4081 = vrot.slane %v4080, 4
      %v4082 = vmax.f32 %v4080, %v4081
      %v4083 = vrot.slane %v4082, 2
      %v4084 = vmax.f32 %v4082, %v4083
      %v4085 = vrot.slane %v4084, 1
      %v4086 = vmax.f32 %v4084, %v4085
      %v4087 = vsel %vm3603, %v3235, -inf
      %v4088 = vrot.slane %v4087, 4
      %v4089 = vmax.f32 %v4087, %v4088
      %v4090 = vrot.slane %v4089, 2
      %v4091 = vmax.f32 %v4089, %v4090
      %v4092 = vrot.slane %v4091, 1
      %v4093 = vmax.f32 %v4091, %v4092
      %v4094 = vsel %vm3603, %v3234, -inf
      %v4095 = vrot.slane %v4094, 4
      %v4096 = vmax.f32 %v4094, %v4095
      %v4097 = vrot.slane %v4096, 2
      %v4098 = vmax.f32 %v4096, %v4097
      %v4099 = vrot.slane %v4098, 1
      %v4100 = vmax.f32 %v4098, %v4099
      %v4101 = vsel %vm3603, %v3236, -inf
      %v4102 = vrot.slane %v4101, 4
      %v4103 = vmax.f32 %v4101, %v4102
      %v4104 = vrot.slane %v4103, 2
      %v4105 = vmax.f32 %v4103, %v4104
      %v4106 = vrot.slane %v4105, 1
      %v4107 = vmax.f32 %v4105, %v4106
      %v4108 = vsel %vm3603, %v3244, -inf
      %v4109 = vrot.slane %v4108, 4
      %v4110 = vmax.f32 %v4108, %v4109
      %v4111 = vrot.slane %v4110, 2
      %v4112 = vmax.f32 %v4110, %v4111
      %v4113 = vrot.slane %v4112, 1
      %v4114 = vmax.f32 %v4112, %v4113
      %v4115 = vsel %vm3603, %v3252, -inf
      %v4116 = vrot.slane %v4115, 4
      %v4117 = vmax.f32 %v4115, %v4116
      %v4118 = vrot.slane %v4117, 2
      %v4119 = vmax.f32 %v4117, %v4118
      %v4120 = vrot.slane %v4119, 1
      %v4121 = vmax.f32 %v4119, %v4120
      %v4122 = vsel %vm3603, %v3251, -inf
      %v4123 = vrot.slane %v4122, 4
      %v4124 = vmax.f32 %v4122, %v4123
      %v4125 = vrot.slane %v4124, 2
      %v4126 = vmax.f32 %v4124, %v4125
      %v4127 = vrot.slane %v4126, 1
      %v4128 = vmax.f32 %v4126, %v4127
      %v4129 = vsel %vm3603, %v3253, -inf
      %v4130 = vrot.slane %v4129, 4
      %v4131 = vmax.f32 %v4129, %v4130
      %v4132 = vrot.slane %v4131, 2
      %v4133 = vmax.f32 %v4131, %v4132
      %v4134 = vrot.slane %v4133, 1
      %v4135 = vmax.f32 %v4133, %v4134
      %v4136 = vsel %vm3603, %v3261, -inf
      %v4137 = vrot.slane %v4136, 4
      %v4138 = vmax.f32 %v4136, %v4137
      %v4139 = vrot.slane %v4138, 2
      %v4140 = vmax.f32 %v4138, %v4139
      %v4141 = vrot.slane %v4140, 1
      %v4142 = vmax.f32 %v4140, %v4141
      %v4143 = vsel %vm3603, %v3269, -inf
      %v4144 = vrot.slane %v4143, 4
      %v4145 = vmax.f32 %v4143, %v4144
      %v4146 = vrot.slane %v4145, 2
      %v4147 = vmax.f32 %v4145, %v4146
      %v4148 = vrot.slane %v4147, 1
      %v4149 = vmax.f32 %v4147, %v4148
      %v4150 = vsel %vm3603, %v3268, -inf
      %v4151 = vrot.slane %v4150, 4
      %v4152 = vmax.f32 %v4150, %v4151
      %v4153 = vrot.slane %v4152, 2
      %v4154 = vmax.f32 %v4152, %v4153
      %v4155 = vrot.slane %v4154, 1
      %v4156 = vmax.f32 %v4154, %v4155
      %v4157 = vsel %vm3603, %v3270, -inf
      %v4158 = vrot.slane %v4157, 4
      %v4159 = vmax.f32 %v4157, %v4158
      %v4160 = vrot.slane %v4159, 2
      %v4161 = vmax.f32 %v4159, %v4160
      %v4162 = vrot.slane %v4161, 1
      %v4163 = vmax.f32 %v4161, %v4162
      %v4164 = vsel %vm3603, %v3278, -inf
      %v4165 = vrot.slane %v4164, 4
      %v4166 = vmax.f32 %v4164, %v4165
      %v4167 = vrot.slane %v4166, 2
      %v4168 = vmax.f32 %v4166, %v4167
      %v4169 = vrot.slane %v4168, 1
      %v4170 = vmax.f32 %v4168, %v4169
      %v4171 = vsel %vm3603, %v3286, -inf
      %v4172 = vrot.slane %v4171, 4
      %v4173 = vmax.f32 %v4171, %v4172
      %v4174 = vrot.slane %v4173, 2
      %v4175 = vmax.f32 %v4173, %v4174
      %v4176 = vrot.slane %v4175, 1
      %v4177 = vmax.f32 %v4175, %v4176
      %v4178 = vsel %vm3603, %v3285, -inf
      %v4179 = vrot.slane %v4178, 4
      %v4180 = vmax.f32 %v4178, %v4179
      %v4181 = vrot.slane %v4180, 2
      %v4182 = vmax.f32 %v4180, %v4181
      %v4183 = vrot.slane %v4182, 1
      %v4184 = vmax.f32 %v4182, %v4183
      %v4185 = vsel %vm3603, %v3287, -inf
      %v4186 = vrot.slane %v4185, 4
      %v4187 = vmax.f32 %v4185, %v4186
      %v4188 = vrot.slane %v4187, 2
      %v4189 = vmax.f32 %v4187, %v4188
      %v4190 = vrot.slane %v4189, 1
      %v4191 = vmax.f32 %v4189, %v4190
      %v4192 = vsel %vm3603, %v3295, -inf
      %v4193 = vrot.slane %v4192, 4
      %v4194 = vmax.f32 %v4192, %v4193
      %v4195 = vrot.slane %v4194, 2
      %v4196 = vmax.f32 %v4194, %v4195
      %v4197 = vrot.slane %v4196, 1
      %v4198 = vmax.f32 %v4196, %v4197
      %v4199 = vsel %vm3603, %v3303, -inf
      %v4200 = vrot.slane %v4199, 4
      %v4201 = vmax.f32 %v4199, %v4200
      %v4202 = vrot.slane %v4201, 2
      %v4203 = vmax.f32 %v4201, %v4202
      %v4204 = vrot.slane %v4203, 1
      %v4205 = vmax.f32 %v4203, %v4204
      %v4206 = vsel %vm3603, %v3302, -inf
      %v4207 = vrot.slane %v4206, 4
      %v4208 = vmax.f32 %v4206, %v4207
      %v4209 = vrot.slane %v4208, 2
      %v4210 = vmax.f32 %v4208, %v4209
      %v4211 = vrot.slane %v4210, 1
      %v4212 = vmax.f32 %v4210, %v4211
      %v4213 = vsel %vm3603, %v3304, -inf
      %v4214 = vrot.slane %v4213, 4
      %v4215 = vmax.f32 %v4213, %v4214
      %v4216 = vrot.slane %v4215, 2
      %v4217 = vmax.f32 %v4215, %v4216
      %v4218 = vrot.slane %v4217, 1
      %v4219 = vmax.f32 %v4217, %v4218
      %v4220 = vsel %vm3603, %v3312, -inf
      %v4221 = vrot.slane %v4220, 4
      %v4222 = vmax.f32 %v4220, %v4221
      %v4223 = vrot.slane %v4222, 2
      %v4224 = vmax.f32 %v4222, %v4223
      %v4225 = vrot.slane %v4224, 1
      %v4226 = vmax.f32 %v4224, %v4225
      %v4227 = vsel %vm3603, %v3320, -inf
      %v4228 = vrot.slane %v4227, 4
      %v4229 = vmax.f32 %v4227, %v4228
      %v4230 = vrot.slane %v4229, 2
      %v4231 = vmax.f32 %v4229, %v4230
      %v4232 = vrot.slane %v4231, 1
      %v4233 = vmax.f32 %v4231, %v4232
      %v4234 = vsel %vm3603, %v3319, -inf
      %v4235 = vrot.slane %v4234, 4
      %v4236 = vmax.f32 %v4234, %v4235
      %v4237 = vrot.slane %v4236, 2
      %v4238 = vmax.f32 %v4236, %v4237
      %v4239 = vrot.slane %v4238, 1
      %v4240 = vmax.f32 %v4238, %v4239
      %v4241 = vsel %vm3603, %v3321, -inf
      %v4242 = vrot.slane %v4241, 4
      %v4243 = vmax.f32 %v4241, %v4242
      %v4244 = vrot.slane %v4243, 2
      %v4245 = vmax.f32 %v4243, %v4244
      %v4246 = vrot.slane %v4245, 1
      %v4247 = vmax.f32 %v4245, %v4246
      %v4248 = vsel %vm3603, %v3329, -inf
      %v4249 = vrot.slane %v4248, 4
      %v4250 = vmax.f32 %v4248, %v4249
      %v4251 = vrot.slane %v4250, 2
      %v4252 = vmax.f32 %v4250, %v4251
      %v4253 = vrot.slane %v4252, 1
      %v4254 = vmax.f32 %v4252, %v4253
      %v4255 = vsel %vm3603, %v3337, -inf
      %v4256 = vrot.slane %v4255, 4
      %v4257 = vmax.f32 %v4255, %v4256
      %v4258 = vrot.slane %v4257, 2
      %v4259 = vmax.f32 %v4257, %v4258
      %v4260 = vrot.slane %v4259, 1
      %v4261 = vmax.f32 %v4259, %v4260
      %v4262 = vsel %vm3603, %v3336, -inf
      %v4263 = vrot.slane %v4262, 4
      %v4264 = vmax.f32 %v4262, %v4263
      %v4265 = vrot.slane %v4264, 2
      %v4266 = vmax.f32 %v4264, %v4265
      %v4267 = vrot.slane %v4266, 1
      %v4268 = vmax.f32 %v4266, %v4267
      %v4269 = vsel %vm3603, %v3338, -inf
      %v4270 = vrot.slane %v4269, 4
      %v4271 = vmax.f32 %v4269, %v4270
      %v4272 = vrot.slane %v4271, 2
      %v4273 = vmax.f32 %v4271, %v4272
      %v4274 = vrot.slane %v4273, 1
      %v4275 = vmax.f32 %v4273, %v4274
      %v4276 = vsel %vm3603, %v3346, -inf
      %v4277 = vrot.slane %v4276, 4
      %v4278 = vmax.f32 %v4276, %v4277
      %v4279 = vrot.slane %v4278, 2
      %v4280 = vmax.f32 %v4278, %v4279
      %v4281 = vrot.slane %v4280, 1
      %v4282 = vmax.f32 %v4280, %v4281
      %v4283 = vsel %vm3603, %v3354, -inf
      %v4284 = vrot.slane %v4283, 4
      %v4285 = vmax.f32 %v4283, %v4284
      %v4286 = vrot.slane %v4285, 2
      %v4287 = vmax.f32 %v4285, %v4286
      %v4288 = vrot.slane %v4287, 1
      %v4289 = vmax.f32 %v4287, %v4288
      %v4290 = vsel %vm3603, %v3353, -inf
      %v4291 = vrot.slane %v4290, 4
      %v4292 = vmax.f32 %v4290, %v4291
      %v4293 = vrot.slane %v4292, 2
      %v4294 = vmax.f32 %v4292, %v4293
      %v4295 = vrot.slane %v4294, 1
      %v4296 = vmax.f32 %v4294, %v4295
      %v4297 = vsel %vm3603, %v3355, -inf
      %v4298 = vrot.slane %v4297, 4
      %v4299 = vmax.f32 %v4297, %v4298
      %v4300 = vrot.slane %v4299, 2
      %v4301 = vmax.f32 %v4299, %v4300
      %v4302 = vrot.slane %v4301, 1
      %v4303 = vmax.f32 %v4301, %v4302
      %v4304 = vsel %vm3603, %v3363, -inf
      %v4305 = vrot.slane %v4304, 4
      %v4306 = vmax.f32 %v4304, %v4305
      %v4307 = vrot.slane %v4306, 2
      %v4308 = vmax.f32 %v4306, %v4307
      %v4309 = vrot.slane %v4308, 1
      %v4310 = vmax.f32 %v4308, %v4309
      %v4311 = vsel %vm3603, %v3371, -inf
      %v4312 = vrot.slane %v4311, 4
      %v4313 = vmax.f32 %v4311, %v4312
      %v4314 = vrot.slane %v4313, 2
      %v4315 = vmax.f32 %v4313, %v4314
      %v4316 = vrot.slane %v4315, 1
      %v4317 = vmax.f32 %v4315, %v4316
      %v4318 = vsel %vm3603, %v3370, -inf
      %v4319 = vrot.slane %v4318, 4
      %v4320 = vmax.f32 %v4318, %v4319
      %v4321 = vrot.slane %v4320, 2
      %v4322 = vmax.f32 %v4320, %v4321
      %v4323 = vrot.slane %v4322, 1
      %v4324 = vmax.f32 %v4322, %v4323
      %v4325 = vsel %vm3603, %v3372, -inf
      %v4326 = vrot.slane %v4325, 4
      %v4327 = vmax.f32 %v4325, %v4326
      %v4328 = vrot.slane %v4327, 2
      %v4329 = vmax.f32 %v4327, %v4328
      %v4330 = vrot.slane %v4329, 1
      %v4331 = vmax.f32 %v4329, %v4330
      %v4332 = vsel %vm3603, %v3380, -inf
      %v4333 = vrot.slane %v4332, 4
      %v4334 = vmax.f32 %v4332, %v4333
      %v4335 = vrot.slane %v4334, 2
      %v4336 = vmax.f32 %v4334, %v4335
      %v4337 = vrot.slane %v4336, 1
      %v4338 = vmax.f32 %v4336, %v4337
      %v4339 = vsel %vm3603, %v3388, -inf
      %v4340 = vrot.slane %v4339, 4
      %v4341 = vmax.f32 %v4339, %v4340
      %v4342 = vrot.slane %v4341, 2
      %v4343 = vmax.f32 %v4341, %v4342
      %v4344 = vrot.slane %v4343, 1
      %v4345 = vmax.f32 %v4343, %v4344
      %v4346 = vsel %vm3603, %v3387, -inf
      %v4347 = vrot.slane %v4346, 4
      %v4348 = vmax.f32 %v4346, %v4347
      %v4349 = vrot.slane %v4348, 2
      %v4350 = vmax.f32 %v4348, %v4349
      %v4351 = vrot.slane %v4350, 1
      %v4352 = vmax.f32 %v4350, %v4351
      %v4353 = vsel %vm3603, %v3389, -inf
      %v4354 = vrot.slane %v4353, 4
      %v4355 = vmax.f32 %v4353, %v4354
      %v4356 = vrot.slane %v4355, 2
      %v4357 = vmax.f32 %v4355, %v4356
      %v4358 = vrot.slane %v4357, 1
      %v4359 = vmax.f32 %v4357, %v4358
      %v4360 = vsel %vm3603, %v3397, -inf
      %v4361 = vrot.slane %v4360, 4
      %v4362 = vmax.f32 %v4360, %v4361
      %v4363 = vrot.slane %v4362, 2
      %v4364 = vmax.f32 %v4362, %v4363
      %v4365 = vrot.slane %v4364, 1
      %v4366 = vmax.f32 %v4364, %v4365
      %v4367 = vsel %vm3603, %v3405, -inf
      %v4368 = vrot.slane %v4367, 4
      %v4369 = vmax.f32 %v4367, %v4368
      %v4370 = vrot.slane %v4369, 2
      %v4371 = vmax.f32 %v4369, %v4370
      %v4372 = vrot.slane %v4371, 1
      %v4373 = vmax.f32 %v4371, %v4372
      %v4374 = vsel %vm3603, %v3404, -inf
      %v4375 = vrot.slane %v4374, 4
      %v4376 = vmax.f32 %v4374, %v4375
      %v4377 = vrot.slane %v4376, 2
      %v4378 = vmax.f32 %v4376, %v4377
      %v4379 = vrot.slane %v4378, 1
      %v4380 = vmax.f32 %v4378, %v4379
      %v4381 = vsel %vm3603, %v3406, -inf
      %v4382 = vrot.slane %v4381, 4
      %v4383 = vmax.f32 %v4381, %v4382
      %v4384 = vrot.slane %v4383, 2
      %v4385 = vmax.f32 %v4383, %v4384
      %v4386 = vrot.slane %v4385, 1
      %v4387 = vmax.f32 %v4385, %v4386
      %v4388 = vsel %vm3603, %v3414, -inf
      %v4389 = vrot.slane %v4388, 4
      %v4390 = vmax.f32 %v4388, %v4389
      %v4391 = vrot.slane %v4390, 2
      %v4392 = vmax.f32 %v4390, %v4391
      %v4393 = vrot.slane %v4392, 1
      %v4394 = vmax.f32 %v4392, %v4393
      %v4395 = vsel %vm3603, %v3422, -inf
      %v4396 = vrot.slane %v4395, 4
      %v4397 = vmax.f32 %v4395, %v4396
      %v4398 = vrot.slane %v4397, 2
      %v4399 = vmax.f32 %v4397, %v4398
      %v4400 = vrot.slane %v4399, 1
      %v4401 = vmax.f32 %v4399, %v4400
      %v4402 = vsel %vm3603, %v3421, -inf
      %v4403 = vrot.slane %v4402, 4
      %v4404 = vmax.f32 %v4402, %v4403
      %v4405 = vrot.slane %v4404, 2
      %v4406 = vmax.f32 %v4404, %v4405
      %v4407 = vrot.slane %v4406, 1
      %v4408 = vmax.f32 %v4406, %v4407
      %v4409 = vsel %vm3603, %v3423, -inf
      %v4410 = vrot.slane %v4409, 4
      %v4411 = vmax.f32 %v4409, %v4410
      %v4412 = vrot.slane %v4411, 2
      %v4413 = vmax.f32 %v4411, %v4412
      %v4414 = vrot.slane %v4413, 1
      %v4415 = vmax.f32 %v4413, %v4414
      %v4416 = vsel %vm3603, %v3431, -inf
      %v4417 = vrot.slane %v4416, 4
      %v4418 = vmax.f32 %v4416, %v4417
      %v4419 = vrot.slane %v4418, 2
      %v4420 = vmax.f32 %v4418, %v4419
      %v4421 = vrot.slane %v4420, 1
      %v4422 = vmax.f32 %v4420, %v4421
      %v4423 = vsel %vm3603, %v3439, -inf
      %v4424 = vrot.slane %v4423, 4
      %v4425 = vmax.f32 %v4423, %v4424
      %v4426 = vrot.slane %v4425, 2
      %v4427 = vmax.f32 %v4425, %v4426
      %v4428 = vrot.slane %v4427, 1
      %v4429 = vmax.f32 %v4427, %v4428
      %v4430 = vsel %vm3603, %v3438, -inf
      %v4431 = vrot.slane %v4430, 4
      %v4432 = vmax.f32 %v4430, %v4431
      %v4433 = vrot.slane %v4432, 2
      %v4434 = vmax.f32 %v4432, %v4433
      %v4435 = vrot.slane %v4434, 1
      %v4436 = vmax.f32 %v4434, %v4435
      %v4437 = vsel %vm3603, %v3440, -inf
      %v4438 = vrot.slane %v4437, 4
      %v4439 = vmax.f32 %v4437, %v4438
      %v4440 = vrot.slane %v4439, 2
      %v4441 = vmax.f32 %v4439, %v4440
      %v4442 = vrot.slane %v4441, 1
      %v4443 = vmax.f32 %v4441, %v4442
      %v4444 = vsel %vm3603, %v3448, -inf
      %v4445 = vrot.slane %v4444, 4
      %v4446 = vmax.f32 %v4444, %v4445
      %v4447 = vrot.slane %v4446, 2
      %v4448 = vmax.f32 %v4446, %v4447
      %v4449 = vrot.slane %v4448, 1
      %v4450 = vmax.f32 %v4448, %v4449
      %v4451 = vsel %vm3603, %v3456, -inf
      %v4452 = vrot.slane %v4451, 4
      %v4453 = vmax.f32 %v4451, %v4452
      %v4454 = vrot.slane %v4453, 2
      %v4455 = vmax.f32 %v4453, %v4454
      %v4456 = vrot.slane %v4455, 1
      %v4457 = vmax.f32 %v4455, %v4456
      %v4458 = vsel %vm3603, %v3455, -inf
      %v4459 = vrot.slane %v4458, 4
      %v4460 = vmax.f32 %v4458, %v4459
      %v4461 = vrot.slane %v4460, 2
      %v4462 = vmax.f32 %v4460, %v4461
      %v4463 = vrot.slane %v4462, 1
      %v4464 = vmax.f32 %v4462, %v4463
      %v4465 = vsel %vm3603, %v3457, -inf
      %v4466 = vrot.slane %v4465, 4
      %v4467 = vmax.f32 %v4465, %v4466
      %v4468 = vrot.slane %v4467, 2
      %v4469 = vmax.f32 %v4467, %v4468
      %v4470 = vrot.slane %v4469, 1
      %v4471 = vmax.f32 %v4469, %v4470
      %v4472 = vsel %vm3603, %v3465, -inf
      %v4473 = vrot.slane %v4472, 4
      %v4474 = vmax.f32 %v4472, %v4473
      %v4475 = vrot.slane %v4474, 2
      %v4476 = vmax.f32 %v4474, %v4475
      %v4477 = vrot.slane %v4476, 1
      %v4478 = vmax.f32 %v4476, %v4477
      %v4479 = vsel %vm3603, %v3473, -inf
      %v4480 = vrot.slane %v4479, 4
      %v4481 = vmax.f32 %v4479, %v4480
      %v4482 = vrot.slane %v4481, 2
      %v4483 = vmax.f32 %v4481, %v4482
      %v4484 = vrot.slane %v4483, 1
      %v4485 = vmax.f32 %v4483, %v4484
      %v4486 = vsel %vm3603, %v3472, -inf
      %v4487 = vrot.slane %v4486, 4
      %v4488 = vmax.f32 %v4486, %v4487
      %v4489 = vrot.slane %v4488, 2
      %v4490 = vmax.f32 %v4488, %v4489
      %v4491 = vrot.slane %v4490, 1
      %v4492 = vmax.f32 %v4490, %v4491
      %v4493 = vsel %vm3603, %v3474, -inf
      %v4494 = vrot.slane %v4493, 4
      %v4495 = vmax.f32 %v4493, %v4494
      %v4496 = vrot.slane %v4495, 2
      %v4497 = vmax.f32 %v4495, %v4496
      %v4498 = vrot.slane %v4497, 1
      %v4499 = vmax.f32 %v4497, %v4498
      %v4500 = vsel %vm643, %v3610, -inf
      %v4501 = vsel %vm643, %v3666, -inf
      %v4502 = vmax.f32 %v4500, %v4501
      %v4503 = vsel %vm643, %v3617, -inf
      %v4504 = vsel %vm643, %v3673, -inf
      %v4505 = vmax.f32 %v4503, %v4504
      %v4506 = vsel %vm643, %v3624, -inf
      %v4507 = vsel %vm643, %v3680, -inf
      %v4508 = vmax.f32 %v4506, %v4507
      %v4509 = vsel %vm643, %v3631, -inf
      %v4510 = vsel %vm643, %v3687, -inf
      %v4511 = vmax.f32 %v4509, %v4510
      %v4512 = vsel %vm643, %v3638, -inf
      %v4513 = vsel %vm643, %v3694, -inf
      %v4514 = vmax.f32 %v4512, %v4513
      %v4515 = vsel %vm643, %v3645, -inf
      %v4516 = vsel %vm643, %v3701, -inf
      %v4517 = vmax.f32 %v4515, %v4516
      %v4518 = vsel %vm643, %v3652, -inf
      %v4519 = vsel %vm643, %v3708, -inf
      %v4520 = vmax.f32 %v4518, %v4519
      %v4521 = vsel %vm643, %v3659, -inf
      %v4522 = vsel %vm643, %v3715, -inf
      %v4523 = vmax.f32 %v4521, %v4522
      %v4524 = vsel %vm643, %v3722, -inf
      %v4525 = vsel %vm643, %v3778, -inf
      %v4526 = vmax.f32 %v4524, %v4525
      %v4527 = vsel %vm643, %v3729, -inf
      %v4528 = vsel %vm643, %v3785, -inf
      %v4529 = vmax.f32 %v4527, %v4528
      %v4530 = vsel %vm643, %v3736, -inf
      %v4531 = vsel %vm643, %v3792, -inf
      %v4532 = vmax.f32 %v4530, %v4531
      %v4533 = vsel %vm643, %v3743, -inf
      %v4534 = vsel %vm643, %v3799, -inf
      %v4535 = vmax.f32 %v4533, %v4534
      %v4536 = vsel %vm643, %v3750, -inf
      %v4537 = vsel %vm643, %v3806, -inf
      %v4538 = vmax.f32 %v4536, %v4537
      %v4539 = vsel %vm643, %v3757, -inf
      %v4540 = vsel %vm643, %v3813, -inf
      %v4541 = vmax.f32 %v4539, %v4540
      %v4542 = vsel %vm643, %v3764, -inf
      %v4543 = vsel %vm643, %v3820, -inf
      %v4544 = vmax.f32 %v4542, %v4543
      %v4545 = vsel %vm643, %v3771, -inf
      %v4546 = vsel %vm643, %v3827, -inf
      %v4547 = vmax.f32 %v4545, %v4546
      %v4548 = vsel %vm643, %v3834, -inf
      %v4549 = vsel %vm643, %v3890, -inf
      %v4550 = vmax.f32 %v4548, %v4549
      %v4551 = vsel %vm643, %v3841, -inf
      %v4552 = vsel %vm643, %v3897, -inf
      %v4553 = vmax.f32 %v4551, %v4552
      %v4554 = vsel %vm643, %v3848, -inf
      %v4555 = vsel %vm643, %v3904, -inf
      %v4556 = vmax.f32 %v4554, %v4555
      %v4557 = vsel %vm643, %v3855, -inf
      %v4558 = vsel %vm643, %v3911, -inf
      %v4559 = vmax.f32 %v4557, %v4558
      %v4560 = vsel %vm643, %v3862, -inf
      %v4561 = vsel %vm643, %v3918, -inf
      %v4562 = vmax.f32 %v4560, %v4561
      %v4563 = vsel %vm643, %v3869, -inf
      %v4564 = vsel %vm643, %v3925, -inf
      %v4565 = vmax.f32 %v4563, %v4564
      %v4566 = vsel %vm643, %v3876, -inf
      %v4567 = vsel %vm643, %v3932, -inf
      %v4568 = vmax.f32 %v4566, %v4567
      %v4569 = vsel %vm643, %v3883, -inf
      %v4570 = vsel %vm643, %v3939, -inf
      %v4571 = vmax.f32 %v4569, %v4570
      %v4572 = vsel %vm643, %v3946, -inf
      %v4573 = vsel %vm643, %v4002, -inf
      %v4574 = vmax.f32 %v4572, %v4573
      %v4575 = vsel %vm643, %v3953, -inf
      %v4576 = vsel %vm643, %v4009, -inf
      %v4577 = vmax.f32 %v4575, %v4576
      %v4578 = vsel %vm643, %v3960, -inf
      %v4579 = vsel %vm643, %v4016, -inf
      %v4580 = vmax.f32 %v4578, %v4579
      %v4581 = vsel %vm643, %v3967, -inf
      %v4582 = vsel %vm643, %v4023, -inf
      %v4583 = vmax.f32 %v4581, %v4582
      %v4584 = vsel %vm643, %v3974, -inf
      %v4585 = vsel %vm643, %v4030, -inf
      %v4586 = vmax.f32 %v4584, %v4585
      %v4587 = vsel %vm643, %v3981, -inf
      %v4588 = vsel %vm643, %v4037, -inf
      %v4589 = vmax.f32 %v4587, %v4588
      %v4590 = vsel %vm643, %v3988, -inf
      %v4591 = vsel %vm643, %v4044, -inf
      %v4592 = vmax.f32 %v4590, %v4591
      %v4593 = vsel %vm643, %v3995, -inf
      %v4594 = vsel %vm643, %v4051, -inf
      %v4595 = vmax.f32 %v4593, %v4594
      %v4596 = vsel %vm643, %v4058, -inf
      %v4597 = vsel %vm643, %v4114, -inf
      %v4598 = vmax.f32 %v4596, %v4597
      %v4599 = vsel %vm643, %v4065, -inf
      %v4600 = vsel %vm643, %v4121, -inf
      %v4601 = vmax.f32 %v4599, %v4600
      %v4602 = vsel %vm643, %v4072, -inf
      %v4603 = vsel %vm643, %v4128, -inf
      %v4604 = vmax.f32 %v4602, %v4603
      %v4605 = vsel %vm643, %v4079, -inf
      %v4606 = vsel %vm643, %v4135, -inf
      %v4607 = vmax.f32 %v4605, %v4606
      %v4608 = vsel %vm643, %v4086, -inf
      %v4609 = vsel %vm643, %v4142, -inf
      %v4610 = vmax.f32 %v4608, %v4609
      %v4611 = vsel %vm643, %v4093, -inf
      %v4612 = vsel %vm643, %v4149, -inf
      %v4613 = vmax.f32 %v4611, %v4612
      %v4614 = vsel %vm643, %v4100, -inf
      %v4615 = vsel %vm643, %v4156, -inf
      %v4616 = vmax.f32 %v4614, %v4615
      %v4617 = vsel %vm643, %v4107, -inf
      %v4618 = vsel %vm643, %v4163, -inf
      %v4619 = vmax.f32 %v4617, %v4618
      %v4620 = vsel %vm643, %v4170, -inf
      %v4621 = vsel %vm643, %v4226, -inf
      %v4622 = vmax.f32 %v4620, %v4621
      %v4623 = vsel %vm643, %v4177, -inf
      %v4624 = vsel %vm643, %v4233, -inf
      %v4625 = vmax.f32 %v4623, %v4624
      %v4626 = vsel %vm643, %v4184, -inf
      %v4627 = vsel %vm643, %v4240, -inf
      %v4628 = vmax.f32 %v4626, %v4627
      %v4629 = vsel %vm643, %v4191, -inf
      %v4630 = vsel %vm643, %v4247, -inf
      %v4631 = vmax.f32 %v4629, %v4630
      %v4632 = vsel %vm643, %v4198, -inf
      %v4633 = vsel %vm643, %v4254, -inf
      %v4634 = vmax.f32 %v4632, %v4633
      %v4635 = vsel %vm643, %v4205, -inf
      %v4636 = vsel %vm643, %v4261, -inf
      %v4637 = vmax.f32 %v4635, %v4636
      %v4638 = vsel %vm643, %v4212, -inf
      %v4639 = vsel %vm643, %v4268, -inf
      %v4640 = vmax.f32 %v4638, %v4639
      %v4641 = vsel %vm643, %v4219, -inf
      %v4642 = vsel %vm643, %v4275, -inf
      %v4643 = vmax.f32 %v4641, %v4642
      %v4644 = vsel %vm643, %v4282, -inf
      %v4645 = vsel %vm643, %v4338, -inf
      %v4646 = vmax.f32 %v4644, %v4645
      %v4647 = vsel %vm643, %v4289, -inf
      %v4648 = vsel %vm643, %v4345, -inf
      %v4649 = vmax.f32 %v4647, %v4648
      %v4650 = vsel %vm643, %v4296, -inf
      %v4651 = vsel %vm643, %v4352, -inf
      %v4652 = vmax.f32 %v4650, %v4651
      %v4653 = vsel %vm643, %v4303, -inf
      %v4654 = vsel %vm643, %v4359, -inf
      %v4655 = vmax.f32 %v4653, %v4654
      %v4656 = vsel %vm643, %v4310, -inf
      %v4657 = vsel %vm643, %v4366, -inf
      %v4658 = vmax.f32 %v4656, %v4657
      %v4659 = vsel %vm643, %v4317, -inf
      %v4660 = vsel %vm643, %v4373, -inf
      %v4661 = vmax.f32 %v4659, %v4660
      %v4662 = vsel %vm643, %v4324, -inf
      %v4663 = vsel %vm643, %v4380, -inf
      %v4664 = vmax.f32 %v4662, %v4663
      %v4665 = vsel %vm643, %v4331, -inf
      %v4666 = vsel %vm643, %v4387, -inf
      %v4667 = vmax.f32 %v4665, %v4666
      %v4668 = vsel %vm643, %v4394, -inf
      %v4669 = vsel %vm643, %v4450, -inf
      %v4670 = vmax.f32 %v4668, %v4669
      %v4671 = vsel %vm643, %v4401, -inf
      %v4672 = vsel %vm643, %v4457, -inf
      %v4673 = vmax.f32 %v4671, %v4672
      %v4674 = vsel %vm643, %v4408, -inf
      %v4675 = vsel %vm643, %v4464, -inf
      %v4676 = vmax.f32 %v4674, %v4675
      %v4677 = vsel %vm643, %v4415, -inf
      %v4678 = vsel %vm643, %v4471, -inf
      %v4679 = vmax.f32 %v4677, %v4678
      %v4680 = vsel %vm643, %v4422, -inf
      %v4681 = vsel %vm643, %v4478, -inf
      %v4682 = vmax.f32 %v4680, %v4681
      %v4683 = vsel %vm643, %v4429, -inf
      %v4684 = vsel %vm643, %v4485, -inf
      %v4685 = vmax.f32 %v4683, %v4684
      %v4686 = vsel %vm643, %v4436, -inf
      %v4687 = vsel %vm643, %v4492, -inf
      %v4688 = vmax.f32 %v4686, %v4687
      %v4689 = vsel %vm643, %v4443, -inf
      %v4690 = vsel %vm643, %v4499, -inf
      %v4691 = vmax.f32 %v4689, %v4690
      %v4692 = vpack.c.bf16 %v4502, %v4502
      %v4693 = vpack.c.bf16 %v4505, %v4505
      %v4694 = vpack.c.bf16 %v4508, %v4508
      %v4695 = vpack.c.bf16 %v4511, %v4511
      %v4696 = vpack.c.bf16 %v4514, %v4514
      %v4697 = vpack.c.bf16 %v4517, %v4517
      %v4698 = vpack.c.bf16 %v4520, %v4520
      %v4699 = vpack.c.bf16 %v4523, %v4523
      %v4700 = vpack.c.bf16 %v4526, %v4526
      %v4701 = vpack.c.bf16 %v4529, %v4529
      %v4702 = vpack.c.bf16 %v4532, %v4532
      %v4703 = vpack.c.bf16 %v4535, %v4535
      %v4704 = vpack.c.bf16 %v4538, %v4538
      %v4705 = vpack.c.bf16 %v4541, %v4541
      %v4706 = vpack.c.bf16 %v4544, %v4544
      %v4707 = vpack.c.bf16 %v4547, %v4547
      %v4708 = vpack.c.bf16 %v4550, %v4550
      %v4709 = vpack.c.bf16 %v4553, %v4553
      %v4710 = vpack.c.bf16 %v4556, %v4556
      %v4711 = vpack.c.bf16 %v4559, %v4559
      %v4712 = vpack.c.bf16 %v4562, %v4562
      %v4713 = vpack.c.bf16 %v4565, %v4565
      %v4714 = vpack.c.bf16 %v4568, %v4568
      %v4715 = vpack.c.bf16 %v4571, %v4571
      %v4716 = vpack.c.bf16 %v4574, %v4574
      %v4717 = vpack.c.bf16 %v4577, %v4577
      %v4718 = vpack.c.bf16 %v4580, %v4580
      %v4719 = vpack.c.bf16 %v4583, %v4583
      %v4720 = vpack.c.bf16 %v4586, %v4586
      %v4721 = vpack.c.bf16 %v4589, %v4589
      %v4722 = vpack.c.bf16 %v4592, %v4592
      %v4723 = vpack.c.bf16 %v4595, %v4595
      %v4724 = vpack.c.bf16 %v4598, %v4598
      %v4725 = vpack.c.bf16 %v4601, %v4601
      %v4726 = vpack.c.bf16 %v4604, %v4604
      %v4727 = vpack.c.bf16 %v4607, %v4607
      %v4728 = vpack.c.bf16 %v4610, %v4610
      %v4729 = vpack.c.bf16 %v4613, %v4613
      %v4730 = vpack.c.bf16 %v4616, %v4616
      %v4731 = vpack.c.bf16 %v4619, %v4619
      %v4732 = vpack.c.bf16 %v4622, %v4622
      %v4733 = vpack.c.bf16 %v4625, %v4625
      %v4734 = vpack.c.bf16 %v4628, %v4628
      %v4735 = vpack.c.bf16 %v4631, %v4631
      %v4736 = vpack.c.bf16 %v4634, %v4634
      %v4737 = vpack.c.bf16 %v4637, %v4637
      %v4738 = vpack.c.bf16 %v4640, %v4640
      %v4739 = vpack.c.bf16 %v4643, %v4643
      %v4740 = vpack.c.bf16 %v4646, %v4646
      %v4741 = vpack.c.bf16 %v4649, %v4649
      %v4742 = vpack.c.bf16 %v4652, %v4652
      %v4743 = vpack.c.bf16 %v4655, %v4655
      %v4744 = vpack.c.bf16 %v4658, %v4658
      %v4745 = vpack.c.bf16 %v4661, %v4661
      %v4746 = vpack.c.bf16 %v4664, %v4664
      %v4747 = vpack.c.bf16 %v4667, %v4667
      %v4748 = vpack.c.bf16 %v4670, %v4670
      %v4749 = vpack.c.bf16 %v4673, %v4673
      %v4750 = vpack.c.bf16 %v4676, %v4676
      %v4751 = vpack.c.bf16 %v4679, %v4679
      %v4752 = vpack.c.bf16 %v4682, %v4682
      %v4753 = vpack.c.bf16 %v4685, %v4685
      %v4754 = vpack.c.bf16 %v4688, %v4688
      %v4755 = vpack.c.bf16 %v4691, %v4691
      %vm4756 = vcmask 519168
      %4757 = vst.msk [vmem:[%s170] sm:$0xf] %vm4756, 0
      %4758 = vst.msk [vmem:[%s170 + $0x4] sm:$0xf] %vm4756, 0
      %4759 = vst.msk [vmem:[%s170 + $0x8] sm:$0xf] %vm4756, 0
      %4760 = vst.msk [vmem:[%s170 + $0xc] sm:$0xf] %vm4756, 0
      %4761 = vst.msk [vmem:[%s170 + $0x10] sm:$0xf] %vm4756, 0
      %4762 = vst.msk [vmem:[%s170 + $0x14] sm:$0xf] %vm4756, 0
      %4763 = vst.msk [vmem:[%s170 + $0x18] sm:$0xf] %vm4756, 0
      %4764 = vst.msk [vmem:[%s170 + $0x1c] sm:$0xf] %vm4756, 0
      %4765 = vst.msk [vmem:[%s170 + $0x20] sm:$0xf] %vm4756, 0
      %4766 = vst.msk [vmem:[%s170 + $0x24] sm:$0xf] %vm4756, 0
      %4767 = vst.msk [vmem:[%s170 + $0x28] sm:$0xf] %vm4756, 0
      %4768 = vst.msk [vmem:[%s170 + $0x2c] sm:$0xf] %vm4756, 0
      %4769 = vst.msk [vmem:[%s170 + $0x30] sm:$0xf] %vm4756, 0
      %4770 = vst.msk [vmem:[%s170 + $0x34] sm:$0xf] %vm4756, 0
      %4771 = vst.msk [vmem:[%s170 + $0x38] sm:$0xf] %vm4756, 0
      %4772 = vst.msk [vmem:[%s170 + $0x3c] sm:$0xf] %vm4756, 0
      %4773 = vst.msk [vmem:[%s170 + $0x40] sm:$0xf] %vm4756, 0
      %4774 = vst.msk [vmem:[%s170 + $0x44] sm:$0xf] %vm4756, 0
      %4775 = vst.msk [vmem:[%s170 + $0x48] sm:$0xf] %vm4756, 0
      %4776 = vst.msk [vmem:[%s170 + $0x4c] sm:$0xf] %vm4756, 0
      %4777 = vst.msk [vmem:[%s170 + $0x50] sm:$0xf] %vm4756, 0
      %4778 = vst.msk [vmem:[%s170 + $0x54] sm:$0xf] %vm4756, 0
      %v4843 = vunpack.c.l.b16 %v4692
      %v4844 = vunpack.c.l.b16 %v4693
      %v4845 = vunpack.c.l.b16 %v4694
      %v4846 = vunpack.c.l.b16 %v4695
      %v4847 = vunpack.c.l.b16 %v4696
      %v4848 = vunpack.c.l.b16 %v4697
      %v4849 = vunpack.c.l.b16 %v4698
      %v4850 = vunpack.c.l.b16 %v4699
      %v4851 = vunpack.c.l.b16 %v4700
      %v4852 = vunpack.c.l.b16 %v4701
      %v4853 = vunpack.c.l.b16 %v4702
      %v4854 = vunpack.c.l.b16 %v4703
      %v4855 = vunpack.c.l.b16 %v4704
      %v4856 = vunpack.c.l.b16 %v4705
      %v4857 = vunpack.c.l.b16 %v4706
      %v4858 = vunpack.c.l.b16 %v4707
      %v4859 = vunpack.c.l.b16 %v4708
      %v4860 = vunpack.c.l.b16 %v4709
      %v4861 = vunpack.c.l.b16 %v4710
      %v4862 = vunpack.c.l.b16 %v4711
      %v4863 = vunpack.c.l.b16 %v4712
      %v4864 = vunpack.c.l.b16 %v4713
      %v4865 = vunpack.c.l.b16 %v4714
      %v4866 = vunpack.c.l.b16 %v4715
      %v4867 = vunpack.c.l.b16 %v4716
      %v4868 = vunpack.c.l.b16 %v4717
      %v4869 = vunpack.c.l.b16 %v4718
      %v4870 = vunpack.c.l.b16 %v4719
      %v4871 = vunpack.c.l.b16 %v4720
      %v4872 = vunpack.c.l.b16 %v4721
      %v4873 = vunpack.c.l.b16 %v4722
      %v4874 = vunpack.c.l.b16 %v4723
      %v4875 = vunpack.c.l.b16 %v4724
      %v4876 = vunpack.c.l.b16 %v4725
      %v4877 = vunpack.c.l.b16 %v4726
      %v4878 = vunpack.c.l.b16 %v4727
      %v4879 = vunpack.c.l.b16 %v4728
      %v4880 = vunpack.c.l.b16 %v4729
      %v4881 = vunpack.c.l.b16 %v4730
      %v4882 = vunpack.c.l.b16 %v4731
      %v4883 = vunpack.c.l.b16 %v4732
      %v4884 = vunpack.c.l.b16 %v4733
      %v4885 = vunpack.c.l.b16 %v4734
      %v4886 = vunpack.c.l.b16 %v4735
      %v4887 = vunpack.c.l.b16 %v4736
      %v4888 = vunpack.c.l.b16 %v4737
      %v4889 = vunpack.c.l.b16 %v4738
      %v4890 = vunpack.c.l.b16 %v4739
      %v4891 = vunpack.c.l.b16 %v4740
      %v4892 = vunpack.c.l.b16 %v4741
      %v4893 = vunpack.c.l.b16 %v4742
      %v4894 = vunpack.c.l.b16 %v4743
      %v4895 = vunpack.c.l.b16 %v4744
      %v4896 = vunpack.c.l.b16 %v4745
      %v4897 = vunpack.c.l.b16 %v4746
      %v4898 = vunpack.c.l.b16 %v4747
      %v4899 = vunpack.c.l.b16 %v4748
      %v4900 = vunpack.c.l.b16 %v4749
      %v4901 = vunpack.c.l.b16 %v4750
      %v4902 = vunpack.c.l.b16 %v4751
      %v4903 = vunpack.c.l.b16 %v4752
      %v4904 = vunpack.c.l.b16 %v4753
      %v4905 = vunpack.c.l.b16 %v4754
      %v4906 = vunpack.c.l.b16 %v4755
      %v4907 = vpack.c.b16 %v4843, %v4843
      %v4908 = vpack.c.b16 %v4844, %v4844
      %v4909 = vpack.c.b16 %v4845, %v4845
      %v4910 = vpack.c.b16 %v4846, %v4846
      %v4911 = vpack.c.b16 %v4847, %v4847
      %v4912 = vpack.c.b16 %v4848, %v4848
      %v4913 = vpack.c.b16 %v4849, %v4849
      %v4914 = vpack.c.b16 %v4850, %v4850
      %v4915 = vpack.c.b16 %v4851, %v4851
      %v4916 = vpack.c.b16 %v4852, %v4852
      %v4917 = vpack.c.b16 %v4853, %v4853
      %v4918 = vpack.c.b16 %v4854, %v4854
      %v4919 = vpack.c.b16 %v4855, %v4855
      %v4920 = vpack.c.b16 %v4856, %v4856
      %v4921 = vpack.c.b16 %v4857, %v4857
      %v4922 = vpack.c.b16 %v4858, %v4858
      %v4923 = vpack.c.b16 %v4859, %v4859
      %v4924 = vpack.c.b16 %v4860, %v4860
      %v4925 = vpack.c.b16 %v4861, %v4861
      %v4926 = vpack.c.b16 %v4862, %v4862
      %v4927 = vpack.c.b16 %v4863, %v4863
      %v4928 = vpack.c.b16 %v4864, %v4864
      %v4929 = vpack.c.b16 %v4865, %v4865
      %v4930 = vpack.c.b16 %v4866, %v4866
      %v4931 = vpack.c.b16 %v4867, %v4867
      %v4932 = vpack.c.b16 %v4868, %v4868
      %v4933 = vpack.c.b16 %v4869, %v4869
      %v4934 = vpack.c.b16 %v4870, %v4870
      %v4935 = vpack.c.b16 %v4871, %v4871
      %v4936 = vpack.c.b16 %v4872, %v4872
      %v4937 = vpack.c.b16 %v4873, %v4873
      %v4938 = vpack.c.b16 %v4874, %v4874
      %v4939 = vpack.c.b16 %v4875, %v4875
      %v4940 = vpack.c.b16 %v4876, %v4876
      %v4941 = vpack.c.b16 %v4877, %v4877
      %v4942 = vpack.c.b16 %v4878, %v4878
      %v4943 = vpack.c.b16 %v4879, %v4879
      %v4944 = vpack.c.b16 %v4880, %v4880
      %v4945 = vpack.c.b16 %v4881, %v4881
      %v4946 = vpack.c.b16 %v4882, %v4882
      %v4947 = vpack.c.b16 %v4883, %v4883
      %v4948 = vpack.c.b16 %v4884, %v4884
      %v4949 = vpack.c.b16 %v4885, %v4885
      %v4950 = vpack.c.b16 %v4886, %v4886
      %v4951 = vpack.c.b16 %v4887, %v4887
      %v4952 = vpack.c.b16 %v4888, %v4888
      %v4953 = vpack.c.b16 %v4889, %v4889
      %v4954 = vpack.c.b16 %v4890, %v4890
      %v4955 = vpack.c.b16 %v4891, %v4891
      %v4956 = vpack.c.b16 %v4892, %v4892
      %v4957 = vpack.c.b16 %v4893, %v4893
      %v4958 = vpack.c.b16 %v4894, %v4894
      %v4959 = vpack.c.b16 %v4895, %v4895
      %v4960 = vpack.c.b16 %v4896, %v4896
      %v4961 = vpack.c.b16 %v4897, %v4897
      %v4962 = vpack.c.b16 %v4898, %v4898
      %v4963 = vpack.c.b16 %v4899, %v4899
      %v4964 = vpack.c.b16 %v4900, %v4900
      %v4965 = vpack.c.b16 %v4901, %v4901
      %v4966 = vpack.c.b16 %v4902, %v4902
      %v4967 = vpack.c.b16 %v4903, %v4903
      %v4968 = vpack.c.b16 %v4904, %v4904
      %v4969 = vpack.c.b16 %v4905, %v4905
      %v4970 = vpack.c.b16 %v4906, %v4906
      %v4971 = vunpack.c.l.b16 %v4907
      %v4972 = vunpack.c.l.b16 %v4908
      %v4973 = vunpack.c.l.b16 %v4909
      %v4974 = vunpack.c.l.b16 %v4910
      %v4975 = vunpack.c.l.b16 %v4911
      %v4976 = vunpack.c.l.b16 %v4912
      %v4977 = vunpack.c.l.b16 %v4913
      %v4978 = vunpack.c.l.b16 %v4914
      %v4979 = vunpack.c.l.b16 %v4915
      %v4980 = vunpack.c.l.b16 %v4916
      %v4981 = vunpack.c.l.b16 %v4917
      %v4982 = vunpack.c.l.b16 %v4918
      %v4983 = vunpack.c.l.b16 %v4919
      %v4984 = vunpack.c.l.b16 %v4920
      %v4985 = vunpack.c.l.b16 %v4921
      %v4986 = vunpack.c.l.b16 %v4922
      %v4987 = vunpack.c.l.b16 %v4923
      %v4988 = vunpack.c.l.b16 %v4924
      %v4989 = vunpack.c.l.b16 %v4925
      %v4990 = vunpack.c.l.b16 %v4926
      %v4991 = vunpack.c.l.b16 %v4927
      %v4992 = vunpack.c.l.b16 %v4928
      %v4993 = vunpack.c.l.b16 %v4929
      %v4994 = vunpack.c.l.b16 %v4930
      %v4995 = vunpack.c.l.b16 %v4931
      %v4996 = vunpack.c.l.b16 %v4932
      %v4997 = vunpack.c.l.b16 %v4933
      %v4998 = vunpack.c.l.b16 %v4934
      %v4999 = vunpack.c.l.b16 %v4935
      %v5000 = vunpack.c.l.b16 %v4936
      %v5001 = vunpack.c.l.b16 %v4937
      %v5002 = vunpack.c.l.b16 %v4938
      %v5003 = vunpack.c.l.b16 %v4939
      %v5004 = vunpack.c.l.b16 %v4940
      %v5005 = vunpack.c.l.b16 %v4941
      %v5006 = vunpack.c.l.b16 %v4942
      %v5007 = vunpack.c.l.b16 %v4943
      %v5008 = vunpack.c.l.b16 %v4944
      %v5009 = vunpack.c.l.b16 %v4945
      %v5010 = vunpack.c.l.b16 %v4946
      %v5011 = vunpack.c.l.b16 %v4947
      %v5012 = vunpack.c.l.b16 %v4948
      %v5013 = vunpack.c.l.b16 %v4949
      %v5014 = vunpack.c.l.b16 %v4950
      %v5015 = vunpack.c.l.b16 %v4951
      %v5016 = vunpack.c.l.b16 %v4952
      %v5017 = vunpack.c.l.b16 %v4953
      %v5018 = vunpack.c.l.b16 %v4954
      %v5019 = vunpack.c.l.b16 %v4955
      %v5020 = vunpack.c.l.b16 %v4956
      %v5021 = vunpack.c.l.b16 %v4957
      %v5022 = vunpack.c.l.b16 %v4958
      %v5023 = vunpack.c.l.b16 %v4959
      %v5024 = vunpack.c.l.b16 %v4960
      %v5025 = vunpack.c.l.b16 %v4961
      %v5026 = vunpack.c.l.b16 %v4962
      %v5027 = vunpack.c.l.b16 %v4963
      %v5028 = vunpack.c.l.b16 %v4964
      %v5029 = vunpack.c.l.b16 %v4965
      %v5030 = vunpack.c.l.b16 %v4966
      %v5031 = vunpack.c.l.b16 %v4967
      %v5032 = vunpack.c.l.b16 %v4968
      %v5033 = vunpack.c.l.b16 %v4969
      %v5034 = vunpack.c.l.b16 %v4970
      %vm5035 = vcmask 1042434
      %v5036 = vsel %vm5035, %v4972, %v4971
      %vm5037 = vcmask 1043459
      %v5038 = vsel %vm5037, %v4973, %v5036
      %vm5039 = vcmask 1044484
      %v5040 = vsel %vm5039, %v4974, %v5038
      %vm5041 = vcmask 1045509
      %v5042 = vsel %vm5041, %v4975, %v5040
      %vm5043 = vcmask 1046534
      %v5044 = vsel %vm5043, %v4976, %v5042
      %vm5045 = vcmask 1047559
      %v5046 = vsel %vm5045, %v4977, %v5044
      %v5047 = vsel %vm5035, %v4980, %v4979
      %v5048 = vsel %vm5037, %v4981, %v5047
      %v5049 = vsel %vm5039, %v4982, %v5048
      %v5050 = vsel %vm5041, %v4983, %v5049
      %v5051 = vsel %vm5043, %v4984, %v5050
      %v5052 = vsel %vm5045, %v4985, %v5051
      %v5053 = vsel %vm5035, %v4988, %v4987
      %v5054 = vsel %vm5037, %v4989, %v5053
      %v5055 = vsel %vm5039, %v4990, %v5054
      %v5056 = vsel %vm5041, %v4991, %v5055
      %v5057 = vsel %vm5043, %v4992, %v5056
      %v5058 = vsel %vm5045, %v4993, %v5057
      %v5059 = vsel %vm5035, %v4996, %v4995
      %v5060 = vsel %vm5037, %v4997, %v5059
      %v5061 = vsel %vm5039, %v4998, %v5060
      %v5062 = vsel %vm5041, %v4999, %v5061
      %v5063 = vsel %vm5043, %v5000, %v5062
      %v5064 = vsel %vm5045, %v5001, %v5063
      %v5065 = vsel %vm5035, %v5004, %v5003
      %v5066 = vsel %vm5037, %v5005, %v5065
      %v5067 = vsel %vm5039, %v5006, %v5066
      %v5068 = vsel %vm5041, %v5007, %v5067
      %v5069 = vsel %vm5043, %v5008, %v5068
      %v5070 = vsel %vm5045, %v5009, %v5069
      %v5071 = vsel %vm5035, %v5012, %v5011
      %v5072 = vsel %vm5037, %v5013, %v5071
      %v5073 = vsel %vm5039, %v5014, %v5072
      %v5074 = vsel %vm5041, %v5015, %v5073
      %v5075 = vsel %vm5043, %v5016, %v5074
      %v5076 = vsel %vm5045, %v5017, %v5075
      %v5077 = vsel %vm5035, %v5020, %v5019
      %v5078 = vsel %vm5037, %v5021, %v5077
      %v5079 = vsel %vm5039, %v5022, %v5078
      %v5080 = vsel %vm5041, %v5023, %v5079
      %v5081 = vsel %vm5043, %v5024, %v5080
      %v5082 = vsel %vm5045, %v5025, %v5081
      %v5083 = vsel %vm5035, %v5028, %v5027
      %v5084 = vsel %vm5037, %v5029, %v5083
      %v5085 = vsel %vm5039, %v5030, %v5084
      %v5086 = vsel %vm5041, %v5031, %v5085
      %v5087 = vsel %vm5043, %v5032, %v5086
      %v5088 = vsel %vm5045, %v5033, %v5087
      %v5089 = vpack.c.b16 %v5046, %v5046
      %v5090 = vpack.c.b16 %v4978, %v4978
      %v5091 = vpack.c.b16 %v5052, %v5052
      %v5092 = vpack.c.b16 %v4986, %v4986
      %v5093 = vpack.c.b16 %v5058, %v5058
      %v5094 = vpack.c.b16 %v4994, %v4994
      %v5095 = vpack.c.b16 %v5064, %v5064
      %v5096 = vpack.c.b16 %v5002, %v5002
      %v5097 = vpack.c.b16 %v5070, %v5070
      %v5098 = vpack.c.b16 %v5010, %v5010
      %v5099 = vpack.c.b16 %v5076, %v5076
      %v5100 = vpack.c.b16 %v5018, %v5018
      %v5101 = vpack.c.b16 %v5082, %v5082
      %v5102 = vpack.c.b16 %v5026, %v5026
      %v5103 = vpack.c.b16 %v5088, %v5088
      %v5104 = vpack.c.b16 %v5034, %v5034
      %s5121 = scalar_lea.vmem %s170, 8
      %vm5122 = vcmask 519168
      %vm5123 = vsmask.f32 7938
      %vm5124 = vmand %vm5122, %vm5123
      %v5125 = vld [vmem:[%s5121] sm:$0xf]
      %v5126 = vsel %vm5124, %v5089, %v5125
      %5127 = vst [vmem:[%s5121] sm:$0xf] %v5126
      %vm5128 = vcmask 516096
      %vm5129 = vsmask.f32 256
      %vm5130 = vmand %vm5128, %vm5129
      %v5131 = vld [vmem:[%s5121 + $0x4] sm:$0x1]
      %v5132 = vsel %vm5130, %v5090, %v5131
      %5133 = vst [vmem:[%s5121 + $0x4] sm:$0x1] %v5132
      %v5134 = vld [vmem:[%s5121 + $0x8] sm:$0xf]
      %v5135 = vsel %vm5124, %v5091, %v5134
      %5136 = vst [vmem:[%s5121 + $0x8] sm:$0xf] %v5135
      %v5137 = vld [vmem:[%s5121 + $0xc] sm:$0x1]
      %v5138 = vsel %vm5130, %v5092, %v5137
      %5139 = vst [vmem:[%s5121 + $0xc] sm:$0x1] %v5138
      %v5140 = vld [vmem:[%s5121 + $0x10] sm:$0xf]
      %v5141 = vsel %vm5124, %v5093, %v5140
      %5142 = vst [vmem:[%s5121 + $0x10] sm:$0xf] %v5141
      %v5143 = vld [vmem:[%s5121 + $0x14] sm:$0x1]
      %v5144 = vsel %vm5130, %v5094, %v5143
      %5145 = vst [vmem:[%s5121 + $0x14] sm:$0x1] %v5144
      %v5146 = vld [vmem:[%s5121 + $0x18] sm:$0xf]
      %v5147 = vsel %vm5124, %v5095, %v5146
      %5148 = vst [vmem:[%s5121 + $0x18] sm:$0xf] %v5147
      %v5149 = vld [vmem:[%s5121 + $0x1c] sm:$0x1]
      %v5150 = vsel %vm5130, %v5096, %v5149
      %5151 = vst [vmem:[%s5121 + $0x1c] sm:$0x1] %v5150
      %v5152 = vld [vmem:[%s5121 + $0x20] sm:$0xf]
      %v5153 = vsel %vm5124, %v5097, %v5152
      %5154 = vst [vmem:[%s5121 + $0x20] sm:$0xf] %v5153
      %v5155 = vld [vmem:[%s5121 + $0x24] sm:$0x1]
      %v5156 = vsel %vm5130, %v5098, %v5155
      %5157 = vst [vmem:[%s5121 + $0x24] sm:$0x1] %v5156
      %v5158 = vld [vmem:[%s5121 + $0x28] sm:$0xf]
      %v5159 = vsel %vm5124, %v5099, %v5158
      %5160 = vst [vmem:[%s5121 + $0x28] sm:$0xf] %v5159
      %v5161 = vld [vmem:[%s5121 + $0x2c] sm:$0x1]
      %v5162 = vsel %vm5130, %v5100, %v5161
      %5163 = vst [vmem:[%s5121 + $0x2c] sm:$0x1] %v5162
      %v5164 = vld [vmem:[%s5121 + $0x30] sm:$0xf]
      %v5165 = vsel %vm5124, %v5101, %v5164
      %5166 = vst [vmem:[%s5121 + $0x30] sm:$0xf] %v5165
      %v5167 = vld [vmem:[%s5121 + $0x34] sm:$0x1]
      %v5168 = vsel %vm5130, %v5102, %v5167
      %5169 = vst [vmem:[%s5121 + $0x34] sm:$0x1] %v5168
      %v5170 = vld [vmem:[%s5121 + $0x38] sm:$0xf]
      %v5171 = vsel %vm5124, %v5103, %v5170
      %5172 = vst [vmem:[%s5121 + $0x38] sm:$0xf] %v5171
      %v5173 = vld [vmem:[%s5121 + $0x3c] sm:$0x1]
      %v5174 = vsel %vm5130, %v5104, %v5173
      %5175 = vst [vmem:[%s5121 + $0x3c] sm:$0x1] %v5174
      %p5176 = scmp.lt.s32.totalorder %s14, 1
      %s5177 = scalar_select %p5176, %s14, 1
      %s5178 = smul.addr %s5177, 22
      %s5179 = smul.addr %s5178, 4
      %s5180 = scalar_lea.vmem %s3, %s5179
      // Predicated region
      $region33: #{netf_forward.5} parent=31 // pred_check
        %p5181 = pneg %p100
      $region34: #{netf_forward.5} parent=31 // pred_check_branch
        %5183 = sbr.rel (%p5181) target = $region36
      $region35: #{netf_forward.5} parent=31 // pred_region
        _
      $region36: #{netf_forward.5} parent=31 // pred_fallthru
        _
    $region32: #{netf_forward.5} parent=5 // pred_fallthru
      _
    %p5184 = scmp.le.s32.totalorder 2, %s9
    // Predicated region
    $region37: #{netf_forward.5} parent=5 // pred_check
      %p5185 = pneg %p5184
    $region38: #{netf_forward.5} parent=5 // pred_check_branch
      %5187 = sbr.rel (%p5185) target = $region40
    $region39: #{netf_forward.5} parent=5 // pred_region
      %s5188 = ssub.s32 %s9, 2
      // Predicated region
      $region41: #{netf_forward.5} parent=39 // pred_check
        %p5189 = pneg %p106
      $region42: #{netf_forward.5} parent=39 // pred_check_branch
        %5191 = sbr.rel (%p5189) target = $region44
      $region43: #{netf_forward.5} parent=39 // pred_region
        %p5192 = scmp.lt.s32.totalorder %s15, 1
        %s5193 = scalar_select %p5192, %s15, 1
        %s5194 = smul.addr %s5193, 22
        %s5195 = smul.addr %s5194, 4
        %s5196 = scalar_lea.vmem %s3, %s5195
      $region44: #{netf_forward.5} parent=39 // pred_fallthru
        _
    $region40: #{netf_forward.5} parent=5 // pred_fallthru
      _
  $region6: #{netf_forward.5} parent=0 // loop_footer
    %s13 = sadd.s32 1, %s9
  $region7: #{netf_forward.5} parent=0 // loop_footer_branch
    %8 = sbr.rel target = $region3
  $region8: #{netf_forward.5} parent=0 // loop_exit
    _

</llo_original>
